<compile_context>
chip_gen: v7x
topology: tpu7x:2x2x1
jax: 0.10.0
libtpu: 0.0.40
codegen_flags: <defaults>
</compile_context>

<pallas_src>
from functools import partial

import jax
import jax.numpy as jnp
from jax.experimental import pallas as pl
from jax.experimental.pallas import tpu as pltpu

BN_EPS = 1e-5
_M_ALIGN = 1024          # keeps M divisible by 8*r for every lane-pack r <= 128


def _round_up(x, m):
    return (x + m - 1) // m * m


def _chip_config():
    """Per-generation (tm_target, vmem_limit_bytes), conservative fallback."""
    try:
        vmem = int(pltpu.get_tpu_info().vmem_capacity_bytes)
    except Exception:                      # unknown chip / API unavailable
        return 1024, 32 * 1024 * 1024
    if vmem >= 96 * 1024 * 1024:           # v5e / v6e: 128 MiB physical VMEM
        return 2048, 96 * 1024 * 1024
    if vmem >= 48 * 1024 * 1024:           # v7x: 64 MiB physical VMEM
        return 1024, 40 * 1024 * 1024
    return 1024, 24 * 1024 * 1024


def _pack_factor(c):
    """Smallest power-of-two r (<=128) with r*c >= 128 (lane-dense packing)."""
    r = 1
    while r * c < 128 and r < 128:
        r *= 2
    return r


def _choose_m_tiling(m, tm_target):
    """Pad M to a multiple of 1024 and pick an M-tile (multiple of 1024) that
    divides the padded M and is <= tm_target."""
    mp = _round_up(m, _M_ALIGN)
    tm = min(tm_target, mp)
    while mp % tm:
        tm -= _M_ALIGN
    return mp, tm


# ----------------------------- Pallas kernels ------------------------------

def _matmul_stats_kernel(p_ref, w_ref, y_ref, st_ref):
    """Conv-as-matmul tile (bf16 MXU operands, f32 accumulation); also emits
    this tile's per-channel partial sum / sum-of-squares (merged (1,2,C) block)
    so the grid axis stays 'parallel' (no revisited accumulator)."""
    y = jnp.dot(p_ref[...], w_ref[...], preferred_element_type=jnp.float32)
    y_ref[...] = y.astype(y_ref.dtype)
    s = jnp.sum(y, axis=0, keepdims=True)          # (1, C) f32
    ss = jnp.sum(y * y, axis=0, keepdims=True)     # (1, C) f32
    st_ref[...] = jnp.concatenate([s, ss], axis=0)[None]   # (1, 2, C)


def matmul_stats(patches, w, *, tm, vmem_limit):
    """(Mp, K)bf16 @ (K, C)bf16 -> y (Mp, C) bf16 + per-tile stats (nt, 2, C) f32."""
    Mp, K = patches.shape
    C = w.shape[1]
    nt = Mp // tm
    y, st = pl.pallas_call(
        _matmul_stats_kernel,
        out_shape=(jax.ShapeDtypeStruct((Mp, C), jnp.bfloat16),
                   jax.ShapeDtypeStruct((nt, 2, C), jnp.float32)),
        grid=(nt,),
        in_specs=[pl.BlockSpec((tm, K), lambda i: (i, 0)),
                  pl.BlockSpec((K, C), lambda i: (0, 0))],
        out_specs=(pl.BlockSpec((tm, C), lambda i: (i, 0)),
                   pl.BlockSpec((1, 2, C), lambda i: (i, 0, 0))),
        compiler_params=pltpu.CompilerParams(
            dimension_semantics=("parallel",),
            vmem_limit_bytes=vmem_limit),
    )(patches, w)
    return y, st


def _bn_scale_shift(stats_partial, gamma, beta, count):
    """Tiny (C,) XLA op: fold partial sums into per-channel scale/shift once,
    so the BN kernels are a single FMA + select per element (no per-step rsqrt).
    Training-mode (biased) variance, as torch BatchNorm uses for normalization."""
    st = jnp.sum(stats_partial, axis=0)            # (2, C) f32
    mean = st[0] / count
    var = jnp.maximum(st[1] / count - mean * mean, 0.0)
    inv = jax.lax.rsqrt(var + BN_EPS)
    scale = gamma * inv
    shift = beta - mean * scale
    return scale, shift


def _bn_act_kernel(y_ref, sc_ref, sh_ref, o_ref, *, neg_slope):
    yh = y_ref[...].astype(jnp.float32) * sc_ref[...] + sh_ref[...]
    o_ref[...] = jnp.where(yh >= 0, yh, neg_slope * yh).astype(o_ref.dtype)


def bn_act(y, scale, shift, neg_slope, out_dtype, *, tm, vmem_limit):
    """Normalize + (Leaky)ReLU on a lane-packed (Mp/r, r*C) view (r*C >= 128)."""
    Mp, C = y.shape
    r = _pack_factor(C)
    rows, rt = Mp // r, tm // r
    yp = y.reshape(rows, r * C)
    scp = jnp.tile(scale.reshape(1, C).astype(jnp.float32), (1, r))
    shp = jnp.tile(shift.reshape(1, C).astype(jnp.float32), (1, r))
    out = pl.pallas_call(
        partial(_bn_act_kernel, neg_slope=neg_slope),
        out_shape=jax.ShapeDtypeStruct((rows, r * C), out_dtype),
        grid=(rows // rt,),
        in_specs=[pl.BlockSpec((rt, r * C), lambda i: (i, 0)),
                  pl.BlockSpec((1, r * C), lambda i: (0, 0)),
                  pl.BlockSpec((1, r * C), lambda i: (0, 0))],
        out_specs=pl.BlockSpec((rt, r * C), lambda i: (i, 0)),
        compiler_params=pltpu.CompilerParams(
            dimension_semantics=("parallel",),
            vmem_limit_bytes=vmem_limit),
    )(yp, scp, shp)
    return out.reshape(Mp, C)


def _bn_act_res_kernel(y_ref, sc_ref, sh_ref, r_ref, o_ref, *, neg_slope):
    """Normalize + LeakyReLU + residual add (residual has full channel count)."""
    yh = y_ref[...].astype(jnp.float32) * sc_ref[...] + sh_ref[...]
    act = jnp.where(yh >= 0, yh, neg_slope * yh)
    o_ref[...] = (act + r_ref[...].astype(jnp.float32)).astype(o_ref.dtype)


def _bn_act_res_pad_kernel(y_ref, sc_ref, sh_ref, r_ref, o_ref, *, neg_slope, cres):
    """Normalize + LeakyReLU + residual add to channel group 0 only
    (torch.cat((x, zeros_like(x)), 1)) via static slice stores — no HBM zeros."""
    yh = y_ref[...].astype(jnp.float32) * sc_ref[...] + sh_ref[...]
    act = jnp.where(yh >= 0, yh, neg_slope * yh)
    o_ref[:, :cres] = (act[:, :cres] + r_ref[...].astype(jnp.float32)).astype(o_ref.dtype)
    o_ref[:, cres:] = act[:, cres:].astype(o_ref.dtype)


def bn_act_residual(y, scale, shift, resid, neg_slope, *, tm, vmem_limit):
    Mp, cout = y.shape
    cres = resid.shape[1]
    cp = pltpu.CompilerParams(dimension_semantics=("parallel",),
                              vmem_limit_bytes=vmem_limit)
    if cres == cout:
        # identity / 1x1-conv residual: fully lane-packed elementwise kernel.
        r = _pack_factor(cout)
        rows, rt = Mp // r, tm // r
        yp = y.reshape(rows, r * cout)
        rp = resid.reshape(rows, r * cout)
        scp = jnp.tile(scale.reshape(1, cout).astype(jnp.float32), (1, r))
        shp = jnp.tile(shift.reshape(1, cout).astype(jnp.float32), (1, r))
        out = pl.pallas_call(
            partial(_bn_act_res_kernel, neg_slope=neg_slope),
            out_shape=jax.ShapeDtypeStruct((rows, r * cout), jnp.float32),
            grid=(rows // rt,),
            in_specs=[pl.BlockSpec((rt, r * cout), lambda i: (i, 0)),
                      pl.BlockSpec((1, r * cout), lambda i: (0, 0)),
                      pl.BlockSpec((1, r * cout), lambda i: (0, 0)),
                      pl.BlockSpec((rt, r * cout), lambda i: (i, 0))],
            out_specs=pl.BlockSpec((rt, r * cout), lambda i: (i, 0)),
            compiler_params=cp,
        )(yp, scp, shp, rp)
        return out.reshape(Mp, cout)

    # cin < cout: zero-padded channel concat handled by slice writes in-kernel.
    assert cout == 2 * cres  # torch.cat((x, zeros_like(x)), 1) doubles channels,
                             # so the module's residual add requires cout == 2*cin.
    return pl.pallas_call(
        partial(_bn_act_res_pad_kernel, neg_slope=neg_slope, cres=cres),
        out_shape=jax.ShapeDtypeStruct((Mp, cout), jnp.float32),
        grid=(Mp // tm,),
        in_specs=[pl.BlockSpec((tm, cout), lambda i: (i, 0)),
                  pl.BlockSpec((1, cout), lambda i: (0, 0)),
                  pl.BlockSpec((1, cout), lambda i: (0, 0)),
                  pl.BlockSpec((tm, cres), lambda i: (i, 0))],
        out_specs=pl.BlockSpec((tm, cout), lambda i: (i, 0)),
        compiler_params=cp,
    )(y, scale.reshape(1, cout).astype(jnp.float32),
      shift.reshape(1, cout).astype(jnp.float32), resid)


# ------------------------------ JAX glue -----------------------------------

def im2col_3x3_nhwc(x_nhwc):
    """(N, H, W, C), pad=1 -> (N*H*W, 9*C) bf16 patches; column order (kh, kw, cin),
    matching torch weight (Cout, Cin, kH, kW) transposed to (kH, kW, Cin, Cout)."""
    N, H, W, C = x_nhwc.shape
    xp = jnp.pad(x_nhwc.astype(jnp.bfloat16), ((0, 0), (1, 1), (1, 1), (0, 0)))
    taps = [xp[:, di:di + H, dj:dj + W, :] for di in range(3) for dj in range(3)]
    cols = jnp.stack(taps, axis=3)                 # (N, H, W, 9, C)
    return cols.reshape(N * H * W, 9 * C)


def init_params(key, cin, cout):
    k = jax.random.split(key, 6)
    p = {
        "conv1_w": 0.1 * jax.random.normal(k[0], (cin, cin, 3, 3), jnp.float32),
        "conv1_b": 0.1 * jax.random.normal(k[1], (cin,), jnp.float32),
        "conv2_w": 0.1 * jax.random.normal(k[2], (cout, cin, 3, 3), jnp.float32),
        "conv2_b": 0.1 * jax.random.normal(k[3], (cout,), jnp.float32),
        "bn1_gamma": jnp.ones((cin,), jnp.float32),    # torch BN default init
        "bn1_beta": jnp.zeros((cin,), jnp.float32),
        "bn2_gamma": jnp.ones((cout,), jnp.float32),
        "bn2_beta": jnp.zeros((cout,), jnp.float32),
    }
    if cin > cout:
        p["conv1x1_w"] = 0.1 * jax.random.normal(k[4], (cout, cin, 1, 1), jnp.float32)
        p["conv1x1_b"] = 0.1 * jax.random.normal(k[5], (cout,), jnp.float32)
        p["bn1x1_gamma"] = jnp.ones((cout,), jnp.float32)
        p["bn1x1_beta"] = jnp.zeros((cout,), jnp.float32)
    return p


def res_block_2d(params, x_nchw, cin, cout, *, tm_target=None, vmem_limit=None):
    """ResBlock2D.forward with resolution=None (training-mode BatchNorm).

    Conv biases are intentionally not applied in the kernels: they cancel
    exactly against the training-mode BN mean subtraction."""
    if tm_target is None or vmem_limit is None:
        t, v = _chip_config()
        tm_target = tm_target or t
        vmem_limit = vmem_limit or v

    N, C, H, W = x_nchw.shape
    assert C == cin
    M = N * H * W
    Mp, tm = _choose_m_tiling(M, tm_target)

    x_nhwc = jnp.transpose(x_nchw, (0, 2, 3, 1))    # single entry transpose

    # res = LeakyReLU(0.2)(bn1(conv1(x)))
    p1 = jnp.pad(im2col_3x3_nhwc(x_nhwc), ((0, Mp - M), (0, 0)))
    w1 = jnp.transpose(params["conv1_w"], (2, 3, 1, 0)) \
            .reshape(9 * cin, cin).astype(jnp.bfloat16)
    y1, st1 = matmul_stats(p1, w1, tm=tm, vmem_limit=vmem_limit)
    sc1, sh1 = _bn_scale_shift(st1, params["bn1_gamma"], params["bn1_beta"], M)
    a1 = bn_act(y1, sc1, sh1, 0.2, jnp.bfloat16, tm=tm, vmem_limit=vmem_limit)
    a1 = a1[:M].reshape(N, H, W, cin)               # stays NHWC, no transpose

    # res = LeakyReLU(0.2)(bn2(conv2(res)))  (+ fused residual below)
    p2 = jnp.pad(im2col_3x3_nhwc(a1), ((0, Mp - M), (0, 0)))
    w2 = jnp.transpose(params["conv2_w"], (2, 3, 1, 0)) \
            .reshape(9 * cin, cout).astype(jnp.bfloat16)
    y2, st2 = matmul_stats(p2, w2, tm=tm, vmem_limit=vmem_limit)
    sc2, sh2 = _bn_scale_shift(st2, params["bn2_gamma"], params["bn2_beta"], M)

    # residual branch (flat NHWC rows, no transposes)
    x_flat = jnp.pad(x_nhwc.reshape(M, cin), ((0, Mp - M), (0, 0)))
    if cin > cout:
        # x = relu(bn_conv_1x1(conv_1x1(x)))
        w1x1 = jnp.transpose(params["conv1x1_w"][:, :, 0, 0], (1, 0)) \
                  .astype(jnp.bfloat16)             # (cin, cout)
        yr, str_ = matmul_stats(x_flat.astype(jnp.bfloat16), w1x1,
                                tm=tm, vmem_limit=vmem_limit)
        scr, shr = _bn_scale_shift(str_, params["bn1x1_gamma"],
                                   params["bn1x1_beta"], M)
        resid = bn_act(yr, scr, shr, 0.0, jnp.bfloat16,
                       tm=tm, vmem_limit=vmem_limit)          # ReLU, (Mp, cout)
    else:
        resid = x_flat                              # identity, or zero-pad in-kernel

    out = bn_act_residual(y2, sc2, sh2, resid, 0.2, tm=tm, vmem_limit=vmem_limit)
    out = out[:M].reshape(N, H, W, cout)
    return jnp.transpose(out, (0, 3, 1, 2))         # single exit transpose


# ---------------------------- pure-JAX reference ----------------------------

def _ref_res_block(params, x, cin, cout):
    def conv2d(x, w, b):
        y = jax.lax.conv_general_dilated(
            x, w, (1, 1), ((1, 1), (1, 1)),
            dimension_numbers=("NCHW", "OIHW", "NCHW"),
            precision=jax.lax.Precision.HIGHEST)
        return y + b[None, :, None, None]

    def bn(y, g, bta):
        mean = y.mean(axis=(0, 2, 3), keepdims=True)
        var = ((y - mean) ** 2).mean(axis=(0, 2, 3), keepdims=True)
        return (y - mean) / jnp.sqrt(var + BN_EPS) * g[None, :, None, None] \
            + bta[None, :, None, None]

    def lrelu(y, s):
        return jnp.where(y >= 0, y, s * y)

    r = lrelu(bn(conv2d(x, params["conv1_w"], params["conv1_b"]),
                 params["bn1_gamma"], params["bn1_beta"]), 0.2)
    r = lrelu(bn(conv2d(r, params["conv2_w"], params["conv2_b"]),
                 params["bn2_gamma"], params["bn2_beta"]), 0.2)
    if cin < cout:
        xr = jnp.concatenate([x, jnp.zeros_like(x)], axis=1)
    elif cin > cout:
        y = jax.lax.conv_general_dilated(
            x, params["conv1x1_w"], (1, 1), ((0, 0), (0, 0)),
            dimension_numbers=("NCHW", "OIHW", "NCHW"),
            precision=jax.lax.Precision.HIGHEST) \
            + params["conv1x1_b"][None, :, None, None]
        xr = jnp.maximum(bn(y, params["bn1x1_gamma"], params["bn1x1_beta"]), 0.0)
    else:
        xr = x
    return r + xr


# --------------------------------- main -------------------------------------

if __name__ == "__main__":
    key = jax.random.PRNGKey(0)

    configs = [
        (2, 4, 8, 16, 16),   # cin < cout: zero-padded channel residual
        (2, 8, 8, 16, 16),   # cin == cout: identity residual
        (2, 8, 4, 16, 16),   # cin > cout: 1x1-conv + BN + ReLU residual
    ]
    for N, CIN, COUT, H, W in configs:
        kx, kp, key = jax.random.split(key, 3)
        x = jax.random.normal(kx, (N, CIN, H, W), jnp.float32)
        params = init_params(kp, CIN, COUT)

        fwd = jax.jit(partial(res_block_2d, cin=CIN, cout=COUT))
        out = jax.block_until_ready(fwd(params, x))
        assert out.shape == (N, COUT, H, W), out.shape

        ref = _ref_res_block(params, x, CIN, COUT)
        max_err = float(jnp.max(jnp.abs(out - ref)))
        # Kernels use bf16 MXU operands / bf16 y storage with f32 stats and
        # accumulation; the reference is full-f32 HIGHEST -> loosened tolerance.
        assert jnp.allclose(out, ref, atol=5e-2, rtol=5e-2), \
            f"cin={CIN} cout={COUT} max_err={max_err}"

    print("KERNEL_OK")
</pallas_src>

<mosaic_0001>
module attributes {stable_mosaic.version = 11 : i64} {
  func.func @_matmul_stats_kernel(%arg0: i32, %arg1: memref<1024x36xbf16, #tpu.memory_space<vmem>>, %arg2: memref<36x4xbf16, #tpu.memory_space<vmem>>, %arg3: memref<1024x4xbf16, #tpu.memory_space<vmem>>, %arg4: memref<1x2x4xf32, #tpu.memory_space<vmem>>) attributes {dimension_semantics = [#tpu.dimension_semantics<parallel>], iteration_bounds = array<i64: 1>, scalar_prefetch = 0 : i64, scratch_operands = 0 : i64, tpu.core_type = #tpu.core_type<tc>, window_params = [{transform_indices = @transform_0, window_bounds = array<i64: 1024, 36>}, {pipeline_mode = #tpu.pipeline_mode<synchronous>, transform_indices = @transform_1, window_bounds = array<i64: 36, 4>}, {transform_indices = @transform_2, window_bounds = array<i64: 1024, 4>}, {transform_indices = @transform_3, window_bounds = array<i64: 1, 2, 4>}]} {
    %c0 = arith.constant 0 : index
    %c0_0 = arith.constant 0 : index
    %0 = vector.load %arg1[%c0, %c0_0] : memref<1024x36xbf16, #tpu.memory_space<vmem>>, vector<1024x36xbf16>
    %c0_1 = arith.constant 0 : index
    %c0_2 = arith.constant 0 : index
    %1 = vector.load %arg2[%c0_1, %c0_2] : memref<36x4xbf16, #tpu.memory_space<vmem>>, vector<36x4xbf16>
    %cst = arith.constant dense<0.000000e+00> : vector<1024x4xf32>
    %2 = tpu.matmul %0, %1, %cst {dimension_numbers = #tpu.dot_dimension_numbers<[1], [0], [0], [1], [0, 0, 1, 1], [], []>} : vector<1024x36xbf16>, vector<36x4xbf16>, vector<1024x4xf32> -> vector<1024x4xf32>
    %3 = arith.truncf %2 : vector<1024x4xf32> to vector<1024x4xbf16>
    %c0_3 = arith.constant 0 : index
    %c0_4 = arith.constant 0 : index
    %4 = vector.load %arg3[%c0_3, %c0_4] : memref<1024x4xbf16, #tpu.memory_space<vmem>>, vector<1024x4xbf16>
    tpu.vector_store %arg3[%c0_3, %c0_4], %3 {strides = array<i32>} : memref<1024x4xbf16, #tpu.memory_space<vmem>>, vector<1024x4xbf16>,
    %cst_5 = arith.constant dense<0.000000e+00> : vector<4xf32>
    %5 = vector.multi_reduction <add>, %2, %cst_5 [0] : vector<1024x4xf32> to vector<4xf32>
    %6 = vector.shape_cast %5 : vector<4xf32> to vector<1x4xf32>
    %7 = arith.mulf %2, %2 : vector<1024x4xf32>
    %cst_6 = arith.constant dense<0.000000e+00> : vector<4xf32>
    %8 = vector.multi_reduction <add>, %7, %cst_6 [0] : vector<1024x4xf32> to vector<4xf32>
    %9 = vector.shape_cast %8 : vector<4xf32> to vector<1x4xf32>
    %10 = tpu.concatenate %6, %9 in 0 : vector<1x4xf32>, vector<1x4xf32> -> vector<2x4xf32>
    %11 = vector.shape_cast %10 : vector<2x4xf32> to vector<1x2x4xf32>
    %c0_7 = arith.constant 0 : index
    %c0_8 = arith.constant 0 : index
    %c0_9 = arith.constant 0 : index
    %12 = vector.load %arg4[%c0_7, %c0_8, %c0_9] : memref<1x2x4xf32, #tpu.memory_space<vmem>>, vector<1x2x4xf32>
    tpu.vector_store %arg4[%c0_7, %c0_8, %c0_9], %11 {strides = array<i32>} : memref<1x2x4xf32, #tpu.memory_space<vmem>>, vector<1x2x4xf32>,
    return
  }
  func.func @transform_0(%arg0: i32) -> (i32, i32) {
    %c0_i32 = arith.constant 0 : i32
    %c0_i32_0 = arith.constant 0 : i32
    return %arg0, %c0_i32 : i32, i32
  }
  func.func @transform_1(%arg0: i32) -> (i32, i32) {
    %c0_i32 = arith.constant 0 : i32
    %c0_i32_0 = arith.constant 0 : i32
    %c0_i32_1 = arith.constant 0 : i32
    return %c0_i32, %c0_i32_0 : i32, i32
  }
  func.func @transform_2(%arg0: i32) -> (i32, i32) {
    %c0_i32 = arith.constant 0 : i32
    %c0_i32_0 = arith.constant 0 : i32
    return %arg0, %c0_i32 : i32, i32
  }
  func.func @transform_3(%arg0: i32) -> (i32, i32, i32) {
    %c0_i32 = arith.constant 0 : i32
    %c0_i32_0 = arith.constant 0 : i32
    %c0_i32_1 = arith.constant 0 : i32
    return %arg0, %c0_i32, %c0_i32_0 : i32, i32, i32
  }
}

module attributes {stable_mosaic.version = 11 : i64} {
  func.func @_bn_act_kernel(%arg0: i32, %arg1: memref<32x128xbf16, #tpu.memory_space<vmem>>, %arg2: memref<1x128xf32, #tpu.memory_space<vmem>>, %arg3: memref<1x128xf32, #tpu.memory_space<vmem>>, %arg4: memref<32x128xbf16, #tpu.memory_space<vmem>>) attributes {dimension_semantics = [#tpu.dimension_semantics<parallel>], iteration_bounds = array<i64: 1>, scalar_prefetch = 0 : i64, scratch_operands = 0 : i64, tpu.core_type = #tpu.core_type<tc>, window_params = [{transform_indices = @transform_0, window_bounds = array<i64: 32, 128>}, {pipeline_mode = #tpu.pipeline_mode<synchronous>, transform_indices = @transform_1, window_bounds = array<i64: 1, 128>}, {pipeline_mode = #tpu.pipeline_mode<synchronous>, transform_indices = @transform_2, window_bounds = array<i64: 1, 128>}, {transform_indices = @transform_3, window_bounds = array<i64: 32, 128>}]} {
    %c0 = arith.constant 0 : index
    %c0_0 = arith.constant 0 : index
    %0 = vector.load %arg1[%c0, %c0_0] : memref<32x128xbf16, #tpu.memory_space<vmem>>, vector<32x128xbf16>
    %1 = arith.extf %0 : vector<32x128xbf16> to vector<32x128xf32>
    %c0_1 = arith.constant 0 : index
    %c0_2 = arith.constant 0 : index
    %2 = vector.load %arg2[%c0_1, %c0_2] : memref<1x128xf32, #tpu.memory_space<vmem>>, vector<1x128xf32>
    %3 = vector.broadcast %2 : vector<1x128xf32> to vector<32x128xf32>
    %4 = arith.mulf %1, %3 : vector<32x128xf32>
    %c0_3 = arith.constant 0 : index
    %c0_4 = arith.constant 0 : index
    %5 = vector.load %arg3[%c0_3, %c0_4] : memref<1x128xf32, #tpu.memory_space<vmem>>, vector<1x128xf32>
    %6 = vector.broadcast %5 : vector<1x128xf32> to vector<32x128xf32>
    %7 = arith.addf %4, %6 : vector<32x128xf32>
    %cst = arith.constant 0.000000e+00 : f32
    %8 = vector.broadcast %cst : f32 to vector<32x128xf32>
    %9 = arith.cmpf oge, %7, %8 : vector<32x128xf32>
    %cst_5 = arith.constant 2.000000e-01 : f32
    %10 = vector.broadcast %cst_5 : f32 to vector<32x128xf32>
    %11 = arith.mulf %10, %7 : vector<32x128xf32>
    %12 = arith.select %9, %7, %11 : vector<32x128xi1>, vector<32x128xf32>
    %13 = arith.truncf %12 : vector<32x128xf32> to vector<32x128xbf16>
    %c0_6 = arith.constant 0 : index
    %c0_7 = arith.constant 0 : index
    %14 = vector.load %arg4[%c0_6, %c0_7] : memref<32x128xbf16, #tpu.memory_space<vmem>>, vector<32x128xbf16>
    tpu.vector_store %arg4[%c0_6, %c0_7], %13 {strides = array<i32>} : memref<32x128xbf16, #tpu.memory_space<vmem>>, vector<32x128xbf16>,
    return
  }
  func.func @transform_0(%arg0: i32) -> (i32, i32) {
    %c0_i32 = arith.constant 0 : i32
    %c0_i32_0 = arith.constant 0 : i32
    return %arg0, %c0_i32 : i32, i32
  }
  func.func @transform_1(%arg0: i32) -> (i32, i32) {
    %c0_i32 = arith.constant 0 : i32
    %c0_i32_0 = arith.constant 0 : i32
    %c0_i32_1 = arith.constant 0 : i32
    return %c0_i32, %c0_i32_0 : i32, i32
  }
  func.func @transform_2(%arg0: i32) -> (i32, i32) {
    %c0_i32 = arith.constant 0 : i32
    %c0_i32_0 = arith.constant 0 : i32
    %c0_i32_1 = arith.constant 0 : i32
    return %c0_i32, %c0_i32_0 : i32, i32
  }
  func.func @transform_3(%arg0: i32) -> (i32, i32) {
    %c0_i32 = arith.constant 0 : i32
    %c0_i32_0 = arith.constant 0 : i32
    return %arg0, %c0_i32 : i32, i32
  }
}

module attributes {stable_mosaic.version = 11 : i64} {
  func.func @_bn_act_res_pad_kernel(%arg0: i32, %arg1: memref<1024x8xbf16, #tpu.memory_space<vmem>>, %arg2: memref<1x8xf32, #tpu.memory_space<vmem>>, %arg3: memref<1x8xf32, #tpu.memory_space<vmem>>, %arg4: memref<1024x4xf32, #tpu.memory_space<vmem>>, %arg5: memref<1024x8xf32, #tpu.memory_space<vmem>>) attributes {dimension_semantics = [#tpu.dimension_semantics<parallel>], iteration_bounds = array<i64: 1>, scalar_prefetch = 0 : i64, scratch_operands = 0 : i64, tpu.core_type = #tpu.core_type<tc>, window_params = [{transform_indices = @transform_0, window_bounds = array<i64: 1024, 8>}, {pipeline_mode = #tpu.pipeline_mode<synchronous>, transform_indices = @transform_1, window_bounds = array<i64: 1, 8>}, {pipeline_mode = #tpu.pipeline_mode<synchronous>, transform_indices = @transform_2, window_bounds = array<i64: 1, 8>}, {transform_indices = @transform_3, window_bounds = array<i64: 1024, 4>}, {transform_indices = @transform_4, window_bounds = array<i64: 1024, 8>}]} {
    %c0 = arith.constant 0 : index
    %c0_0 = arith.constant 0 : index
    %0 = vector.load %arg1[%c0, %c0_0] : memref<1024x8xbf16, #tpu.memory_space<vmem>>, vector<1024x8xbf16>
    %1 = arith.extf %0 : vector<1024x8xbf16> to vector<1024x8xf32>
    %c0_1 = arith.constant 0 : index
    %c0_2 = arith.constant 0 : index
    %2 = vector.load %arg2[%c0_1, %c0_2] : memref<1x8xf32, #tpu.memory_space<vmem>>, vector<1x8xf32>
    %3 = vector.broadcast %2 : vector<1x8xf32> to vector<1024x8xf32>
    %4 = arith.mulf %1, %3 : vector<1024x8xf32>
    %c0_3 = arith.constant 0 : index
    %c0_4 = arith.constant 0 : index
    %5 = vector.load %arg3[%c0_3, %c0_4] : memref<1x8xf32, #tpu.memory_space<vmem>>, vector<1x8xf32>
    %6 = vector.broadcast %5 : vector<1x8xf32> to vector<1024x8xf32>
    %7 = arith.addf %4, %6 : vector<1024x8xf32>
    %cst = arith.constant 0.000000e+00 : f32
    %8 = vector.broadcast %cst : f32 to vector<1024x8xf32>
    %9 = arith.cmpf oge, %7, %8 : vector<1024x8xf32>
    %cst_5 = arith.constant 2.000000e-01 : f32
    %10 = vector.broadcast %cst_5 : f32 to vector<1024x8xf32>
    %11 = arith.mulf %10, %7 : vector<1024x8xf32>
    %12 = arith.select %9, %7, %11 : vector<1024x8xi1>, vector<1024x8xf32>
    %13 = vector.extract_strided_slice %12 {offsets = [0, 0], sizes = [1024, 4], strides = [1, 1]} : vector<1024x8xf32> to vector<1024x4xf32>
    %c0_6 = arith.constant 0 : index
    %c0_7 = arith.constant 0 : index
    %14 = vector.load %arg4[%c0_6, %c0_7] : memref<1024x4xf32, #tpu.memory_space<vmem>>, vector<1024x4xf32>
    %15 = arith.addf %13, %14 : vector<1024x4xf32>
    %c0_8 = arith.constant 0 : index
    %c0_9 = arith.constant 0 : index
    %16 = vector.load %arg5[%c0_8, %c0_9] : memref<1024x8xf32, #tpu.memory_space<vmem>>, vector<1024x4xf32>
    tpu.vector_store %arg5[%c0_8, %c0_9], %15 {strides = array<i32>} : memref<1024x8xf32, #tpu.memory_space<vmem>>, vector<1024x4xf32>,
    %17 = vector.extract_strided_slice %12 {offsets = [0, 4], sizes = [1024, 4], strides = [1, 1]} : vector<1024x8xf32> to vector<1024x4xf32>
    %c0_10 = arith.constant 0 : index
    %c4 = arith.constant 4 : index
    %18 = vector.load %arg5[%c0_10, %c4] : memref<1024x8xf32, #tpu.memory_space<vmem>>, vector<1024x4xf32>
    tpu.vector_store %arg5[%c0_10, %c4], %17 {strides = array<i32>} : memref<1024x8xf32, #tpu.memory_space<vmem>>, vector<1024x4xf32>,
    return
  }
  func.func @transform_0(%arg0: i32) -> (i32, i32) {
    %c0_i32 = arith.constant 0 : i32
    %c0_i32_0 = arith.constant 0 : i32
    return %arg0, %c0_i32 : i32, i32
  }
  func.func @transform_1(%arg0: i32) -> (i32, i32) {
    %c0_i32 = arith.constant 0 : i32
    %c0_i32_0 = arith.constant 0 : i32
    %c0_i32_1 = arith.constant 0 : i32
    return %c0_i32, %c0_i32_0 : i32, i32
  }
  func.func @transform_2(%arg0: i32) -> (i32, i32) {
    %c0_i32 = arith.constant 0 : i32
    %c0_i32_0 = arith.constant 0 : i32
    %c0_i32_1 = arith.constant 0 : i32
    return %c0_i32, %c0_i32_0 : i32, i32
  }
  func.func @transform_3(%arg0: i32) -> (i32, i32) {
    %c0_i32 = arith.constant 0 : i32
    %c0_i32_0 = arith.constant 0 : i32
    return %arg0, %c0_i32 : i32, i32
  }
  func.func @transform_4(%arg0: i32) -> (i32, i32) {
    %c0_i32 = arith.constant 0 : i32
    %c0_i32_0 = arith.constant 0 : i32
    return %arg0, %c0_i32 : i32, i32
  }
}

module attributes {stable_mosaic.version = 11 : i64} {
  func.func @_matmul_stats_kernel(%arg0: i32, %arg1: memref<1024x36xbf16, #tpu.memory_space<vmem>>, %arg2: memref<36x8xbf16, #tpu.memory_space<vmem>>, %arg3: memref<1024x8xbf16, #tpu.memory_space<vmem>>, %arg4: memref<1x2x8xf32, #tpu.memory_space<vmem>>) attributes {dimension_semantics = [#tpu.dimension_semantics<parallel>], iteration_bounds = array<i64: 1>, scalar_prefetch = 0 : i64, scratch_operands = 0 : i64, tpu.core_type = #tpu.core_type<tc>, window_params = [{transform_indices = @transform_0, window_bounds = array<i64: 1024, 36>}, {pipeline_mode = #tpu.pipeline_mode<synchronous>, transform_indices = @transform_1, window_bounds = array<i64: 36, 8>}, {transform_indices = @transform_2, window_bounds = array<i64: 1024, 8>}, {transform_indices = @transform_3, window_bounds = array<i64: 1, 2, 8>}]} {
    %c0 = arith.constant 0 : index
    %c0_0 = arith.constant 0 : index
    %0 = vector.load %arg1[%c0, %c0_0] : memref<1024x36xbf16, #tpu.memory_space<vmem>>, vector<1024x36xbf16>
    %c0_1 = arith.constant 0 : index
    %c0_2 = arith.constant 0 : index
    %1 = vector.load %arg2[%c0_1, %c0_2] : memref<36x8xbf16, #tpu.memory_space<vmem>>, vector<36x8xbf16>
    %cst = arith.constant dense<0.000000e+00> : vector<1024x8xf32>
    %2 = tpu.matmul %0, %1, %cst {dimension_numbers = #tpu.dot_dimension_numbers<[1], [0], [0], [1], [0, 0, 1, 1], [], []>} : vector<1024x36xbf16>, vector<36x8xbf16>, vector<1024x8xf32> -> vector<1024x8xf32>
    %3 = arith.truncf %2 : vector<1024x8xf32> to vector<1024x8xbf16>
    %c0_3 = arith.constant 0 : index
    %c0_4 = arith.constant 0 : index
    %4 = vector.load %arg3[%c0_3, %c0_4] : memref<1024x8xbf16, #tpu.memory_space<vmem>>, vector<1024x8xbf16>
    tpu.vector_store %arg3[%c0_3, %c0_4], %3 {strides = array<i32>} : memref<1024x8xbf16, #tpu.memory_space<vmem>>, vector<1024x8xbf16>,
    %cst_5 = arith.constant dense<0.000000e+00> : vector<8xf32>
    %5 = vector.multi_reduction <add>, %2, %cst_5 [0] : vector<1024x8xf32> to vector<8xf32>
    %6 = vector.shape_cast %5 : vector<8xf32> to vector<1x8xf32>
    %7 = arith.mulf %2, %2 : vector<1024x8xf32>
    %cst_6 = arith.constant dense<0.000000e+00> : vector<8xf32>
    %8 = vector.multi_reduction <add>, %7, %cst_6 [0] : vector<1024x8xf32> to vector<8xf32>
    %9 = vector.shape_cast %8 : vector<8xf32> to vector<1x8xf32>
    %10 = tpu.concatenate %6, %9 in 0 : vector<1x8xf32>, vector<1x8xf32> -> vector<2x8xf32>
    %11 = vector.shape_cast %10 : vector<2x8xf32> to vector<1x2x8xf32>
    %c0_7 = arith.constant 0 : index
    %c0_8 = arith.constant 0 : index
    %c0_9 = arith.constant 0 : index
    %12 = vector.load %arg4[%c0_7, %c0_8, %c0_9] : memref<1x2x8xf32, #tpu.memory_space<vmem>>, vector<1x2x8xf32>
    tpu.vector_store %arg4[%c0_7, %c0_8, %c0_9], %11 {strides = array<i32>} : memref<1x2x8xf32, #tpu.memory_space<vmem>>, vector<1x2x8xf32>,
    return
  }
  func.func @transform_0(%arg0: i32) -> (i32, i32) {
    %c0_i32 = arith.constant 0 : i32
    %c0_i32_0 = arith.constant 0 : i32
    return %arg0, %c0_i32 : i32, i32
  }
  func.func @transform_1(%arg0: i32) -> (i32, i32) {
    %c0_i32 = arith.constant 0 : i32
    %c0_i32_0 = arith.constant 0 : i32
    %c0_i32_1 = arith.constant 0 : i32
    return %c0_i32, %c0_i32_0 : i32, i32
  }
  func.func @transform_2(%arg0: i32) -> (i32, i32) {
    %c0_i32 = arith.constant 0 : i32
    %c0_i32_0 = arith.constant 0 : i32
    return %arg0, %c0_i32 : i32, i32
  }
  func.func @transform_3(%arg0: i32) -> (i32, i32, i32) {
    %c0_i32 = arith.constant 0 : i32
    %c0_i32_0 = arith.constant 0 : i32
    %c0_i32_1 = arith.constant 0 : i32
    return %arg0, %c0_i32, %c0_i32_0 : i32, i32, i32
  }
}

</mosaic_0001>

<llo_original>
// kernel: res_block_2d.5
$region0: #{res_block_2d.5}
  #allocation0 [shape = 'u32[]', space=smem, size = 0x4, offset = 0x4, fixed_abs, tag = 'smem constant byte address 0x4 - core index']
  #allocation1 [shape = 'u32[144,128]{1,0:T(1,128)}', space=vmem, size = 0x12000, scoped, tag = 'internal scratch']
  %s0 = inlined_call_operand.vmem [shape: bf16[32,128], index: 0, kind: input, shape index: {}]
  %s1 = inlined_call_operand.vmem [shape: f32[1,128], index: 1, kind: input, shape index: {}]
  %s2 = inlined_call_operand.vmem [shape: f32[1,128], index: 2, kind: input, shape index: {}]
  %s3 = inlined_call_operand.vmem [shape: bf16[32,128], index: 3, kind: output, shape index: {}]
  %s4 = sld [smem:[#allocation0]]
  $region22: #{res_block_2d.5} parent=0
    _
  %s6 = ssub.s32 1, %s4
  %s7 = scalar_select 0, %s6, %s4
  // Predicated region
  $region2: #{res_block_2d.5} parent=0 // pred_check
    _
  $region3: #{res_block_2d.5} parent=0 // pred_check_branch
    %9 = sbr.rel (0) target = $region5
  $region4: #{res_block_2d.5} parent=0 // pred_region
    _
  $region5: #{res_block_2d.5} parent=0 // pred_fallthru
    _
  // Predicated region
  $region6: #{res_block_2d.5} parent=0 // pred_check
    _
  $region7: #{res_block_2d.5} parent=0 // pred_check_branch
    %11 = sbr.rel (0) target = $region9
  $region8: #{res_block_2d.5} parent=0 // pred_region
    _
  $region9: #{res_block_2d.5} parent=0 // pred_fallthru
    _
  // Predicated region
  $region10: #{res_block_2d.5} parent=0 // pred_check
    _
  $region11: #{res_block_2d.5} parent=0 // pred_check_branch
    %13 = sbr.rel (0) target = $region13
  $region12: #{res_block_2d.5} parent=0 // pred_region
    _
  $region13: #{res_block_2d.5} parent=0 // pred_fallthru
    _
  %v14 = vld [vmem:[%s0] sm:$0xf]
  %v15 = vld [vmem:[%s0 + $0x4] sm:$0xf]
  %v16 = vld [vmem:[%s0 + $0x8] sm:$0xf]
  %v17 = vld [vmem:[%s0 + $0xc] sm:$0xf]
  %v18 = vunpack.c.l.bf16 %v14
  %v19 = vunpack.c.l.bf16 %v15
  %v20 = vunpack.c.l.bf16 %v16
  %v21 = vunpack.c.l.bf16 %v17
  %v22 = vld [vmem:[%s1] sm:$0x1]
  %v24 = vlaneseq
  %v25 = vshrl.u32 %v24, 7
  %v26 = vsub.s32 0, %v25
  %v27 = vrot.slane %v22, %v26
  %v29 = vmul.f32 %v18, %v27
  %v30 = vmul.f32 %v19, %v27
  %v31 = vmul.f32 %v20, %v27
  %v32 = vmul.f32 %v21, %v27
  %v33 = vld [vmem:[%s2] sm:$0x1]
  %v35 = vlaneseq
  %v36 = vshrl.u32 %v35, 7
  %v37 = vsub.s32 0, %v36
  %v38 = vrot.slane %v33, %v37
  %v40 = vadd.f32 %v29, %v38
  %v41 = vadd.f32 %v30, %v38
  %v42 = vadd.f32 %v31, %v38
  %v43 = vadd.f32 %v32, %v38
  %vm44 = vcmp.ge.f32.partialorder %v40, 0.0
  %vm45 = vcmp.ge.f32.partialorder %v41, 0.0
  %vm46 = vcmp.ge.f32.partialorder %v42, 0.0
  %vm47 = vcmp.ge.f32.partialorder %v43, 0.0
  %v48 = vmul.f32 %v40, 0.2
  %v49 = vmul.f32 %v41, 0.2
  %v50 = vmul.f32 %v42, 0.2
  %v51 = vmul.f32 %v43, 0.2
  %v52 = vsel %vm44, %v40, %v48
  %v53 = vsel %vm45, %v41, %v49
  %v54 = vsel %vm46, %v42, %v50
  %v55 = vsel %vm47, %v43, %v51
  %v56 = vpack.c.bf16 %v53, %v52
  %v57 = vpack.c.bf16 %v55, %v54
  %v60 = vunpack.c.l.b16 %v56
  %v61 = vunpack.c.h.b16 %v56
  %v62 = vunpack.c.l.b16 %v57
  %v63 = vunpack.c.h.b16 %v57
  %v64 = vpack.c.b16 %v60, %v60
  %v65 = vpack.c.b16 %v61, %v61
  %v66 = vpack.c.b16 %v62, %v62
  %v67 = vpack.c.b16 %v63, %v63
  %72 = vst [vmem:[%s3] sm:$0xf] %v64
  %73 = vst [vmem:[%s3 + $0x4] sm:$0xf] %v65
  %74 = vst [vmem:[%s3 + $0x8] sm:$0xf] %v66
  %75 = vst [vmem:[%s3 + $0xc] sm:$0xf] %v67
  // Predicated region
  $region14: #{res_block_2d.5} parent=0 // pred_check
    _
  $region15: #{res_block_2d.5} parent=0 // pred_check_branch
    %77 = sbr.rel (0) target = $region17
  $region16: #{res_block_2d.5} parent=0 // pred_region
    _
  $region17: #{res_block_2d.5} parent=0 // pred_fallthru
    _
  // Predicated region
  $region18: #{res_block_2d.5} parent=0 // pred_check
    _
  $region19: #{res_block_2d.5} parent=0 // pred_check_branch
    %79 = sbr.rel (0) target = $region21
  $region20: #{res_block_2d.5} parent=0 // pred_region
    _
  $region21: #{res_block_2d.5} parent=0 // pred_fallthru
    _

// kernel: res_block_2d.4
$region0: #{res_block_2d.4}
  #allocation0 [shape = 'u32[]', space=smem, size = 0x4, offset = 0x4, fixed_abs, tag = 'smem constant byte address 0x4 - core index']
  #allocation1 [shape = 'u32[144,128]{1,0:T(1,128)}', space=vmem, size = 0x12000, scoped, tag = 'internal scratch']
  %s0 = inlined_call_operand.vmem [shape: bf16[1024,36], index: 0, kind: input, shape index: {}]
  %s1 = inlined_call_operand.vmem [shape: bf16[36,4], index: 1, kind: input, shape index: {}]
  %s2 = inlined_call_operand.vmem [shape: bf16[1024,4], index: 2, kind: output, shape index: {0}]
  %s3 = inlined_call_operand.vmem [shape: f32[1,2,4], index: 3, kind: output, shape index: {1}]
  %4 = xla_tuple %s2, %s3
  %s5 = sld [smem:[#allocation0]]
  $region26: #{res_block_2d.4} parent=0
    _
  %s7 = ssub.s32 1, %s5
  %s8 = scalar_select 0, %s7, %s5
  // Predicated region
  $region2: #{res_block_2d.4} parent=0 // pred_check
    _
  $region3: #{res_block_2d.4} parent=0 // pred_check_branch
    %10 = sbr.rel (0) target = $region5
  $region4: #{res_block_2d.4} parent=0 // pred_region
    _
  $region5: #{res_block_2d.4} parent=0 // pred_fallthru
    _
  // Predicated region
  $region6: #{res_block_2d.4} parent=0 // pred_check
    _
  $region7: #{res_block_2d.4} parent=0 // pred_check_branch
    %12 = sbr.rel (0) target = $region9
  $region8: #{res_block_2d.4} parent=0 // pred_region
    _
  $region9: #{res_block_2d.4} parent=0 // pred_fallthru
    _
  %v14 = vld [vmem:[%s0] sm:$0xf]
  %v15 = vld [vmem:[%s0 + $0x4] sm:$0xf]
  %v16 = vld [vmem:[%s0 + $0x8] sm:$0xf]
  %v17 = vld [vmem:[%s0 + $0xc] sm:$0xf]
  %v18 = vld [vmem:[%s0 + $0x10] sm:$0xf]
  %v19 = vld [vmem:[%s0 + $0x14] sm:$0xf]
  %v20 = vld [vmem:[%s0 + $0x18] sm:$0xf]
  %v21 = vld [vmem:[%s0 + $0x1c] sm:$0xf]
  %v22 = vld [vmem:[%s0 + $0x20] sm:$0xf]
  %v23 = vld [vmem:[%s0 + $0x24] sm:$0xf]
  %v24 = vld [vmem:[%s0 + $0x28] sm:$0xf]
  %v25 = vld [vmem:[%s0 + $0x2c] sm:$0xf]
  %v26 = vld [vmem:[%s0 + $0x30] sm:$0xf]
  %v27 = vld [vmem:[%s0 + $0x34] sm:$0xf]
  %v28 = vld [vmem:[%s0 + $0x38] sm:$0xf]
  %v29 = vld [vmem:[%s0 + $0x3c] sm:$0xf]
  %v30 = vld [vmem:[%s0 + $0x40] sm:$0xf]
  %v31 = vld [vmem:[%s0 + $0x44] sm:$0xf]
  %v32 = vld [vmem:[%s0 + $0x48] sm:$0xf]
  %v33 = vld [vmem:[%s0 + $0x4c] sm:$0xf]
  %v34 = vld [vmem:[%s0 + $0x50] sm:$0xf]
  %v35 = vld [vmem:[%s0 + $0x54] sm:$0xf]
  %v36 = vld [vmem:[%s0 + $0x58] sm:$0xf]
  %v37 = vld [vmem:[%s0 + $0x5c] sm:$0xf]
  %v38 = vld [vmem:[%s0 + $0x60] sm:$0xf]
  %v39 = vld [vmem:[%s0 + $0x64] sm:$0xf]
  %v40 = vld [vmem:[%s0 + $0x68] sm:$0xf]
  %v41 = vld [vmem:[%s0 + $0x6c] sm:$0xf]
  %v42 = vld [vmem:[%s0 + $0x70] sm:$0xf]
  %v43 = vld [vmem:[%s0 + $0x74] sm:$0xf]
  %v44 = vld [vmem:[%s0 + $0x78] sm:$0xf]
  %v45 = vld [vmem:[%s0 + $0x7c] sm:$0xf]
  %v46 = vld [vmem:[%s0 + $0x80] sm:$0xf]
  %v47 = vld [vmem:[%s0 + $0x84] sm:$0xf]
  %v48 = vld [vmem:[%s0 + $0x88] sm:$0xf]
  %v49 = vld [vmem:[%s0 + $0x8c] sm:$0xf]
  %v50 = vld [vmem:[%s0 + $0x90] sm:$0xf]
  %v51 = vld [vmem:[%s0 + $0x94] sm:$0xf]
  %v52 = vld [vmem:[%s0 + $0x98] sm:$0xf]
  %v53 = vld [vmem:[%s0 + $0x9c] sm:$0xf]
  %v54 = vld [vmem:[%s0 + $0xa0] sm:$0xf]
  %v55 = vld [vmem:[%s0 + $0xa4] sm:$0xf]
  %v56 = vld [vmem:[%s0 + $0xa8] sm:$0xf]
  %v57 = vld [vmem:[%s0 + $0xac] sm:$0xf]
  %v58 = vld [vmem:[%s0 + $0xb0] sm:$0xf]
  %v59 = vld [vmem:[%s0 + $0xb4] sm:$0xf]
  %v60 = vld [vmem:[%s0 + $0xb8] sm:$0xf]
  %v61 = vld [vmem:[%s0 + $0xbc] sm:$0xf]
  %v62 = vld [vmem:[%s0 + $0xc0] sm:$0xf]
  %v63 = vld [vmem:[%s0 + $0xc4] sm:$0xf]
  %v64 = vld [vmem:[%s0 + $0xc8] sm:$0xf]
  %v65 = vld [vmem:[%s0 + $0xcc] sm:$0xf]
  %v66 = vld [vmem:[%s0 + $0xd0] sm:$0xf]
  %v67 = vld [vmem:[%s0 + $0xd4] sm:$0xf]
  %v68 = vld [vmem:[%s0 + $0xd8] sm:$0xf]
  %v69 = vld [vmem:[%s0 + $0xdc] sm:$0xf]
  %v70 = vld [vmem:[%s0 + $0xe0] sm:$0xf]
  %v71 = vld [vmem:[%s0 + $0xe4] sm:$0xf]
  %v72 = vld [vmem:[%s0 + $0xe8] sm:$0xf]
  %v73 = vld [vmem:[%s0 + $0xec] sm:$0xf]
  %v74 = vld [vmem:[%s0 + $0xf0] sm:$0xf]
  %v75 = vld [vmem:[%s0 + $0xf4] sm:$0xf]
  %v76 = vld [vmem:[%s0 + $0xf8] sm:$0xf]
  %v77 = vld [vmem:[%s0 + $0xfc] sm:$0xf]
  %v78 = vld [vmem:[%s0 + $0x100] sm:$0xf]
  %v79 = vld [vmem:[%s0 + $0x104] sm:$0xf]
  %v80 = vld [vmem:[%s0 + $0x108] sm:$0xf]
  %v81 = vld [vmem:[%s0 + $0x10c] sm:$0xf]
  %v82 = vld [vmem:[%s0 + $0x110] sm:$0xf]
  %v83 = vld [vmem:[%s0 + $0x114] sm:$0xf]
  %v84 = vld [vmem:[%s0 + $0x118] sm:$0xf]
  %v85 = vld [vmem:[%s0 + $0x11c] sm:$0xf]
  %v86 = vld [vmem:[%s0 + $0x120] sm:$0xf]
  %v87 = vld [vmem:[%s0 + $0x124] sm:$0xf]
  %v88 = vld [vmem:[%s0 + $0x128] sm:$0xf]
  %v89 = vld [vmem:[%s0 + $0x12c] sm:$0xf]
  %v90 = vld [vmem:[%s0 + $0x130] sm:$0xf]
  %v91 = vld [vmem:[%s0 + $0x134] sm:$0xf]
  %v92 = vld [vmem:[%s0 + $0x138] sm:$0xf]
  %v93 = vld [vmem:[%s0 + $0x13c] sm:$0xf]
  %v94 = vld [vmem:[%s0 + $0x140] sm:$0xf]
  %v95 = vld [vmem:[%s0 + $0x144] sm:$0xf]
  %v96 = vld [vmem:[%s0 + $0x148] sm:$0xf]
  %v97 = vld [vmem:[%s0 + $0x14c] sm:$0xf]
  %v98 = vld [vmem:[%s0 + $0x150] sm:$0xf]
  %v99 = vld [vmem:[%s0 + $0x154] sm:$0xf]
  %v100 = vld [vmem:[%s0 + $0x158] sm:$0xf]
  %v101 = vld [vmem:[%s0 + $0x15c] sm:$0xf]
  %v102 = vld [vmem:[%s0 + $0x160] sm:$0xf]
  %v103 = vld [vmem:[%s0 + $0x164] sm:$0xf]
  %v104 = vld [vmem:[%s0 + $0x168] sm:$0xf]
  %v105 = vld [vmem:[%s0 + $0x16c] sm:$0xf]
  %v106 = vld [vmem:[%s0 + $0x170] sm:$0xf]
  %v107 = vld [vmem:[%s0 + $0x174] sm:$0xf]
  %v108 = vld [vmem:[%s0 + $0x178] sm:$0xf]
  %v109 = vld [vmem:[%s0 + $0x17c] sm:$0xf]
  %v110 = vld [vmem:[%s0 + $0x180] sm:$0xf]
  %v111 = vld [vmem:[%s0 + $0x184] sm:$0xf]
  %v112 = vld [vmem:[%s0 + $0x188] sm:$0xf]
  %v113 = vld [vmem:[%s0 + $0x18c] sm:$0xf]
  %v114 = vld [vmem:[%s0 + $0x190] sm:$0xf]
  %v115 = vld [vmem:[%s0 + $0x194] sm:$0xf]
  %v116 = vld [vmem:[%s0 + $0x198] sm:$0xf]
  %v117 = vld [vmem:[%s0 + $0x19c] sm:$0xf]
  %v118 = vld [vmem:[%s0 + $0x1a0] sm:$0xf]
  %v119 = vld [vmem:[%s0 + $0x1a4] sm:$0xf]
  %v120 = vld [vmem:[%s0 + $0x1a8] sm:$0xf]
  %v121 = vld [vmem:[%s0 + $0x1ac] sm:$0xf]
  %v122 = vld [vmem:[%s0 + $0x1b0] sm:$0xf]
  %v123 = vld [vmem:[%s0 + $0x1b4] sm:$0xf]
  %v124 = vld [vmem:[%s0 + $0x1b8] sm:$0xf]
  %v125 = vld [vmem:[%s0 + $0x1bc] sm:$0xf]
  %v126 = vld [vmem:[%s0 + $0x1c0] sm:$0xf]
  %v127 = vld [vmem:[%s0 + $0x1c4] sm:$0xf]
  %v128 = vld [vmem:[%s0 + $0x1c8] sm:$0xf]
  %v129 = vld [vmem:[%s0 + $0x1cc] sm:$0xf]
  %v130 = vld [vmem:[%s0 + $0x1d0] sm:$0xf]
  %v131 = vld [vmem:[%s0 + $0x1d4] sm:$0xf]
  %v132 = vld [vmem:[%s0 + $0x1d8] sm:$0xf]
  %v133 = vld [vmem:[%s0 + $0x1dc] sm:$0xf]
  %v134 = vld [vmem:[%s0 + $0x1e0] sm:$0xf]
  %v135 = vld [vmem:[%s0 + $0x1e4] sm:$0xf]
  %v136 = vld [vmem:[%s0 + $0x1e8] sm:$0xf]
  %v137 = vld [vmem:[%s0 + $0x1ec] sm:$0xf]
  %v138 = vld [vmem:[%s0 + $0x1f0] sm:$0xf]
  %v139 = vld [vmem:[%s0 + $0x1f4] sm:$0xf]
  %v140 = vld [vmem:[%s0 + $0x1f8] sm:$0xf]
  %v141 = vld [vmem:[%s0 + $0x1fc] sm:$0xf]
  %v142 = vld [vmem:[%s1] sm:$0xf]
  %v143 = vld [vmem:[%s1 + $0x4] sm:$0xf]
  %v144 = vld [vmem:[%s1 + $0x8] sm:$0xf]
  %v145 = vld [vmem:[%s1 + $0xc] sm:$0xf]
  %v146 = vld [vmem:[%s1 + $0x10] sm:$0x3]
  %v275 = vunpack.c.l.b16 %v14
  %v276 = vunpack.c.l.b16 %v15
  %v277 = vunpack.c.l.b16 %v16
  %v278 = vunpack.c.l.b16 %v17
  %v279 = vunpack.c.l.b16 %v18
  %v280 = vunpack.c.l.b16 %v19
  %v281 = vunpack.c.l.b16 %v20
  %v282 = vunpack.c.l.b16 %v21
  %v283 = vunpack.c.l.b16 %v22
  %v284 = vunpack.c.l.b16 %v23
  %v285 = vunpack.c.l.b16 %v24
  %v286 = vunpack.c.l.b16 %v25
  %v287 = vunpack.c.l.b16 %v26
  %v288 = vunpack.c.l.b16 %v27
  %v289 = vunpack.c.l.b16 %v28
  %v290 = vunpack.c.l.b16 %v29
  %v291 = vunpack.c.l.b16 %v30
  %v292 = vunpack.c.l.b16 %v31
  %v293 = vunpack.c.l.b16 %v32
  %v294 = vunpack.c.l.b16 %v33
  %v295 = vunpack.c.l.b16 %v34
  %v296 = vunpack.c.l.b16 %v35
  %v297 = vunpack.c.l.b16 %v36
  %v298 = vunpack.c.l.b16 %v37
  %v299 = vunpack.c.l.b16 %v38
  %v300 = vunpack.c.l.b16 %v39
  %v301 = vunpack.c.l.b16 %v40
  %v302 = vunpack.c.l.b16 %v41
  %v303 = vunpack.c.l.b16 %v42
  %v304 = vunpack.c.l.b16 %v43
  %v305 = vunpack.c.l.b16 %v44
  %v306 = vunpack.c.l.b16 %v45
  %v307 = vunpack.c.l.b16 %v46
  %v308 = vunpack.c.l.b16 %v47
  %v309 = vunpack.c.l.b16 %v48
  %v310 = vunpack.c.l.b16 %v49
  %v311 = vunpack.c.l.b16 %v50
  %v312 = vunpack.c.l.b16 %v51
  %v313 = vunpack.c.l.b16 %v52
  %v314 = vunpack.c.l.b16 %v53
  %v315 = vunpack.c.l.b16 %v54
  %v316 = vunpack.c.l.b16 %v55
  %v317 = vunpack.c.l.b16 %v56
  %v318 = vunpack.c.l.b16 %v57
  %v319 = vunpack.c.l.b16 %v58
  %v320 = vunpack.c.l.b16 %v59
  %v321 = vunpack.c.l.b16 %v60
  %v322 = vunpack.c.l.b16 %v61
  %v323 = vunpack.c.l.b16 %v62
  %v324 = vunpack.c.l.b16 %v63
  %v325 = vunpack.c.l.b16 %v64
  %v326 = vunpack.c.l.b16 %v65
  %v327 = vunpack.c.l.b16 %v66
  %v328 = vunpack.c.l.b16 %v67
  %v329 = vunpack.c.l.b16 %v68
  %v330 = vunpack.c.l.b16 %v69
  %v331 = vunpack.c.l.b16 %v70
  %v332 = vunpack.c.l.b16 %v71
  %v333 = vunpack.c.l.b16 %v72
  %v334 = vunpack.c.l.b16 %v73
  %v335 = vunpack.c.l.b16 %v74
  %v336 = vunpack.c.l.b16 %v75
  %v337 = vunpack.c.l.b16 %v76
  %v338 = vunpack.c.l.b16 %v77
  %v339 = vunpack.c.l.b16 %v78
  %v340 = vunpack.c.l.b16 %v79
  %v341 = vunpack.c.l.b16 %v80
  %v342 = vunpack.c.l.b16 %v81
  %v343 = vunpack.c.l.b16 %v82
  %v344 = vunpack.c.l.b16 %v83
  %v345 = vunpack.c.l.b16 %v84
  %v346 = vunpack.c.l.b16 %v85
  %v347 = vunpack.c.l.b16 %v86
  %v348 = vunpack.c.l.b16 %v87
  %v349 = vunpack.c.l.b16 %v88
  %v350 = vunpack.c.l.b16 %v89
  %v351 = vunpack.c.l.b16 %v90
  %v352 = vunpack.c.l.b16 %v91
  %v353 = vunpack.c.l.b16 %v92
  %v354 = vunpack.c.l.b16 %v93
  %v355 = vunpack.c.l.b16 %v94
  %v356 = vunpack.c.l.b16 %v95
  %v357 = vunpack.c.l.b16 %v96
  %v358 = vunpack.c.l.b16 %v97
  %v359 = vunpack.c.l.b16 %v98
  %v360 = vunpack.c.l.b16 %v99
  %v361 = vunpack.c.l.b16 %v100
  %v362 = vunpack.c.l.b16 %v101
  %v363 = vunpack.c.l.b16 %v102
  %v364 = vunpack.c.l.b16 %v103
  %v365 = vunpack.c.l.b16 %v104
  %v366 = vunpack.c.l.b16 %v105
  %v367 = vunpack.c.l.b16 %v106
  %v368 = vunpack.c.l.b16 %v107
  %v369 = vunpack.c.l.b16 %v108
  %v370 = vunpack.c.l.b16 %v109
  %v371 = vunpack.c.l.b16 %v110
  %v372 = vunpack.c.l.b16 %v111
  %v373 = vunpack.c.l.b16 %v112
  %v374 = vunpack.c.l.b16 %v113
  %v375 = vunpack.c.l.b16 %v114
  %v376 = vunpack.c.l.b16 %v115
  %v377 = vunpack.c.l.b16 %v116
  %v378 = vunpack.c.l.b16 %v117
  %v379 = vunpack.c.l.b16 %v118
  %v380 = vunpack.c.l.b16 %v119
  %v381 = vunpack.c.l.b16 %v120
  %v382 = vunpack.c.l.b16 %v121
  %v383 = vunpack.c.l.b16 %v122
  %v384 = vunpack.c.l.b16 %v123
  %v385 = vunpack.c.l.b16 %v124
  %v386 = vunpack.c.l.b16 %v125
  %v387 = vunpack.c.l.b16 %v126
  %v388 = vunpack.c.l.b16 %v127
  %v389 = vunpack.c.l.b16 %v128
  %v390 = vunpack.c.l.b16 %v129
  %v391 = vunpack.c.l.b16 %v130
  %v392 = vunpack.c.l.b16 %v131
  %v393 = vunpack.c.l.b16 %v132
  %v394 = vunpack.c.l.b16 %v133
  %v395 = vunpack.c.l.b16 %v134
  %v396 = vunpack.c.l.b16 %v135
  %v397 = vunpack.c.l.b16 %v136
  %v398 = vunpack.c.l.b16 %v137
  %v399 = vunpack.c.l.b16 %v138
  %v400 = vunpack.c.l.b16 %v139
  %v401 = vunpack.c.l.b16 %v140
  %v402 = vunpack.c.l.b16 %v141
  %v403 = vpack.c.b16 %v276, %v275
  %v404 = vpack.c.b16 %v278, %v277
  %v405 = vpack.c.b16 %v280, %v279
  %v406 = vpack.c.b16 %v282, %v281
  %v407 = vpack.c.b16 %v284, %v283
  %v408 = vpack.c.b16 %v286, %v285
  %v409 = vpack.c.b16 %v288, %v287
  %v410 = vpack.c.b16 %v290, %v289
  %v411 = vpack.c.b16 %v292, %v291
  %v412 = vpack.c.b16 %v294, %v293
  %v413 = vpack.c.b16 %v296, %v295
  %v414 = vpack.c.b16 %v298, %v297
  %v415 = vpack.c.b16 %v300, %v299
  %v416 = vpack.c.b16 %v302, %v301
  %v417 = vpack.c.b16 %v304, %v303
  %v418 = vpack.c.b16 %v306, %v305
  %v419 = vpack.c.b16 %v308, %v307
  %v420 = vpack.c.b16 %v310, %v309
  %v421 = vpack.c.b16 %v312, %v311
  %v422 = vpack.c.b16 %v314, %v313
  %v423 = vpack.c.b16 %v316, %v315
  %v424 = vpack.c.b16 %v318, %v317
  %v425 = vpack.c.b16 %v320, %v319
  %v426 = vpack.c.b16 %v322, %v321
  %v427 = vpack.c.b16 %v324, %v323
  %v428 = vpack.c.b16 %v326, %v325
  %v429 = vpack.c.b16 %v328, %v327
  %v430 = vpack.c.b16 %v330, %v329
  %v431 = vpack.c.b16 %v332, %v331
  %v432 = vpack.c.b16 %v334, %v333
  %v433 = vpack.c.b16 %v336, %v335
  %v434 = vpack.c.b16 %v338, %v337
  %v435 = vpack.c.b16 %v340, %v339
  %v436 = vpack.c.b16 %v342, %v341
  %v437 = vpack.c.b16 %v344, %v343
  %v438 = vpack.c.b16 %v346, %v345
  %v439 = vpack.c.b16 %v348, %v347
  %v440 = vpack.c.b16 %v350, %v349
  %v441 = vpack.c.b16 %v352, %v351
  %v442 = vpack.c.b16 %v354, %v353
  %v443 = vpack.c.b16 %v356, %v355
  %v444 = vpack.c.b16 %v358, %v357
  %v445 = vpack.c.b16 %v360, %v359
  %v446 = vpack.c.b16 %v362, %v361
  %v447 = vpack.c.b16 %v364, %v363
  %v448 = vpack.c.b16 %v366, %v365
  %v449 = vpack.c.b16 %v368, %v367
  %v450 = vpack.c.b16 %v370, %v369
  %v451 = vpack.c.b16 %v372, %v371
  %v452 = vpack.c.b16 %v374, %v373
  %v453 = vpack.c.b16 %v376, %v375
  %v454 = vpack.c.b16 %v378, %v377
  %v455 = vpack.c.b16 %v380, %v379
  %v456 = vpack.c.b16 %v382, %v381
  %v457 = vpack.c.b16 %v384, %v383
  %v458 = vpack.c.b16 %v386, %v385
  %v459 = vpack.c.b16 %v388, %v387
  %v460 = vpack.c.b16 %v390, %v389
  %v461 = vpack.c.b16 %v392, %v391
  %v462 = vpack.c.b16 %v394, %v393
  %v463 = vpack.c.b16 %v396, %v395
  %v464 = vpack.c.b16 %v398, %v397
  %v465 = vpack.c.b16 %v400, %v399
  %v466 = vpack.c.b16 %v402, %v401
  %v472 = vunpack.c.l.b16 %v142
  %v473 = vunpack.c.l.b16 %v143
  %v474 = vunpack.c.l.b16 %v144
  %v475 = vunpack.c.l.b16 %v145
  %v476 = vunpack.c.l.b16 %v146
  %v477 = vpack.c.b16 %v473, %v472
  %v478 = vpack.c.b16 %v475, %v474
  %v479 = vpack.c.b16 %v476, %v476
  %vm482 = vcmask 293888
  %v484 = vsel %vm482, %v403, 0
  %v487 = vsel %vm482, %v404, 0
  %v490 = vsel %vm482, %v405, 0
  %v493 = vsel %vm482, %v406, 0
  %v496 = vsel %vm482, %v407, 0
  %v499 = vsel %vm482, %v408, 0
  %v502 = vsel %vm482, %v409, 0
  %v505 = vsel %vm482, %v410, 0
  %v508 = vsel %vm482, %v411, 0
  %v511 = vsel %vm482, %v412, 0
  %v514 = vsel %vm482, %v413, 0
  %v517 = vsel %vm482, %v414, 0
  %v520 = vsel %vm482, %v415, 0
  %v523 = vsel %vm482, %v416, 0
  %v526 = vsel %vm482, %v417, 0
  %v529 = vsel %vm482, %v418, 0
  %v532 = vsel %vm482, %v419, 0
  %v535 = vsel %vm482, %v420, 0
  %v538 = vsel %vm482, %v421, 0
  %v541 = vsel %vm482, %v422, 0
  %v544 = vsel %vm482, %v423, 0
  %v547 = vsel %vm482, %v424, 0
  %v550 = vsel %vm482, %v425, 0
  %v553 = vsel %vm482, %v426, 0
  %v556 = vsel %vm482, %v427, 0
  %v559 = vsel %vm482, %v428, 0
  %v562 = vsel %vm482, %v429, 0
  %v565 = vsel %vm482, %v430, 0
  %v568 = vsel %vm482, %v431, 0
  %v571 = vsel %vm482, %v432, 0
  %v574 = vsel %vm482, %v433, 0
  %v577 = vsel %vm482, %v434, 0
  %v580 = vsel %vm482, %v435, 0
  %v583 = vsel %vm482, %v436, 0
  %v586 = vsel %vm482, %v437, 0
  %v589 = vsel %vm482, %v438, 0
  %v592 = vsel %vm482, %v439, 0
  %v595 = vsel %vm482, %v440, 0
  %v598 = vsel %vm482, %v441, 0
  %v601 = vsel %vm482, %v442, 0
  %v604 = vsel %vm482, %v443, 0
  %v607 = vsel %vm482, %v444, 0
  %v610 = vsel %vm482, %v445, 0
  %v613 = vsel %vm482, %v446, 0
  %v616 = vsel %vm482, %v447, 0
  %v619 = vsel %vm482, %v448, 0
  %v622 = vsel %vm482, %v449, 0
  %v625 = vsel %vm482, %v450, 0
  %v628 = vsel %vm482, %v451, 0
  %v631 = vsel %vm482, %v452, 0
  %v634 = vsel %vm482, %v453, 0
  %v637 = vsel %vm482, %v454, 0
  %v640 = vsel %vm482, %v455, 0
  %v643 = vsel %vm482, %v456, 0
  %v646 = vsel %vm482, %v457, 0
  %v649 = vsel %vm482, %v458, 0
  %v652 = vsel %vm482, %v459, 0
  %v655 = vsel %vm482, %v460, 0
  %v658 = vsel %vm482, %v461, 0
  %v661 = vsel %vm482, %v462, 0
  %v664 = vsel %vm482, %v463, 0
  %v667 = vsel %vm482, %v464, 0
  %v670 = vsel %vm482, %v465, 0
  %v673 = vsel %vm482, %v466, 0
  %vm675 = vcmask 1041408
  %v677 = vsel %vm675, %v479, 0
  %679 = vmatprep.subr.bf16.mxu0 0
  %680 = vmatpush1.bf16.msra.mxu0 %v477
  %681 = vmatprep.subr.bf16.mxu0 0
  %682 = vmatpush1.bf16.msra.mxu0 %v478
  %683 = vmatprep.subr.bf16.mxu0 0
  %684 = vmatpush1.bf16.msra.mxu0 %v677
  %685 = vmatprep.subr.bf16.mxu0 0
  %686 = vmatpush1.bf16.msra.mxu0 0
  %687 = vmatprep.subr.bf16.mxu0 0
  %688 = vmatpush1.bf16.msra.mxu0 0
  %689 = vmatprep.subr.bf16.mxu0 0
  %690 = vmatpush1.bf16.msra.mxu0 0
  %691 = vmatprep.subr.bf16.mxu0 0
  %692 = vmatpush1.bf16.msra.mxu0 0
  %693 = vmatprep.subr.bf16.mxu0 0
  %694 = vmatpush1.bf16.msra.mxu0 0
  %695 = vmatprep.subr.bf16.mxu0 0
  %696 = vmatpush1.bf16.msra.mxu0 0
  %697 = vmatprep.subr.bf16.mxu0 0
  %698 = vmatpush1.bf16.msra.mxu0 0
  %699 = vmatprep.subr.bf16.mxu0 0
  %700 = vmatpush1.bf16.msra.mxu0 0
  %701 = vmatprep.subr.bf16.mxu0 0
  %702 = vmatpush1.bf16.msra.mxu0 0
  %703 = vmatprep.subr.bf16.mxu0 0
  %704 = vmatpush1.bf16.msra.mxu0 0
  %705 = vmatprep.subr.bf16.mxu0 0
  %706 = vmatpush1.bf16.msra.mxu0 0
  %707 = vmatprep.subr.bf16.mxu0 0
  %708 = vmatpush1.bf16.msra.mxu0 0
  %709 = vmatprep.subr.bf16.mxu0 0
  %710 = vmatpush1.bf16.msra.mxu0 0
  %711 = vmatprep.mubr.bf16.mxu0 0
  %712 = vmatmul.mubr.bf16.gmra.mrb[0].mxu0 %v484
  %v713 = vpop.f32.mrb[0].mxu0
  %v714 = vadd.f32 0.0, %v713
  %v715 = vpop.f32.mrb[0].mxu0
  %v716 = vpop.f32.mrb[0].mxu0
  %v717 = vadd.f32 0.0, %v716
  %v718 = vpop.f32.mrb[0].mxu0
  %719 = vmatprep.mubr.bf16.mxu0 0
  %720 = vmatmul.mubr.bf16.gmra.mrb[0].mxu0 %v487
  %v721 = vpop.f32.mrb[0].mxu0
  %v722 = vadd.f32 0.0, %v721
  %v723 = vpop.f32.mrb[0].mxu0
  %v724 = vpop.f32.mrb[0].mxu0
  %v725 = vadd.f32 0.0, %v724
  %v726 = vpop.f32.mrb[0].mxu0
  %727 = vmatprep.mubr.bf16.mxu0 0
  %728 = vmatmul.mubr.bf16.gmra.mrb[0].mxu0 %v490
  %v729 = vpop.f32.mrb[0].mxu0
  %v730 = vadd.f32 0.0, %v729
  %v731 = vpop.f32.mrb[0].mxu0
  %v732 = vpop.f32.mrb[0].mxu0
  %v733 = vadd.f32 0.0, %v732
  %v734 = vpop.f32.mrb[0].mxu0
  %735 = vmatprep.mubr.bf16.mxu0 0
  %736 = vmatmul.mubr.bf16.gmra.mrb[0].mxu0 %v493
  %v737 = vpop.f32.mrb[0].mxu0
  %v738 = vadd.f32 0.0, %v737
  %v739 = vpop.f32.mrb[0].mxu0
  %v740 = vpop.f32.mrb[0].mxu0
  %v741 = vadd.f32 0.0, %v740
  %v742 = vpop.f32.mrb[0].mxu0
  %743 = vmatprep.mubr.bf16.mxu0 0
  %744 = vmatmul.mubr.bf16.gmra.mrb[0].mxu0 %v496
  %v745 = vpop.f32.mrb[0].mxu0
  %v746 = vadd.f32 0.0, %v745
  %v747 = vpop.f32.mrb[0].mxu0
  %v748 = vpop.f32.mrb[0].mxu0
  %v749 = vadd.f32 0.0, %v748
  %v750 = vpop.f32.mrb[0].mxu0
  %751 = vmatprep.mubr.bf16.mxu0 0
  %752 = vmatmul.mubr.bf16.gmra.mrb[0].mxu0 %v499
  %v753 = vpop.f32.mrb[0].mxu0
  %v754 = vadd.f32 0.0, %v753
  %v755 = vpop.f32.mrb[0].mxu0
  %v756 = vpop.f32.mrb[0].mxu0
  %v757 = vadd.f32 0.0, %v756
  %v758 = vpop.f32.mrb[0].mxu0
  %759 = vmatprep.mubr.bf16.mxu0 0
  %760 = vmatmul.mubr.bf16.gmra.mrb[0].mxu0 %v502
  %v761 = vpop.f32.mrb[0].mxu0
  %v762 = vadd.f32 0.0, %v761
  %v763 = vpop.f32.mrb[0].mxu0
  %v764 = vpop.f32.mrb[0].mxu0
  %v765 = vadd.f32 0.0, %v764
  %v766 = vpop.f32.mrb[0].mxu0
  %767 = vmatprep.mubr.bf16.mxu0 0
  %768 = vmatmul.mubr.bf16.gmra.mrb[0].mxu0 %v505
  %v769 = vpop.f32.mrb[0].mxu0
  %v770 = vadd.f32 0.0, %v769
  %v771 = vpop.f32.mrb[0].mxu0
  %v772 = vpop.f32.mrb[0].mxu0
  %v773 = vadd.f32 0.0, %v772
  %v774 = vpop.f32.mrb[0].mxu0
  %775 = vmatprep.mubr.bf16.mxu0 0
  %776 = vmatmul.mubr.bf16.gmra.mrb[0].mxu0 %v508
  %v777 = vpop.f32.mrb[0].mxu0
  %v778 = vadd.f32 0.0, %v777
  %v779 = vpop.f32.mrb[0].mxu0
  %v780 = vpop.f32.mrb[0].mxu0
  %v781 = vadd.f32 0.0, %v780
  %v782 = vpop.f32.mrb[0].mxu0
  %783 = vmatprep.mubr.bf16.mxu0 0
  %784 = vmatmul.mubr.bf16.gmra.mrb[0].mxu0 %v511
  %v785 = vpop.f32.mrb[0].mxu0
  %v786 = vadd.f32 0.0, %v785
  %v787 = vpop.f32.mrb[0].mxu0
  %v788 = vpop.f32.mrb[0].mxu0
  %v789 = vadd.f32 0.0, %v788
  %v790 = vpop.f32.mrb[0].mxu0
  %791 = vmatprep.mubr.bf16.mxu0 0
  %792 = vmatmul.mubr.bf16.gmra.mrb[0].mxu0 %v514
  %v793 = vpop.f32.mrb[0].mxu0
  %v794 = vadd.f32 0.0, %v793
  %v795 = vpop.f32.mrb[0].mxu0
  %v796 = vpop.f32.mrb[0].mxu0
  %v797 = vadd.f32 0.0, %v796
  %v798 = vpop.f32.mrb[0].mxu0
  %799 = vmatprep.mubr.bf16.mxu0 0
  %800 = vmatmul.mubr.bf16.gmra.mrb[0].mxu0 %v517
  %v801 = vpop.f32.mrb[0].mxu0
  %v802 = vadd.f32 0.0, %v801
  %v803 = vpop.f32.mrb[0].mxu0
  %v804 = vpop.f32.mrb[0].mxu0
  %v805 = vadd.f32 0.0, %v804
  %v806 = vpop.f32.mrb[0].mxu0
  %807 = vmatprep.mubr.bf16.mxu0 0
  %808 = vmatmul.mubr.bf16.gmra.mrb[0].mxu0 %v520
  %v809 = vpop.f32.mrb[0].mxu0
  %v810 = vadd.f32 0.0, %v809
  %v811 = vpop.f32.mrb[0].mxu0
  %v812 = vpop.f32.mrb[0].mxu0
  %v813 = vadd.f32 0.0, %v812
  %v814 = vpop.f32.mrb[0].mxu0
  %815 = vmatprep.mubr.bf16.mxu0 0
  %816 = vmatmul.mubr.bf16.gmra.mrb[0].mxu0 %v523
  %v817 = vpop.f32.mrb[0].mxu0
  %v818 = vadd.f32 0.0, %v817
  %v819 = vpop.f32.mrb[0].mxu0
  %v820 = vpop.f32.mrb[0].mxu0
  %v821 = vadd.f32 0.0, %v820
  %v822 = vpop.f32.mrb[0].mxu0
  %823 = vmatprep.mubr.bf16.mxu0 0
  %824 = vmatmul.mubr.bf16.gmra.mrb[0].mxu0 %v526
  %v825 = vpop.f32.mrb[0].mxu0
  %v826 = vadd.f32 0.0, %v825
  %v827 = vpop.f32.mrb[0].mxu0
  %v828 = vpop.f32.mrb[0].mxu0
  %v829 = vadd.f32 0.0, %v828
  %v830 = vpop.f32.mrb[0].mxu0
  %831 = vmatprep.mubr.bf16.mxu0 0
  %832 = vmatmul.mubr.bf16.gmra.mrb[0].mxu0 %v529
  %v833 = vpop.f32.mrb[0].mxu0
  %v834 = vadd.f32 0.0, %v833
  %v835 = vpop.f32.mrb[0].mxu0
  %v836 = vpop.f32.mrb[0].mxu0
  %v837 = vadd.f32 0.0, %v836
  %v838 = vpop.f32.mrb[0].mxu0
  %839 = vmatprep.mubr.bf16.mxu0 0
  %840 = vmatmul.mubr.bf16.gmra.mrb[0].mxu0 %v532
  %v841 = vpop.f32.mrb[0].mxu0
  %v842 = vadd.f32 0.0, %v841
  %v843 = vpop.f32.mrb[0].mxu0
  %v844 = vpop.f32.mrb[0].mxu0
  %v845 = vadd.f32 0.0, %v844
  %v846 = vpop.f32.mrb[0].mxu0
  %847 = vmatprep.mubr.bf16.mxu0 0
  %848 = vmatmul.mubr.bf16.gmra.mrb[0].mxu0 %v535
  %v849 = vpop.f32.mrb[0].mxu0
  %v850 = vadd.f32 0.0, %v849
  %v851 = vpop.f32.mrb[0].mxu0
  %v852 = vpop.f32.mrb[0].mxu0
  %v853 = vadd.f32 0.0, %v852
  %v854 = vpop.f32.mrb[0].mxu0
  %855 = vmatprep.mubr.bf16.mxu0 0
  %856 = vmatmul.mubr.bf16.gmra.mrb[0].mxu0 %v538
  %v857 = vpop.f32.mrb[0].mxu0
  %v858 = vadd.f32 0.0, %v857
  %v859 = vpop.f32.mrb[0].mxu0
  %v860 = vpop.f32.mrb[0].mxu0
  %v861 = vadd.f32 0.0, %v860
  %v862 = vpop.f32.mrb[0].mxu0
  %863 = vmatprep.mubr.bf16.mxu0 0
  %864 = vmatmul.mubr.bf16.gmra.mrb[0].mxu0 %v541
  %v865 = vpop.f32.mrb[0].mxu0
  %v866 = vadd.f32 0.0, %v865
  %v867 = vpop.f32.mrb[0].mxu0
  %v868 = vpop.f32.mrb[0].mxu0
  %v869 = vadd.f32 0.0, %v868
  %v870 = vpop.f32.mrb[0].mxu0
  %871 = vmatprep.mubr.bf16.mxu0 0
  %872 = vmatmul.mubr.bf16.gmra.mrb[0].mxu0 %v544
  %v873 = vpop.f32.mrb[0].mxu0
  %v874 = vadd.f32 0.0, %v873
  %v875 = vpop.f32.mrb[0].mxu0
  %v876 = vpop.f32.mrb[0].mxu0
  %v877 = vadd.f32 0.0, %v876
  %v878 = vpop.f32.mrb[0].mxu0
  %879 = vmatprep.mubr.bf16.mxu0 0
  %880 = vmatmul.mubr.bf16.gmra.mrb[0].mxu0 %v547
  %v881 = vpop.f32.mrb[0].mxu0
  %v882 = vadd.f32 0.0, %v881
  %v883 = vpop.f32.mrb[0].mxu0
  %v884 = vpop.f32.mrb[0].mxu0
  %v885 = vadd.f32 0.0, %v884
  %v886 = vpop.f32.mrb[0].mxu0
  %887 = vmatprep.mubr.bf16.mxu0 0
  %888 = vmatmul.mubr.bf16.gmra.mrb[0].mxu0 %v550
  %v889 = vpop.f32.mrb[0].mxu0
  %v890 = vadd.f32 0.0, %v889
  %v891 = vpop.f32.mrb[0].mxu0
  %v892 = vpop.f32.mrb[0].mxu0
  %v893 = vadd.f32 0.0, %v892
  %v894 = vpop.f32.mrb[0].mxu0
  %895 = vmatprep.mubr.bf16.mxu0 0
  %896 = vmatmul.mubr.bf16.gmra.mrb[0].mxu0 %v553
  %v897 = vpop.f32.mrb[0].mxu0
  %v898 = vadd.f32 0.0, %v897
  %v899 = vpop.f32.mrb[0].mxu0
  %v900 = vpop.f32.mrb[0].mxu0
  %v901 = vadd.f32 0.0, %v900
  %v902 = vpop.f32.mrb[0].mxu0
  %903 = vmatprep.mubr.bf16.mxu0 0
  %904 = vmatmul.mubr.bf16.gmra.mrb[0].mxu0 %v556
  %v905 = vpop.f32.mrb[0].mxu0
  %v906 = vadd.f32 0.0, %v905
  %v907 = vpop.f32.mrb[0].mxu0
  %v908 = vpop.f32.mrb[0].mxu0
  %v909 = vadd.f32 0.0, %v908
  %v910 = vpop.f32.mrb[0].mxu0
  %911 = vmatprep.mubr.bf16.mxu0 0
  %912 = vmatmul.mubr.bf16.gmra.mrb[0].mxu0 %v559
  %v913 = vpop.f32.mrb[0].mxu0
  %v914 = vadd.f32 0.0, %v913
  %v915 = vpop.f32.mrb[0].mxu0
  %v916 = vpop.f32.mrb[0].mxu0
  %v917 = vadd.f32 0.0, %v916
  %v918 = vpop.f32.mrb[0].mxu0
  %919 = vmatprep.mubr.bf16.mxu0 0
  %920 = vmatmul.mubr.bf16.gmra.mrb[0].mxu0 %v562
  %v921 = vpop.f32.mrb[0].mxu0
  %v922 = vadd.f32 0.0, %v921
  %v923 = vpop.f32.mrb[0].mxu0
  %v924 = vpop.f32.mrb[0].mxu0
  %v925 = vadd.f32 0.0, %v924
  %v926 = vpop.f32.mrb[0].mxu0
  %927 = vmatprep.mubr.bf16.mxu0 0
  %928 = vmatmul.mubr.bf16.gmra.mrb[0].mxu0 %v565
  %v929 = vpop.f32.mrb[0].mxu0
  %v930 = vadd.f32 0.0, %v929
  %v931 = vpop.f32.mrb[0].mxu0
  %v932 = vpop.f32.mrb[0].mxu0
  %v933 = vadd.f32 0.0, %v932
  %v934 = vpop.f32.mrb[0].mxu0
  %935 = vmatprep.mubr.bf16.mxu0 0
  %936 = vmatmul.mubr.bf16.gmra.mrb[0].mxu0 %v568
  %v937 = vpop.f32.mrb[0].mxu0
  %v938 = vadd.f32 0.0, %v937
  %v939 = vpop.f32.mrb[0].mxu0
  %v940 = vpop.f32.mrb[0].mxu0
  %v941 = vadd.f32 0.0, %v940
  %v942 = vpop.f32.mrb[0].mxu0
  %943 = vmatprep.mubr.bf16.mxu0 0
  %944 = vmatmul.mubr.bf16.gmra.mrb[0].mxu0 %v571
  %v945 = vpop.f32.mrb[0].mxu0
  %v946 = vadd.f32 0.0, %v945
  %v947 = vpop.f32.mrb[0].mxu0
  %v948 = vpop.f32.mrb[0].mxu0
  %v949 = vadd.f32 0.0, %v948
  %v950 = vpop.f32.mrb[0].mxu0
  %951 = vmatprep.mubr.bf16.mxu0 0
  %952 = vmatmul.mubr.bf16.gmra.mrb[0].mxu0 %v574
  %v953 = vpop.f32.mrb[0].mxu0
  %v954 = vadd.f32 0.0, %v953
  %v955 = vpop.f32.mrb[0].mxu0
  %v956 = vpop.f32.mrb[0].mxu0
  %v957 = vadd.f32 0.0, %v956
  %v958 = vpop.f32.mrb[0].mxu0
  %959 = vmatprep.mubr.bf16.mxu0 0
  %960 = vmatmul.mubr.bf16.gmra.mrb[0].mxu0 %v577
  %v961 = vpop.f32.mrb[0].mxu0
  %v962 = vadd.f32 0.0, %v961
  %v963 = vpop.f32.mrb[0].mxu0
  %v964 = vpop.f32.mrb[0].mxu0
  %v965 = vadd.f32 0.0, %v964
  %v966 = vpop.f32.mrb[0].mxu0
  %967 = vmatprep.mubr.bf16.mxu0 0
  %968 = vmatmul.mubr.bf16.gmra.mrb[0].mxu0 %v580
  %v969 = vpop.f32.mrb[0].mxu0
  %v970 = vadd.f32 0.0, %v969
  %v971 = vpop.f32.mrb[0].mxu0
  %v972 = vpop.f32.mrb[0].mxu0
  %v973 = vadd.f32 0.0, %v972
  %v974 = vpop.f32.mrb[0].mxu0
  %975 = vmatprep.mubr.bf16.mxu0 0
  %976 = vmatmul.mubr.bf16.gmra.mrb[0].mxu0 %v583
  %v977 = vpop.f32.mrb[0].mxu0
  %v978 = vadd.f32 0.0, %v977
  %v979 = vpop.f32.mrb[0].mxu0
  %v980 = vpop.f32.mrb[0].mxu0
  %v981 = vadd.f32 0.0, %v980
  %v982 = vpop.f32.mrb[0].mxu0
  %983 = vmatprep.mubr.bf16.mxu0 0
  %984 = vmatmul.mubr.bf16.gmra.mrb[0].mxu0 %v586
  %v985 = vpop.f32.mrb[0].mxu0
  %v986 = vadd.f32 0.0, %v985
  %v987 = vpop.f32.mrb[0].mxu0
  %v988 = vpop.f32.mrb[0].mxu0
  %v989 = vadd.f32 0.0, %v988
  %v990 = vpop.f32.mrb[0].mxu0
  %991 = vmatprep.mubr.bf16.mxu0 0
  %992 = vmatmul.mubr.bf16.gmra.mrb[0].mxu0 %v589
  %v993 = vpop.f32.mrb[0].mxu0
  %v994 = vadd.f32 0.0, %v993
  %v995 = vpop.f32.mrb[0].mxu0
  %v996 = vpop.f32.mrb[0].mxu0
  %v997 = vadd.f32 0.0, %v996
  %v998 = vpop.f32.mrb[0].mxu0
  %999 = vmatprep.mubr.bf16.mxu0 0
  %1000 = vmatmul.mubr.bf16.gmra.mrb[0].mxu0 %v592
  %v1001 = vpop.f32.mrb[0].mxu0
  %v1002 = vadd.f32 0.0, %v1001
  %v1003 = vpop.f32.mrb[0].mxu0
  %v1004 = vpop.f32.mrb[0].mxu0
  %v1005 = vadd.f32 0.0, %v1004
  %v1006 = vpop.f32.mrb[0].mxu0
  %1007 = vmatprep.mubr.bf16.mxu0 0
  %1008 = vmatmul.mubr.bf16.gmra.mrb[0].mxu0 %v595
  %v1009 = vpop.f32.mrb[0].mxu0
  %v1010 = vadd.f32 0.0, %v1009
  %v1011 = vpop.f32.mrb[0].mxu0
  %v1012 = vpop.f32.mrb[0].mxu0
  %v1013 = vadd.f32 0.0, %v1012
  %v1014 = vpop.f32.mrb[0].mxu0
  %1015 = vmatprep.mubr.bf16.mxu0 0
  %1016 = vmatmul.mubr.bf16.gmra.mrb[0].mxu0 %v598
  %v1017 = vpop.f32.mrb[0].mxu0
  %v1018 = vadd.f32 0.0, %v1017
  %v1019 = vpop.f32.mrb[0].mxu0
  %v1020 = vpop.f32.mrb[0].mxu0
  %v1021 = vadd.f32 0.0, %v1020
  %v1022 = vpop.f32.mrb[0].mxu0
  %1023 = vmatprep.mubr.bf16.mxu0 0
  %1024 = vmatmul.mubr.bf16.gmra.mrb[0].mxu0 %v601
  %v1025 = vpop.f32.mrb[0].mxu0
  %v1026 = vadd.f32 0.0, %v1025
  %v1027 = vpop.f32.mrb[0].mxu0
  %v1028 = vpop.f32.mrb[0].mxu0
  %v1029 = vadd.f32 0.0, %v1028
  %v1030 = vpop.f32.mrb[0].mxu0
  %1031 = vmatprep.mubr.bf16.mxu0 0
  %1032 = vmatmul.mubr.bf16.gmra.mrb[0].mxu0 %v604
  %v1033 = vpop.f32.mrb[0].mxu0
  %v1034 = vadd.f32 0.0, %v1033
  %v1035 = vpop.f32.mrb[0].mxu0
  %v1036 = vpop.f32.mrb[0].mxu0
  %v1037 = vadd.f32 0.0, %v1036
  %v1038 = vpop.f32.mrb[0].mxu0
  %1039 = vmatprep.mubr.bf16.mxu0 0
  %1040 = vmatmul.mubr.bf16.gmra.mrb[0].mxu0 %v607
  %v1041 = vpop.f32.mrb[0].mxu0
  %v1042 = vadd.f32 0.0, %v1041
  %v1043 = vpop.f32.mrb[0].mxu0
  %v1044 = vpop.f32.mrb[0].mxu0
  %v1045 = vadd.f32 0.0, %v1044
  %v1046 = vpop.f32.mrb[0].mxu0
  %1047 = vmatprep.mubr.bf16.mxu0 0
  %1048 = vmatmul.mubr.bf16.gmra.mrb[0].mxu0 %v610
  %v1049 = vpop.f32.mrb[0].mxu0
  %v1050 = vadd.f32 0.0, %v1049
  %v1051 = vpop.f32.mrb[0].mxu0
  %v1052 = vpop.f32.mrb[0].mxu0
  %v1053 = vadd.f32 0.0, %v1052
  %v1054 = vpop.f32.mrb[0].mxu0
  %1055 = vmatprep.mubr.bf16.mxu0 0
  %1056 = vmatmul.mubr.bf16.gmra.mrb[0].mxu0 %v613
  %v1057 = vpop.f32.mrb[0].mxu0
  %v1058 = vadd.f32 0.0, %v1057
  %v1059 = vpop.f32.mrb[0].mxu0
  %v1060 = vpop.f32.mrb[0].mxu0
  %v1061 = vadd.f32 0.0, %v1060
  %v1062 = vpop.f32.mrb[0].mxu0
  %1063 = vmatprep.mubr.bf16.mxu0 0
  %1064 = vmatmul.mubr.bf16.gmra.mrb[0].mxu0 %v616
  %v1065 = vpop.f32.mrb[0].mxu0
  %v1066 = vadd.f32 0.0, %v1065
  %v1067 = vpop.f32.mrb[0].mxu0
  %v1068 = vpop.f32.mrb[0].mxu0
  %v1069 = vadd.f32 0.0, %v1068
  %v1070 = vpop.f32.mrb[0].mxu0
  %1071 = vmatprep.mubr.bf16.mxu0 0
  %1072 = vmatmul.mubr.bf16.gmra.mrb[0].mxu0 %v619
  %v1073 = vpop.f32.mrb[0].mxu0
  %v1074 = vadd.f32 0.0, %v1073
  %v1075 = vpop.f32.mrb[0].mxu0
  %v1076 = vpop.f32.mrb[0].mxu0
  %v1077 = vadd.f32 0.0, %v1076
  %v1078 = vpop.f32.mrb[0].mxu0
  %1079 = vmatprep.mubr.bf16.mxu0 0
  %1080 = vmatmul.mubr.bf16.gmra.mrb[0].mxu0 %v622
  %v1081 = vpop.f32.mrb[0].mxu0
  %v1082 = vadd.f32 0.0, %v1081
  %v1083 = vpop.f32.mrb[0].mxu0
  %v1084 = vpop.f32.mrb[0].mxu0
  %v1085 = vadd.f32 0.0, %v1084
  %v1086 = vpop.f32.mrb[0].mxu0
  %1087 = vmatprep.mubr.bf16.mxu0 0
  %1088 = vmatmul.mubr.bf16.gmra.mrb[0].mxu0 %v625
  %v1089 = vpop.f32.mrb[0].mxu0
  %v1090 = vadd.f32 0.0, %v1089
  %v1091 = vpop.f32.mrb[0].mxu0
  %v1092 = vpop.f32.mrb[0].mxu0
  %v1093 = vadd.f32 0.0, %v1092
  %v1094 = vpop.f32.mrb[0].mxu0
  %1095 = vmatprep.mubr.bf16.mxu0 0
  %1096 = vmatmul.mubr.bf16.gmra.mrb[0].mxu0 %v628
  %v1097 = vpop.f32.mrb[0].mxu0
  %v1098 = vadd.f32 0.0, %v1097
  %v1099 = vpop.f32.mrb[0].mxu0
  %v1100 = vpop.f32.mrb[0].mxu0
  %v1101 = vadd.f32 0.0, %v1100
  %v1102 = vpop.f32.mrb[0].mxu0
  %1103 = vmatprep.mubr.bf16.mxu0 0
  %1104 = vmatmul.mubr.bf16.gmra.mrb[0].mxu0 %v631
  %v1105 = vpop.f32.mrb[0].mxu0
  %v1106 = vadd.f32 0.0, %v1105
  %v1107 = vpop.f32.mrb[0].mxu0
  %v1108 = vpop.f32.mrb[0].mxu0
  %v1109 = vadd.f32 0.0, %v1108
  %v1110 = vpop.f32.mrb[0].mxu0
  %1111 = vmatprep.mubr.bf16.mxu0 0
  %1112 = vmatmul.mubr.bf16.gmra.mrb[0].mxu0 %v634
  %v1113 = vpop.f32.mrb[0].mxu0
  %v1114 = vadd.f32 0.0, %v1113
  %v1115 = vpop.f32.mrb[0].mxu0
  %v1116 = vpop.f32.mrb[0].mxu0
  %v1117 = vadd.f32 0.0, %v1116
  %v1118 = vpop.f32.mrb[0].mxu0
  %1119 = vmatprep.mubr.bf16.mxu0 0
  %1120 = vmatmul.mubr.bf16.gmra.mrb[0].mxu0 %v637
  %v1121 = vpop.f32.mrb[0].mxu0
  %v1122 = vadd.f32 0.0, %v1121
  %v1123 = vpop.f32.mrb[0].mxu0
  %v1124 = vpop.f32.mrb[0].mxu0
  %v1125 = vadd.f32 0.0, %v1124
  %v1126 = vpop.f32.mrb[0].mxu0
  %1127 = vmatprep.mubr.bf16.mxu0 0
  %1128 = vmatmul.mubr.bf16.gmra.mrb[0].mxu0 %v640
  %v1129 = vpop.f32.mrb[0].mxu0
  %v1130 = vadd.f32 0.0, %v1129
  %v1131 = vpop.f32.mrb[0].mxu0
  %v1132 = vpop.f32.mrb[0].mxu0
  %v1133 = vadd.f32 0.0, %v1132
  %v1134 = vpop.f32.mrb[0].mxu0
  %1135 = vmatprep.mubr.bf16.mxu0 0
  %1136 = vmatmul.mubr.bf16.gmra.mrb[0].mxu0 %v643
  %v1137 = vpop.f32.mrb[0].mxu0
  %v1138 = vadd.f32 0.0, %v1137
  %v1139 = vpop.f32.mrb[0].mxu0
  %v1140 = vpop.f32.mrb[0].mxu0
  %v1141 = vadd.f32 0.0, %v1140
  %v1142 = vpop.f32.mrb[0].mxu0
  %1143 = vmatprep.mubr.bf16.mxu0 0
  %1144 = vmatmul.mubr.bf16.gmra.mrb[0].mxu0 %v646
  %v1145 = vpop.f32.mrb[0].mxu0
  %v1146 = vadd.f32 0.0, %v1145
  %v1147 = vpop.f32.mrb[0].mxu0
  %v1148 = vpop.f32.mrb[0].mxu0
  %v1149 = vadd.f32 0.0, %v1148
  %v1150 = vpop.f32.mrb[0].mxu0
  %1151 = vmatprep.mubr.bf16.mxu0 0
  %1152 = vmatmul.mubr.bf16.gmra.mrb[0].mxu0 %v649
  %v1153 = vpop.f32.mrb[0].mxu0
  %v1154 = vadd.f32 0.0, %v1153
  %v1155 = vpop.f32.mrb[0].mxu0
  %v1156 = vpop.f32.mrb[0].mxu0
  %v1157 = vadd.f32 0.0, %v1156
  %v1158 = vpop.f32.mrb[0].mxu0
  %1159 = vmatprep.mubr.bf16.mxu0 0
  %1160 = vmatmul.mubr.bf16.gmra.mrb[0].mxu0 %v652
  %v1161 = vpop.f32.mrb[0].mxu0
  %v1162 = vadd.f32 0.0, %v1161
  %v1163 = vpop.f32.mrb[0].mxu0
  %v1164 = vpop.f32.mrb[0].mxu0
  %v1165 = vadd.f32 0.0, %v1164
  %v1166 = vpop.f32.mrb[0].mxu0
  %1167 = vmatprep.mubr.bf16.mxu0 0
  %1168 = vmatmul.mubr.bf16.gmra.mrb[0].mxu0 %v655
  %v1169 = vpop.f32.mrb[0].mxu0
  %v1170 = vadd.f32 0.0, %v1169
  %v1171 = vpop.f32.mrb[0].mxu0
  %v1172 = vpop.f32.mrb[0].mxu0
  %v1173 = vadd.f32 0.0, %v1172
  %v1174 = vpop.f32.mrb[0].mxu0
  %1175 = vmatprep.mubr.bf16.mxu0 0
  %1176 = vmatmul.mubr.bf16.gmra.mrb[0].mxu0 %v658
  %v1177 = vpop.f32.mrb[0].mxu0
  %v1178 = vadd.f32 0.0, %v1177
  %v1179 = vpop.f32.mrb[0].mxu0
  %v1180 = vpop.f32.mrb[0].mxu0
  %v1181 = vadd.f32 0.0, %v1180
  %v1182 = vpop.f32.mrb[0].mxu0
  %1183 = vmatprep.mubr.bf16.mxu0 0
  %1184 = vmatmul.mubr.bf16.gmra.mrb[0].mxu0 %v661
  %v1185 = vpop.f32.mrb[0].mxu0
  %v1186 = vadd.f32 0.0, %v1185
  %v1187 = vpop.f32.mrb[0].mxu0
  %v1188 = vpop.f32.mrb[0].mxu0
  %v1189 = vadd.f32 0.0, %v1188
  %v1190 = vpop.f32.mrb[0].mxu0
  %1191 = vmatprep.mubr.bf16.mxu0 0
  %1192 = vmatmul.mubr.bf16.gmra.mrb[0].mxu0 %v664
  %v1193 = vpop.f32.mrb[0].mxu0
  %v1194 = vadd.f32 0.0, %v1193
  %v1195 = vpop.f32.mrb[0].mxu0
  %v1196 = vpop.f32.mrb[0].mxu0
  %v1197 = vadd.f32 0.0, %v1196
  %v1198 = vpop.f32.mrb[0].mxu0
  %1199 = vmatprep.mubr.bf16.mxu0 0
  %1200 = vmatmul.mubr.bf16.gmra.mrb[0].mxu0 %v667
  %v1201 = vpop.f32.mrb[0].mxu0
  %v1202 = vadd.f32 0.0, %v1201
  %v1203 = vpop.f32.mrb[0].mxu0
  %v1204 = vpop.f32.mrb[0].mxu0
  %v1205 = vadd.f32 0.0, %v1204
  %v1206 = vpop.f32.mrb[0].mxu0
  %1207 = vmatprep.mubr.bf16.mxu0 0
  %1208 = vmatmul.mubr.bf16.gmra.mrb[0].mxu0 %v670
  %v1209 = vpop.f32.mrb[0].mxu0
  %v1210 = vadd.f32 0.0, %v1209
  %v1211 = vpop.f32.mrb[0].mxu0
  %v1212 = vpop.f32.mrb[0].mxu0
  %v1213 = vadd.f32 0.0, %v1212
  %v1214 = vpop.f32.mrb[0].mxu0
  %1215 = vmatprep.mubr.bf16.mxu0 0
  %1216 = vmatmul.mubr.bf16.gmra.mrb[0].mxu0 %v673
  %v1217 = vpop.f32.mrb[0].mxu0
  %v1218 = vadd.f32 0.0, %v1217
  %v1219 = vpop.f32.mrb[0].mxu0
  %v1220 = vpop.f32.mrb[0].mxu0
  %v1221 = vadd.f32 0.0, %v1220
  %v1222 = vpop.f32.mrb[0].mxu0
  %1223 = vdwg.mxu0
  %v1224 = vpack.c.bf16 %v717, %v714
  %v1225 = vpack.c.bf16 %v725, %v722
  %v1226 = vpack.c.bf16 %v733, %v730
  %v1227 = vpack.c.bf16 %v741, %v738
  %v1228 = vpack.c.bf16 %v749, %v746
  %v1229 = vpack.c.bf16 %v757, %v754
  %v1230 = vpack.c.bf16 %v765, %v762
  %v1231 = vpack.c.bf16 %v773, %v770
  %v1232 = vpack.c.bf16 %v781, %v778
  %v1233 = vpack.c.bf16 %v789, %v786
  %v1234 = vpack.c.bf16 %v797, %v794
  %v1235 = vpack.c.bf16 %v805, %v802
  %v1236 = vpack.c.bf16 %v813, %v810
  %v1237 = vpack.c.bf16 %v821, %v818
  %v1238 = vpack.c.bf16 %v829, %v826
  %v1239 = vpack.c.bf16 %v837, %v834
  %v1240 = vpack.c.bf16 %v845, %v842
  %v1241 = vpack.c.bf16 %v853, %v850
  %v1242 = vpack.c.bf16 %v861, %v858
  %v1243 = vpack.c.bf16 %v869, %v866
  %v1244 = vpack.c.bf16 %v877, %v874
  %v1245 = vpack.c.bf16 %v885, %v882
  %v1246 = vpack.c.bf16 %v893, %v890
  %v1247 = vpack.c.bf16 %v901, %v898
  %v1248 = vpack.c.bf16 %v909, %v906
  %v1249 = vpack.c.bf16 %v917, %v914
  %v1250 = vpack.c.bf16 %v925, %v922
  %v1251 = vpack.c.bf16 %v933, %v930
  %v1252 = vpack.c.bf16 %v941, %v938
  %v1253 = vpack.c.bf16 %v949, %v946
  %v1254 = vpack.c.bf16 %v957, %v954
  %v1255 = vpack.c.bf16 %v965, %v962
  %v1256 = vpack.c.bf16 %v973, %v970
  %v1257 = vpack.c.bf16 %v981, %v978
  %v1258 = vpack.c.bf16 %v989, %v986
  %v1259 = vpack.c.bf16 %v997, %v994
  %v1260 = vpack.c.bf16 %v1005, %v1002
  %v1261 = vpack.c.bf16 %v1013, %v1010
  %v1262 = vpack.c.bf16 %v1021, %v1018
  %v1263 = vpack.c.bf16 %v1029, %v1026
  %v1264 = vpack.c.bf16 %v1037, %v1034
  %v1265 = vpack.c.bf16 %v1045, %v1042
  %v1266 = vpack.c.bf16 %v1053, %v1050
  %v1267 = vpack.c.bf16 %v1061, %v1058
  %v1268 = vpack.c.bf16 %v1069, %v1066
  %v1269 = vpack.c.bf16 %v1077, %v1074
  %v1270 = vpack.c.bf16 %v1085, %v1082
  %v1271 = vpack.c.bf16 %v1093, %v1090
  %v1272 = vpack.c.bf16 %v1101, %v1098
  %v1273 = vpack.c.bf16 %v1109, %v1106
  %v1274 = vpack.c.bf16 %v1117, %v1114
  %v1275 = vpack.c.bf16 %v1125, %v1122
  %v1276 = vpack.c.bf16 %v1133, %v1130
  %v1277 = vpack.c.bf16 %v1141, %v1138
  %v1278 = vpack.c.bf16 %v1149, %v1146
  %v1279 = vpack.c.bf16 %v1157, %v1154
  %v1280 = vpack.c.bf16 %v1165, %v1162
  %v1281 = vpack.c.bf16 %v1173, %v1170
  %v1282 = vpack.c.bf16 %v1181, %v1178
  %v1283 = vpack.c.bf16 %v1189, %v1186
  %v1284 = vpack.c.bf16 %v1197, %v1194
  %v1285 = vpack.c.bf16 %v1205, %v1202
  %v1286 = vpack.c.bf16 %v1213, %v1210
  %v1287 = vpack.c.bf16 %v1221, %v1218
  %v1352 = vunpack.c.l.b16 %v1224
  %v1353 = vunpack.c.h.b16 %v1224
  %v1354 = vunpack.c.l.b16 %v1225
  %v1355 = vunpack.c.h.b16 %v1225
  %v1356 = vunpack.c.l.b16 %v1226
  %v1357 = vunpack.c.h.b16 %v1226
  %v1358 = vunpack.c.l.b16 %v1227
  %v1359 = vunpack.c.h.b16 %v1227
  %v1360 = vunpack.c.l.b16 %v1228
  %v1361 = vunpack.c.h.b16 %v1228
  %v1362 = vunpack.c.l.b16 %v1229
  %v1363 = vunpack.c.h.b16 %v1229
  %v1364 = vunpack.c.l.b16 %v1230
  %v1365 = vunpack.c.h.b16 %v1230
  %v1366 = vunpack.c.l.b16 %v1231
  %v1367 = vunpack.c.h.b16 %v1231
  %v1368 = vunpack.c.l.b16 %v1232
  %v1369 = vunpack.c.h.b16 %v1232
  %v1370 = vunpack.c.l.b16 %v1233
  %v1371 = vunpack.c.h.b16 %v1233
  %v1372 = vunpack.c.l.b16 %v1234
  %v1373 = vunpack.c.h.b16 %v1234
  %v1374 = vunpack.c.l.b16 %v1235
  %v1375 = vunpack.c.h.b16 %v1235
  %v1376 = vunpack.c.l.b16 %v1236
  %v1377 = vunpack.c.h.b16 %v1236
  %v1378 = vunpack.c.l.b16 %v1237
  %v1379 = vunpack.c.h.b16 %v1237
  %v1380 = vunpack.c.l.b16 %v1238
  %v1381 = vunpack.c.h.b16 %v1238
  %v1382 = vunpack.c.l.b16 %v1239
  %v1383 = vunpack.c.h.b16 %v1239
  %v1384 = vunpack.c.l.b16 %v1240
  %v1385 = vunpack.c.h.b16 %v1240
  %v1386 = vunpack.c.l.b16 %v1241
  %v1387 = vunpack.c.h.b16 %v1241
  %v1388 = vunpack.c.l.b16 %v1242
  %v1389 = vunpack.c.h.b16 %v1242
  %v1390 = vunpack.c.l.b16 %v1243
  %v1391 = vunpack.c.h.b16 %v1243
  %v1392 = vunpack.c.l.b16 %v1244
  %v1393 = vunpack.c.h.b16 %v1244
  %v1394 = vunpack.c.l.b16 %v1245
  %v1395 = vunpack.c.h.b16 %v1245
  %v1396 = vunpack.c.l.b16 %v1246
  %v1397 = vunpack.c.h.b16 %v1246
  %v1398 = vunpack.c.l.b16 %v1247
  %v1399 = vunpack.c.h.b16 %v1247
  %v1400 = vunpack.c.l.b16 %v1248
  %v1401 = vunpack.c.h.b16 %v1248
  %v1402 = vunpack.c.l.b16 %v1249
  %v1403 = vunpack.c.h.b16 %v1249
  %v1404 = vunpack.c.l.b16 %v1250
  %v1405 = vunpack.c.h.b16 %v1250
  %v1406 = vunpack.c.l.b16 %v1251
  %v1407 = vunpack.c.h.b16 %v1251
  %v1408 = vunpack.c.l.b16 %v1252
  %v1409 = vunpack.c.h.b16 %v1252
  %v1410 = vunpack.c.l.b16 %v1253
  %v1411 = vunpack.c.h.b16 %v1253
  %v1412 = vunpack.c.l.b16 %v1254
  %v1413 = vunpack.c.h.b16 %v1254
  %v1414 = vunpack.c.l.b16 %v1255
  %v1415 = vunpack.c.h.b16 %v1255
  %v1416 = vunpack.c.l.b16 %v1256
  %v1417 = vunpack.c.h.b16 %v1256
  %v1418 = vunpack.c.l.b16 %v1257
  %v1419 = vunpack.c.h.b16 %v1257
  %v1420 = vunpack.c.l.b16 %v1258
  %v1421 = vunpack.c.h.b16 %v1258
  %v1422 = vunpack.c.l.b16 %v1259
  %v1423 = vunpack.c.h.b16 %v1259
  %v1424 = vunpack.c.l.b16 %v1260
  %v1425 = vunpack.c.h.b16 %v1260
  %v1426 = vunpack.c.l.b16 %v1261
  %v1427 = vunpack.c.h.b16 %v1261
  %v1428 = vunpack.c.l.b16 %v1262
  %v1429 = vunpack.c.h.b16 %v1262
  %v1430 = vunpack.c.l.b16 %v1263
  %v1431 = vunpack.c.h.b16 %v1263
  %v1432 = vunpack.c.l.b16 %v1264
  %v1433 = vunpack.c.h.b16 %v1264
  %v1434 = vunpack.c.l.b16 %v1265
  %v1435 = vunpack.c.h.b16 %v1265
  %v1436 = vunpack.c.l.b16 %v1266
  %v1437 = vunpack.c.h.b16 %v1266
  %v1438 = vunpack.c.l.b16 %v1267
  %v1439 = vunpack.c.h.b16 %v1267
  %v1440 = vunpack.c.l.b16 %v1268
  %v1441 = vunpack.c.h.b16 %v1268
  %v1442 = vunpack.c.l.b16 %v1269
  %v1443 = vunpack.c.h.b16 %v1269
  %v1444 = vunpack.c.l.b16 %v1270
  %v1445 = vunpack.c.h.b16 %v1270
  %v1446 = vunpack.c.l.b16 %v1271
  %v1447 = vunpack.c.h.b16 %v1271
  %v1448 = vunpack.c.l.b16 %v1272
  %v1449 = vunpack.c.h.b16 %v1272
  %v1450 = vunpack.c.l.b16 %v1273
  %v1451 = vunpack.c.h.b16 %v1273
  %v1452 = vunpack.c.l.b16 %v1274
  %v1453 = vunpack.c.h.b16 %v1274
  %v1454 = vunpack.c.l.b16 %v1275
  %v1455 = vunpack.c.h.b16 %v1275
  %v1456 = vunpack.c.l.b16 %v1276
  %v1457 = vunpack.c.h.b16 %v1276
  %v1458 = vunpack.c.l.b16 %v1277
  %v1459 = vunpack.c.h.b16 %v1277
  %v1460 = vunpack.c.l.b16 %v1278
  %v1461 = vunpack.c.h.b16 %v1278
  %v1462 = vunpack.c.l.b16 %v1279
  %v1463 = vunpack.c.h.b16 %v1279
  %v1464 = vunpack.c.l.b16 %v1280
  %v1465 = vunpack.c.h.b16 %v1280
  %v1466 = vunpack.c.l.b16 %v1281
  %v1467 = vunpack.c.h.b16 %v1281
  %v1468 = vunpack.c.l.b16 %v1282
  %v1469 = vunpack.c.h.b16 %v1282
  %v1470 = vunpack.c.l.b16 %v1283
  %v1471 = vunpack.c.h.b16 %v1283
  %v1472 = vunpack.c.l.b16 %v1284
  %v1473 = vunpack.c.h.b16 %v1284
  %v1474 = vunpack.c.l.b16 %v1285
  %v1475 = vunpack.c.h.b16 %v1285
  %v1476 = vunpack.c.l.b16 %v1286
  %v1477 = vunpack.c.h.b16 %v1286
  %v1478 = vunpack.c.l.b16 %v1287
  %v1479 = vunpack.c.h.b16 %v1287
  %v1480 = vpack.c.b16 %v1352, %v1352
  %v1481 = vpack.c.b16 %v1353, %v1353
  %v1482 = vpack.c.b16 %v1354, %v1354
  %v1483 = vpack.c.b16 %v1355, %v1355
  %v1484 = vpack.c.b16 %v1356, %v1356
  %v1485 = vpack.c.b16 %v1357, %v1357
  %v1486 = vpack.c.b16 %v1358, %v1358
  %v1487 = vpack.c.b16 %v1359, %v1359
  %v1488 = vpack.c.b16 %v1360, %v1360
  %v1489 = vpack.c.b16 %v1361, %v1361
  %v1490 = vpack.c.b16 %v1362, %v1362
  %v1491 = vpack.c.b16 %v1363, %v1363
  %v1492 = vpack.c.b16 %v1364, %v1364
  %v1493 = vpack.c.b16 %v1365, %v1365
  %v1494 = vpack.c.b16 %v1366, %v1366
  %v1495 = vpack.c.b16 %v1367, %v1367
  %v1496 = vpack.c.b16 %v1368, %v1368
  %v1497 = vpack.c.b16 %v1369, %v1369
  %v1498 = vpack.c.b16 %v1370, %v1370
  %v1499 = vpack.c.b16 %v1371, %v1371
  %v1500 = vpack.c.b16 %v1372, %v1372
  %v1501 = vpack.c.b16 %v1373, %v1373
  %v1502 = vpack.c.b16 %v1374, %v1374
  %v1503 = vpack.c.b16 %v1375, %v1375
  %v1504 = vpack.c.b16 %v1376, %v1376
  %v1505 = vpack.c.b16 %v1377, %v1377
  %v1506 = vpack.c.b16 %v1378, %v1378
  %v1507 = vpack.c.b16 %v1379, %v1379
  %v1508 = vpack.c.b16 %v1380, %v1380
  %v1509 = vpack.c.b16 %v1381, %v1381
  %v1510 = vpack.c.b16 %v1382, %v1382
  %v1511 = vpack.c.b16 %v1383, %v1383
  %v1512 = vpack.c.b16 %v1384, %v1384
  %v1513 = vpack.c.b16 %v1385, %v1385
  %v1514 = vpack.c.b16 %v1386, %v1386
  %v1515 = vpack.c.b16 %v1387, %v1387
  %v1516 = vpack.c.b16 %v1388, %v1388
  %v1517 = vpack.c.b16 %v1389, %v1389
  %v1518 = vpack.c.b16 %v1390, %v1390
  %v1519 = vpack.c.b16 %v1391, %v1391
  %v1520 = vpack.c.b16 %v1392, %v1392
  %v1521 = vpack.c.b16 %v1393, %v1393
  %v1522 = vpack.c.b16 %v1394, %v1394
  %v1523 = vpack.c.b16 %v1395, %v1395
  %v1524 = vpack.c.b16 %v1396, %v1396
  %v1525 = vpack.c.b16 %v1397, %v1397
  %v1526 = vpack.c.b16 %v1398, %v1398
  %v1527 = vpack.c.b16 %v1399, %v1399
  %v1528 = vpack.c.b16 %v1400, %v1400
  %v1529 = vpack.c.b16 %v1401, %v1401
  %v1530 = vpack.c.b16 %v1402, %v1402
  %v1531 = vpack.c.b16 %v1403, %v1403
  %v1532 = vpack.c.b16 %v1404, %v1404
  %v1533 = vpack.c.b16 %v1405, %v1405
  %v1534 = vpack.c.b16 %v1406, %v1406
  %v1535 = vpack.c.b16 %v1407, %v1407
  %v1536 = vpack.c.b16 %v1408, %v1408
  %v1537 = vpack.c.b16 %v1409, %v1409
  %v1538 = vpack.c.b16 %v1410, %v1410
  %v1539 = vpack.c.b16 %v1411, %v1411
  %v1540 = vpack.c.b16 %v1412, %v1412
  %v1541 = vpack.c.b16 %v1413, %v1413
  %v1542 = vpack.c.b16 %v1414, %v1414
  %v1543 = vpack.c.b16 %v1415, %v1415
  %v1544 = vpack.c.b16 %v1416, %v1416
  %v1545 = vpack.c.b16 %v1417, %v1417
  %v1546 = vpack.c.b16 %v1418, %v1418
  %v1547 = vpack.c.b16 %v1419, %v1419
  %v1548 = vpack.c.b16 %v1420, %v1420
  %v1549 = vpack.c.b16 %v1421, %v1421
  %v1550 = vpack.c.b16 %v1422, %v1422
  %v1551 = vpack.c.b16 %v1423, %v1423
  %v1552 = vpack.c.b16 %v1424, %v1424
  %v1553 = vpack.c.b16 %v1425, %v1425
  %v1554 = vpack.c.b16 %v1426, %v1426
  %v1555 = vpack.c.b16 %v1427, %v1427
  %v1556 = vpack.c.b16 %v1428, %v1428
  %v1557 = vpack.c.b16 %v1429, %v1429
  %v1558 = vpack.c.b16 %v1430, %v1430
  %v1559 = vpack.c.b16 %v1431, %v1431
  %v1560 = vpack.c.b16 %v1432, %v1432
  %v1561 = vpack.c.b16 %v1433, %v1433
  %v1562 = vpack.c.b16 %v1434, %v1434
  %v1563 = vpack.c.b16 %v1435, %v1435
  %v1564 = vpack.c.b16 %v1436, %v1436
  %v1565 = vpack.c.b16 %v1437, %v1437
  %v1566 = vpack.c.b16 %v1438, %v1438
  %v1567 = vpack.c.b16 %v1439, %v1439
  %v1568 = vpack.c.b16 %v1440, %v1440
  %v1569 = vpack.c.b16 %v1441, %v1441
  %v1570 = vpack.c.b16 %v1442, %v1442
  %v1571 = vpack.c.b16 %v1443, %v1443
  %v1572 = vpack.c.b16 %v1444, %v1444
  %v1573 = vpack.c.b16 %v1445, %v1445
  %v1574 = vpack.c.b16 %v1446, %v1446
  %v1575 = vpack.c.b16 %v1447, %v1447
  %v1576 = vpack.c.b16 %v1448, %v1448
  %v1577 = vpack.c.b16 %v1449, %v1449
  %v1578 = vpack.c.b16 %v1450, %v1450
  %v1579 = vpack.c.b16 %v1451, %v1451
  %v1580 = vpack.c.b16 %v1452, %v1452
  %v1581 = vpack.c.b16 %v1453, %v1453
  %v1582 = vpack.c.b16 %v1454, %v1454
  %v1583 = vpack.c.b16 %v1455, %v1455
  %v1584 = vpack.c.b16 %v1456, %v1456
  %v1585 = vpack.c.b16 %v1457, %v1457
  %v1586 = vpack.c.b16 %v1458, %v1458
  %v1587 = vpack.c.b16 %v1459, %v1459
  %v1588 = vpack.c.b16 %v1460, %v1460
  %v1589 = vpack.c.b16 %v1461, %v1461
  %v1590 = vpack.c.b16 %v1462, %v1462
  %v1591 = vpack.c.b16 %v1463, %v1463
  %v1592 = vpack.c.b16 %v1464, %v1464
  %v1593 = vpack.c.b16 %v1465, %v1465
  %v1594 = vpack.c.b16 %v1466, %v1466
  %v1595 = vpack.c.b16 %v1467, %v1467
  %v1596 = vpack.c.b16 %v1468, %v1468
  %v1597 = vpack.c.b16 %v1469, %v1469
  %v1598 = vpack.c.b16 %v1470, %v1470
  %v1599 = vpack.c.b16 %v1471, %v1471
  %v1600 = vpack.c.b16 %v1472, %v1472
  %v1601 = vpack.c.b16 %v1473, %v1473
  %v1602 = vpack.c.b16 %v1474, %v1474
  %v1603 = vpack.c.b16 %v1475, %v1475
  %v1604 = vpack.c.b16 %v1476, %v1476
  %v1605 = vpack.c.b16 %v1477, %v1477
  %v1606 = vpack.c.b16 %v1478, %v1478
  %v1607 = vpack.c.b16 %v1479, %v1479
  %vm1736 = vcmask 27648
  %1737 = vst.msk [vmem:[%s2] sm:$0xf] %vm1736, %v1480
  %1738 = vst.msk [vmem:[%s2 + $0x4] sm:$0xf] %vm1736, %v1481
  %1739 = vst.msk [vmem:[%s2 + $0x8] sm:$0xf] %vm1736, %v1482
  %1740 = vst.msk [vmem:[%s2 + $0xc] sm:$0xf] %vm1736, %v1483
  %1741 = vst.msk [vmem:[%s2 + $0x10] sm:$0xf] %vm1736, %v1484
  %1742 = vst.msk [vmem:[%s2 + $0x14] sm:$0xf] %vm1736, %v1485
  %1743 = vst.msk [vmem:[%s2 + $0x18] sm:$0xf] %vm1736, %v1486
  %1744 = vst.msk [vmem:[%s2 + $0x1c] sm:$0xf] %vm1736, %v1487
  %1745 = vst.msk [vmem:[%s2 + $0x20] sm:$0xf] %vm1736, %v1488
  %1746 = vst.msk [vmem:[%s2 + $0x24] sm:$0xf] %vm1736, %v1489
  %1747 = vst.msk [vmem:[%s2 + $0x28] sm:$0xf] %vm1736, %v1490
  %1748 = vst.msk [vmem:[%s2 + $0x2c] sm:$0xf] %vm1736, %v1491
  %1749 = vst.msk [vmem:[%s2 + $0x30] sm:$0xf] %vm1736, %v1492
  %1750 = vst.msk [vmem:[%s2 + $0x34] sm:$0xf] %vm1736, %v1493
  %1751 = vst.msk [vmem:[%s2 + $0x38] sm:$0xf] %vm1736, %v1494
  %1752 = vst.msk [vmem:[%s2 + $0x3c] sm:$0xf] %vm1736, %v1495
  %1753 = vst.msk [vmem:[%s2 + $0x40] sm:$0xf] %vm1736, %v1496
  %1754 = vst.msk [vmem:[%s2 + $0x44] sm:$0xf] %vm1736, %v1497
  %1755 = vst.msk [vmem:[%s2 + $0x48] sm:$0xf] %vm1736, %v1498
  %1756 = vst.msk [vmem:[%s2 + $0x4c] sm:$0xf] %vm1736, %v1499
  %1757 = vst.msk [vmem:[%s2 + $0x50] sm:$0xf] %vm1736, %v1500
  %1758 = vst.msk [vmem:[%s2 + $0x54] sm:$0xf] %vm1736, %v1501
  %1759 = vst.msk [vmem:[%s2 + $0x58] sm:$0xf] %vm1736, %v1502
  %1760 = vst.msk [vmem:[%s2 + $0x5c] sm:$0xf] %vm1736, %v1503
  %1761 = vst.msk [vmem:[%s2 + $0x60] sm:$0xf] %vm1736, %v1504
  %1762 = vst.msk [vmem:[%s2 + $0x64] sm:$0xf] %vm1736, %v1505
  %1763 = vst.msk [vmem:[%s2 + $0x68] sm:$0xf] %vm1736, %v1506
  %1764 = vst.msk [vmem:[%s2 + $0x6c] sm:$0xf] %vm1736, %v1507
  %1765 = vst.msk [vmem:[%s2 + $0x70] sm:$0xf] %vm1736, %v1508
  %1766 = vst.msk [vmem:[%s2 + $0x74] sm:$0xf] %vm1736, %v1509
  %1767 = vst.msk [vmem:[%s2 + $0x78] sm:$0xf] %vm1736, %v1510
  %1768 = vst.msk [vmem:[%s2 + $0x7c] sm:$0xf] %vm1736, %v1511
  %1769 = vst.msk [vmem:[%s2 + $0x80] sm:$0xf] %vm1736, %v1512
  %1770 = vst.msk [vmem:[%s2 + $0x84] sm:$0xf] %vm1736, %v1513
  %1771 = vst.msk [vmem:[%s2 + $0x88] sm:$0xf] %vm1736, %v1514
  %1772 = vst.msk [vmem:[%s2 + $0x8c] sm:$0xf] %vm1736, %v1515
  %1773 = vst.msk [vmem:[%s2 + $0x90] sm:$0xf] %vm1736, %v1516
  %1774 = vst.msk [vmem:[%s2 + $0x94] sm:$0xf] %vm1736, %v1517
  %1775 = vst.msk [vmem:[%s2 + $0x98] sm:$0xf] %vm1736, %v1518
  %1776 = vst.msk [vmem:[%s2 + $0x9c] sm:$0xf] %vm1736, %v1519
  %1777 = vst.msk [vmem:[%s2 + $0xa0] sm:$0xf] %vm1736, %v1520
  %1778 = vst.msk [vmem:[%s2 + $0xa4] sm:$0xf] %vm1736, %v1521
  %1779 = vst.msk [vmem:[%s2 + $0xa8] sm:$0xf] %vm1736, %v1522
  %1780 = vst.msk [vmem:[%s2 + $0xac] sm:$0xf] %vm1736, %v1523
  %1781 = vst.msk [vmem:[%s2 + $0xb0] sm:$0xf] %vm1736, %v1524
  %1782 = vst.msk [vmem:[%s2 + $0xb4] sm:$0xf] %vm1736, %v1525
  %1783 = vst.msk [vmem:[%s2 + $0xb8] sm:$0xf] %vm1736, %v1526
  %1784 = vst.msk [vmem:[%s2 + $0xbc] sm:$0xf] %vm1736, %v1527
  %1785 = vst.msk [vmem:[%s2 + $0xc0] sm:$0xf] %vm1736, %v1528
  %1786 = vst.msk [vmem:[%s2 + $0xc4] sm:$0xf] %vm1736, %v1529
  %1787 = vst.msk [vmem:[%s2 + $0xc8] sm:$0xf] %vm1736, %v1530
  %1788 = vst.msk [vmem:[%s2 + $0xcc] sm:$0xf] %vm1736, %v1531
  %1789 = vst.msk [vmem:[%s2 + $0xd0] sm:$0xf] %vm1736, %v1532
  %1790 = vst.msk [vmem:[%s2 + $0xd4] sm:$0xf] %vm1736, %v1533
  %1791 = vst.msk [vmem:[%s2 + $0xd8] sm:$0xf] %vm1736, %v1534
  %1792 = vst.msk [vmem:[%s2 + $0xdc] sm:$0xf] %vm1736, %v1535
  %1793 = vst.msk [vmem:[%s2 + $0xe0] sm:$0xf] %vm1736, %v1536
  %1794 = vst.msk [vmem:[%s2 + $0xe4] sm:$0xf] %vm1736, %v1537
  %1795 = vst.msk [vmem:[%s2 + $0xe8] sm:$0xf] %vm1736, %v1538
  %1796 = vst.msk [vmem:[%s2 + $0xec] sm:$0xf] %vm1736, %v1539
  %1797 = vst.msk [vmem:[%s2 + $0xf0] sm:$0xf] %vm1736, %v1540
  %1798 = vst.msk [vmem:[%s2 + $0xf4] sm:$0xf] %vm1736, %v1541
  %1799 = vst.msk [vmem:[%s2 + $0xf8] sm:$0xf] %vm1736, %v1542
  %1800 = vst.msk [vmem:[%s2 + $0xfc] sm:$0xf] %vm1736, %v1543
  %1801 = vst.msk [vmem:[%s2 + $0x100] sm:$0xf] %vm1736, %v1544
  %1802 = vst.msk [vmem:[%s2 + $0x104] sm:$0xf] %vm1736, %v1545
  %1803 = vst.msk [vmem:[%s2 + $0x108] sm:$0xf] %vm1736, %v1546
  %1804 = vst.msk [vmem:[%s2 + $0x10c] sm:$0xf] %vm1736, %v1547
  %1805 = vst.msk [vmem:[%s2 + $0x110] sm:$0xf] %vm1736, %v1548
  %1806 = vst.msk [vmem:[%s2 + $0x114] sm:$0xf] %vm1736, %v1549
  %1807 = vst.msk [vmem:[%s2 + $0x118] sm:$0xf] %vm1736, %v1550
  %1808 = vst.msk [vmem:[%s2 + $0x11c] sm:$0xf] %vm1736, %v1551
  %1809 = vst.msk [vmem:[%s2 + $0x120] sm:$0xf] %vm1736, %v1552
  %1810 = vst.msk [vmem:[%s2 + $0x124] sm:$0xf] %vm1736, %v1553
  %1811 = vst.msk [vmem:[%s2 + $0x128] sm:$0xf] %vm1736, %v1554
  %1812 = vst.msk [vmem:[%s2 + $0x12c] sm:$0xf] %vm1736, %v1555
  %1813 = vst.msk [vmem:[%s2 + $0x130] sm:$0xf] %vm1736, %v1556
  %1814 = vst.msk [vmem:[%s2 + $0x134] sm:$0xf] %vm1736, %v1557
  %1815 = vst.msk [vmem:[%s2 + $0x138] sm:$0xf] %vm1736, %v1558
  %1816 = vst.msk [vmem:[%s2 + $0x13c] sm:$0xf] %vm1736, %v1559
  %1817 = vst.msk [vmem:[%s2 + $0x140] sm:$0xf] %vm1736, %v1560
  %1818 = vst.msk [vmem:[%s2 + $0x144] sm:$0xf] %vm1736, %v1561
  %1819 = vst.msk [vmem:[%s2 + $0x148] sm:$0xf] %vm1736, %v1562
  %1820 = vst.msk [vmem:[%s2 + $0x14c] sm:$0xf] %vm1736, %v1563
  %1821 = vst.msk [vmem:[%s2 + $0x150] sm:$0xf] %vm1736, %v1564
  %1822 = vst.msk [vmem:[%s2 + $0x154] sm:$0xf] %vm1736, %v1565
  %1823 = vst.msk [vmem:[%s2 + $0x158] sm:$0xf] %vm1736, %v1566
  %1824 = vst.msk [vmem:[%s2 + $0x15c] sm:$0xf] %vm1736, %v1567
  %1825 = vst.msk [vmem:[%s2 + $0x160] sm:$0xf] %vm1736, %v1568
  %1826 = vst.msk [vmem:[%s2 + $0x164] sm:$0xf] %vm1736, %v1569
  %1827 = vst.msk [vmem:[%s2 + $0x168] sm:$0xf] %vm1736, %v1570
  %1828 = vst.msk [vmem:[%s2 + $0x16c] sm:$0xf] %vm1736, %v1571
  %1829 = vst.msk [vmem:[%s2 + $0x170] sm:$0xf] %vm1736, %v1572
  %1830 = vst.msk [vmem:[%s2 + $0x174] sm:$0xf] %vm1736, %v1573
  %1831 = vst.msk [vmem:[%s2 + $0x178] sm:$0xf] %vm1736, %v1574
  %1832 = vst.msk [vmem:[%s2 + $0x17c] sm:$0xf] %vm1736, %v1575
  %1833 = vst.msk [vmem:[%s2 + $0x180] sm:$0xf] %vm1736, %v1576
  %1834 = vst.msk [vmem:[%s2 + $0x184] sm:$0xf] %vm1736, %v1577
  %1835 = vst.msk [vmem:[%s2 + $0x188] sm:$0xf] %vm1736, %v1578
  %1836 = vst.msk [vmem:[%s2 + $0x18c] sm:$0xf] %vm1736, %v1579
  %1837 = vst.msk [vmem:[%s2 + $0x190] sm:$0xf] %vm1736, %v1580
  %1838 = vst.msk [vmem:[%s2 + $0x194] sm:$0xf] %vm1736, %v1581
  %1839 = vst.msk [vmem:[%s2 + $0x198] sm:$0xf] %vm1736, %v1582
  %1840 = vst.msk [vmem:[%s2 + $0x19c] sm:$0xf] %vm1736, %v1583
  %1841 = vst.msk [vmem:[%s2 + $0x1a0] sm:$0xf] %vm1736, %v1584
  %1842 = vst.msk [vmem:[%s2 + $0x1a4] sm:$0xf] %vm1736, %v1585
  %1843 = vst.msk [vmem:[%s2 + $0x1a8] sm:$0xf] %vm1736, %v1586
  %1844 = vst.msk [vmem:[%s2 + $0x1ac] sm:$0xf] %vm1736, %v1587
  %1845 = vst.msk [vmem:[%s2 + $0x1b0] sm:$0xf] %vm1736, %v1588
  %1846 = vst.msk [vmem:[%s2 + $0x1b4] sm:$0xf] %vm1736, %v1589
  %1847 = vst.msk [vmem:[%s2 + $0x1b8] sm:$0xf] %vm1736, %v1590
  %1848 = vst.msk [vmem:[%s2 + $0x1bc] sm:$0xf] %vm1736, %v1591
  %1849 = vst.msk [vmem:[%s2 + $0x1c0] sm:$0xf] %vm1736, %v1592
  %1850 = vst.msk [vmem:[%s2 + $0x1c4] sm:$0xf] %vm1736, %v1593
  %1851 = vst.msk [vmem:[%s2 + $0x1c8] sm:$0xf] %vm1736, %v1594
  %1852 = vst.msk [vmem:[%s2 + $0x1cc] sm:$0xf] %vm1736, %v1595
  %1853 = vst.msk [vmem:[%s2 + $0x1d0] sm:$0xf] %vm1736, %v1596
  %1854 = vst.msk [vmem:[%s2 + $0x1d4] sm:$0xf] %vm1736, %v1597
  %1855 = vst.msk [vmem:[%s2 + $0x1d8] sm:$0xf] %vm1736, %v1598
  %1856 = vst.msk [vmem:[%s2 + $0x1dc] sm:$0xf] %vm1736, %v1599
  %1857 = vst.msk [vmem:[%s2 + $0x1e0] sm:$0xf] %vm1736, %v1600
  %1858 = vst.msk [vmem:[%s2 + $0x1e4] sm:$0xf] %vm1736, %v1601
  %1859 = vst.msk [vmem:[%s2 + $0x1e8] sm:$0xf] %vm1736, %v1602
  %1860 = vst.msk [vmem:[%s2 + $0x1ec] sm:$0xf] %vm1736, %v1603
  %1861 = vst.msk [vmem:[%s2 + $0x1f0] sm:$0xf] %vm1736, %v1604
  %1862 = vst.msk [vmem:[%s2 + $0x1f4] sm:$0xf] %vm1736, %v1605
  %1863 = vst.msk [vmem:[%s2 + $0x1f8] sm:$0xf] %vm1736, %v1606
  %1864 = vst.msk [vmem:[%s2 + $0x1fc] sm:$0xf] %vm1736, %v1607
  %vm1865 = vcmask 31744
  %v1866 = vsel %vm1865, %v714, 0.0
  %v1867 = vsel %vm1865, %v717, 0.0
  %v1868 = vadd.f32 %v1866, %v1867
  %v1869 = vsel %vm1865, %v722, 0.0
  %v1870 = vadd.f32 %v1868, %v1869
  %v1871 = vsel %vm1865, %v725, 0.0
  %v1872 = vadd.f32 %v1870, %v1871
  %v1873 = vsel %vm1865, %v730, 0.0
  %v1874 = vadd.f32 %v1872, %v1873
  %v1875 = vsel %vm1865, %v733, 0.0
  %v1876 = vadd.f32 %v1874, %v1875
  %v1877 = vsel %vm1865, %v738, 0.0
  %v1878 = vadd.f32 %v1876, %v1877
  %v1879 = vsel %vm1865, %v741, 0.0
  %v1880 = vadd.f32 %v1878, %v1879
  %v1881 = vsel %vm1865, %v746, 0.0
  %v1882 = vadd.f32 %v1880, %v1881
  %v1883 = vsel %vm1865, %v749, 0.0
  %v1884 = vadd.f32 %v1882, %v1883
  %v1885 = vsel %vm1865, %v754, 0.0
  %v1886 = vadd.f32 %v1884, %v1885
  %v1887 = vsel %vm1865, %v757, 0.0
  %v1888 = vadd.f32 %v1886, %v1887
  %v1889 = vsel %vm1865, %v762, 0.0
  %v1890 = vadd.f32 %v1888, %v1889
  %v1891 = vsel %vm1865, %v765, 0.0
  %v1892 = vadd.f32 %v1890, %v1891
  %v1893 = vsel %vm1865, %v770, 0.0
  %v1894 = vadd.f32 %v1892, %v1893
  %v1895 = vsel %vm1865, %v773, 0.0
  %v1896 = vadd.f32 %v1894, %v1895
  %v1897 = vsel %vm1865, %v778, 0.0
  %v1898 = vadd.f32 %v1896, %v1897
  %v1899 = vsel %vm1865, %v781, 0.0
  %v1900 = vadd.f32 %v1898, %v1899
  %v1901 = vsel %vm1865, %v786, 0.0
  %v1902 = vadd.f32 %v1900, %v1901
  %v1903 = vsel %vm1865, %v789, 0.0
  %v1904 = vadd.f32 %v1902, %v1903
  %v1905 = vsel %vm1865, %v794, 0.0
  %v1906 = vadd.f32 %v1904, %v1905
  %v1907 = vsel %vm1865, %v797, 0.0
  %v1908 = vadd.f32 %v1906, %v1907
  %v1909 = vsel %vm1865, %v802, 0.0
  %v1910 = vadd.f32 %v1908, %v1909
  %v1911 = vsel %vm1865, %v805, 0.0
  %v1912 = vadd.f32 %v1910, %v1911
  %v1913 = vsel %vm1865, %v810, 0.0
  %v1914 = vadd.f32 %v1912, %v1913
  %v1915 = vsel %vm1865, %v813, 0.0
  %v1916 = vadd.f32 %v1914, %v1915
  %v1917 = vsel %vm1865, %v818, 0.0
  %v1918 = vadd.f32 %v1916, %v1917
  %v1919 = vsel %vm1865, %v821, 0.0
  %v1920 = vadd.f32 %v1918, %v1919
  %v1921 = vsel %vm1865, %v826, 0.0
  %v1922 = vadd.f32 %v1920, %v1921
  %v1923 = vsel %vm1865, %v829, 0.0
  %v1924 = vadd.f32 %v1922, %v1923
  %v1925 = vsel %vm1865, %v834, 0.0
  %v1926 = vadd.f32 %v1924, %v1925
  %v1927 = vsel %vm1865, %v837, 0.0
  %v1928 = vadd.f32 %v1926, %v1927
  %v1929 = vsel %vm1865, %v842, 0.0
  %v1930 = vadd.f32 %v1928, %v1929
  %v1931 = vsel %vm1865, %v845, 0.0
  %v1932 = vadd.f32 %v1930, %v1931
  %v1933 = vsel %vm1865, %v850, 0.0
  %v1934 = vadd.f32 %v1932, %v1933
  %v1935 = vsel %vm1865, %v853, 0.0
  %v1936 = vadd.f32 %v1934, %v1935
  %v1937 = vsel %vm1865, %v858, 0.0
  %v1938 = vadd.f32 %v1936, %v1937
  %v1939 = vsel %vm1865, %v861, 0.0
  %v1940 = vadd.f32 %v1938, %v1939
  %v1941 = vsel %vm1865, %v866, 0.0
  %v1942 = vadd.f32 %v1940, %v1941
  %v1943 = vsel %vm1865, %v869, 0.0
  %v1944 = vadd.f32 %v1942, %v1943
  %v1945 = vsel %vm1865, %v874, 0.0
  %v1946 = vadd.f32 %v1944, %v1945
  %v1947 = vsel %vm1865, %v877, 0.0
  %v1948 = vadd.f32 %v1946, %v1947
  %v1949 = vsel %vm1865, %v882, 0.0
  %v1950 = vadd.f32 %v1948, %v1949
  %v1951 = vsel %vm1865, %v885, 0.0
  %v1952 = vadd.f32 %v1950, %v1951
  %v1953 = vsel %vm1865, %v890, 0.0
  %v1954 = vadd.f32 %v1952, %v1953
  %v1955 = vsel %vm1865, %v893, 0.0
  %v1956 = vadd.f32 %v1954, %v1955
  %v1957 = vsel %vm1865, %v898, 0.0
  %v1958 = vadd.f32 %v1956, %v1957
  %v1959 = vsel %vm1865, %v901, 0.0
  %v1960 = vadd.f32 %v1958, %v1959
  %v1961 = vsel %vm1865, %v906, 0.0
  %v1962 = vadd.f32 %v1960, %v1961
  %v1963 = vsel %vm1865, %v909, 0.0
  %v1964 = vadd.f32 %v1962, %v1963
  %v1965 = vsel %vm1865, %v914, 0.0
  %v1966 = vadd.f32 %v1964, %v1965
  %v1967 = vsel %vm1865, %v917, 0.0
  %v1968 = vadd.f32 %v1966, %v1967
  %v1969 = vsel %vm1865, %v922, 0.0
  %v1970 = vadd.f32 %v1968, %v1969
  %v1971 = vsel %vm1865, %v925, 0.0
  %v1972 = vadd.f32 %v1970, %v1971
  %v1973 = vsel %vm1865, %v930, 0.0
  %v1974 = vadd.f32 %v1972, %v1973
  %v1975 = vsel %vm1865, %v933, 0.0
  %v1976 = vadd.f32 %v1974, %v1975
  %v1977 = vsel %vm1865, %v938, 0.0
  %v1978 = vadd.f32 %v1976, %v1977
  %v1979 = vsel %vm1865, %v941, 0.0
  %v1980 = vadd.f32 %v1978, %v1979
  %v1981 = vsel %vm1865, %v946, 0.0
  %v1982 = vadd.f32 %v1980, %v1981
  %v1983 = vsel %vm1865, %v949, 0.0
  %v1984 = vadd.f32 %v1982, %v1983
  %v1985 = vsel %vm1865, %v954, 0.0
  %v1986 = vadd.f32 %v1984, %v1985
  %v1987 = vsel %vm1865, %v957, 0.0
  %v1988 = vadd.f32 %v1986, %v1987
  %v1989 = vsel %vm1865, %v962, 0.0
  %v1990 = vadd.f32 %v1988, %v1989
  %v1991 = vsel %vm1865, %v965, 0.0
  %v1992 = vadd.f32 %v1990, %v1991
  %v1993 = vsel %vm1865, %v970, 0.0
  %v1994 = vadd.f32 %v1992, %v1993
  %v1995 = vsel %vm1865, %v973, 0.0
  %v1996 = vadd.f32 %v1994, %v1995
  %v1997 = vsel %vm1865, %v978, 0.0
  %v1998 = vadd.f32 %v1996, %v1997
  %v1999 = vsel %vm1865, %v981, 0.0
  %v2000 = vadd.f32 %v1998, %v1999
  %v2001 = vsel %vm1865, %v986, 0.0
  %v2002 = vadd.f32 %v2000, %v2001
  %v2003 = vsel %vm1865, %v989, 0.0
  %v2004 = vadd.f32 %v2002, %v2003
  %v2005 = vsel %vm1865, %v994, 0.0
  %v2006 = vadd.f32 %v2004, %v2005
  %v2007 = vsel %vm1865, %v997, 0.0
  %v2008 = vadd.f32 %v2006, %v2007
  %v2009 = vsel %vm1865, %v1002, 0.0
  %v2010 = vadd.f32 %v2008, %v2009
  %v2011 = vsel %vm1865, %v1005, 0.0
  %v2012 = vadd.f32 %v2010, %v2011
  %v2013 = vsel %vm1865, %v1010, 0.0
  %v2014 = vadd.f32 %v2012, %v2013
  %v2015 = vsel %vm1865, %v1013, 0.0
  %v2016 = vadd.f32 %v2014, %v2015
  %v2017 = vsel %vm1865, %v1018, 0.0
  %v2018 = vadd.f32 %v2016, %v2017
  %v2019 = vsel %vm1865, %v1021, 0.0
  %v2020 = vadd.f32 %v2018, %v2019
  %v2021 = vsel %vm1865, %v1026, 0.0
  %v2022 = vadd.f32 %v2020, %v2021
  %v2023 = vsel %vm1865, %v1029, 0.0
  %v2024 = vadd.f32 %v2022, %v2023
  %v2025 = vsel %vm1865, %v1034, 0.0
  %v2026 = vadd.f32 %v2024, %v2025
  %v2027 = vsel %vm1865, %v1037, 0.0
  %v2028 = vadd.f32 %v2026, %v2027
  %v2029 = vsel %vm1865, %v1042, 0.0
  %v2030 = vadd.f32 %v2028, %v2029
  %v2031 = vsel %vm1865, %v1045, 0.0
  %v2032 = vadd.f32 %v2030, %v2031
  %v2033 = vsel %vm1865, %v1050, 0.0
  %v2034 = vadd.f32 %v2032, %v2033
  %v2035 = vsel %vm1865, %v1053, 0.0
  %v2036 = vadd.f32 %v2034, %v2035
  %v2037 = vsel %vm1865, %v1058, 0.0
  %v2038 = vadd.f32 %v2036, %v2037
  %v2039 = vsel %vm1865, %v1061, 0.0
  %v2040 = vadd.f32 %v2038, %v2039
  %v2041 = vsel %vm1865, %v1066, 0.0
  %v2042 = vadd.f32 %v2040, %v2041
  %v2043 = vsel %vm1865, %v1069, 0.0
  %v2044 = vadd.f32 %v2042, %v2043
  %v2045 = vsel %vm1865, %v1074, 0.0
  %v2046 = vadd.f32 %v2044, %v2045
  %v2047 = vsel %vm1865, %v1077, 0.0
  %v2048 = vadd.f32 %v2046, %v2047
  %v2049 = vsel %vm1865, %v1082, 0.0
  %v2050 = vadd.f32 %v2048, %v2049
  %v2051 = vsel %vm1865, %v1085, 0.0
  %v2052 = vadd.f32 %v2050, %v2051
  %v2053 = vsel %vm1865, %v1090, 0.0
  %v2054 = vadd.f32 %v2052, %v2053
  %v2055 = vsel %vm1865, %v1093, 0.0
  %v2056 = vadd.f32 %v2054, %v2055
  %v2057 = vsel %vm1865, %v1098, 0.0
  %v2058 = vadd.f32 %v2056, %v2057
  %v2059 = vsel %vm1865, %v1101, 0.0
  %v2060 = vadd.f32 %v2058, %v2059
  %v2061 = vsel %vm1865, %v1106, 0.0
  %v2062 = vadd.f32 %v2060, %v2061
  %v2063 = vsel %vm1865, %v1109, 0.0
  %v2064 = vadd.f32 %v2062, %v2063
  %v2065 = vsel %vm1865, %v1114, 0.0
  %v2066 = vadd.f32 %v2064, %v2065
  %v2067 = vsel %vm1865, %v1117, 0.0
  %v2068 = vadd.f32 %v2066, %v2067
  %v2069 = vsel %vm1865, %v1122, 0.0
  %v2070 = vadd.f32 %v2068, %v2069
  %v2071 = vsel %vm1865, %v1125, 0.0
  %v2072 = vadd.f32 %v2070, %v2071
  %v2073 = vsel %vm1865, %v1130, 0.0
  %v2074 = vadd.f32 %v2072, %v2073
  %v2075 = vsel %vm1865, %v1133, 0.0
  %v2076 = vadd.f32 %v2074, %v2075
  %v2077 = vsel %vm1865, %v1138, 0.0
  %v2078 = vadd.f32 %v2076, %v2077
  %v2079 = vsel %vm1865, %v1141, 0.0
  %v2080 = vadd.f32 %v2078, %v2079
  %v2081 = vsel %vm1865, %v1146, 0.0
  %v2082 = vadd.f32 %v2080, %v2081
  %v2083 = vsel %vm1865, %v1149, 0.0
  %v2084 = vadd.f32 %v2082, %v2083
  %v2085 = vsel %vm1865, %v1154, 0.0
  %v2086 = vadd.f32 %v2084, %v2085
  %v2087 = vsel %vm1865, %v1157, 0.0
  %v2088 = vadd.f32 %v2086, %v2087
  %v2089 = vsel %vm1865, %v1162, 0.0
  %v2090 = vadd.f32 %v2088, %v2089
  %v2091 = vsel %vm1865, %v1165, 0.0
  %v2092 = vadd.f32 %v2090, %v2091
  %v2093 = vsel %vm1865, %v1170, 0.0
  %v2094 = vadd.f32 %v2092, %v2093
  %v2095 = vsel %vm1865, %v1173, 0.0
  %v2096 = vadd.f32 %v2094, %v2095
  %v2097 = vsel %vm1865, %v1178, 0.0
  %v2098 = vadd.f32 %v2096, %v2097
  %v2099 = vsel %vm1865, %v1181, 0.0
  %v2100 = vadd.f32 %v2098, %v2099
  %v2101 = vsel %vm1865, %v1186, 0.0
  %v2102 = vadd.f32 %v2100, %v2101
  %v2103 = vsel %vm1865, %v1189, 0.0
  %v2104 = vadd.f32 %v2102, %v2103
  %v2105 = vsel %vm1865, %v1194, 0.0
  %v2106 = vadd.f32 %v2104, %v2105
  %v2107 = vsel %vm1865, %v1197, 0.0
  %v2108 = vadd.f32 %v2106, %v2107
  %v2109 = vsel %vm1865, %v1202, 0.0
  %v2110 = vadd.f32 %v2108, %v2109
  %v2111 = vsel %vm1865, %v1205, 0.0
  %v2112 = vadd.f32 %v2110, %v2111
  %v2113 = vsel %vm1865, %v1210, 0.0
  %v2114 = vadd.f32 %v2112, %v2113
  %v2115 = vsel %vm1865, %v1213, 0.0
  %v2116 = vadd.f32 %v2114, %v2115
  %v2117 = vsel %vm1865, %v1218, 0.0
  %v2118 = vadd.f32 %v2116, %v2117
  %v2119 = vsel %vm1865, %v1221, 0.0
  %v2120 = vadd.f32 %v2118, %v2119
  %v2121 = vrot.slane %v2120, 4
  %v2122 = vadd.f32 %v2120, %v2121
  %v2123 = vrot.slane %v2122, 2
  %v2124 = vadd.f32 %v2122, %v2123
  %v2125 = vrot.slane %v2124, 1
  %v2126 = vadd.f32 %v2124, %v2125
  %v2127 = vmul.f32 %v714, %v714
  %v2128 = vmul.f32 %v717, %v717
  %v2129 = vmul.f32 %v722, %v722
  %v2130 = vmul.f32 %v725, %v725
  %v2131 = vmul.f32 %v730, %v730
  %v2132 = vmul.f32 %v733, %v733
  %v2133 = vmul.f32 %v738, %v738
  %v2134 = vmul.f32 %v741, %v741
  %v2135 = vmul.f32 %v746, %v746
  %v2136 = vmul.f32 %v749, %v749
  %v2137 = vmul.f32 %v754, %v754
  %v2138 = vmul.f32 %v757, %v757
  %v2139 = vmul.f32 %v762, %v762
  %v2140 = vmul.f32 %v765, %v765
  %v2141 = vmul.f32 %v770, %v770
  %v2142 = vmul.f32 %v773, %v773
  %v2143 = vmul.f32 %v778, %v778
  %v2144 = vmul.f32 %v781, %v781
  %v2145 = vmul.f32 %v786, %v786
  %v2146 = vmul.f32 %v789, %v789
  %v2147 = vmul.f32 %v794, %v794
  %v2148 = vmul.f32 %v797, %v797
  %v2149 = vmul.f32 %v802, %v802
  %v2150 = vmul.f32 %v805, %v805
  %v2151 = vmul.f32 %v810, %v810
  %v2152 = vmul.f32 %v813, %v813
  %v2153 = vmul.f32 %v818, %v818
  %v2154 = vmul.f32 %v821, %v821
  %v2155 = vmul.f32 %v826, %v826
  %v2156 = vmul.f32 %v829, %v829
  %v2157 = vmul.f32 %v834, %v834
  %v2158 = vmul.f32 %v837, %v837
  %v2159 = vmul.f32 %v842, %v842
  %v2160 = vmul.f32 %v845, %v845
  %v2161 = vmul.f32 %v850, %v850
  %v2162 = vmul.f32 %v853, %v853
  %v2163 = vmul.f32 %v858, %v858
  %v2164 = vmul.f32 %v861, %v861
  %v2165 = vmul.f32 %v866, %v866
  %v2166 = vmul.f32 %v869, %v869
  %v2167 = vmul.f32 %v874, %v874
  %v2168 = vmul.f32 %v877, %v877
  %v2169 = vmul.f32 %v882, %v882
  %v2170 = vmul.f32 %v885, %v885
  %v2171 = vmul.f32 %v890, %v890
  %v2172 = vmul.f32 %v893, %v893
  %v2173 = vmul.f32 %v898, %v898
  %v2174 = vmul.f32 %v901, %v901
  %v2175 = vmul.f32 %v906, %v906
  %v2176 = vmul.f32 %v909, %v909
  %v2177 = vmul.f32 %v914, %v914
  %v2178 = vmul.f32 %v917, %v917
  %v2179 = vmul.f32 %v922, %v922
  %v2180 = vmul.f32 %v925, %v925
  %v2181 = vmul.f32 %v930, %v930
  %v2182 = vmul.f32 %v933, %v933
  %v2183 = vmul.f32 %v938, %v938
  %v2184 = vmul.f32 %v941, %v941
  %v2185 = vmul.f32 %v946, %v946
  %v2186 = vmul.f32 %v949, %v949
  %v2187 = vmul.f32 %v954, %v954
  %v2188 = vmul.f32 %v957, %v957
  %v2189 = vmul.f32 %v962, %v962
  %v2190 = vmul.f32 %v965, %v965
  %v2191 = vmul.f32 %v970, %v970
  %v2192 = vmul.f32 %v973, %v973
  %v2193 = vmul.f32 %v978, %v978
  %v2194 = vmul.f32 %v981, %v981
  %v2195 = vmul.f32 %v986, %v986
  %v2196 = vmul.f32 %v989, %v989
  %v2197 = vmul.f32 %v994, %v994
  %v2198 = vmul.f32 %v997, %v997
  %v2199 = vmul.f32 %v1002, %v1002
  %v2200 = vmul.f32 %v1005, %v1005
  %v2201 = vmul.f32 %v1010, %v1010
  %v2202 = vmul.f32 %v1013, %v1013
  %v2203 = vmul.f32 %v1018, %v1018
  %v2204 = vmul.f32 %v1021, %v1021
  %v2205 = vmul.f32 %v1026, %v1026
  %v2206 = vmul.f32 %v1029, %v1029
  %v2207 = vmul.f32 %v1034, %v1034
  %v2208 = vmul.f32 %v1037, %v1037
  %v2209 = vmul.f32 %v1042, %v1042
  %v2210 = vmul.f32 %v1045, %v1045
  %v2211 = vmul.f32 %v1050, %v1050
  %v2212 = vmul.f32 %v1053, %v1053
  %v2213 = vmul.f32 %v1058, %v1058
  %v2214 = vmul.f32 %v1061, %v1061
  %v2215 = vmul.f32 %v1066, %v1066
  %v2216 = vmul.f32 %v1069, %v1069
  %v2217 = vmul.f32 %v1074, %v1074
  %v2218 = vmul.f32 %v1077, %v1077
  %v2219 = vmul.f32 %v1082, %v1082
  %v2220 = vmul.f32 %v1085, %v1085
  %v2221 = vmul.f32 %v1090, %v1090
  %v2222 = vmul.f32 %v1093, %v1093
  %v2223 = vmul.f32 %v1098, %v1098
  %v2224 = vmul.f32 %v1101, %v1101
  %v2225 = vmul.f32 %v1106, %v1106
  %v2226 = vmul.f32 %v1109, %v1109
  %v2227 = vmul.f32 %v1114, %v1114
  %v2228 = vmul.f32 %v1117, %v1117
  %v2229 = vmul.f32 %v1122, %v1122
  %v2230 = vmul.f32 %v1125, %v1125
  %v2231 = vmul.f32 %v1130, %v1130
  %v2232 = vmul.f32 %v1133, %v1133
  %v2233 = vmul.f32 %v1138, %v1138
  %v2234 = vmul.f32 %v1141, %v1141
  %v2235 = vmul.f32 %v1146, %v1146
  %v2236 = vmul.f32 %v1149, %v1149
  %v2237 = vmul.f32 %v1154, %v1154
  %v2238 = vmul.f32 %v1157, %v1157
  %v2239 = vmul.f32 %v1162, %v1162
  %v2240 = vmul.f32 %v1165, %v1165
  %v2241 = vmul.f32 %v1170, %v1170
  %v2242 = vmul.f32 %v1173, %v1173
  %v2243 = vmul.f32 %v1178, %v1178
  %v2244 = vmul.f32 %v1181, %v1181
  %v2245 = vmul.f32 %v1186, %v1186
  %v2246 = vmul.f32 %v1189, %v1189
  %v2247 = vmul.f32 %v1194, %v1194
  %v2248 = vmul.f32 %v1197, %v1197
  %v2249 = vmul.f32 %v1202, %v1202
  %v2250 = vmul.f32 %v1205, %v1205
  %v2251 = vmul.f32 %v1210, %v1210
  %v2252 = vmul.f32 %v1213, %v1213
  %v2253 = vmul.f32 %v1218, %v1218
  %v2254 = vmul.f32 %v1221, %v1221
  %v2255 = vsel %vm1865, %v2127, 0.0
  %v2256 = vsel %vm1865, %v2128, 0.0
  %v2257 = vadd.f32 %v2255, %v2256
  %v2258 = vsel %vm1865, %v2129, 0.0
  %v2259 = vadd.f32 %v2257, %v2258
  %v2260 = vsel %vm1865, %v2130, 0.0
  %v2261 = vadd.f32 %v2259, %v2260
  %v2262 = vsel %vm1865, %v2131, 0.0
  %v2263 = vadd.f32 %v2261, %v2262
  %v2264 = vsel %vm1865, %v2132, 0.0
  %v2265 = vadd.f32 %v2263, %v2264
  %v2266 = vsel %vm1865, %v2133, 0.0
  %v2267 = vadd.f32 %v2265, %v2266
  %v2268 = vsel %vm1865, %v2134, 0.0
  %v2269 = vadd.f32 %v2267, %v2268
  %v2270 = vsel %vm1865, %v2135, 0.0
  %v2271 = vadd.f32 %v2269, %v2270
  %v2272 = vsel %vm1865, %v2136, 0.0
  %v2273 = vadd.f32 %v2271, %v2272
  %v2274 = vsel %vm1865, %v2137, 0.0
  %v2275 = vadd.f32 %v2273, %v2274
  %v2276 = vsel %vm1865, %v2138, 0.0
  %v2277 = vadd.f32 %v2275, %v2276
  %v2278 = vsel %vm1865, %v2139, 0.0
  %v2279 = vadd.f32 %v2277, %v2278
  %v2280 = vsel %vm1865, %v2140, 0.0
  %v2281 = vadd.f32 %v2279, %v2280
  %v2282 = vsel %vm1865, %v2141, 0.0
  %v2283 = vadd.f32 %v2281, %v2282
  %v2284 = vsel %vm1865, %v2142, 0.0
  %v2285 = vadd.f32 %v2283, %v2284
  %v2286 = vsel %vm1865, %v2143, 0.0
  %v2287 = vadd.f32 %v2285, %v2286
  %v2288 = vsel %vm1865, %v2144, 0.0
  %v2289 = vadd.f32 %v2287, %v2288
  %v2290 = vsel %vm1865, %v2145, 0.0
  %v2291 = vadd.f32 %v2289, %v2290
  %v2292 = vsel %vm1865, %v2146, 0.0
  %v2293 = vadd.f32 %v2291, %v2292
  %v2294 = vsel %vm1865, %v2147, 0.0
  %v2295 = vadd.f32 %v2293, %v2294
  %v2296 = vsel %vm1865, %v2148, 0.0
  %v2297 = vadd.f32 %v2295, %v2296
  %v2298 = vsel %vm1865, %v2149, 0.0
  %v2299 = vadd.f32 %v2297, %v2298
  %v2300 = vsel %vm1865, %v2150, 0.0
  %v2301 = vadd.f32 %v2299, %v2300
  %v2302 = vsel %vm1865, %v2151, 0.0
  %v2303 = vadd.f32 %v2301, %v2302
  %v2304 = vsel %vm1865, %v2152, 0.0
  %v2305 = vadd.f32 %v2303, %v2304
  %v2306 = vsel %vm1865, %v2153, 0.0
  %v2307 = vadd.f32 %v2305, %v2306
  %v2308 = vsel %vm1865, %v2154, 0.0
  %v2309 = vadd.f32 %v2307, %v2308
  %v2310 = vsel %vm1865, %v2155, 0.0
  %v2311 = vadd.f32 %v2309, %v2310
  %v2312 = vsel %vm1865, %v2156, 0.0
  %v2313 = vadd.f32 %v2311, %v2312
  %v2314 = vsel %vm1865, %v2157, 0.0
  %v2315 = vadd.f32 %v2313, %v2314
  %v2316 = vsel %vm1865, %v2158, 0.0
  %v2317 = vadd.f32 %v2315, %v2316
  %v2318 = vsel %vm1865, %v2159, 0.0
  %v2319 = vadd.f32 %v2317, %v2318
  %v2320 = vsel %vm1865, %v2160, 0.0
  %v2321 = vadd.f32 %v2319, %v2320
  %v2322 = vsel %vm1865, %v2161, 0.0
  %v2323 = vadd.f32 %v2321, %v2322
  %v2324 = vsel %vm1865, %v2162, 0.0
  %v2325 = vadd.f32 %v2323, %v2324
  %v2326 = vsel %vm1865, %v2163, 0.0
  %v2327 = vadd.f32 %v2325, %v2326
  %v2328 = vsel %vm1865, %v2164, 0.0
  %v2329 = vadd.f32 %v2327, %v2328
  %v2330 = vsel %vm1865, %v2165, 0.0
  %v2331 = vadd.f32 %v2329, %v2330
  %v2332 = vsel %vm1865, %v2166, 0.0
  %v2333 = vadd.f32 %v2331, %v2332
  %v2334 = vsel %vm1865, %v2167, 0.0
  %v2335 = vadd.f32 %v2333, %v2334
  %v2336 = vsel %vm1865, %v2168, 0.0
  %v2337 = vadd.f32 %v2335, %v2336
  %v2338 = vsel %vm1865, %v2169, 0.0
  %v2339 = vadd.f32 %v2337, %v2338
  %v2340 = vsel %vm1865, %v2170, 0.0
  %v2341 = vadd.f32 %v2339, %v2340
  %v2342 = vsel %vm1865, %v2171, 0.0
  %v2343 = vadd.f32 %v2341, %v2342
  %v2344 = vsel %vm1865, %v2172, 0.0
  %v2345 = vadd.f32 %v2343, %v2344
  %v2346 = vsel %vm1865, %v2173, 0.0
  %v2347 = vadd.f32 %v2345, %v2346
  %v2348 = vsel %vm1865, %v2174, 0.0
  %v2349 = vadd.f32 %v2347, %v2348
  %v2350 = vsel %vm1865, %v2175, 0.0
  %v2351 = vadd.f32 %v2349, %v2350
  %v2352 = vsel %vm1865, %v2176, 0.0
  %v2353 = vadd.f32 %v2351, %v2352
  %v2354 = vsel %vm1865, %v2177, 0.0
  %v2355 = vadd.f32 %v2353, %v2354
  %v2356 = vsel %vm1865, %v2178, 0.0
  %v2357 = vadd.f32 %v2355, %v2356
  %v2358 = vsel %vm1865, %v2179, 0.0
  %v2359 = vadd.f32 %v2357, %v2358
  %v2360 = vsel %vm1865, %v2180, 0.0
  %v2361 = vadd.f32 %v2359, %v2360
  %v2362 = vsel %vm1865, %v2181, 0.0
  %v2363 = vadd.f32 %v2361, %v2362
  %v2364 = vsel %vm1865, %v2182, 0.0
  %v2365 = vadd.f32 %v2363, %v2364
  %v2366 = vsel %vm1865, %v2183, 0.0
  %v2367 = vadd.f32 %v2365, %v2366
  %v2368 = vsel %vm1865, %v2184, 0.0
  %v2369 = vadd.f32 %v2367, %v2368
  %v2370 = vsel %vm1865, %v2185, 0.0
  %v2371 = vadd.f32 %v2369, %v2370
  %v2372 = vsel %vm1865, %v2186, 0.0
  %v2373 = vadd.f32 %v2371, %v2372
  %v2374 = vsel %vm1865, %v2187, 0.0
  %v2375 = vadd.f32 %v2373, %v2374
  %v2376 = vsel %vm1865, %v2188, 0.0
  %v2377 = vadd.f32 %v2375, %v2376
  %v2378 = vsel %vm1865, %v2189, 0.0
  %v2379 = vadd.f32 %v2377, %v2378
  %v2380 = vsel %vm1865, %v2190, 0.0
  %v2381 = vadd.f32 %v2379, %v2380
  %v2382 = vsel %vm1865, %v2191, 0.0
  %v2383 = vadd.f32 %v2381, %v2382
  %v2384 = vsel %vm1865, %v2192, 0.0
  %v2385 = vadd.f32 %v2383, %v2384
  %v2386 = vsel %vm1865, %v2193, 0.0
  %v2387 = vadd.f32 %v2385, %v2386
  %v2388 = vsel %vm1865, %v2194, 0.0
  %v2389 = vadd.f32 %v2387, %v2388
  %v2390 = vsel %vm1865, %v2195, 0.0
  %v2391 = vadd.f32 %v2389, %v2390
  %v2392 = vsel %vm1865, %v2196, 0.0
  %v2393 = vadd.f32 %v2391, %v2392
  %v2394 = vsel %vm1865, %v2197, 0.0
  %v2395 = vadd.f32 %v2393, %v2394
  %v2396 = vsel %vm1865, %v2198, 0.0
  %v2397 = vadd.f32 %v2395, %v2396
  %v2398 = vsel %vm1865, %v2199, 0.0
  %v2399 = vadd.f32 %v2397, %v2398
  %v2400 = vsel %vm1865, %v2200, 0.0
  %v2401 = vadd.f32 %v2399, %v2400
  %v2402 = vsel %vm1865, %v2201, 0.0
  %v2403 = vadd.f32 %v2401, %v2402
  %v2404 = vsel %vm1865, %v2202, 0.0
  %v2405 = vadd.f32 %v2403, %v2404
  %v2406 = vsel %vm1865, %v2203, 0.0
  %v2407 = vadd.f32 %v2405, %v2406
  %v2408 = vsel %vm1865, %v2204, 0.0
  %v2409 = vadd.f32 %v2407, %v2408
  %v2410 = vsel %vm1865, %v2205, 0.0
  %v2411 = vadd.f32 %v2409, %v2410
  %v2412 = vsel %vm1865, %v2206, 0.0
  %v2413 = vadd.f32 %v2411, %v2412
  %v2414 = vsel %vm1865, %v2207, 0.0
  %v2415 = vadd.f32 %v2413, %v2414
  %v2416 = vsel %vm1865, %v2208, 0.0
  %v2417 = vadd.f32 %v2415, %v2416
  %v2418 = vsel %vm1865, %v2209, 0.0
  %v2419 = vadd.f32 %v2417, %v2418
  %v2420 = vsel %vm1865, %v2210, 0.0
  %v2421 = vadd.f32 %v2419, %v2420
  %v2422 = vsel %vm1865, %v2211, 0.0
  %v2423 = vadd.f32 %v2421, %v2422
  %v2424 = vsel %vm1865, %v2212, 0.0
  %v2425 = vadd.f32 %v2423, %v2424
  %v2426 = vsel %vm1865, %v2213, 0.0
  %v2427 = vadd.f32 %v2425, %v2426
  %v2428 = vsel %vm1865, %v2214, 0.0
  %v2429 = vadd.f32 %v2427, %v2428
  %v2430 = vsel %vm1865, %v2215, 0.0
  %v2431 = vadd.f32 %v2429, %v2430
  %v2432 = vsel %vm1865, %v2216, 0.0
  %v2433 = vadd.f32 %v2431, %v2432
  %v2434 = vsel %vm1865, %v2217, 0.0
  %v2435 = vadd.f32 %v2433, %v2434
  %v2436 = vsel %vm1865, %v2218, 0.0
  %v2437 = vadd.f32 %v2435, %v2436
  %v2438 = vsel %vm1865, %v2219, 0.0
  %v2439 = vadd.f32 %v2437, %v2438
  %v2440 = vsel %vm1865, %v2220, 0.0
  %v2441 = vadd.f32 %v2439, %v2440
  %v2442 = vsel %vm1865, %v2221, 0.0
  %v2443 = vadd.f32 %v2441, %v2442
  %v2444 = vsel %vm1865, %v2222, 0.0
  %v2445 = vadd.f32 %v2443, %v2444
  %v2446 = vsel %vm1865, %v2223, 0.0
  %v2447 = vadd.f32 %v2445, %v2446
  %v2448 = vsel %vm1865, %v2224, 0.0
  %v2449 = vadd.f32 %v2447, %v2448
  %v2450 = vsel %vm1865, %v2225, 0.0
  %v2451 = vadd.f32 %v2449, %v2450
  %v2452 = vsel %vm1865, %v2226, 0.0
  %v2453 = vadd.f32 %v2451, %v2452
  %v2454 = vsel %vm1865, %v2227, 0.0
  %v2455 = vadd.f32 %v2453, %v2454
  %v2456 = vsel %vm1865, %v2228, 0.0
  %v2457 = vadd.f32 %v2455, %v2456
  %v2458 = vsel %vm1865, %v2229, 0.0
  %v2459 = vadd.f32 %v2457, %v2458
  %v2460 = vsel %vm1865, %v2230, 0.0
  %v2461 = vadd.f32 %v2459, %v2460
  %v2462 = vsel %vm1865, %v2231, 0.0
  %v2463 = vadd.f32 %v2461, %v2462
  %v2464 = vsel %vm1865, %v2232, 0.0
  %v2465 = vadd.f32 %v2463, %v2464
  %v2466 = vsel %vm1865, %v2233, 0.0
  %v2467 = vadd.f32 %v2465, %v2466
  %v2468 = vsel %vm1865, %v2234, 0.0
  %v2469 = vadd.f32 %v2467, %v2468
  %v2470 = vsel %vm1865, %v2235, 0.0
  %v2471 = vadd.f32 %v2469, %v2470
  %v2472 = vsel %vm1865, %v2236, 0.0
  %v2473 = vadd.f32 %v2471, %v2472
  %v2474 = vsel %vm1865, %v2237, 0.0
  %v2475 = vadd.f32 %v2473, %v2474
  %v2476 = vsel %vm1865, %v2238, 0.0
  %v2477 = vadd.f32 %v2475, %v2476
  %v2478 = vsel %vm1865, %v2239, 0.0
  %v2479 = vadd.f32 %v2477, %v2478
  %v2480 = vsel %vm1865, %v2240, 0.0
  %v2481 = vadd.f32 %v2479, %v2480
  %v2482 = vsel %vm1865, %v2241, 0.0
  %v2483 = vadd.f32 %v2481, %v2482
  %v2484 = vsel %vm1865, %v2242, 0.0
  %v2485 = vadd.f32 %v2483, %v2484
  %v2486 = vsel %vm1865, %v2243, 0.0
  %v2487 = vadd.f32 %v2485, %v2486
  %v2488 = vsel %vm1865, %v2244, 0.0
  %v2489 = vadd.f32 %v2487, %v2488
  %v2490 = vsel %vm1865, %v2245, 0.0
  %v2491 = vadd.f32 %v2489, %v2490
  %v2492 = vsel %vm1865, %v2246, 0.0
  %v2493 = vadd.f32 %v2491, %v2492
  %v2494 = vsel %vm1865, %v2247, 0.0
  %v2495 = vadd.f32 %v2493, %v2494
  %v2496 = vsel %vm1865, %v2248, 0.0
  %v2497 = vadd.f32 %v2495, %v2496
  %v2498 = vsel %vm1865, %v2249, 0.0
  %v2499 = vadd.f32 %v2497, %v2498
  %v2500 = vsel %vm1865, %v2250, 0.0
  %v2501 = vadd.f32 %v2499, %v2500
  %v2502 = vsel %vm1865, %v2251, 0.0
  %v2503 = vadd.f32 %v2501, %v2502
  %v2504 = vsel %vm1865, %v2252, 0.0
  %v2505 = vadd.f32 %v2503, %v2504
  %v2506 = vsel %vm1865, %v2253, 0.0
  %v2507 = vadd.f32 %v2505, %v2506
  %v2508 = vsel %vm1865, %v2254, 0.0
  %v2509 = vadd.f32 %v2507, %v2508
  %v2510 = vrot.slane %v2509, 4
  %v2511 = vadd.f32 %v2509, %v2510
  %v2512 = vrot.slane %v2511, 2
  %v2513 = vadd.f32 %v2511, %v2512
  %v2514 = vrot.slane %v2513, 1
  %v2515 = vadd.f32 %v2513, %v2514
  %vm2516 = vcmask 1040384
  %v2517 = vsel %vm2516, %v2126, %v2515
  %vm2518 = vcmask 25600
  %2519 = vst.msk [vmem:[%s3] sm:$0x3] %vm2518, %v2517
  // Predicated region
  $region10: #{res_block_2d.4} parent=0 // pred_check
    _
  $region11: #{res_block_2d.4} parent=0 // pred_check_branch
    %2521 = sbr.rel (0) target = $region13
  $region12: #{res_block_2d.4} parent=0 // pred_region
    _
  $region13: #{res_block_2d.4} parent=0 // pred_fallthru
    _
  // Predicated region
  $region14: #{res_block_2d.4} parent=0 // pred_check
    _
  $region15: #{res_block_2d.4} parent=0 // pred_check_branch
    %2523 = sbr.rel (0) target = $region17
  $region16: #{res_block_2d.4} parent=0 // pred_region
    _
  $region17: #{res_block_2d.4} parent=0 // pred_fallthru
    _
  // Predicated region
  $region18: #{res_block_2d.4} parent=0 // pred_check
    _
  $region19: #{res_block_2d.4} parent=0 // pred_check_branch
    %2525 = sbr.rel (0) target = $region21
  $region20: #{res_block_2d.4} parent=0 // pred_region
    _
  $region21: #{res_block_2d.4} parent=0 // pred_fallthru
    _
  // Predicated region
  $region22: #{res_block_2d.4} parent=0 // pred_check
    _
  $region23: #{res_block_2d.4} parent=0 // pred_check_branch
    %2527 = sbr.rel (0) target = $region25
  $region24: #{res_block_2d.4} parent=0 // pred_region
    _
  $region25: #{res_block_2d.4} parent=0 // pred_fallthru
    _

// kernel: res_block_2d.7
$region0: #{res_block_2d.7}
  #allocation0 [shape = 'u32[]', space=smem, size = 0x4, offset = 0x4, fixed_abs, tag = 'smem constant byte address 0x4 - core index']
  #allocation1 [shape = 'u32[144,128]{1,0:T(1,128)}', space=vmem, size = 0x12000, scoped, tag = 'internal scratch']
  %s0 = inlined_call_operand.vmem [shape: bf16[1024,8], index: 0, kind: input, shape index: {}]
  %s1 = inlined_call_operand.vmem [shape: f32[1,8], index: 1, kind: input, shape index: {}]
  %s2 = inlined_call_operand.vmem [shape: f32[1,8], index: 2, kind: input, shape index: {}]
  %s3 = inlined_call_operand.vmem [shape: f32[1024,4], index: 3, kind: input, shape index: {}]
  %s4 = inlined_call_operand.vmem [shape: f32[1024,8], index: 4, kind: output, shape index: {}]
  %s5 = sld [smem:[#allocation0]]
  $region26: #{res_block_2d.7} parent=0
    _
  %s7 = ssub.s32 1, %s5
  %s8 = scalar_select 0, %s7, %s5
  // Predicated region
  $region2: #{res_block_2d.7} parent=0 // pred_check
    _
  $region3: #{res_block_2d.7} parent=0 // pred_check_branch
    %10 = sbr.rel (0) target = $region5
  $region4: #{res_block_2d.7} parent=0 // pred_region
    _
  $region5: #{res_block_2d.7} parent=0 // pred_fallthru
    _
  // Predicated region
  $region6: #{res_block_2d.7} parent=0 // pred_check
    _
  $region7: #{res_block_2d.7} parent=0 // pred_check_branch
    %12 = sbr.rel (0) target = $region9
  $region8: #{res_block_2d.7} parent=0 // pred_region
    _
  $region9: #{res_block_2d.7} parent=0 // pred_fallthru
    _
  // Predicated region
  $region10: #{res_block_2d.7} parent=0 // pred_check
    _
  $region11: #{res_block_2d.7} parent=0 // pred_check_branch
    %14 = sbr.rel (0) target = $region13
  $region12: #{res_block_2d.7} parent=0 // pred_region
    _
  $region13: #{res_block_2d.7} parent=0 // pred_fallthru
    _
  // Predicated region
  $region14: #{res_block_2d.7} parent=0 // pred_check
    _
  $region15: #{res_block_2d.7} parent=0 // pred_check_branch
    %16 = sbr.rel (0) target = $region17
  $region16: #{res_block_2d.7} parent=0 // pred_region
    _
  $region17: #{res_block_2d.7} parent=0 // pred_fallthru
    _
  %v17 = vld [vmem:[%s0] sm:$0xf]
  %v18 = vld [vmem:[%s0 + $0x4] sm:$0xf]
  %v19 = vld [vmem:[%s0 + $0x8] sm:$0xf]
  %v20 = vld [vmem:[%s0 + $0xc] sm:$0xf]
  %v21 = vld [vmem:[%s0 + $0x10] sm:$0xf]
  %v22 = vld [vmem:[%s0 + $0x14] sm:$0xf]
  %v23 = vld [vmem:[%s0 + $0x18] sm:$0xf]
  %v24 = vld [vmem:[%s0 + $0x1c] sm:$0xf]
  %v25 = vld [vmem:[%s0 + $0x20] sm:$0xf]
  %v26 = vld [vmem:[%s0 + $0x24] sm:$0xf]
  %v27 = vld [vmem:[%s0 + $0x28] sm:$0xf]
  %v28 = vld [vmem:[%s0 + $0x2c] sm:$0xf]
  %v29 = vld [vmem:[%s0 + $0x30] sm:$0xf]
  %v30 = vld [vmem:[%s0 + $0x34] sm:$0xf]
  %v31 = vld [vmem:[%s0 + $0x38] sm:$0xf]
  %v32 = vld [vmem:[%s0 + $0x3c] sm:$0xf]
  %v33 = vld [vmem:[%s0 + $0x40] sm:$0xf]
  %v34 = vld [vmem:[%s0 + $0x44] sm:$0xf]
  %v35 = vld [vmem:[%s0 + $0x48] sm:$0xf]
  %v36 = vld [vmem:[%s0 + $0x4c] sm:$0xf]
  %v37 = vld [vmem:[%s0 + $0x50] sm:$0xf]
  %v38 = vld [vmem:[%s0 + $0x54] sm:$0xf]
  %v39 = vld [vmem:[%s0 + $0x58] sm:$0xf]
  %v40 = vld [vmem:[%s0 + $0x5c] sm:$0xf]
  %v41 = vld [vmem:[%s0 + $0x60] sm:$0xf]
  %v42 = vld [vmem:[%s0 + $0x64] sm:$0xf]
  %v43 = vld [vmem:[%s0 + $0x68] sm:$0xf]
  %v44 = vld [vmem:[%s0 + $0x6c] sm:$0xf]
  %v45 = vld [vmem:[%s0 + $0x70] sm:$0xf]
  %v46 = vld [vmem:[%s0 + $0x74] sm:$0xf]
  %v47 = vld [vmem:[%s0 + $0x78] sm:$0xf]
  %v48 = vld [vmem:[%s0 + $0x7c] sm:$0xf]
  %v49 = vld [vmem:[%s0 + $0x80] sm:$0xf]
  %v50 = vld [vmem:[%s0 + $0x84] sm:$0xf]
  %v51 = vld [vmem:[%s0 + $0x88] sm:$0xf]
  %v52 = vld [vmem:[%s0 + $0x8c] sm:$0xf]
  %v53 = vld [vmem:[%s0 + $0x90] sm:$0xf]
  %v54 = vld [vmem:[%s0 + $0x94] sm:$0xf]
  %v55 = vld [vmem:[%s0 + $0x98] sm:$0xf]
  %v56 = vld [vmem:[%s0 + $0x9c] sm:$0xf]
  %v57 = vld [vmem:[%s0 + $0xa0] sm:$0xf]
  %v58 = vld [vmem:[%s0 + $0xa4] sm:$0xf]
  %v59 = vld [vmem:[%s0 + $0xa8] sm:$0xf]
  %v60 = vld [vmem:[%s0 + $0xac] sm:$0xf]
  %v61 = vld [vmem:[%s0 + $0xb0] sm:$0xf]
  %v62 = vld [vmem:[%s0 + $0xb4] sm:$0xf]
  %v63 = vld [vmem:[%s0 + $0xb8] sm:$0xf]
  %v64 = vld [vmem:[%s0 + $0xbc] sm:$0xf]
  %v65 = vld [vmem:[%s0 + $0xc0] sm:$0xf]
  %v66 = vld [vmem:[%s0 + $0xc4] sm:$0xf]
  %v67 = vld [vmem:[%s0 + $0xc8] sm:$0xf]
  %v68 = vld [vmem:[%s0 + $0xcc] sm:$0xf]
  %v69 = vld [vmem:[%s0 + $0xd0] sm:$0xf]
  %v70 = vld [vmem:[%s0 + $0xd4] sm:$0xf]
  %v71 = vld [vmem:[%s0 + $0xd8] sm:$0xf]
  %v72 = vld [vmem:[%s0 + $0xdc] sm:$0xf]
  %v73 = vld [vmem:[%s0 + $0xe0] sm:$0xf]
  %v74 = vld [vmem:[%s0 + $0xe4] sm:$0xf]
  %v75 = vld [vmem:[%s0 + $0xe8] sm:$0xf]
  %v76 = vld [vmem:[%s0 + $0xec] sm:$0xf]
  %v77 = vld [vmem:[%s0 + $0xf0] sm:$0xf]
  %v78 = vld [vmem:[%s0 + $0xf4] sm:$0xf]
  %v79 = vld [vmem:[%s0 + $0xf8] sm:$0xf]
  %v80 = vld [vmem:[%s0 + $0xfc] sm:$0xf]
  %v81 = vld [vmem:[%s0 + $0x100] sm:$0xf]
  %v82 = vld [vmem:[%s0 + $0x104] sm:$0xf]
  %v83 = vld [vmem:[%s0 + $0x108] sm:$0xf]
  %v84 = vld [vmem:[%s0 + $0x10c] sm:$0xf]
  %v85 = vld [vmem:[%s0 + $0x110] sm:$0xf]
  %v86 = vld [vmem:[%s0 + $0x114] sm:$0xf]
  %v87 = vld [vmem:[%s0 + $0x118] sm:$0xf]
  %v88 = vld [vmem:[%s0 + $0x11c] sm:$0xf]
  %v89 = vld [vmem:[%s0 + $0x120] sm:$0xf]
  %v90 = vld [vmem:[%s0 + $0x124] sm:$0xf]
  %v91 = vld [vmem:[%s0 + $0x128] sm:$0xf]
  %v92 = vld [vmem:[%s0 + $0x12c] sm:$0xf]
  %v93 = vld [vmem:[%s0 + $0x130] sm:$0xf]
  %v94 = vld [vmem:[%s0 + $0x134] sm:$0xf]
  %v95 = vld [vmem:[%s0 + $0x138] sm:$0xf]
  %v96 = vld [vmem:[%s0 + $0x13c] sm:$0xf]
  %v97 = vld [vmem:[%s0 + $0x140] sm:$0xf]
  %v98 = vld [vmem:[%s0 + $0x144] sm:$0xf]
  %v99 = vld [vmem:[%s0 + $0x148] sm:$0xf]
  %v100 = vld [vmem:[%s0 + $0x14c] sm:$0xf]
  %v101 = vld [vmem:[%s0 + $0x150] sm:$0xf]
  %v102 = vld [vmem:[%s0 + $0x154] sm:$0xf]
  %v103 = vld [vmem:[%s0 + $0x158] sm:$0xf]
  %v104 = vld [vmem:[%s0 + $0x15c] sm:$0xf]
  %v105 = vld [vmem:[%s0 + $0x160] sm:$0xf]
  %v106 = vld [vmem:[%s0 + $0x164] sm:$0xf]
  %v107 = vld [vmem:[%s0 + $0x168] sm:$0xf]
  %v108 = vld [vmem:[%s0 + $0x16c] sm:$0xf]
  %v109 = vld [vmem:[%s0 + $0x170] sm:$0xf]
  %v110 = vld [vmem:[%s0 + $0x174] sm:$0xf]
  %v111 = vld [vmem:[%s0 + $0x178] sm:$0xf]
  %v112 = vld [vmem:[%s0 + $0x17c] sm:$0xf]
  %v113 = vld [vmem:[%s0 + $0x180] sm:$0xf]
  %v114 = vld [vmem:[%s0 + $0x184] sm:$0xf]
  %v115 = vld [vmem:[%s0 + $0x188] sm:$0xf]
  %v116 = vld [vmem:[%s0 + $0x18c] sm:$0xf]
  %v117 = vld [vmem:[%s0 + $0x190] sm:$0xf]
  %v118 = vld [vmem:[%s0 + $0x194] sm:$0xf]
  %v119 = vld [vmem:[%s0 + $0x198] sm:$0xf]
  %v120 = vld [vmem:[%s0 + $0x19c] sm:$0xf]
  %v121 = vld [vmem:[%s0 + $0x1a0] sm:$0xf]
  %v122 = vld [vmem:[%s0 + $0x1a4] sm:$0xf]
  %v123 = vld [vmem:[%s0 + $0x1a8] sm:$0xf]
  %v124 = vld [vmem:[%s0 + $0x1ac] sm:$0xf]
  %v125 = vld [vmem:[%s0 + $0x1b0] sm:$0xf]
  %v126 = vld [vmem:[%s0 + $0x1b4] sm:$0xf]
  %v127 = vld [vmem:[%s0 + $0x1b8] sm:$0xf]
  %v128 = vld [vmem:[%s0 + $0x1bc] sm:$0xf]
  %v129 = vld [vmem:[%s0 + $0x1c0] sm:$0xf]
  %v130 = vld [vmem:[%s0 + $0x1c4] sm:$0xf]
  %v131 = vld [vmem:[%s0 + $0x1c8] sm:$0xf]
  %v132 = vld [vmem:[%s0 + $0x1cc] sm:$0xf]
  %v133 = vld [vmem:[%s0 + $0x1d0] sm:$0xf]
  %v134 = vld [vmem:[%s0 + $0x1d4] sm:$0xf]
  %v135 = vld [vmem:[%s0 + $0x1d8] sm:$0xf]
  %v136 = vld [vmem:[%s0 + $0x1dc] sm:$0xf]
  %v137 = vld [vmem:[%s0 + $0x1e0] sm:$0xf]
  %v138 = vld [vmem:[%s0 + $0x1e4] sm:$0xf]
  %v139 = vld [vmem:[%s0 + $0x1e8] sm:$0xf]
  %v140 = vld [vmem:[%s0 + $0x1ec] sm:$0xf]
  %v141 = vld [vmem:[%s0 + $0x1f0] sm:$0xf]
  %v142 = vld [vmem:[%s0 + $0x1f4] sm:$0xf]
  %v143 = vld [vmem:[%s0 + $0x1f8] sm:$0xf]
  %v144 = vld [vmem:[%s0 + $0x1fc] sm:$0xf]
  %v145 = vunpack.c.l.bf16 %v17
  %v146 = vunpack.c.l.bf16 %v18
  %v147 = vunpack.c.l.bf16 %v19
  %v148 = vunpack.c.l.bf16 %v20
  %v149 = vunpack.c.l.bf16 %v21
  %v150 = vunpack.c.l.bf16 %v22
  %v151 = vunpack.c.l.bf16 %v23
  %v152 = vunpack.c.l.bf16 %v24
  %v153 = vunpack.c.l.bf16 %v25
  %v154 = vunpack.c.l.bf16 %v26
  %v155 = vunpack.c.l.bf16 %v27
  %v156 = vunpack.c.l.bf16 %v28
  %v157 = vunpack.c.l.bf16 %v29
  %v158 = vunpack.c.l.bf16 %v30
  %v159 = vunpack.c.l.bf16 %v31
  %v160 = vunpack.c.l.bf16 %v32
  %v161 = vunpack.c.l.bf16 %v33
  %v162 = vunpack.c.l.bf16 %v34
  %v163 = vunpack.c.l.bf16 %v35
  %v164 = vunpack.c.l.bf16 %v36
  %v165 = vunpack.c.l.bf16 %v37
  %v166 = vunpack.c.l.bf16 %v38
  %v167 = vunpack.c.l.bf16 %v39
  %v168 = vunpack.c.l.bf16 %v40
  %v169 = vunpack.c.l.bf16 %v41
  %v170 = vunpack.c.l.bf16 %v42
  %v171 = vunpack.c.l.bf16 %v43
  %v172 = vunpack.c.l.bf16 %v44
  %v173 = vunpack.c.l.bf16 %v45
  %v174 = vunpack.c.l.bf16 %v46
  %v175 = vunpack.c.l.bf16 %v47
  %v176 = vunpack.c.l.bf16 %v48
  %v177 = vunpack.c.l.bf16 %v49
  %v178 = vunpack.c.l.bf16 %v50
  %v179 = vunpack.c.l.bf16 %v51
  %v180 = vunpack.c.l.bf16 %v52
  %v181 = vunpack.c.l.bf16 %v53
  %v182 = vunpack.c.l.bf16 %v54
  %v183 = vunpack.c.l.bf16 %v55
  %v184 = vunpack.c.l.bf16 %v56
  %v185 = vunpack.c.l.bf16 %v57
  %v186 = vunpack.c.l.bf16 %v58
  %v187 = vunpack.c.l.bf16 %v59
  %v188 = vunpack.c.l.bf16 %v60
  %v189 = vunpack.c.l.bf16 %v61
  %v190 = vunpack.c.l.bf16 %v62
  %v191 = vunpack.c.l.bf16 %v63
  %v192 = vunpack.c.l.bf16 %v64
  %v193 = vunpack.c.l.bf16 %v65
  %v194 = vunpack.c.l.bf16 %v66
  %v195 = vunpack.c.l.bf16 %v67
  %v196 = vunpack.c.l.bf16 %v68
  %v197 = vunpack.c.l.bf16 %v69
  %v198 = vunpack.c.l.bf16 %v70
  %v199 = vunpack.c.l.bf16 %v71
  %v200 = vunpack.c.l.bf16 %v72
  %v201 = vunpack.c.l.bf16 %v73
  %v202 = vunpack.c.l.bf16 %v74
  %v203 = vunpack.c.l.bf16 %v75
  %v204 = vunpack.c.l.bf16 %v76
  %v205 = vunpack.c.l.bf16 %v77
  %v206 = vunpack.c.l.bf16 %v78
  %v207 = vunpack.c.l.bf16 %v79
  %v208 = vunpack.c.l.bf16 %v80
  %v209 = vunpack.c.l.bf16 %v81
  %v210 = vunpack.c.l.bf16 %v82
  %v211 = vunpack.c.l.bf16 %v83
  %v212 = vunpack.c.l.bf16 %v84
  %v213 = vunpack.c.l.bf16 %v85
  %v214 = vunpack.c.l.bf16 %v86
  %v215 = vunpack.c.l.bf16 %v87
  %v216 = vunpack.c.l.bf16 %v88
  %v217 = vunpack.c.l.bf16 %v89
  %v218 = vunpack.c.l.bf16 %v90
  %v219 = vunpack.c.l.bf16 %v91
  %v220 = vunpack.c.l.bf16 %v92
  %v221 = vunpack.c.l.bf16 %v93
  %v222 = vunpack.c.l.bf16 %v94
  %v223 = vunpack.c.l.bf16 %v95
  %v224 = vunpack.c.l.bf16 %v96
  %v225 = vunpack.c.l.bf16 %v97
  %v226 = vunpack.c.l.bf16 %v98
  %v227 = vunpack.c.l.bf16 %v99
  %v228 = vunpack.c.l.bf16 %v100
  %v229 = vunpack.c.l.bf16 %v101
  %v230 = vunpack.c.l.bf16 %v102
  %v231 = vunpack.c.l.bf16 %v103
  %v232 = vunpack.c.l.bf16 %v104
  %v233 = vunpack.c.l.bf16 %v105
  %v234 = vunpack.c.l.bf16 %v106
  %v235 = vunpack.c.l.bf16 %v107
  %v236 = vunpack.c.l.bf16 %v108
  %v237 = vunpack.c.l.bf16 %v109
  %v238 = vunpack.c.l.bf16 %v110
  %v239 = vunpack.c.l.bf16 %v111
  %v240 = vunpack.c.l.bf16 %v112
  %v241 = vunpack.c.l.bf16 %v113
  %v242 = vunpack.c.l.bf16 %v114
  %v243 = vunpack.c.l.bf16 %v115
  %v244 = vunpack.c.l.bf16 %v116
  %v245 = vunpack.c.l.bf16 %v117
  %v246 = vunpack.c.l.bf16 %v118
  %v247 = vunpack.c.l.bf16 %v119
  %v248 = vunpack.c.l.bf16 %v120
  %v249 = vunpack.c.l.bf16 %v121
  %v250 = vunpack.c.l.bf16 %v122
  %v251 = vunpack.c.l.bf16 %v123
  %v252 = vunpack.c.l.bf16 %v124
  %v253 = vunpack.c.l.bf16 %v125
  %v254 = vunpack.c.l.bf16 %v126
  %v255 = vunpack.c.l.bf16 %v127
  %v256 = vunpack.c.l.bf16 %v128
  %v257 = vunpack.c.l.bf16 %v129
  %v258 = vunpack.c.l.bf16 %v130
  %v259 = vunpack.c.l.bf16 %v131
  %v260 = vunpack.c.l.bf16 %v132
  %v261 = vunpack.c.l.bf16 %v133
  %v262 = vunpack.c.l.bf16 %v134
  %v263 = vunpack.c.l.bf16 %v135
  %v264 = vunpack.c.l.bf16 %v136
  %v265 = vunpack.c.l.bf16 %v137
  %v266 = vunpack.c.l.bf16 %v138
  %v267 = vunpack.c.l.bf16 %v139
  %v268 = vunpack.c.l.bf16 %v140
  %v269 = vunpack.c.l.bf16 %v141
  %v270 = vunpack.c.l.bf16 %v142
  %v271 = vunpack.c.l.bf16 %v143
  %v272 = vunpack.c.l.bf16 %v144
  %v273 = vld [vmem:[%s1] sm:$0x1]
  %v275 = vlaneseq
  %v276 = vshrl.u32 %v275, 7
  %v277 = vsub.s32 0, %v276
  %v278 = vrot.slane %v273, %v277
  %v280 = vmul.f32 %v145, %v278
  %v281 = vmul.f32 %v146, %v278
  %v282 = vmul.f32 %v147, %v278
  %v283 = vmul.f32 %v148, %v278
  %v284 = vmul.f32 %v149, %v278
  %v285 = vmul.f32 %v150, %v278
  %v286 = vmul.f32 %v151, %v278
  %v287 = vmul.f32 %v152, %v278
  %v288 = vmul.f32 %v153, %v278
  %v289 = vmul.f32 %v154, %v278
  %v290 = vmul.f32 %v155, %v278
  %v291 = vmul.f32 %v156, %v278
  %v292 = vmul.f32 %v157, %v278
  %v293 = vmul.f32 %v158, %v278
  %v294 = vmul.f32 %v159, %v278
  %v295 = vmul.f32 %v160, %v278
  %v296 = vmul.f32 %v161, %v278
  %v297 = vmul.f32 %v162, %v278
  %v298 = vmul.f32 %v163, %v278
  %v299 = vmul.f32 %v164, %v278
  %v300 = vmul.f32 %v165, %v278
  %v301 = vmul.f32 %v166, %v278
  %v302 = vmul.f32 %v167, %v278
  %v303 = vmul.f32 %v168, %v278
  %v304 = vmul.f32 %v169, %v278
  %v305 = vmul.f32 %v170, %v278
  %v306 = vmul.f32 %v171, %v278
  %v307 = vmul.f32 %v172, %v278
  %v308 = vmul.f32 %v173, %v278
  %v309 = vmul.f32 %v174, %v278
  %v310 = vmul.f32 %v175, %v278
  %v311 = vmul.f32 %v176, %v278
  %v312 = vmul.f32 %v177, %v278
  %v313 = vmul.f32 %v178, %v278
  %v314 = vmul.f32 %v179, %v278
  %v315 = vmul.f32 %v180, %v278
  %v316 = vmul.f32 %v181, %v278
  %v317 = vmul.f32 %v182, %v278
  %v318 = vmul.f32 %v183, %v278
  %v319 = vmul.f32 %v184, %v278
  %v320 = vmul.f32 %v185, %v278
  %v321 = vmul.f32 %v186, %v278
  %v322 = vmul.f32 %v187, %v278
  %v323 = vmul.f32 %v188, %v278
  %v324 = vmul.f32 %v189, %v278
  %v325 = vmul.f32 %v190, %v278
  %v326 = vmul.f32 %v191, %v278
  %v327 = vmul.f32 %v192, %v278
  %v328 = vmul.f32 %v193, %v278
  %v329 = vmul.f32 %v194, %v278
  %v330 = vmul.f32 %v195, %v278
  %v331 = vmul.f32 %v196, %v278
  %v332 = vmul.f32 %v197, %v278
  %v333 = vmul.f32 %v198, %v278
  %v334 = vmul.f32 %v199, %v278
  %v335 = vmul.f32 %v200, %v278
  %v336 = vmul.f32 %v201, %v278
  %v337 = vmul.f32 %v202, %v278
  %v338 = vmul.f32 %v203, %v278
  %v339 = vmul.f32 %v204, %v278
  %v340 = vmul.f32 %v205, %v278
  %v341 = vmul.f32 %v206, %v278
  %v342 = vmul.f32 %v207, %v278
  %v343 = vmul.f32 %v208, %v278
  %v344 = vmul.f32 %v209, %v278
  %v345 = vmul.f32 %v210, %v278
  %v346 = vmul.f32 %v211, %v278
  %v347 = vmul.f32 %v212, %v278
  %v348 = vmul.f32 %v213, %v278
  %v349 = vmul.f32 %v214, %v278
  %v350 = vmul.f32 %v215, %v278
  %v351 = vmul.f32 %v216, %v278
  %v352 = vmul.f32 %v217, %v278
  %v353 = vmul.f32 %v218, %v278
  %v354 = vmul.f32 %v219, %v278
  %v355 = vmul.f32 %v220, %v278
  %v356 = vmul.f32 %v221, %v278
  %v357 = vmul.f32 %v222, %v278
  %v358 = vmul.f32 %v223, %v278
  %v359 = vmul.f32 %v224, %v278
  %v360 = vmul.f32 %v225, %v278
  %v361 = vmul.f32 %v226, %v278
  %v362 = vmul.f32 %v227, %v278
  %v363 = vmul.f32 %v228, %v278
  %v364 = vmul.f32 %v229, %v278
  %v365 = vmul.f32 %v230, %v278
  %v366 = vmul.f32 %v231, %v278
  %v367 = vmul.f32 %v232, %v278
  %v368 = vmul.f32 %v233, %v278
  %v369 = vmul.f32 %v234, %v278
  %v370 = vmul.f32 %v235, %v278
  %v371 = vmul.f32 %v236, %v278
  %v372 = vmul.f32 %v237, %v278
  %v373 = vmul.f32 %v238, %v278
  %v374 = vmul.f32 %v239, %v278
  %v375 = vmul.f32 %v240, %v278
  %v376 = vmul.f32 %v241, %v278
  %v377 = vmul.f32 %v242, %v278
  %v378 = vmul.f32 %v243, %v278
  %v379 = vmul.f32 %v244, %v278
  %v380 = vmul.f32 %v245, %v278
  %v381 = vmul.f32 %v246, %v278
  %v382 = vmul.f32 %v247, %v278
  %v383 = vmul.f32 %v248, %v278
  %v384 = vmul.f32 %v249, %v278
  %v385 = vmul.f32 %v250, %v278
  %v386 = vmul.f32 %v251, %v278
  %v387 = vmul.f32 %v252, %v278
  %v388 = vmul.f32 %v253, %v278
  %v389 = vmul.f32 %v254, %v278
  %v390 = vmul.f32 %v255, %v278
  %v391 = vmul.f32 %v256, %v278
  %v392 = vmul.f32 %v257, %v278
  %v393 = vmul.f32 %v258, %v278
  %v394 = vmul.f32 %v259, %v278
  %v395 = vmul.f32 %v260, %v278
  %v396 = vmul.f32 %v261, %v278
  %v397 = vmul.f32 %v262, %v278
  %v398 = vmul.f32 %v263, %v278
  %v399 = vmul.f32 %v264, %v278
  %v400 = vmul.f32 %v265, %v278
  %v401 = vmul.f32 %v266, %v278
  %v402 = vmul.f32 %v267, %v278
  %v403 = vmul.f32 %v268, %v278
  %v404 = vmul.f32 %v269, %v278
  %v405 = vmul.f32 %v270, %v278
  %v406 = vmul.f32 %v271, %v278
  %v407 = vmul.f32 %v272, %v278
  %v408 = vld [vmem:[%s2] sm:$0x1]
  %v410 = vlaneseq
  %v411 = vshrl.u32 %v410, 7
  %v412 = vsub.s32 0, %v411
  %v413 = vrot.slane %v408, %v412
  %v415 = vadd.f32 %v280, %v413
  %v416 = vadd.f32 %v281, %v413
  %v417 = vadd.f32 %v282, %v413
  %v418 = vadd.f32 %v283, %v413
  %v419 = vadd.f32 %v284, %v413
  %v420 = vadd.f32 %v285, %v413
  %v421 = vadd.f32 %v286, %v413
  %v422 = vadd.f32 %v287, %v413
  %v423 = vadd.f32 %v288, %v413
  %v424 = vadd.f32 %v289, %v413
  %v425 = vadd.f32 %v290, %v413
  %v426 = vadd.f32 %v291, %v413
  %v427 = vadd.f32 %v292, %v413
  %v428 = vadd.f32 %v293, %v413
  %v429 = vadd.f32 %v294, %v413
  %v430 = vadd.f32 %v295, %v413
  %v431 = vadd.f32 %v296, %v413
  %v432 = vadd.f32 %v297, %v413
  %v433 = vadd.f32 %v298, %v413
  %v434 = vadd.f32 %v299, %v413
  %v435 = vadd.f32 %v300, %v413
  %v436 = vadd.f32 %v301, %v413
  %v437 = vadd.f32 %v302, %v413
  %v438 = vadd.f32 %v303, %v413
  %v439 = vadd.f32 %v304, %v413
  %v440 = vadd.f32 %v305, %v413
  %v441 = vadd.f32 %v306, %v413
  %v442 = vadd.f32 %v307, %v413
  %v443 = vadd.f32 %v308, %v413
  %v444 = vadd.f32 %v309, %v413
  %v445 = vadd.f32 %v310, %v413
  %v446 = vadd.f32 %v311, %v413
  %v447 = vadd.f32 %v312, %v413
  %v448 = vadd.f32 %v313, %v413
  %v449 = vadd.f32 %v314, %v413
  %v450 = vadd.f32 %v315, %v413
  %v451 = vadd.f32 %v316, %v413
  %v452 = vadd.f32 %v317, %v413
  %v453 = vadd.f32 %v318, %v413
  %v454 = vadd.f32 %v319, %v413
  %v455 = vadd.f32 %v320, %v413
  %v456 = vadd.f32 %v321, %v413
  %v457 = vadd.f32 %v322, %v413
  %v458 = vadd.f32 %v323, %v413
  %v459 = vadd.f32 %v324, %v413
  %v460 = vadd.f32 %v325, %v413
  %v461 = vadd.f32 %v326, %v413
  %v462 = vadd.f32 %v327, %v413
  %v463 = vadd.f32 %v328, %v413
  %v464 = vadd.f32 %v329, %v413
  %v465 = vadd.f32 %v330, %v413
  %v466 = vadd.f32 %v331, %v413
  %v467 = vadd.f32 %v332, %v413
  %v468 = vadd.f32 %v333, %v413
  %v469 = vadd.f32 %v334, %v413
  %v470 = vadd.f32 %v335, %v413
  %v471 = vadd.f32 %v336, %v413
  %v472 = vadd.f32 %v337, %v413
  %v473 = vadd.f32 %v338, %v413
  %v474 = vadd.f32 %v339, %v413
  %v475 = vadd.f32 %v340, %v413
  %v476 = vadd.f32 %v341, %v413
  %v477 = vadd.f32 %v342, %v413
  %v478 = vadd.f32 %v343, %v413
  %v479 = vadd.f32 %v344, %v413
  %v480 = vadd.f32 %v345, %v413
  %v481 = vadd.f32 %v346, %v413
  %v482 = vadd.f32 %v347, %v413
  %v483 = vadd.f32 %v348, %v413
  %v484 = vadd.f32 %v349, %v413
  %v485 = vadd.f32 %v350, %v413
  %v486 = vadd.f32 %v351, %v413
  %v487 = vadd.f32 %v352, %v413
  %v488 = vadd.f32 %v353, %v413
  %v489 = vadd.f32 %v354, %v413
  %v490 = vadd.f32 %v355, %v413
  %v491 = vadd.f32 %v356, %v413
  %v492 = vadd.f32 %v357, %v413
  %v493 = vadd.f32 %v358, %v413
  %v494 = vadd.f32 %v359, %v413
  %v495 = vadd.f32 %v360, %v413
  %v496 = vadd.f32 %v361, %v413
  %v497 = vadd.f32 %v362, %v413
  %v498 = vadd.f32 %v363, %v413
  %v499 = vadd.f32 %v364, %v413
  %v500 = vadd.f32 %v365, %v413
  %v501 = vadd.f32 %v366, %v413
  %v502 = vadd.f32 %v367, %v413
  %v503 = vadd.f32 %v368, %v413
  %v504 = vadd.f32 %v369, %v413
  %v505 = vadd.f32 %v370, %v413
  %v506 = vadd.f32 %v371, %v413
  %v507 = vadd.f32 %v372, %v413
  %v508 = vadd.f32 %v373, %v413
  %v509 = vadd.f32 %v374, %v413
  %v510 = vadd.f32 %v375, %v413
  %v511 = vadd.f32 %v376, %v413
  %v512 = vadd.f32 %v377, %v413
  %v513 = vadd.f32 %v378, %v413
  %v514 = vadd.f32 %v379, %v413
  %v515 = vadd.f32 %v380, %v413
  %v516 = vadd.f32 %v381, %v413
  %v517 = vadd.f32 %v382, %v413
  %v518 = vadd.f32 %v383, %v413
  %v519 = vadd.f32 %v384, %v413
  %v520 = vadd.f32 %v385, %v413
  %v521 = vadd.f32 %v386, %v413
  %v522 = vadd.f32 %v387, %v413
  %v523 = vadd.f32 %v388, %v413
  %v524 = vadd.f32 %v389, %v413
  %v525 = vadd.f32 %v390, %v413
  %v526 = vadd.f32 %v391, %v413
  %v527 = vadd.f32 %v392, %v413
  %v528 = vadd.f32 %v393, %v413
  %v529 = vadd.f32 %v394, %v413
  %v530 = vadd.f32 %v395, %v413
  %v531 = vadd.f32 %v396, %v413
  %v532 = vadd.f32 %v397, %v413
  %v533 = vadd.f32 %v398, %v413
  %v534 = vadd.f32 %v399, %v413
  %v535 = vadd.f32 %v400, %v413
  %v536 = vadd.f32 %v401, %v413
  %v537 = vadd.f32 %v402, %v413
  %v538 = vadd.f32 %v403, %v413
  %v539 = vadd.f32 %v404, %v413
  %v540 = vadd.f32 %v405, %v413
  %v541 = vadd.f32 %v406, %v413
  %v542 = vadd.f32 %v407, %v413
  %vm543 = vcmp.ge.f32.partialorder %v415, 0.0
  %vm544 = vcmp.ge.f32.partialorder %v416, 0.0
  %vm545 = vcmp.ge.f32.partialorder %v417, 0.0
  %vm546 = vcmp.ge.f32.partialorder %v418, 0.0
  %vm547 = vcmp.ge.f32.partialorder %v419, 0.0
  %vm548 = vcmp.ge.f32.partialorder %v420, 0.0
  %vm549 = vcmp.ge.f32.partialorder %v421, 0.0
  %vm550 = vcmp.ge.f32.partialorder %v422, 0.0
  %vm551 = vcmp.ge.f32.partialorder %v423, 0.0
  %vm552 = vcmp.ge.f32.partialorder %v424, 0.0
  %vm553 = vcmp.ge.f32.partialorder %v425, 0.0
  %vm554 = vcmp.ge.f32.partialorder %v426, 0.0
  %vm555 = vcmp.ge.f32.partialorder %v427, 0.0
  %vm556 = vcmp.ge.f32.partialorder %v428, 0.0
  %vm557 = vcmp.ge.f32.partialorder %v429, 0.0
  %vm558 = vcmp.ge.f32.partialorder %v430, 0.0
  %vm559 = vcmp.ge.f32.partialorder %v431, 0.0
  %vm560 = vcmp.ge.f32.partialorder %v432, 0.0
  %vm561 = vcmp.ge.f32.partialorder %v433, 0.0
  %vm562 = vcmp.ge.f32.partialorder %v434, 0.0
  %vm563 = vcmp.ge.f32.partialorder %v435, 0.0
  %vm564 = vcmp.ge.f32.partialorder %v436, 0.0
  %vm565 = vcmp.ge.f32.partialorder %v437, 0.0
  %vm566 = vcmp.ge.f32.partialorder %v438, 0.0
  %vm567 = vcmp.ge.f32.partialorder %v439, 0.0
  %vm568 = vcmp.ge.f32.partialorder %v440, 0.0
  %vm569 = vcmp.ge.f32.partialorder %v441, 0.0
  %vm570 = vcmp.ge.f32.partialorder %v442, 0.0
  %vm571 = vcmp.ge.f32.partialorder %v443, 0.0
  %vm572 = vcmp.ge.f32.partialorder %v444, 0.0
  %vm573 = vcmp.ge.f32.partialorder %v445, 0.0
  %vm574 = vcmp.ge.f32.partialorder %v446, 0.0
  %vm575 = vcmp.ge.f32.partialorder %v447, 0.0
  %vm576 = vcmp.ge.f32.partialorder %v448, 0.0
  %vm577 = vcmp.ge.f32.partialorder %v449, 0.0
  %vm578 = vcmp.ge.f32.partialorder %v450, 0.0
  %vm579 = vcmp.ge.f32.partialorder %v451, 0.0
  %vm580 = vcmp.ge.f32.partialorder %v452, 0.0
  %vm581 = vcmp.ge.f32.partialorder %v453, 0.0
  %vm582 = vcmp.ge.f32.partialorder %v454, 0.0
  %vm583 = vcmp.ge.f32.partialorder %v455, 0.0
  %vm584 = vcmp.ge.f32.partialorder %v456, 0.0
  %vm585 = vcmp.ge.f32.partialorder %v457, 0.0
  %vm586 = vcmp.ge.f32.partialorder %v458, 0.0
  %vm587 = vcmp.ge.f32.partialorder %v459, 0.0
  %vm588 = vcmp.ge.f32.partialorder %v460, 0.0
  %vm589 = vcmp.ge.f32.partialorder %v461, 0.0
  %vm590 = vcmp.ge.f32.partialorder %v462, 0.0
  %vm591 = vcmp.ge.f32.partialorder %v463, 0.0
  %vm592 = vcmp.ge.f32.partialorder %v464, 0.0
  %vm593 = vcmp.ge.f32.partialorder %v465, 0.0
  %vm594 = vcmp.ge.f32.partialorder %v466, 0.0
  %vm595 = vcmp.ge.f32.partialorder %v467, 0.0
  %vm596 = vcmp.ge.f32.partialorder %v468, 0.0
  %vm597 = vcmp.ge.f32.partialorder %v469, 0.0
  %vm598 = vcmp.ge.f32.partialorder %v470, 0.0
  %vm599 = vcmp.ge.f32.partialorder %v471, 0.0
  %vm600 = vcmp.ge.f32.partialorder %v472, 0.0
  %vm601 = vcmp.ge.f32.partialorder %v473, 0.0
  %vm602 = vcmp.ge.f32.partialorder %v474, 0.0
  %vm603 = vcmp.ge.f32.partialorder %v475, 0.0
  %vm604 = vcmp.ge.f32.partialorder %v476, 0.0
  %vm605 = vcmp.ge.f32.partialorder %v477, 0.0
  %vm606 = vcmp.ge.f32.partialorder %v478, 0.0
  %vm607 = vcmp.ge.f32.partialorder %v479, 0.0
  %vm608 = vcmp.ge.f32.partialorder %v480, 0.0
  %vm609 = vcmp.ge.f32.partialorder %v481, 0.0
  %vm610 = vcmp.ge.f32.partialorder %v482, 0.0
  %vm611 = vcmp.ge.f32.partialorder %v483, 0.0
  %vm612 = vcmp.ge.f32.partialorder %v484, 0.0
  %vm613 = vcmp.ge.f32.partialorder %v485, 0.0
  %vm614 = vcmp.ge.f32.partialorder %v486, 0.0
  %vm615 = vcmp.ge.f32.partialorder %v487, 0.0
  %vm616 = vcmp.ge.f32.partialorder %v488, 0.0
  %vm617 = vcmp.ge.f32.partialorder %v489, 0.0
  %vm618 = vcmp.ge.f32.partialorder %v490, 0.0
  %vm619 = vcmp.ge.f32.partialorder %v491, 0.0
  %vm620 = vcmp.ge.f32.partialorder %v492, 0.0
  %vm621 = vcmp.ge.f32.partialorder %v493, 0.0
  %vm622 = vcmp.ge.f32.partialorder %v494, 0.0
  %vm623 = vcmp.ge.f32.partialorder %v495, 0.0
  %vm624 = vcmp.ge.f32.partialorder %v496, 0.0
  %vm625 = vcmp.ge.f32.partialorder %v497, 0.0
  %vm626 = vcmp.ge.f32.partialorder %v498, 0.0
  %vm627 = vcmp.ge.f32.partialorder %v499, 0.0
  %vm628 = vcmp.ge.f32.partialorder %v500, 0.0
  %vm629 = vcmp.ge.f32.partialorder %v501, 0.0
  %vm630 = vcmp.ge.f32.partialorder %v502, 0.0
  %vm631 = vcmp.ge.f32.partialorder %v503, 0.0
  %vm632 = vcmp.ge.f32.partialorder %v504, 0.0
  %vm633 = vcmp.ge.f32.partialorder %v505, 0.0
  %vm634 = vcmp.ge.f32.partialorder %v506, 0.0
  %vm635 = vcmp.ge.f32.partialorder %v507, 0.0
  %vm636 = vcmp.ge.f32.partialorder %v508, 0.0
  %vm637 = vcmp.ge.f32.partialorder %v509, 0.0
  %vm638 = vcmp.ge.f32.partialorder %v510, 0.0
  %vm639 = vcmp.ge.f32.partialorder %v511, 0.0
  %vm640 = vcmp.ge.f32.partialorder %v512, 0.0
  %vm641 = vcmp.ge.f32.partialorder %v513, 0.0
  %vm642 = vcmp.ge.f32.partialorder %v514, 0.0
  %vm643 = vcmp.ge.f32.partialorder %v515, 0.0
  %vm644 = vcmp.ge.f32.partialorder %v516, 0.0
  %vm645 = vcmp.ge.f32.partialorder %v517, 0.0
  %vm646 = vcmp.ge.f32.partialorder %v518, 0.0
  %vm647 = vcmp.ge.f32.partialorder %v519, 0.0
  %vm648 = vcmp.ge.f32.partialorder %v520, 0.0
  %vm649 = vcmp.ge.f32.partialorder %v521, 0.0
  %vm650 = vcmp.ge.f32.partialorder %v522, 0.0
  %vm651 = vcmp.ge.f32.partialorder %v523, 0.0
  %vm652 = vcmp.ge.f32.partialorder %v524, 0.0
  %vm653 = vcmp.ge.f32.partialorder %v525, 0.0
  %vm654 = vcmp.ge.f32.partialorder %v526, 0.0
  %vm655 = vcmp.ge.f32.partialorder %v527, 0.0
  %vm656 = vcmp.ge.f32.partialorder %v528, 0.0
  %vm657 = vcmp.ge.f32.partialorder %v529, 0.0
  %vm658 = vcmp.ge.f32.partialorder %v530, 0.0
  %vm659 = vcmp.ge.f32.partialorder %v531, 0.0
  %vm660 = vcmp.ge.f32.partialorder %v532, 0.0
  %vm661 = vcmp.ge.f32.partialorder %v533, 0.0
  %vm662 = vcmp.ge.f32.partialorder %v534, 0.0
  %vm663 = vcmp.ge.f32.partialorder %v535, 0.0
  %vm664 = vcmp.ge.f32.partialorder %v536, 0.0
  %vm665 = vcmp.ge.f32.partialorder %v537, 0.0
  %vm666 = vcmp.ge.f32.partialorder %v538, 0.0
  %vm667 = vcmp.ge.f32.partialorder %v539, 0.0
  %vm668 = vcmp.ge.f32.partialorder %v540, 0.0
  %vm669 = vcmp.ge.f32.partialorder %v541, 0.0
  %vm670 = vcmp.ge.f32.partialorder %v542, 0.0
  %v671 = vmul.f32 %v415, 0.2
  %v672 = vmul.f32 %v416, 0.2
  %v673 = vmul.f32 %v417, 0.2
  %v674 = vmul.f32 %v418, 0.2
  %v675 = vmul.f32 %v419, 0.2
  %v676 = vmul.f32 %v420, 0.2
  %v677 = vmul.f32 %v421, 0.2
  %v678 = vmul.f32 %v422, 0.2
  %v679 = vmul.f32 %v423, 0.2
  %v680 = vmul.f32 %v424, 0.2
  %v681 = vmul.f32 %v425, 0.2
  %v682 = vmul.f32 %v426, 0.2
  %v683 = vmul.f32 %v427, 0.2
  %v684 = vmul.f32 %v428, 0.2
  %v685 = vmul.f32 %v429, 0.2
  %v686 = vmul.f32 %v430, 0.2
  %v687 = vmul.f32 %v431, 0.2
  %v688 = vmul.f32 %v432, 0.2
  %v689 = vmul.f32 %v433, 0.2
  %v690 = vmul.f32 %v434, 0.2
  %v691 = vmul.f32 %v435, 0.2
  %v692 = vmul.f32 %v436, 0.2
  %v693 = vmul.f32 %v437, 0.2
  %v694 = vmul.f32 %v438, 0.2
  %v695 = vmul.f32 %v439, 0.2
  %v696 = vmul.f32 %v440, 0.2
  %v697 = vmul.f32 %v441, 0.2
  %v698 = vmul.f32 %v442, 0.2
  %v699 = vmul.f32 %v443, 0.2
  %v700 = vmul.f32 %v444, 0.2
  %v701 = vmul.f32 %v445, 0.2
  %v702 = vmul.f32 %v446, 0.2
  %v703 = vmul.f32 %v447, 0.2
  %v704 = vmul.f32 %v448, 0.2
  %v705 = vmul.f32 %v449, 0.2
  %v706 = vmul.f32 %v450, 0.2
  %v707 = vmul.f32 %v451, 0.2
  %v708 = vmul.f32 %v452, 0.2
  %v709 = vmul.f32 %v453, 0.2
  %v710 = vmul.f32 %v454, 0.2
  %v711 = vmul.f32 %v455, 0.2
  %v712 = vmul.f32 %v456, 0.2
  %v713 = vmul.f32 %v457, 0.2
  %v714 = vmul.f32 %v458, 0.2
  %v715 = vmul.f32 %v459, 0.2
  %v716 = vmul.f32 %v460, 0.2
  %v717 = vmul.f32 %v461, 0.2
  %v718 = vmul.f32 %v462, 0.2
  %v719 = vmul.f32 %v463, 0.2
  %v720 = vmul.f32 %v464, 0.2
  %v721 = vmul.f32 %v465, 0.2
  %v722 = vmul.f32 %v466, 0.2
  %v723 = vmul.f32 %v467, 0.2
  %v724 = vmul.f32 %v468, 0.2
  %v725 = vmul.f32 %v469, 0.2
  %v726 = vmul.f32 %v470, 0.2
  %v727 = vmul.f32 %v471, 0.2
  %v728 = vmul.f32 %v472, 0.2
  %v729 = vmul.f32 %v473, 0.2
  %v730 = vmul.f32 %v474, 0.2
  %v731 = vmul.f32 %v475, 0.2
  %v732 = vmul.f32 %v476, 0.2
  %v733 = vmul.f32 %v477, 0.2
  %v734 = vmul.f32 %v478, 0.2
  %v735 = vmul.f32 %v479, 0.2
  %v736 = vmul.f32 %v480, 0.2
  %v737 = vmul.f32 %v481, 0.2
  %v738 = vmul.f32 %v482, 0.2
  %v739 = vmul.f32 %v483, 0.2
  %v740 = vmul.f32 %v484, 0.2
  %v741 = vmul.f32 %v485, 0.2
  %v742 = vmul.f32 %v486, 0.2
  %v743 = vmul.f32 %v487, 0.2
  %v744 = vmul.f32 %v488, 0.2
  %v745 = vmul.f32 %v489, 0.2
  %v746 = vmul.f32 %v490, 0.2
  %v747 = vmul.f32 %v491, 0.2
  %v748 = vmul.f32 %v492, 0.2
  %v749 = vmul.f32 %v493, 0.2
  %v750 = vmul.f32 %v494, 0.2
  %v751 = vmul.f32 %v495, 0.2
  %v752 = vmul.f32 %v496, 0.2
  %v753 = vmul.f32 %v497, 0.2
  %v754 = vmul.f32 %v498, 0.2
  %v755 = vmul.f32 %v499, 0.2
  %v756 = vmul.f32 %v500, 0.2
  %v757 = vmul.f32 %v501, 0.2
  %v758 = vmul.f32 %v502, 0.2
  %v759 = vmul.f32 %v503, 0.2
  %v760 = vmul.f32 %v504, 0.2
  %v761 = vmul.f32 %v505, 0.2
  %v762 = vmul.f32 %v506, 0.2
  %v763 = vmul.f32 %v507, 0.2
  %v764 = vmul.f32 %v508, 0.2
  %v765 = vmul.f32 %v509, 0.2
  %v766 = vmul.f32 %v510, 0.2
  %v767 = vmul.f32 %v511, 0.2
  %v768 = vmul.f32 %v512, 0.2
  %v769 = vmul.f32 %v513, 0.2
  %v770 = vmul.f32 %v514, 0.2
  %v771 = vmul.f32 %v515, 0.2
  %v772 = vmul.f32 %v516, 0.2
  %v773 = vmul.f32 %v517, 0.2
  %v774 = vmul.f32 %v518, 0.2
  %v775 = vmul.f32 %v519, 0.2
  %v776 = vmul.f32 %v520, 0.2
  %v777 = vmul.f32 %v521, 0.2
  %v778 = vmul.f32 %v522, 0.2
  %v779 = vmul.f32 %v523, 0.2
  %v780 = vmul.f32 %v524, 0.2
  %v781 = vmul.f32 %v525, 0.2
  %v782 = vmul.f32 %v526, 0.2
  %v783 = vmul.f32 %v527, 0.2
  %v784 = vmul.f32 %v528, 0.2
  %v785 = vmul.f32 %v529, 0.2
  %v786 = vmul.f32 %v530, 0.2
  %v787 = vmul.f32 %v531, 0.2
  %v788 = vmul.f32 %v532, 0.2
  %v789 = vmul.f32 %v533, 0.2
  %v790 = vmul.f32 %v534, 0.2
  %v791 = vmul.f32 %v535, 0.2
  %v792 = vmul.f32 %v536, 0.2
  %v793 = vmul.f32 %v537, 0.2
  %v794 = vmul.f32 %v538, 0.2
  %v795 = vmul.f32 %v539, 0.2
  %v796 = vmul.f32 %v540, 0.2
  %v797 = vmul.f32 %v541, 0.2
  %v798 = vmul.f32 %v542, 0.2
  %v799 = vsel %vm543, %v415, %v671
  %v800 = vsel %vm544, %v416, %v672
  %v801 = vsel %vm545, %v417, %v673
  %v802 = vsel %vm546, %v418, %v674
  %v803 = vsel %vm547, %v419, %v675
  %v804 = vsel %vm548, %v420, %v676
  %v805 = vsel %vm549, %v421, %v677
  %v806 = vsel %vm550, %v422, %v678
  %v807 = vsel %vm551, %v423, %v679
  %v808 = vsel %vm552, %v424, %v680
  %v809 = vsel %vm553, %v425, %v681
  %v810 = vsel %vm554, %v426, %v682
  %v811 = vsel %vm555, %v427, %v683
  %v812 = vsel %vm556, %v428, %v684
  %v813 = vsel %vm557, %v429, %v685
  %v814 = vsel %vm558, %v430, %v686
  %v815 = vsel %vm559, %v431, %v687
  %v816 = vsel %vm560, %v432, %v688
  %v817 = vsel %vm561, %v433, %v689
  %v818 = vsel %vm562, %v434, %v690
  %v819 = vsel %vm563, %v435, %v691
  %v820 = vsel %vm564, %v436, %v692
  %v821 = vsel %vm565, %v437, %v693
  %v822 = vsel %vm566, %v438, %v694
  %v823 = vsel %vm567, %v439, %v695
  %v824 = vsel %vm568, %v440, %v696
  %v825 = vsel %vm569, %v441, %v697
  %v826 = vsel %vm570, %v442, %v698
  %v827 = vsel %vm571, %v443, %v699
  %v828 = vsel %vm572, %v444, %v700
  %v829 = vsel %vm573, %v445, %v701
  %v830 = vsel %vm574, %v446, %v702
  %v831 = vsel %vm575, %v447, %v703
  %v832 = vsel %vm576, %v448, %v704
  %v833 = vsel %vm577, %v449, %v705
  %v834 = vsel %vm578, %v450, %v706
  %v835 = vsel %vm579, %v451, %v707
  %v836 = vsel %vm580, %v452, %v708
  %v837 = vsel %vm581, %v453, %v709
  %v838 = vsel %vm582, %v454, %v710
  %v839 = vsel %vm583, %v455, %v711
  %v840 = vsel %vm584, %v456, %v712
  %v841 = vsel %vm585, %v457, %v713
  %v842 = vsel %vm586, %v458, %v714
  %v843 = vsel %vm587, %v459, %v715
  %v844 = vsel %vm588, %v460, %v716
  %v845 = vsel %vm589, %v461, %v717
  %v846 = vsel %vm590, %v462, %v718
  %v847 = vsel %vm591, %v463, %v719
  %v848 = vsel %vm592, %v464, %v720
  %v849 = vsel %vm593, %v465, %v721
  %v850 = vsel %vm594, %v466, %v722
  %v851 = vsel %vm595, %v467, %v723
  %v852 = vsel %vm596, %v468, %v724
  %v853 = vsel %vm597, %v469, %v725
  %v854 = vsel %vm598, %v470, %v726
  %v855 = vsel %vm599, %v471, %v727
  %v856 = vsel %vm600, %v472, %v728
  %v857 = vsel %vm601, %v473, %v729
  %v858 = vsel %vm602, %v474, %v730
  %v859 = vsel %vm603, %v475, %v731
  %v860 = vsel %vm604, %v476, %v732
  %v861 = vsel %vm605, %v477, %v733
  %v862 = vsel %vm606, %v478, %v734
  %v863 = vsel %vm607, %v479, %v735
  %v864 = vsel %vm608, %v480, %v736
  %v865 = vsel %vm609, %v481, %v737
  %v866 = vsel %vm610, %v482, %v738
  %v867 = vsel %vm611, %v483, %v739
  %v868 = vsel %vm612, %v484, %v740
  %v869 = vsel %vm613, %v485, %v741
  %v870 = vsel %vm614, %v486, %v742
  %v871 = vsel %vm615, %v487, %v743
  %v872 = vsel %vm616, %v488, %v744
  %v873 = vsel %vm617, %v489, %v745
  %v874 = vsel %vm618, %v490, %v746
  %v875 = vsel %vm619, %v491, %v747
  %v876 = vsel %vm620, %v492, %v748
  %v877 = vsel %vm621, %v493, %v749
  %v878 = vsel %vm622, %v494, %v750
  %v879 = vsel %vm623, %v495, %v751
  %v880 = vsel %vm624, %v496, %v752
  %v881 = vsel %vm625, %v497, %v753
  %v882 = vsel %vm626, %v498, %v754
  %v883 = vsel %vm627, %v499, %v755
  %v884 = vsel %vm628, %v500, %v756
  %v885 = vsel %vm629, %v501, %v757
  %v886 = vsel %vm630, %v502, %v758
  %v887 = vsel %vm631, %v503, %v759
  %v888 = vsel %vm632, %v504, %v760
  %v889 = vsel %vm633, %v505, %v761
  %v890 = vsel %vm634, %v506, %v762
  %v891 = vsel %vm635, %v507, %v763
  %v892 = vsel %vm636, %v508, %v764
  %v893 = vsel %vm637, %v509, %v765
  %v894 = vsel %vm638, %v510, %v766
  %v895 = vsel %vm639, %v511, %v767
  %v896 = vsel %vm640, %v512, %v768
  %v897 = vsel %vm641, %v513, %v769
  %v898 = vsel %vm642, %v514, %v770
  %v899 = vsel %vm643, %v515, %v771
  %v900 = vsel %vm644, %v516, %v772
  %v901 = vsel %vm645, %v517, %v773
  %v902 = vsel %vm646, %v518, %v774
  %v903 = vsel %vm647, %v519, %v775
  %v904 = vsel %vm648, %v520, %v776
  %v905 = vsel %vm649, %v521, %v777
  %v906 = vsel %vm650, %v522, %v778
  %v907 = vsel %vm651, %v523, %v779
  %v908 = vsel %vm652, %v524, %v780
  %v909 = vsel %vm653, %v525, %v781
  %v910 = vsel %vm654, %v526, %v782
  %v911 = vsel %vm655, %v527, %v783
  %v912 = vsel %vm656, %v528, %v784
  %v913 = vsel %vm657, %v529, %v785
  %v914 = vsel %vm658, %v530, %v786
  %v915 = vsel %vm659, %v531, %v787
  %v916 = vsel %vm660, %v532, %v788
  %v917 = vsel %vm661, %v533, %v789
  %v918 = vsel %vm662, %v534, %v790
  %v919 = vsel %vm663, %v535, %v791
  %v920 = vsel %vm664, %v536, %v792
  %v921 = vsel %vm665, %v537, %v793
  %v922 = vsel %vm666, %v538, %v794
  %v923 = vsel %vm667, %v539, %v795
  %v924 = vsel %vm668, %v540, %v796
  %v925 = vsel %vm669, %v541, %v797
  %v926 = vsel %vm670, %v542, %v798
  %v927 = vld [vmem:[%s3] sm:$0xff]
  %v928 = vld [vmem:[%s3 + $0x8] sm:$0xff]
  %v929 = vld [vmem:[%s3 + $0x10] sm:$0xff]
  %v930 = vld [vmem:[%s3 + $0x18] sm:$0xff]
  %v931 = vld [vmem:[%s3 + $0x20] sm:$0xff]
  %v932 = vld [vmem:[%s3 + $0x28] sm:$0xff]
  %v933 = vld [vmem:[%s3 + $0x30] sm:$0xff]
  %v934 = vld [vmem:[%s3 + $0x38] sm:$0xff]
  %v935 = vld [vmem:[%s3 + $0x40] sm:$0xff]
  %v936 = vld [vmem:[%s3 + $0x48] sm:$0xff]
  %v937 = vld [vmem:[%s3 + $0x50] sm:$0xff]
  %v938 = vld [vmem:[%s3 + $0x58] sm:$0xff]
  %v939 = vld [vmem:[%s3 + $0x60] sm:$0xff]
  %v940 = vld [vmem:[%s3 + $0x68] sm:$0xff]
  %v941 = vld [vmem:[%s3 + $0x70] sm:$0xff]
  %v942 = vld [vmem:[%s3 + $0x78] sm:$0xff]
  %v943 = vld [vmem:[%s3 + $0x80] sm:$0xff]
  %v944 = vld [vmem:[%s3 + $0x88] sm:$0xff]
  %v945 = vld [vmem:[%s3 + $0x90] sm:$0xff]
  %v946 = vld [vmem:[%s3 + $0x98] sm:$0xff]
  %v947 = vld [vmem:[%s3 + $0xa0] sm:$0xff]
  %v948 = vld [vmem:[%s3 + $0xa8] sm:$0xff]
  %v949 = vld [vmem:[%s3 + $0xb0] sm:$0xff]
  %v950 = vld [vmem:[%s3 + $0xb8] sm:$0xff]
  %v951 = vld [vmem:[%s3 + $0xc0] sm:$0xff]
  %v952 = vld [vmem:[%s3 + $0xc8] sm:$0xff]
  %v953 = vld [vmem:[%s3 + $0xd0] sm:$0xff]
  %v954 = vld [vmem:[%s3 + $0xd8] sm:$0xff]
  %v955 = vld [vmem:[%s3 + $0xe0] sm:$0xff]
  %v956 = vld [vmem:[%s3 + $0xe8] sm:$0xff]
  %v957 = vld [vmem:[%s3 + $0xf0] sm:$0xff]
  %v958 = vld [vmem:[%s3 + $0xf8] sm:$0xff]
  %v959 = vld [vmem:[%s3 + $0x100] sm:$0xff]
  %v960 = vld [vmem:[%s3 + $0x108] sm:$0xff]
  %v961 = vld [vmem:[%s3 + $0x110] sm:$0xff]
  %v962 = vld [vmem:[%s3 + $0x118] sm:$0xff]
  %v963 = vld [vmem:[%s3 + $0x120] sm:$0xff]
  %v964 = vld [vmem:[%s3 + $0x128] sm:$0xff]
  %v965 = vld [vmem:[%s3 + $0x130] sm:$0xff]
  %v966 = vld [vmem:[%s3 + $0x138] sm:$0xff]
  %v967 = vld [vmem:[%s3 + $0x140] sm:$0xff]
  %v968 = vld [vmem:[%s3 + $0x148] sm:$0xff]
  %v969 = vld [vmem:[%s3 + $0x150] sm:$0xff]
  %v970 = vld [vmem:[%s3 + $0x158] sm:$0xff]
  %v971 = vld [vmem:[%s3 + $0x160] sm:$0xff]
  %v972 = vld [vmem:[%s3 + $0x168] sm:$0xff]
  %v973 = vld [vmem:[%s3 + $0x170] sm:$0xff]
  %v974 = vld [vmem:[%s3 + $0x178] sm:$0xff]
  %v975 = vld [vmem:[%s3 + $0x180] sm:$0xff]
  %v976 = vld [vmem:[%s3 + $0x188] sm:$0xff]
  %v977 = vld [vmem:[%s3 + $0x190] sm:$0xff]
  %v978 = vld [vmem:[%s3 + $0x198] sm:$0xff]
  %v979 = vld [vmem:[%s3 + $0x1a0] sm:$0xff]
  %v980 = vld [vmem:[%s3 + $0x1a8] sm:$0xff]
  %v981 = vld [vmem:[%s3 + $0x1b0] sm:$0xff]
  %v982 = vld [vmem:[%s3 + $0x1b8] sm:$0xff]
  %v983 = vld [vmem:[%s3 + $0x1c0] sm:$0xff]
  %v984 = vld [vmem:[%s3 + $0x1c8] sm:$0xff]
  %v985 = vld [vmem:[%s3 + $0x1d0] sm:$0xff]
  %v986 = vld [vmem:[%s3 + $0x1d8] sm:$0xff]
  %v987 = vld [vmem:[%s3 + $0x1e0] sm:$0xff]
  %v988 = vld [vmem:[%s3 + $0x1e8] sm:$0xff]
  %v989 = vld [vmem:[%s3 + $0x1f0] sm:$0xff]
  %v990 = vld [vmem:[%s3 + $0x1f8] sm:$0xff]
  %v991 = vld [vmem:[%s3 + $0x200] sm:$0xff]
  %v992 = vld [vmem:[%s3 + $0x208] sm:$0xff]
  %v993 = vld [vmem:[%s3 + $0x210] sm:$0xff]
  %v994 = vld [vmem:[%s3 + $0x218] sm:$0xff]
  %v995 = vld [vmem:[%s3 + $0x220] sm:$0xff]
  %v996 = vld [vmem:[%s3 + $0x228] sm:$0xff]
  %v997 = vld [vmem:[%s3 + $0x230] sm:$0xff]
  %v998 = vld [vmem:[%s3 + $0x238] sm:$0xff]
  %v999 = vld [vmem:[%s3 + $0x240] sm:$0xff]
  %v1000 = vld [vmem:[%s3 + $0x248] sm:$0xff]
  %v1001 = vld [vmem:[%s3 + $0x250] sm:$0xff]
  %v1002 = vld [vmem:[%s3 + $0x258] sm:$0xff]
  %v1003 = vld [vmem:[%s3 + $0x260] sm:$0xff]
  %v1004 = vld [vmem:[%s3 + $0x268] sm:$0xff]
  %v1005 = vld [vmem:[%s3 + $0x270] sm:$0xff]
  %v1006 = vld [vmem:[%s3 + $0x278] sm:$0xff]
  %v1007 = vld [vmem:[%s3 + $0x280] sm:$0xff]
  %v1008 = vld [vmem:[%s3 + $0x288] sm:$0xff]
  %v1009 = vld [vmem:[%s3 + $0x290] sm:$0xff]
  %v1010 = vld [vmem:[%s3 + $0x298] sm:$0xff]
  %v1011 = vld [vmem:[%s3 + $0x2a0] sm:$0xff]
  %v1012 = vld [vmem:[%s3 + $0x2a8] sm:$0xff]
  %v1013 = vld [vmem:[%s3 + $0x2b0] sm:$0xff]
  %v1014 = vld [vmem:[%s3 + $0x2b8] sm:$0xff]
  %v1015 = vld [vmem:[%s3 + $0x2c0] sm:$0xff]
  %v1016 = vld [vmem:[%s3 + $0x2c8] sm:$0xff]
  %v1017 = vld [vmem:[%s3 + $0x2d0] sm:$0xff]
  %v1018 = vld [vmem:[%s3 + $0x2d8] sm:$0xff]
  %v1019 = vld [vmem:[%s3 + $0x2e0] sm:$0xff]
  %v1020 = vld [vmem:[%s3 + $0x2e8] sm:$0xff]
  %v1021 = vld [vmem:[%s3 + $0x2f0] sm:$0xff]
  %v1022 = vld [vmem:[%s3 + $0x2f8] sm:$0xff]
  %v1023 = vld [vmem:[%s3 + $0x300] sm:$0xff]
  %v1024 = vld [vmem:[%s3 + $0x308] sm:$0xff]
  %v1025 = vld [vmem:[%s3 + $0x310] sm:$0xff]
  %v1026 = vld [vmem:[%s3 + $0x318] sm:$0xff]
  %v1027 = vld [vmem:[%s3 + $0x320] sm:$0xff]
  %v1028 = vld [vmem:[%s3 + $0x328] sm:$0xff]
  %v1029 = vld [vmem:[%s3 + $0x330] sm:$0xff]
  %v1030 = vld [vmem:[%s3 + $0x338] sm:$0xff]
  %v1031 = vld [vmem:[%s3 + $0x340] sm:$0xff]
  %v1032 = vld [vmem:[%s3 + $0x348] sm:$0xff]
  %v1033 = vld [vmem:[%s3 + $0x350] sm:$0xff]
  %v1034 = vld [vmem:[%s3 + $0x358] sm:$0xff]
  %v1035 = vld [vmem:[%s3 + $0x360] sm:$0xff]
  %v1036 = vld [vmem:[%s3 + $0x368] sm:$0xff]
  %v1037 = vld [vmem:[%s3 + $0x370] sm:$0xff]
  %v1038 = vld [vmem:[%s3 + $0x378] sm:$0xff]
  %v1039 = vld [vmem:[%s3 + $0x380] sm:$0xff]
  %v1040 = vld [vmem:[%s3 + $0x388] sm:$0xff]
  %v1041 = vld [vmem:[%s3 + $0x390] sm:$0xff]
  %v1042 = vld [vmem:[%s3 + $0x398] sm:$0xff]
  %v1043 = vld [vmem:[%s3 + $0x3a0] sm:$0xff]
  %v1044 = vld [vmem:[%s3 + $0x3a8] sm:$0xff]
  %v1045 = vld [vmem:[%s3 + $0x3b0] sm:$0xff]
  %v1046 = vld [vmem:[%s3 + $0x3b8] sm:$0xff]
  %v1047 = vld [vmem:[%s3 + $0x3c0] sm:$0xff]
  %v1048 = vld [vmem:[%s3 + $0x3c8] sm:$0xff]
  %v1049 = vld [vmem:[%s3 + $0x3d0] sm:$0xff]
  %v1050 = vld [vmem:[%s3 + $0x3d8] sm:$0xff]
  %v1051 = vld [vmem:[%s3 + $0x3e0] sm:$0xff]
  %v1052 = vld [vmem:[%s3 + $0x3e8] sm:$0xff]
  %v1053 = vld [vmem:[%s3 + $0x3f0] sm:$0xff]
  %v1054 = vld [vmem:[%s3 + $0x3f8] sm:$0xff]
  %v1055 = vadd.f32 %v799, %v927
  %v1056 = vadd.f32 %v800, %v928
  %v1057 = vadd.f32 %v801, %v929
  %v1058 = vadd.f32 %v802, %v930
  %v1059 = vadd.f32 %v803, %v931
  %v1060 = vadd.f32 %v804, %v932
  %v1061 = vadd.f32 %v805, %v933
  %v1062 = vadd.f32 %v806, %v934
  %v1063 = vadd.f32 %v807, %v935
  %v1064 = vadd.f32 %v808, %v936
  %v1065 = vadd.f32 %v809, %v937
  %v1066 = vadd.f32 %v810, %v938
  %v1067 = vadd.f32 %v811, %v939
  %v1068 = vadd.f32 %v812, %v940
  %v1069 = vadd.f32 %v813, %v941
  %v1070 = vadd.f32 %v814, %v942
  %v1071 = vadd.f32 %v815, %v943
  %v1072 = vadd.f32 %v816, %v944
  %v1073 = vadd.f32 %v817, %v945
  %v1074 = vadd.f32 %v818, %v946
  %v1075 = vadd.f32 %v819, %v947
  %v1076 = vadd.f32 %v820, %v948
  %v1077 = vadd.f32 %v821, %v949
  %v1078 = vadd.f32 %v822, %v950
  %v1079 = vadd.f32 %v823, %v951
  %v1080 = vadd.f32 %v824, %v952
  %v1081 = vadd.f32 %v825, %v953
  %v1082 = vadd.f32 %v826, %v954
  %v1083 = vadd.f32 %v827, %v955
  %v1084 = vadd.f32 %v828, %v956
  %v1085 = vadd.f32 %v829, %v957
  %v1086 = vadd.f32 %v830, %v958
  %v1087 = vadd.f32 %v831, %v959
  %v1088 = vadd.f32 %v832, %v960
  %v1089 = vadd.f32 %v833, %v961
  %v1090 = vadd.f32 %v834, %v962
  %v1091 = vadd.f32 %v835, %v963
  %v1092 = vadd.f32 %v836, %v964
  %v1093 = vadd.f32 %v837, %v965
  %v1094 = vadd.f32 %v838, %v966
  %v1095 = vadd.f32 %v839, %v967
  %v1096 = vadd.f32 %v840, %v968
  %v1097 = vadd.f32 %v841, %v969
  %v1098 = vadd.f32 %v842, %v970
  %v1099 = vadd.f32 %v843, %v971
  %v1100 = vadd.f32 %v844, %v972
  %v1101 = vadd.f32 %v845, %v973
  %v1102 = vadd.f32 %v846, %v974
  %v1103 = vadd.f32 %v847, %v975
  %v1104 = vadd.f32 %v848, %v976
  %v1105 = vadd.f32 %v849, %v977
  %v1106 = vadd.f32 %v850, %v978
  %v1107 = vadd.f32 %v851, %v979
  %v1108 = vadd.f32 %v852, %v980
  %v1109 = vadd.f32 %v853, %v981
  %v1110 = vadd.f32 %v854, %v982
  %v1111 = vadd.f32 %v855, %v983
  %v1112 = vadd.f32 %v856, %v984
  %v1113 = vadd.f32 %v857, %v985
  %v1114 = vadd.f32 %v858, %v986
  %v1115 = vadd.f32 %v859, %v987
  %v1116 = vadd.f32 %v860, %v988
  %v1117 = vadd.f32 %v861, %v989
  %v1118 = vadd.f32 %v862, %v990
  %v1119 = vadd.f32 %v863, %v991
  %v1120 = vadd.f32 %v864, %v992
  %v1121 = vadd.f32 %v865, %v993
  %v1122 = vadd.f32 %v866, %v994
  %v1123 = vadd.f32 %v867, %v995
  %v1124 = vadd.f32 %v868, %v996
  %v1125 = vadd.f32 %v869, %v997
  %v1126 = vadd.f32 %v870, %v998
  %v1127 = vadd.f32 %v871, %v999
  %v1128 = vadd.f32 %v872, %v1000
  %v1129 = vadd.f32 %v873, %v1001
  %v1130 = vadd.f32 %v874, %v1002
  %v1131 = vadd.f32 %v875, %v1003
  %v1132 = vadd.f32 %v876, %v1004
  %v1133 = vadd.f32 %v877, %v1005
  %v1134 = vadd.f32 %v878, %v1006
  %v1135 = vadd.f32 %v879, %v1007
  %v1136 = vadd.f32 %v880, %v1008
  %v1137 = vadd.f32 %v881, %v1009
  %v1138 = vadd.f32 %v882, %v1010
  %v1139 = vadd.f32 %v883, %v1011
  %v1140 = vadd.f32 %v884, %v1012
  %v1141 = vadd.f32 %v885, %v1013
  %v1142 = vadd.f32 %v886, %v1014
  %v1143 = vadd.f32 %v887, %v1015
  %v1144 = vadd.f32 %v888, %v1016
  %v1145 = vadd.f32 %v889, %v1017
  %v1146 = vadd.f32 %v890, %v1018
  %v1147 = vadd.f32 %v891, %v1019
  %v1148 = vadd.f32 %v892, %v1020
  %v1149 = vadd.f32 %v893, %v1021
  %v1150 = vadd.f32 %v894, %v1022
  %v1151 = vadd.f32 %v895, %v1023
  %v1152 = vadd.f32 %v896, %v1024
  %v1153 = vadd.f32 %v897, %v1025
  %v1154 = vadd.f32 %v898, %v1026
  %v1155 = vadd.f32 %v899, %v1027
  %v1156 = vadd.f32 %v900, %v1028
  %v1157 = vadd.f32 %v901, %v1029
  %v1158 = vadd.f32 %v902, %v1030
  %v1159 = vadd.f32 %v903, %v1031
  %v1160 = vadd.f32 %v904, %v1032
  %v1161 = vadd.f32 %v905, %v1033
  %v1162 = vadd.f32 %v906, %v1034
  %v1163 = vadd.f32 %v907, %v1035
  %v1164 = vadd.f32 %v908, %v1036
  %v1165 = vadd.f32 %v909, %v1037
  %v1166 = vadd.f32 %v910, %v1038
  %v1167 = vadd.f32 %v911, %v1039
  %v1168 = vadd.f32 %v912, %v1040
  %v1169 = vadd.f32 %v913, %v1041
  %v1170 = vadd.f32 %v914, %v1042
  %v1171 = vadd.f32 %v915, %v1043
  %v1172 = vadd.f32 %v916, %v1044
  %v1173 = vadd.f32 %v917, %v1045
  %v1174 = vadd.f32 %v918, %v1046
  %v1175 = vadd.f32 %v919, %v1047
  %v1176 = vadd.f32 %v920, %v1048
  %v1177 = vadd.f32 %v921, %v1049
  %v1178 = vadd.f32 %v922, %v1050
  %v1179 = vadd.f32 %v923, %v1051
  %v1180 = vadd.f32 %v924, %v1052
  %v1181 = vadd.f32 %v925, %v1053
  %v1182 = vadd.f32 %v926, %v1054
  %vm1183 = vcmask 31744
  %1184 = vst.msk [vmem:[%s4] sm:$0xff] %vm1183, %v1055
  %1185 = vst.msk [vmem:[%s4 + $0x8] sm:$0xff] %vm1183, %v1056
  %1186 = vst.msk [vmem:[%s4 + $0x10] sm:$0xff] %vm1183, %v1057
  %1187 = vst.msk [vmem:[%s4 + $0x18] sm:$0xff] %vm1183, %v1058
  %1188 = vst.msk [vmem:[%s4 + $0x20] sm:$0xff] %vm1183, %v1059
  %1189 = vst.msk [vmem:[%s4 + $0x28] sm:$0xff] %vm1183, %v1060
  %1190 = vst.msk [vmem:[%s4 + $0x30] sm:$0xff] %vm1183, %v1061
  %1191 = vst.msk [vmem:[%s4 + $0x38] sm:$0xff] %vm1183, %v1062
  %1192 = vst.msk [vmem:[%s4 + $0x40] sm:$0xff] %vm1183, %v1063
  %1193 = vst.msk [vmem:[%s4 + $0x48] sm:$0xff] %vm1183, %v1064
  %1194 = vst.msk [vmem:[%s4 + $0x50] sm:$0xff] %vm1183, %v1065
  %1195 = vst.msk [vmem:[%s4 + $0x58] sm:$0xff] %vm1183, %v1066
  %1196 = vst.msk [vmem:[%s4 + $0x60] sm:$0xff] %vm1183, %v1067
  %1197 = vst.msk [vmem:[%s4 + $0x68] sm:$0xff] %vm1183, %v1068
  %1198 = vst.msk [vmem:[%s4 + $0x70] sm:$0xff] %vm1183, %v1069
  %1199 = vst.msk [vmem:[%s4 + $0x78] sm:$0xff] %vm1183, %v1070
  %1200 = vst.msk [vmem:[%s4 + $0x80] sm:$0xff] %vm1183, %v1071
  %1201 = vst.msk [vmem:[%s4 + $0x88] sm:$0xff] %vm1183, %v1072
  %1202 = vst.msk [vmem:[%s4 + $0x90] sm:$0xff] %vm1183, %v1073
  %1203 = vst.msk [vmem:[%s4 + $0x98] sm:$0xff] %vm1183, %v1074
  %1204 = vst.msk [vmem:[%s4 + $0xa0] sm:$0xff] %vm1183, %v1075
  %1205 = vst.msk [vmem:[%s4 + $0xa8] sm:$0xff] %vm1183, %v1076
  %1206 = vst.msk [vmem:[%s4 + $0xb0] sm:$0xff] %vm1183, %v1077
  %1207 = vst.msk [vmem:[%s4 + $0xb8] sm:$0xff] %vm1183, %v1078
  %1208 = vst.msk [vmem:[%s4 + $0xc0] sm:$0xff] %vm1183, %v1079
  %1209 = vst.msk [vmem:[%s4 + $0xc8] sm:$0xff] %vm1183, %v1080
  %1210 = vst.msk [vmem:[%s4 + $0xd0] sm:$0xff] %vm1183, %v1081
  %1211 = vst.msk [vmem:[%s4 + $0xd8] sm:$0xff] %vm1183, %v1082
  %1212 = vst.msk [vmem:[%s4 + $0xe0] sm:$0xff] %vm1183, %v1083
  %1213 = vst.msk [vmem:[%s4 + $0xe8] sm:$0xff] %vm1183, %v1084
  %1214 = vst.msk [vmem:[%s4 + $0xf0] sm:$0xff] %vm1183, %v1085
  %1215 = vst.msk [vmem:[%s4 + $0xf8] sm:$0xff] %vm1183, %v1086
  %1216 = vst.msk [vmem:[%s4 + $0x100] sm:$0xff] %vm1183, %v1087
  %1217 = vst.msk [vmem:[%s4 + $0x108] sm:$0xff] %vm1183, %v1088
  %1218 = vst.msk [vmem:[%s4 + $0x110] sm:$0xff] %vm1183, %v1089
  %1219 = vst.msk [vmem:[%s4 + $0x118] sm:$0xff] %vm1183, %v1090
  %1220 = vst.msk [vmem:[%s4 + $0x120] sm:$0xff] %vm1183, %v1091
  %1221 = vst.msk [vmem:[%s4 + $0x128] sm:$0xff] %vm1183, %v1092
  %1222 = vst.msk [vmem:[%s4 + $0x130] sm:$0xff] %vm1183, %v1093
  %1223 = vst.msk [vmem:[%s4 + $0x138] sm:$0xff] %vm1183, %v1094
  %1224 = vst.msk [vmem:[%s4 + $0x140] sm:$0xff] %vm1183, %v1095
  %1225 = vst.msk [vmem:[%s4 + $0x148] sm:$0xff] %vm1183, %v1096
  %1226 = vst.msk [vmem:[%s4 + $0x150] sm:$0xff] %vm1183, %v1097
  %1227 = vst.msk [vmem:[%s4 + $0x158] sm:$0xff] %vm1183, %v1098
  %1228 = vst.msk [vmem:[%s4 + $0x160] sm:$0xff] %vm1183, %v1099
  %1229 = vst.msk [vmem:[%s4 + $0x168] sm:$0xff] %vm1183, %v1100
  %1230 = vst.msk [vmem:[%s4 + $0x170] sm:$0xff] %vm1183, %v1101
  %1231 = vst.msk [vmem:[%s4 + $0x178] sm:$0xff] %vm1183, %v1102
  %1232 = vst.msk [vmem:[%s4 + $0x180] sm:$0xff] %vm1183, %v1103
  %1233 = vst.msk [vmem:[%s4 + $0x188] sm:$0xff] %vm1183, %v1104
  %1234 = vst.msk [vmem:[%s4 + $0x190] sm:$0xff] %vm1183, %v1105
  %1235 = vst.msk [vmem:[%s4 + $0x198] sm:$0xff] %vm1183, %v1106
  %1236 = vst.msk [vmem:[%s4 + $0x1a0] sm:$0xff] %vm1183, %v1107
  %1237 = vst.msk [vmem:[%s4 + $0x1a8] sm:$0xff] %vm1183, %v1108
  %1238 = vst.msk [vmem:[%s4 + $0x1b0] sm:$0xff] %vm1183, %v1109
  %1239 = vst.msk [vmem:[%s4 + $0x1b8] sm:$0xff] %vm1183, %v1110
  %1240 = vst.msk [vmem:[%s4 + $0x1c0] sm:$0xff] %vm1183, %v1111
  %1241 = vst.msk [vmem:[%s4 + $0x1c8] sm:$0xff] %vm1183, %v1112
  %1242 = vst.msk [vmem:[%s4 + $0x1d0] sm:$0xff] %vm1183, %v1113
  %1243 = vst.msk [vmem:[%s4 + $0x1d8] sm:$0xff] %vm1183, %v1114
  %1244 = vst.msk [vmem:[%s4 + $0x1e0] sm:$0xff] %vm1183, %v1115
  %1245 = vst.msk [vmem:[%s4 + $0x1e8] sm:$0xff] %vm1183, %v1116
  %1246 = vst.msk [vmem:[%s4 + $0x1f0] sm:$0xff] %vm1183, %v1117
  %1247 = vst.msk [vmem:[%s4 + $0x1f8] sm:$0xff] %vm1183, %v1118
  %1248 = vst.msk [vmem:[%s4 + $0x200] sm:$0xff] %vm1183, %v1119
  %1249 = vst.msk [vmem:[%s4 + $0x208] sm:$0xff] %vm1183, %v1120
  %1250 = vst.msk [vmem:[%s4 + $0x210] sm:$0xff] %vm1183, %v1121
  %1251 = vst.msk [vmem:[%s4 + $0x218] sm:$0xff] %vm1183, %v1122
  %1252 = vst.msk [vmem:[%s4 + $0x220] sm:$0xff] %vm1183, %v1123
  %1253 = vst.msk [vmem:[%s4 + $0x228] sm:$0xff] %vm1183, %v1124
  %1254 = vst.msk [vmem:[%s4 + $0x230] sm:$0xff] %vm1183, %v1125
  %1255 = vst.msk [vmem:[%s4 + $0x238] sm:$0xff] %vm1183, %v1126
  %1256 = vst.msk [vmem:[%s4 + $0x240] sm:$0xff] %vm1183, %v1127
  %1257 = vst.msk [vmem:[%s4 + $0x248] sm:$0xff] %vm1183, %v1128
  %1258 = vst.msk [vmem:[%s4 + $0x250] sm:$0xff] %vm1183, %v1129
  %1259 = vst.msk [vmem:[%s4 + $0x258] sm:$0xff] %vm1183, %v1130
  %1260 = vst.msk [vmem:[%s4 + $0x260] sm:$0xff] %vm1183, %v1131
  %1261 = vst.msk [vmem:[%s4 + $0x268] sm:$0xff] %vm1183, %v1132
  %1262 = vst.msk [vmem:[%s4 + $0x270] sm:$0xff] %vm1183, %v1133
  %1263 = vst.msk [vmem:[%s4 + $0x278] sm:$0xff] %vm1183, %v1134
  %1264 = vst.msk [vmem:[%s4 + $0x280] sm:$0xff] %vm1183, %v1135
  %1265 = vst.msk [vmem:[%s4 + $0x288] sm:$0xff] %vm1183, %v1136
  %1266 = vst.msk [vmem:[%s4 + $0x290] sm:$0xff] %vm1183, %v1137
  %1267 = vst.msk [vmem:[%s4 + $0x298] sm:$0xff] %vm1183, %v1138
  %1268 = vst.msk [vmem:[%s4 + $0x2a0] sm:$0xff] %vm1183, %v1139
  %1269 = vst.msk [vmem:[%s4 + $0x2a8] sm:$0xff] %vm1183, %v1140
  %1270 = vst.msk [vmem:[%s4 + $0x2b0] sm:$0xff] %vm1183, %v1141
  %1271 = vst.msk [vmem:[%s4 + $0x2b8] sm:$0xff] %vm1183, %v1142
  %1272 = vst.msk [vmem:[%s4 + $0x2c0] sm:$0xff] %vm1183, %v1143
  %1273 = vst.msk [vmem:[%s4 + $0x2c8] sm:$0xff] %vm1183, %v1144
  %1274 = vst.msk [vmem:[%s4 + $0x2d0] sm:$0xff] %vm1183, %v1145
  %1275 = vst.msk [vmem:[%s4 + $0x2d8] sm:$0xff] %vm1183, %v1146
  %1276 = vst.msk [vmem:[%s4 + $0x2e0] sm:$0xff] %vm1183, %v1147
  %1277 = vst.msk [vmem:[%s4 + $0x2e8] sm:$0xff] %vm1183, %v1148
  %1278 = vst.msk [vmem:[%s4 + $0x2f0] sm:$0xff] %vm1183, %v1149
  %1279 = vst.msk [vmem:[%s4 + $0x2f8] sm:$0xff] %vm1183, %v1150
  %1280 = vst.msk [vmem:[%s4 + $0x300] sm:$0xff] %vm1183, %v1151
  %1281 = vst.msk [vmem:[%s4 + $0x308] sm:$0xff] %vm1183, %v1152
  %1282 = vst.msk [vmem:[%s4 + $0x310] sm:$0xff] %vm1183, %v1153
  %1283 = vst.msk [vmem:[%s4 + $0x318] sm:$0xff] %vm1183, %v1154
  %1284 = vst.msk [vmem:[%s4 + $0x320] sm:$0xff] %vm1183, %v1155
  %1285 = vst.msk [vmem:[%s4 + $0x328] sm:$0xff] %vm1183, %v1156
  %1286 = vst.msk [vmem:[%s4 + $0x330] sm:$0xff] %vm1183, %v1157
  %1287 = vst.msk [vmem:[%s4 + $0x338] sm:$0xff] %vm1183, %v1158
  %1288 = vst.msk [vmem:[%s4 + $0x340] sm:$0xff] %vm1183, %v1159
  %1289 = vst.msk [vmem:[%s4 + $0x348] sm:$0xff] %vm1183, %v1160
  %1290 = vst.msk [vmem:[%s4 + $0x350] sm:$0xff] %vm1183, %v1161
  %1291 = vst.msk [vmem:[%s4 + $0x358] sm:$0xff] %vm1183, %v1162
  %1292 = vst.msk [vmem:[%s4 + $0x360] sm:$0xff] %vm1183, %v1163
  %1293 = vst.msk [vmem:[%s4 + $0x368] sm:$0xff] %vm1183, %v1164
  %1294 = vst.msk [vmem:[%s4 + $0x370] sm:$0xff] %vm1183, %v1165
  %1295 = vst.msk [vmem:[%s4 + $0x378] sm:$0xff] %vm1183, %v1166
  %1296 = vst.msk [vmem:[%s4 + $0x380] sm:$0xff] %vm1183, %v1167
  %1297 = vst.msk [vmem:[%s4 + $0x388] sm:$0xff] %vm1183, %v1168
  %1298 = vst.msk [vmem:[%s4 + $0x390] sm:$0xff] %vm1183, %v1169
  %1299 = vst.msk [vmem:[%s4 + $0x398] sm:$0xff] %vm1183, %v1170
  %1300 = vst.msk [vmem:[%s4 + $0x3a0] sm:$0xff] %vm1183, %v1171
  %1301 = vst.msk [vmem:[%s4 + $0x3a8] sm:$0xff] %vm1183, %v1172
  %1302 = vst.msk [vmem:[%s4 + $0x3b0] sm:$0xff] %vm1183, %v1173
  %1303 = vst.msk [vmem:[%s4 + $0x3b8] sm:$0xff] %vm1183, %v1174
  %1304 = vst.msk [vmem:[%s4 + $0x3c0] sm:$0xff] %vm1183, %v1175
  %1305 = vst.msk [vmem:[%s4 + $0x3c8] sm:$0xff] %vm1183, %v1176
  %1306 = vst.msk [vmem:[%s4 + $0x3d0] sm:$0xff] %vm1183, %v1177
  %1307 = vst.msk [vmem:[%s4 + $0x3d8] sm:$0xff] %vm1183, %v1178
  %1308 = vst.msk [vmem:[%s4 + $0x3e0] sm:$0xff] %vm1183, %v1179
  %1309 = vst.msk [vmem:[%s4 + $0x3e8] sm:$0xff] %vm1183, %v1180
  %1310 = vst.msk [vmem:[%s4 + $0x3f0] sm:$0xff] %vm1183, %v1181
  %1311 = vst.msk [vmem:[%s4 + $0x3f8] sm:$0xff] %vm1183, %v1182
  %vm1312 = vcmask 64544
  %1313 = vst.msk [vmem:[%s4] sm:$0xff] %vm1312, %v799
  %1314 = vst.msk [vmem:[%s4 + $0x8] sm:$0xff] %vm1312, %v800
  %1315 = vst.msk [vmem:[%s4 + $0x10] sm:$0xff] %vm1312, %v801
  %1316 = vst.msk [vmem:[%s4 + $0x18] sm:$0xff] %vm1312, %v802
  %1317 = vst.msk [vmem:[%s4 + $0x20] sm:$0xff] %vm1312, %v803
  %1318 = vst.msk [vmem:[%s4 + $0x28] sm:$0xff] %vm1312, %v804
  %1319 = vst.msk [vmem:[%s4 + $0x30] sm:$0xff] %vm1312, %v805
  %1320 = vst.msk [vmem:[%s4 + $0x38] sm:$0xff] %vm1312, %v806
  %1321 = vst.msk [vmem:[%s4 + $0x40] sm:$0xff] %vm1312, %v807
  %1322 = vst.msk [vmem:[%s4 + $0x48] sm:$0xff] %vm1312, %v808
  %1323 = vst.msk [vmem:[%s4 + $0x50] sm:$0xff] %vm1312, %v809
  %1324 = vst.msk [vmem:[%s4 + $0x58] sm:$0xff] %vm1312, %v810
  %1325 = vst.msk [vmem:[%s4 + $0x60] sm:$0xff] %vm1312, %v811
  %1326 = vst.msk [vmem:[%s4 + $0x68] sm:$0xff] %vm1312, %v812
  %1327 = vst.msk [vmem:[%s4 + $0x70] sm:$0xff] %vm1312, %v813
  %1328 = vst.msk [vmem:[%s4 + $0x78] sm:$0xff] %vm1312, %v814
  %1329 = vst.msk [vmem:[%s4 + $0x80] sm:$0xff] %vm1312, %v815
  %1330 = vst.msk [vmem:[%s4 + $0x88] sm:$0xff] %vm1312, %v816
  %1331 = vst.msk [vmem:[%s4 + $0x90] sm:$0xff] %vm1312, %v817
  %1332 = vst.msk [vmem:[%s4 + $0x98] sm:$0xff] %vm1312, %v818
  %1333 = vst.msk [vmem:[%s4 + $0xa0] sm:$0xff] %vm1312, %v819
  %1334 = vst.msk [vmem:[%s4 + $0xa8] sm:$0xff] %vm1312, %v820
  %1335 = vst.msk [vmem:[%s4 + $0xb0] sm:$0xff] %vm1312, %v821
  %1336 = vst.msk [vmem:[%s4 + $0xb8] sm:$0xff] %vm1312, %v822
  %1337 = vst.msk [vmem:[%s4 + $0xc0] sm:$0xff] %vm1312, %v823
  %1338 = vst.msk [vmem:[%s4 + $0xc8] sm:$0xff] %vm1312, %v824
  %1339 = vst.msk [vmem:[%s4 + $0xd0] sm:$0xff] %vm1312, %v825
  %1340 = vst.msk [vmem:[%s4 + $0xd8] sm:$0xff] %vm1312, %v826
  %1341 = vst.msk [vmem:[%s4 + $0xe0] sm:$0xff] %vm1312, %v827
  %1342 = vst.msk [vmem:[%s4 + $0xe8] sm:$0xff] %vm1312, %v828
  %1343 = vst.msk [vmem:[%s4 + $0xf0] sm:$0xff] %vm1312, %v829
  %1344 = vst.msk [vmem:[%s4 + $0xf8] sm:$0xff] %vm1312, %v830
  %1345 = vst.msk [vmem:[%s4 + $0x100] sm:$0xff] %vm1312, %v831
  %1346 = vst.msk [vmem:[%s4 + $0x108] sm:$0xff] %vm1312, %v832
  %1347 = vst.msk [vmem:[%s4 + $0x110] sm:$0xff] %vm1312, %v833
  %1348 = vst.msk [vmem:[%s4 + $0x118] sm:$0xff] %vm1312, %v834
  %1349 = vst.msk [vmem:[%s4 + $0x120] sm:$0xff] %vm1312, %v835
  %1350 = vst.msk [vmem:[%s4 + $0x128] sm:$0xff] %vm1312, %v836
  %1351 = vst.msk [vmem:[%s4 + $0x130] sm:$0xff] %vm1312, %v837
  %1352 = vst.msk [vmem:[%s4 + $0x138] sm:$0xff] %vm1312, %v838
  %1353 = vst.msk [vmem:[%s4 + $0x140] sm:$0xff] %vm1312, %v839
  %1354 = vst.msk [vmem:[%s4 + $0x148] sm:$0xff] %vm1312, %v840
  %1355 = vst.msk [vmem:[%s4 + $0x150] sm:$0xff] %vm1312, %v841
  %1356 = vst.msk [vmem:[%s4 + $0x158] sm:$0xff] %vm1312, %v842
  %1357 = vst.msk [vmem:[%s4 + $0x160] sm:$0xff] %vm1312, %v843
  %1358 = vst.msk [vmem:[%s4 + $0x168] sm:$0xff] %vm1312, %v844
  %1359 = vst.msk [vmem:[%s4 + $0x170] sm:$0xff] %vm1312, %v845
  %1360 = vst.msk [vmem:[%s4 + $0x178] sm:$0xff] %vm1312, %v846
  %1361 = vst.msk [vmem:[%s4 + $0x180] sm:$0xff] %vm1312, %v847
  %1362 = vst.msk [vmem:[%s4 + $0x188] sm:$0xff] %vm1312, %v848
  %1363 = vst.msk [vmem:[%s4 + $0x190] sm:$0xff] %vm1312, %v849
  %1364 = vst.msk [vmem:[%s4 + $0x198] sm:$0xff] %vm1312, %v850
  %1365 = vst.msk [vmem:[%s4 + $0x1a0] sm:$0xff] %vm1312, %v851
  %1366 = vst.msk [vmem:[%s4 + $0x1a8] sm:$0xff] %vm1312, %v852
  %1367 = vst.msk [vmem:[%s4 + $0x1b0] sm:$0xff] %vm1312, %v853
  %1368 = vst.msk [vmem:[%s4 + $0x1b8] sm:$0xff] %vm1312, %v854
  %1369 = vst.msk [vmem:[%s4 + $0x1c0] sm:$0xff] %vm1312, %v855
  %1370 = vst.msk [vmem:[%s4 + $0x1c8] sm:$0xff] %vm1312, %v856
  %1371 = vst.msk [vmem:[%s4 + $0x1d0] sm:$0xff] %vm1312, %v857
  %1372 = vst.msk [vmem:[%s4 + $0x1d8] sm:$0xff] %vm1312, %v858
  %1373 = vst.msk [vmem:[%s4 + $0x1e0] sm:$0xff] %vm1312, %v859
  %1374 = vst.msk [vmem:[%s4 + $0x1e8] sm:$0xff] %vm1312, %v860
  %1375 = vst.msk [vmem:[%s4 + $0x1f0] sm:$0xff] %vm1312, %v861
  %1376 = vst.msk [vmem:[%s4 + $0x1f8] sm:$0xff] %vm1312, %v862
  %1377 = vst.msk [vmem:[%s4 + $0x200] sm:$0xff] %vm1312, %v863
  %1378 = vst.msk [vmem:[%s4 + $0x208] sm:$0xff] %vm1312, %v864
  %1379 = vst.msk [vmem:[%s4 + $0x210] sm:$0xff] %vm1312, %v865
  %1380 = vst.msk [vmem:[%s4 + $0x218] sm:$0xff] %vm1312, %v866
  %1381 = vst.msk [vmem:[%s4 + $0x220] sm:$0xff] %vm1312, %v867
  %1382 = vst.msk [vmem:[%s4 + $0x228] sm:$0xff] %vm1312, %v868
  %1383 = vst.msk [vmem:[%s4 + $0x230] sm:$0xff] %vm1312, %v869
  %1384 = vst.msk [vmem:[%s4 + $0x238] sm:$0xff] %vm1312, %v870
  %1385 = vst.msk [vmem:[%s4 + $0x240] sm:$0xff] %vm1312, %v871
  %1386 = vst.msk [vmem:[%s4 + $0x248] sm:$0xff] %vm1312, %v872
  %1387 = vst.msk [vmem:[%s4 + $0x250] sm:$0xff] %vm1312, %v873
  %1388 = vst.msk [vmem:[%s4 + $0x258] sm:$0xff] %vm1312, %v874
  %1389 = vst.msk [vmem:[%s4 + $0x260] sm:$0xff] %vm1312, %v875
  %1390 = vst.msk [vmem:[%s4 + $0x268] sm:$0xff] %vm1312, %v876
  %1391 = vst.msk [vmem:[%s4 + $0x270] sm:$0xff] %vm1312, %v877
  %1392 = vst.msk [vmem:[%s4 + $0x278] sm:$0xff] %vm1312, %v878
  %1393 = vst.msk [vmem:[%s4 + $0x280] sm:$0xff] %vm1312, %v879
  %1394 = vst.msk [vmem:[%s4 + $0x288] sm:$0xff] %vm1312, %v880
  %1395 = vst.msk [vmem:[%s4 + $0x290] sm:$0xff] %vm1312, %v881
  %1396 = vst.msk [vmem:[%s4 + $0x298] sm:$0xff] %vm1312, %v882
  %1397 = vst.msk [vmem:[%s4 + $0x2a0] sm:$0xff] %vm1312, %v883
  %1398 = vst.msk [vmem:[%s4 + $0x2a8] sm:$0xff] %vm1312, %v884
  %1399 = vst.msk [vmem:[%s4 + $0x2b0] sm:$0xff] %vm1312, %v885
  %1400 = vst.msk [vmem:[%s4 + $0x2b8] sm:$0xff] %vm1312, %v886
  %1401 = vst.msk [vmem:[%s4 + $0x2c0] sm:$0xff] %vm1312, %v887
  %1402 = vst.msk [vmem:[%s4 + $0x2c8] sm:$0xff] %vm1312, %v888
  %1403 = vst.msk [vmem:[%s4 + $0x2d0] sm:$0xff] %vm1312, %v889
  %1404 = vst.msk [vmem:[%s4 + $0x2d8] sm:$0xff] %vm1312, %v890
  %1405 = vst.msk [vmem:[%s4 + $0x2e0] sm:$0xff] %vm1312, %v891
  %1406 = vst.msk [vmem:[%s4 + $0x2e8] sm:$0xff] %vm1312, %v892
  %1407 = vst.msk [vmem:[%s4 + $0x2f0] sm:$0xff] %vm1312, %v893
  %1408 = vst.msk [vmem:[%s4 + $0x2f8] sm:$0xff] %vm1312, %v894
  %1409 = vst.msk [vmem:[%s4 + $0x300] sm:$0xff] %vm1312, %v895
  %1410 = vst.msk [vmem:[%s4 + $0x308] sm:$0xff] %vm1312, %v896
  %1411 = vst.msk [vmem:[%s4 + $0x310] sm:$0xff] %vm1312, %v897
  %1412 = vst.msk [vmem:[%s4 + $0x318] sm:$0xff] %vm1312, %v898
  %1413 = vst.msk [vmem:[%s4 + $0x320] sm:$0xff] %vm1312, %v899
  %1414 = vst.msk [vmem:[%s4 + $0x328] sm:$0xff] %vm1312, %v900
  %1415 = vst.msk [vmem:[%s4 + $0x330] sm:$0xff] %vm1312, %v901
  %1416 = vst.msk [vmem:[%s4 + $0x338] sm:$0xff] %vm1312, %v902
  %1417 = vst.msk [vmem:[%s4 + $0x340] sm:$0xff] %vm1312, %v903
  %1418 = vst.msk [vmem:[%s4 + $0x348] sm:$0xff] %vm1312, %v904
  %1419 = vst.msk [vmem:[%s4 + $0x350] sm:$0xff] %vm1312, %v905
  %1420 = vst.msk [vmem:[%s4 + $0x358] sm:$0xff] %vm1312, %v906
  %1421 = vst.msk [vmem:[%s4 + $0x360] sm:$0xff] %vm1312, %v907
  %1422 = vst.msk [vmem:[%s4 + $0x368] sm:$0xff] %vm1312, %v908
  %1423 = vst.msk [vmem:[%s4 + $0x370] sm:$0xff] %vm1312, %v909
  %1424 = vst.msk [vmem:[%s4 + $0x378] sm:$0xff] %vm1312, %v910
  %1425 = vst.msk [vmem:[%s4 + $0x380] sm:$0xff] %vm1312, %v911
  %1426 = vst.msk [vmem:[%s4 + $0x388] sm:$0xff] %vm1312, %v912
  %1427 = vst.msk [vmem:[%s4 + $0x390] sm:$0xff] %vm1312, %v913
  %1428 = vst.msk [vmem:[%s4 + $0x398] sm:$0xff] %vm1312, %v914
  %1429 = vst.msk [vmem:[%s4 + $0x3a0] sm:$0xff] %vm1312, %v915
  %1430 = vst.msk [vmem:[%s4 + $0x3a8] sm:$0xff] %vm1312, %v916
  %1431 = vst.msk [vmem:[%s4 + $0x3b0] sm:$0xff] %vm1312, %v917
  %1432 = vst.msk [vmem:[%s4 + $0x3b8] sm:$0xff] %vm1312, %v918
  %1433 = vst.msk [vmem:[%s4 + $0x3c0] sm:$0xff] %vm1312, %v919
  %1434 = vst.msk [vmem:[%s4 + $0x3c8] sm:$0xff] %vm1312, %v920
  %1435 = vst.msk [vmem:[%s4 + $0x3d0] sm:$0xff] %vm1312, %v921
  %1436 = vst.msk [vmem:[%s4 + $0x3d8] sm:$0xff] %vm1312, %v922
  %1437 = vst.msk [vmem:[%s4 + $0x3e0] sm:$0xff] %vm1312, %v923
  %1438 = vst.msk [vmem:[%s4 + $0x3e8] sm:$0xff] %vm1312, %v924
  %1439 = vst.msk [vmem:[%s4 + $0x3f0] sm:$0xff] %vm1312, %v925
  %1440 = vst.msk [vmem:[%s4 + $0x3f8] sm:$0xff] %vm1312, %v926
  // Predicated region
  $region18: #{res_block_2d.7} parent=0 // pred_check
    _
  $region19: #{res_block_2d.7} parent=0 // pred_check_branch
    %1442 = sbr.rel (0) target = $region21
  $region20: #{res_block_2d.7} parent=0 // pred_region
    _
  $region21: #{res_block_2d.7} parent=0 // pred_fallthru
    _
  // Predicated region
  $region22: #{res_block_2d.7} parent=0 // pred_check
    _
  $region23: #{res_block_2d.7} parent=0 // pred_check_branch
    %1444 = sbr.rel (0) target = $region25
  $region24: #{res_block_2d.7} parent=0 // pred_region
    _
  $region25: #{res_block_2d.7} parent=0 // pred_fallthru
    _

// kernel: res_block_2d.6
$region0: #{res_block_2d.6}
  #allocation0 [shape = 'u32[]', space=smem, size = 0x4, offset = 0x4, fixed_abs, tag = 'smem constant byte address 0x4 - core index']
  #allocation1 [shape = 'u32[144,128]{1,0:T(1,128)}', space=vmem, size = 0x12000, scoped, tag = 'internal scratch']
  %s0 = inlined_call_operand.vmem [shape: bf16[1024,36], index: 0, kind: input, shape index: {}]
  %s1 = inlined_call_operand.vmem [shape: bf16[36,8], index: 1, kind: input, shape index: {}]
  %s2 = inlined_call_operand.vmem [shape: bf16[1024,8], index: 2, kind: output, shape index: {0}]
  %s3 = inlined_call_operand.vmem [shape: f32[1,2,8], index: 3, kind: output, shape index: {1}]
  %4 = xla_tuple %s2, %s3
  %s5 = sld [smem:[#allocation0]]
  $region26: #{res_block_2d.6} parent=0
    _
  %s7 = ssub.s32 1, %s5
  %s8 = scalar_select 0, %s7, %s5
  // Predicated region
  $region2: #{res_block_2d.6} parent=0 // pred_check
    _
  $region3: #{res_block_2d.6} parent=0 // pred_check_branch
    %10 = sbr.rel (0) target = $region5
  $region4: #{res_block_2d.6} parent=0 // pred_region
    _
  $region5: #{res_block_2d.6} parent=0 // pred_fallthru
    _
  // Predicated region
  $region6: #{res_block_2d.6} parent=0 // pred_check
    _
  $region7: #{res_block_2d.6} parent=0 // pred_check_branch
    %12 = sbr.rel (0) target = $region9
  $region8: #{res_block_2d.6} parent=0 // pred_region
    _
  $region9: #{res_block_2d.6} parent=0 // pred_fallthru
    _
  %v14 = vld [vmem:[%s0] sm:$0xf]
  %v15 = vld [vmem:[%s0 + $0x4] sm:$0xf]
  %v16 = vld [vmem:[%s0 + $0x8] sm:$0xf]
  %v17 = vld [vmem:[%s0 + $0xc] sm:$0xf]
  %v18 = vld [vmem:[%s0 + $0x10] sm:$0xf]
  %v19 = vld [vmem:[%s0 + $0x14] sm:$0xf]
  %v20 = vld [vmem:[%s0 + $0x18] sm:$0xf]
  %v21 = vld [vmem:[%s0 + $0x1c] sm:$0xf]
  %v22 = vld [vmem:[%s0 + $0x20] sm:$0xf]
  %v23 = vld [vmem:[%s0 + $0x24] sm:$0xf]
  %v24 = vld [vmem:[%s0 + $0x28] sm:$0xf]
  %v25 = vld [vmem:[%s0 + $0x2c] sm:$0xf]
  %v26 = vld [vmem:[%s0 + $0x30] sm:$0xf]
  %v27 = vld [vmem:[%s0 + $0x34] sm:$0xf]
  %v28 = vld [vmem:[%s0 + $0x38] sm:$0xf]
  %v29 = vld [vmem:[%s0 + $0x3c] sm:$0xf]
  %v30 = vld [vmem:[%s0 + $0x40] sm:$0xf]
  %v31 = vld [vmem:[%s0 + $0x44] sm:$0xf]
  %v32 = vld [vmem:[%s0 + $0x48] sm:$0xf]
  %v33 = vld [vmem:[%s0 + $0x4c] sm:$0xf]
  %v34 = vld [vmem:[%s0 + $0x50] sm:$0xf]
  %v35 = vld [vmem:[%s0 + $0x54] sm:$0xf]
  %v36 = vld [vmem:[%s0 + $0x58] sm:$0xf]
  %v37 = vld [vmem:[%s0 + $0x5c] sm:$0xf]
  %v38 = vld [vmem:[%s0 + $0x60] sm:$0xf]
  %v39 = vld [vmem:[%s0 + $0x64] sm:$0xf]
  %v40 = vld [vmem:[%s0 + $0x68] sm:$0xf]
  %v41 = vld [vmem:[%s0 + $0x6c] sm:$0xf]
  %v42 = vld [vmem:[%s0 + $0x70] sm:$0xf]
  %v43 = vld [vmem:[%s0 + $0x74] sm:$0xf]
  %v44 = vld [vmem:[%s0 + $0x78] sm:$0xf]
  %v45 = vld [vmem:[%s0 + $0x7c] sm:$0xf]
  %v46 = vld [vmem:[%s0 + $0x80] sm:$0xf]
  %v47 = vld [vmem:[%s0 + $0x84] sm:$0xf]
  %v48 = vld [vmem:[%s0 + $0x88] sm:$0xf]
  %v49 = vld [vmem:[%s0 + $0x8c] sm:$0xf]
  %v50 = vld [vmem:[%s0 + $0x90] sm:$0xf]
  %v51 = vld [vmem:[%s0 + $0x94] sm:$0xf]
  %v52 = vld [vmem:[%s0 + $0x98] sm:$0xf]
  %v53 = vld [vmem:[%s0 + $0x9c] sm:$0xf]
  %v54 = vld [vmem:[%s0 + $0xa0] sm:$0xf]
  %v55 = vld [vmem:[%s0 + $0xa4] sm:$0xf]
  %v56 = vld [vmem:[%s0 + $0xa8] sm:$0xf]
  %v57 = vld [vmem:[%s0 + $0xac] sm:$0xf]
  %v58 = vld [vmem:[%s0 + $0xb0] sm:$0xf]
  %v59 = vld [vmem:[%s0 + $0xb4] sm:$0xf]
  %v60 = vld [vmem:[%s0 + $0xb8] sm:$0xf]
  %v61 = vld [vmem:[%s0 + $0xbc] sm:$0xf]
  %v62 = vld [vmem:[%s0 + $0xc0] sm:$0xf]
  %v63 = vld [vmem:[%s0 + $0xc4] sm:$0xf]
  %v64 = vld [vmem:[%s0 + $0xc8] sm:$0xf]
  %v65 = vld [vmem:[%s0 + $0xcc] sm:$0xf]
  %v66 = vld [vmem:[%s0 + $0xd0] sm:$0xf]
  %v67 = vld [vmem:[%s0 + $0xd4] sm:$0xf]
  %v68 = vld [vmem:[%s0 + $0xd8] sm:$0xf]
  %v69 = vld [vmem:[%s0 + $0xdc] sm:$0xf]
  %v70 = vld [vmem:[%s0 + $0xe0] sm:$0xf]
  %v71 = vld [vmem:[%s0 + $0xe4] sm:$0xf]
  %v72 = vld [vmem:[%s0 + $0xe8] sm:$0xf]
  %v73 = vld [vmem:[%s0 + $0xec] sm:$0xf]
  %v74 = vld [vmem:[%s0 + $0xf0] sm:$0xf]
  %v75 = vld [vmem:[%s0 + $0xf4] sm:$0xf]
  %v76 = vld [vmem:[%s0 + $0xf8] sm:$0xf]
  %v77 = vld [vmem:[%s0 + $0xfc] sm:$0xf]
  %v78 = vld [vmem:[%s0 + $0x100] sm:$0xf]
  %v79 = vld [vmem:[%s0 + $0x104] sm:$0xf]
  %v80 = vld [vmem:[%s0 + $0x108] sm:$0xf]
  %v81 = vld [vmem:[%s0 + $0x10c] sm:$0xf]
  %v82 = vld [vmem:[%s0 + $0x110] sm:$0xf]
  %v83 = vld [vmem:[%s0 + $0x114] sm:$0xf]
  %v84 = vld [vmem:[%s0 + $0x118] sm:$0xf]
  %v85 = vld [vmem:[%s0 + $0x11c] sm:$0xf]
  %v86 = vld [vmem:[%s0 + $0x120] sm:$0xf]
  %v87 = vld [vmem:[%s0 + $0x124] sm:$0xf]
  %v88 = vld [vmem:[%s0 + $0x128] sm:$0xf]
  %v89 = vld [vmem:[%s0 + $0x12c] sm:$0xf]
  %v90 = vld [vmem:[%s0 + $0x130] sm:$0xf]
  %v91 = vld [vmem:[%s0 + $0x134] sm:$0xf]
  %v92 = vld [vmem:[%s0 + $0x138] sm:$0xf]
  %v93 = vld [vmem:[%s0 + $0x13c] sm:$0xf]
  %v94 = vld [vmem:[%s0 + $0x140] sm:$0xf]
  %v95 = vld [vmem:[%s0 + $0x144] sm:$0xf]
  %v96 = vld [vmem:[%s0 + $0x148] sm:$0xf]
  %v97 = vld [vmem:[%s0 + $0x14c] sm:$0xf]
  %v98 = vld [vmem:[%s0 + $0x150] sm:$0xf]
  %v99 = vld [vmem:[%s0 + $0x154] sm:$0xf]
  %v100 = vld [vmem:[%s0 + $0x158] sm:$0xf]
  %v101 = vld [vmem:[%s0 + $0x15c] sm:$0xf]
  %v102 = vld [vmem:[%s0 + $0x160] sm:$0xf]
  %v103 = vld [vmem:[%s0 + $0x164] sm:$0xf]
  %v104 = vld [vmem:[%s0 + $0x168] sm:$0xf]
  %v105 = vld [vmem:[%s0 + $0x16c] sm:$0xf]
  %v106 = vld [vmem:[%s0 + $0x170] sm:$0xf]
  %v107 = vld [vmem:[%s0 + $0x174] sm:$0xf]
  %v108 = vld [vmem:[%s0 + $0x178] sm:$0xf]
  %v109 = vld [vmem:[%s0 + $0x17c] sm:$0xf]
  %v110 = vld [vmem:[%s0 + $0x180] sm:$0xf]
  %v111 = vld [vmem:[%s0 + $0x184] sm:$0xf]
  %v112 = vld [vmem:[%s0 + $0x188] sm:$0xf]
  %v113 = vld [vmem:[%s0 + $0x18c] sm:$0xf]
  %v114 = vld [vmem:[%s0 + $0x190] sm:$0xf]
  %v115 = vld [vmem:[%s0 + $0x194] sm:$0xf]
  %v116 = vld [vmem:[%s0 + $0x198] sm:$0xf]
  %v117 = vld [vmem:[%s0 + $0x19c] sm:$0xf]
  %v118 = vld [vmem:[%s0 + $0x1a0] sm:$0xf]
  %v119 = vld [vmem:[%s0 + $0x1a4] sm:$0xf]
  %v120 = vld [vmem:[%s0 + $0x1a8] sm:$0xf]
  %v121 = vld [vmem:[%s0 + $0x1ac] sm:$0xf]
  %v122 = vld [vmem:[%s0 + $0x1b0] sm:$0xf]
  %v123 = vld [vmem:[%s0 + $0x1b4] sm:$0xf]
  %v124 = vld [vmem:[%s0 + $0x1b8] sm:$0xf]
  %v125 = vld [vmem:[%s0 + $0x1bc] sm:$0xf]
  %v126 = vld [vmem:[%s0 + $0x1c0] sm:$0xf]
  %v127 = vld [vmem:[%s0 + $0x1c4] sm:$0xf]
  %v128 = vld [vmem:[%s0 + $0x1c8] sm:$0xf]
  %v129 = vld [vmem:[%s0 + $0x1cc] sm:$0xf]
  %v130 = vld [vmem:[%s0 + $0x1d0] sm:$0xf]
  %v131 = vld [vmem:[%s0 + $0x1d4] sm:$0xf]
  %v132 = vld [vmem:[%s0 + $0x1d8] sm:$0xf]
  %v133 = vld [vmem:[%s0 + $0x1dc] sm:$0xf]
  %v134 = vld [vmem:[%s0 + $0x1e0] sm:$0xf]
  %v135 = vld [vmem:[%s0 + $0x1e4] sm:$0xf]
  %v136 = vld [vmem:[%s0 + $0x1e8] sm:$0xf]
  %v137 = vld [vmem:[%s0 + $0x1ec] sm:$0xf]
  %v138 = vld [vmem:[%s0 + $0x1f0] sm:$0xf]
  %v139 = vld [vmem:[%s0 + $0x1f4] sm:$0xf]
  %v140 = vld [vmem:[%s0 + $0x1f8] sm:$0xf]
  %v141 = vld [vmem:[%s0 + $0x1fc] sm:$0xf]
  %v142 = vld [vmem:[%s1] sm:$0xf]
  %v143 = vld [vmem:[%s1 + $0x4] sm:$0xf]
  %v144 = vld [vmem:[%s1 + $0x8] sm:$0xf]
  %v145 = vld [vmem:[%s1 + $0xc] sm:$0xf]
  %v146 = vld [vmem:[%s1 + $0x10] sm:$0x3]
  %v275 = vunpack.c.l.b16 %v14
  %v276 = vunpack.c.l.b16 %v15
  %v277 = vunpack.c.l.b16 %v16
  %v278 = vunpack.c.l.b16 %v17
  %v279 = vunpack.c.l.b16 %v18
  %v280 = vunpack.c.l.b16 %v19
  %v281 = vunpack.c.l.b16 %v20
  %v282 = vunpack.c.l.b16 %v21
  %v283 = vunpack.c.l.b16 %v22
  %v284 = vunpack.c.l.b16 %v23
  %v285 = vunpack.c.l.b16 %v24
  %v286 = vunpack.c.l.b16 %v25
  %v287 = vunpack.c.l.b16 %v26
  %v288 = vunpack.c.l.b16 %v27
  %v289 = vunpack.c.l.b16 %v28
  %v290 = vunpack.c.l.b16 %v29
  %v291 = vunpack.c.l.b16 %v30
  %v292 = vunpack.c.l.b16 %v31
  %v293 = vunpack.c.l.b16 %v32
  %v294 = vunpack.c.l.b16 %v33
  %v295 = vunpack.c.l.b16 %v34
  %v296 = vunpack.c.l.b16 %v35
  %v297 = vunpack.c.l.b16 %v36
  %v298 = vunpack.c.l.b16 %v37
  %v299 = vunpack.c.l.b16 %v38
  %v300 = vunpack.c.l.b16 %v39
  %v301 = vunpack.c.l.b16 %v40
  %v302 = vunpack.c.l.b16 %v41
  %v303 = vunpack.c.l.b16 %v42
  %v304 = vunpack.c.l.b16 %v43
  %v305 = vunpack.c.l.b16 %v44
  %v306 = vunpack.c.l.b16 %v45
  %v307 = vunpack.c.l.b16 %v46
  %v308 = vunpack.c.l.b16 %v47
  %v309 = vunpack.c.l.b16 %v48
  %v310 = vunpack.c.l.b16 %v49
  %v311 = vunpack.c.l.b16 %v50
  %v312 = vunpack.c.l.b16 %v51
  %v313 = vunpack.c.l.b16 %v52
  %v314 = vunpack.c.l.b16 %v53
  %v315 = vunpack.c.l.b16 %v54
  %v316 = vunpack.c.l.b16 %v55
  %v317 = vunpack.c.l.b16 %v56
  %v318 = vunpack.c.l.b16 %v57
  %v319 = vunpack.c.l.b16 %v58
  %v320 = vunpack.c.l.b16 %v59
  %v321 = vunpack.c.l.b16 %v60
  %v322 = vunpack.c.l.b16 %v61
  %v323 = vunpack.c.l.b16 %v62
  %v324 = vunpack.c.l.b16 %v63
  %v325 = vunpack.c.l.b16 %v64
  %v326 = vunpack.c.l.b16 %v65
  %v327 = vunpack.c.l.b16 %v66
  %v328 = vunpack.c.l.b16 %v67
  %v329 = vunpack.c.l.b16 %v68
  %v330 = vunpack.c.l.b16 %v69
  %v331 = vunpack.c.l.b16 %v70
  %v332 = vunpack.c.l.b16 %v71
  %v333 = vunpack.c.l.b16 %v72
  %v334 = vunpack.c.l.b16 %v73
  %v335 = vunpack.c.l.b16 %v74
  %v336 = vunpack.c.l.b16 %v75
  %v337 = vunpack.c.l.b16 %v76
  %v338 = vunpack.c.l.b16 %v77
  %v339 = vunpack.c.l.b16 %v78
  %v340 = vunpack.c.l.b16 %v79
  %v341 = vunpack.c.l.b16 %v80
  %v342 = vunpack.c.l.b16 %v81
  %v343 = vunpack.c.l.b16 %v82
  %v344 = vunpack.c.l.b16 %v83
  %v345 = vunpack.c.l.b16 %v84
  %v346 = vunpack.c.l.b16 %v85
  %v347 = vunpack.c.l.b16 %v86
  %v348 = vunpack.c.l.b16 %v87
  %v349 = vunpack.c.l.b16 %v88
  %v350 = vunpack.c.l.b16 %v89
  %v351 = vunpack.c.l.b16 %v90
  %v352 = vunpack.c.l.b16 %v91
  %v353 = vunpack.c.l.b16 %v92
  %v354 = vunpack.c.l.b16 %v93
  %v355 = vunpack.c.l.b16 %v94
  %v356 = vunpack.c.l.b16 %v95
  %v357 = vunpack.c.l.b16 %v96
  %v358 = vunpack.c.l.b16 %v97
  %v359 = vunpack.c.l.b16 %v98
  %v360 = vunpack.c.l.b16 %v99
  %v361 = vunpack.c.l.b16 %v100
  %v362 = vunpack.c.l.b16 %v101
  %v363 = vunpack.c.l.b16 %v102
  %v364 = vunpack.c.l.b16 %v103
  %v365 = vunpack.c.l.b16 %v104
  %v366 = vunpack.c.l.b16 %v105
  %v367 = vunpack.c.l.b16 %v106
  %v368 = vunpack.c.l.b16 %v107
  %v369 = vunpack.c.l.b16 %v108
  %v370 = vunpack.c.l.b16 %v109
  %v371 = vunpack.c.l.b16 %v110
  %v372 = vunpack.c.l.b16 %v111
  %v373 = vunpack.c.l.b16 %v112
  %v374 = vunpack.c.l.b16 %v113
  %v375 = vunpack.c.l.b16 %v114
  %v376 = vunpack.c.l.b16 %v115
  %v377 = vunpack.c.l.b16 %v116
  %v378 = vunpack.c.l.b16 %v117
  %v379 = vunpack.c.l.b16 %v118
  %v380 = vunpack.c.l.b16 %v119
  %v381 = vunpack.c.l.b16 %v120
  %v382 = vunpack.c.l.b16 %v121
  %v383 = vunpack.c.l.b16 %v122
  %v384 = vunpack.c.l.b16 %v123
  %v385 = vunpack.c.l.b16 %v124
  %v386 = vunpack.c.l.b16 %v125
  %v387 = vunpack.c.l.b16 %v126
  %v388 = vunpack.c.l.b16 %v127
  %v389 = vunpack.c.l.b16 %v128
  %v390 = vunpack.c.l.b16 %v129
  %v391 = vunpack.c.l.b16 %v130
  %v392 = vunpack.c.l.b16 %v131
  %v393 = vunpack.c.l.b16 %v132
  %v394 = vunpack.c.l.b16 %v133
  %v395 = vunpack.c.l.b16 %v134
  %v396 = vunpack.c.l.b16 %v135
  %v397 = vunpack.c.l.b16 %v136
  %v398 = vunpack.c.l.b16 %v137
  %v399 = vunpack.c.l.b16 %v138
  %v400 = vunpack.c.l.b16 %v139
  %v401 = vunpack.c.l.b16 %v140
  %v402 = vunpack.c.l.b16 %v141
  %v403 = vpack.c.b16 %v276, %v275
  %v404 = vpack.c.b16 %v278, %v277
  %v405 = vpack.c.b16 %v280, %v279
  %v406 = vpack.c.b16 %v282, %v281
  %v407 = vpack.c.b16 %v284, %v283
  %v408 = vpack.c.b16 %v286, %v285
  %v409 = vpack.c.b16 %v288, %v287
  %v410 = vpack.c.b16 %v290, %v289
  %v411 = vpack.c.b16 %v292, %v291
  %v412 = vpack.c.b16 %v294, %v293
  %v413 = vpack.c.b16 %v296, %v295
  %v414 = vpack.c.b16 %v298, %v297
  %v415 = vpack.c.b16 %v300, %v299
  %v416 = vpack.c.b16 %v302, %v301
  %v417 = vpack.c.b16 %v304, %v303
  %v418 = vpack.c.b16 %v306, %v305
  %v419 = vpack.c.b16 %v308, %v307
  %v420 = vpack.c.b16 %v310, %v309
  %v421 = vpack.c.b16 %v312, %v311
  %v422 = vpack.c.b16 %v314, %v313
  %v423 = vpack.c.b16 %v316, %v315
  %v424 = vpack.c.b16 %v318, %v317
  %v425 = vpack.c.b16 %v320, %v319
  %v426 = vpack.c.b16 %v322, %v321
  %v427 = vpack.c.b16 %v324, %v323
  %v428 = vpack.c.b16 %v326, %v325
  %v429 = vpack.c.b16 %v328, %v327
  %v430 = vpack.c.b16 %v330, %v329
  %v431 = vpack.c.b16 %v332, %v331
  %v432 = vpack.c.b16 %v334, %v333
  %v433 = vpack.c.b16 %v336, %v335
  %v434 = vpack.c.b16 %v338, %v337
  %v435 = vpack.c.b16 %v340, %v339
  %v436 = vpack.c.b16 %v342, %v341
  %v437 = vpack.c.b16 %v344, %v343
  %v438 = vpack.c.b16 %v346, %v345
  %v439 = vpack.c.b16 %v348, %v347
  %v440 = vpack.c.b16 %v350, %v349
  %v441 = vpack.c.b16 %v352, %v351
  %v442 = vpack.c.b16 %v354, %v353
  %v443 = vpack.c.b16 %v356, %v355
  %v444 = vpack.c.b16 %v358, %v357
  %v445 = vpack.c.b16 %v360, %v359
  %v446 = vpack.c.b16 %v362, %v361
  %v447 = vpack.c.b16 %v364, %v363
  %v448 = vpack.c.b16 %v366, %v365
  %v449 = vpack.c.b16 %v368, %v367
  %v450 = vpack.c.b16 %v370, %v369
  %v451 = vpack.c.b16 %v372, %v371
  %v452 = vpack.c.b16 %v374, %v373
  %v453 = vpack.c.b16 %v376, %v375
  %v454 = vpack.c.b16 %v378, %v377
  %v455 = vpack.c.b16 %v380, %v379
  %v456 = vpack.c.b16 %v382, %v381
  %v457 = vpack.c.b16 %v384, %v383
  %v458 = vpack.c.b16 %v386, %v385
  %v459 = vpack.c.b16 %v388, %v387
  %v460 = vpack.c.b16 %v390, %v389
  %v461 = vpack.c.b16 %v392, %v391
  %v462 = vpack.c.b16 %v394, %v393
  %v463 = vpack.c.b16 %v396, %v395
  %v464 = vpack.c.b16 %v398, %v397
  %v465 = vpack.c.b16 %v400, %v399
  %v466 = vpack.c.b16 %v402, %v401
  %v472 = vunpack.c.l.b16 %v142
  %v473 = vunpack.c.l.b16 %v143
  %v474 = vunpack.c.l.b16 %v144
  %v475 = vunpack.c.l.b16 %v145
  %v476 = vunpack.c.l.b16 %v146
  %v477 = vpack.c.b16 %v473, %v472
  %v478 = vpack.c.b16 %v475, %v474
  %v479 = vpack.c.b16 %v476, %v476
  %vm482 = vcmask 293888
  %v484 = vsel %vm482, %v403, 0
  %v487 = vsel %vm482, %v404, 0
  %v490 = vsel %vm482, %v405, 0
  %v493 = vsel %vm482, %v406, 0
  %v496 = vsel %vm482, %v407, 0
  %v499 = vsel %vm482, %v408, 0
  %v502 = vsel %vm482, %v409, 0
  %v505 = vsel %vm482, %v410, 0
  %v508 = vsel %vm482, %v411, 0
  %v511 = vsel %vm482, %v412, 0
  %v514 = vsel %vm482, %v413, 0
  %v517 = vsel %vm482, %v414, 0
  %v520 = vsel %vm482, %v415, 0
  %v523 = vsel %vm482, %v416, 0
  %v526 = vsel %vm482, %v417, 0
  %v529 = vsel %vm482, %v418, 0
  %v532 = vsel %vm482, %v419, 0
  %v535 = vsel %vm482, %v420, 0
  %v538 = vsel %vm482, %v421, 0
  %v541 = vsel %vm482, %v422, 0
  %v544 = vsel %vm482, %v423, 0
  %v547 = vsel %vm482, %v424, 0
  %v550 = vsel %vm482, %v425, 0
  %v553 = vsel %vm482, %v426, 0
  %v556 = vsel %vm482, %v427, 0
  %v559 = vsel %vm482, %v428, 0
  %v562 = vsel %vm482, %v429, 0
  %v565 = vsel %vm482, %v430, 0
  %v568 = vsel %vm482, %v431, 0
  %v571 = vsel %vm482, %v432, 0
  %v574 = vsel %vm482, %v433, 0
  %v577 = vsel %vm482, %v434, 0
  %v580 = vsel %vm482, %v435, 0
  %v583 = vsel %vm482, %v436, 0
  %v586 = vsel %vm482, %v437, 0
  %v589 = vsel %vm482, %v438, 0
  %v592 = vsel %vm482, %v439, 0
  %v595 = vsel %vm482, %v440, 0
  %v598 = vsel %vm482, %v441, 0
  %v601 = vsel %vm482, %v442, 0
  %v604 = vsel %vm482, %v443, 0
  %v607 = vsel %vm482, %v444, 0
  %v610 = vsel %vm482, %v445, 0
  %v613 = vsel %vm482, %v446, 0
  %v616 = vsel %vm482, %v447, 0
  %v619 = vsel %vm482, %v448, 0
  %v622 = vsel %vm482, %v449, 0
  %v625 = vsel %vm482, %v450, 0
  %v628 = vsel %vm482, %v451, 0
  %v631 = vsel %vm482, %v452, 0
  %v634 = vsel %vm482, %v453, 0
  %v637 = vsel %vm482, %v454, 0
  %v640 = vsel %vm482, %v455, 0
  %v643 = vsel %vm482, %v456, 0
  %v646 = vsel %vm482, %v457, 0
  %v649 = vsel %vm482, %v458, 0
  %v652 = vsel %vm482, %v459, 0
  %v655 = vsel %vm482, %v460, 0
  %v658 = vsel %vm482, %v461, 0
  %v661 = vsel %vm482, %v462, 0
  %v664 = vsel %vm482, %v463, 0
  %v667 = vsel %vm482, %v464, 0
  %v670 = vsel %vm482, %v465, 0
  %v673 = vsel %vm482, %v466, 0
  %vm675 = vcmask 1041408
  %v677 = vsel %vm675, %v479, 0
  %679 = vmatprep.subr.bf16.mxu0 0
  %680 = vmatpush1.bf16.msra.mxu0 %v477
  %681 = vmatprep.subr.bf16.mxu0 0
  %682 = vmatpush1.bf16.msra.mxu0 %v478
  %683 = vmatprep.subr.bf16.mxu0 0
  %684 = vmatpush1.bf16.msra.mxu0 %v677
  %685 = vmatprep.subr.bf16.mxu0 0
  %686 = vmatpush1.bf16.msra.mxu0 0
  %687 = vmatprep.subr.bf16.mxu0 0
  %688 = vmatpush1.bf16.msra.mxu0 0
  %689 = vmatprep.subr.bf16.mxu0 0
  %690 = vmatpush1.bf16.msra.mxu0 0
  %691 = vmatprep.subr.bf16.mxu0 0
  %692 = vmatpush1.bf16.msra.mxu0 0
  %693 = vmatprep.subr.bf16.mxu0 0
  %694 = vmatpush1.bf16.msra.mxu0 0
  %695 = vmatprep.subr.bf16.mxu0 0
  %696 = vmatpush1.bf16.msra.mxu0 0
  %697 = vmatprep.subr.bf16.mxu0 0
  %698 = vmatpush1.bf16.msra.mxu0 0
  %699 = vmatprep.subr.bf16.mxu0 0
  %700 = vmatpush1.bf16.msra.mxu0 0
  %701 = vmatprep.subr.bf16.mxu0 0
  %702 = vmatpush1.bf16.msra.mxu0 0
  %703 = vmatprep.subr.bf16.mxu0 0
  %704 = vmatpush1.bf16.msra.mxu0 0
  %705 = vmatprep.subr.bf16.mxu0 0
  %706 = vmatpush1.bf16.msra.mxu0 0
  %707 = vmatprep.subr.bf16.mxu0 0
  %708 = vmatpush1.bf16.msra.mxu0 0
  %709 = vmatprep.subr.bf16.mxu0 0
  %710 = vmatpush1.bf16.msra.mxu0 0
  %711 = vmatprep.mubr.bf16.mxu0 0
  %712 = vmatmul.mubr.bf16.gmra.mrb[0].mxu0 %v484
  %v713 = vpop.f32.mrb[0].mxu0
  %v714 = vadd.f32 0.0, %v713
  %v715 = vpop.f32.mrb[0].mxu0
  %v716 = vpop.f32.mrb[0].mxu0
  %v717 = vadd.f32 0.0, %v716
  %v718 = vpop.f32.mrb[0].mxu0
  %719 = vmatprep.mubr.bf16.mxu0 0
  %720 = vmatmul.mubr.bf16.gmra.mrb[0].mxu0 %v487
  %v721 = vpop.f32.mrb[0].mxu0
  %v722 = vadd.f32 0.0, %v721
  %v723 = vpop.f32.mrb[0].mxu0
  %v724 = vpop.f32.mrb[0].mxu0
  %v725 = vadd.f32 0.0, %v724
  %v726 = vpop.f32.mrb[0].mxu0
  %727 = vmatprep.mubr.bf16.mxu0 0
  %728 = vmatmul.mubr.bf16.gmra.mrb[0].mxu0 %v490
  %v729 = vpop.f32.mrb[0].mxu0
  %v730 = vadd.f32 0.0, %v729
  %v731 = vpop.f32.mrb[0].mxu0
  %v732 = vpop.f32.mrb[0].mxu0
  %v733 = vadd.f32 0.0, %v732
  %v734 = vpop.f32.mrb[0].mxu0
  %735 = vmatprep.mubr.bf16.mxu0 0
  %736 = vmatmul.mubr.bf16.gmra.mrb[0].mxu0 %v493
  %v737 = vpop.f32.mrb[0].mxu0
  %v738 = vadd.f32 0.0, %v737
  %v739 = vpop.f32.mrb[0].mxu0
  %v740 = vpop.f32.mrb[0].mxu0
  %v741 = vadd.f32 0.0, %v740
  %v742 = vpop.f32.mrb[0].mxu0
  %743 = vmatprep.mubr.bf16.mxu0 0
  %744 = vmatmul.mubr.bf16.gmra.mrb[0].mxu0 %v496
  %v745 = vpop.f32.mrb[0].mxu0
  %v746 = vadd.f32 0.0, %v745
  %v747 = vpop.f32.mrb[0].mxu0
  %v748 = vpop.f32.mrb[0].mxu0
  %v749 = vadd.f32 0.0, %v748
  %v750 = vpop.f32.mrb[0].mxu0
  %751 = vmatprep.mubr.bf16.mxu0 0
  %752 = vmatmul.mubr.bf16.gmra.mrb[0].mxu0 %v499
  %v753 = vpop.f32.mrb[0].mxu0
  %v754 = vadd.f32 0.0, %v753
  %v755 = vpop.f32.mrb[0].mxu0
  %v756 = vpop.f32.mrb[0].mxu0
  %v757 = vadd.f32 0.0, %v756
  %v758 = vpop.f32.mrb[0].mxu0
  %759 = vmatprep.mubr.bf16.mxu0 0
  %760 = vmatmul.mubr.bf16.gmra.mrb[0].mxu0 %v502
  %v761 = vpop.f32.mrb[0].mxu0
  %v762 = vadd.f32 0.0, %v761
  %v763 = vpop.f32.mrb[0].mxu0
  %v764 = vpop.f32.mrb[0].mxu0
  %v765 = vadd.f32 0.0, %v764
  %v766 = vpop.f32.mrb[0].mxu0
  %767 = vmatprep.mubr.bf16.mxu0 0
  %768 = vmatmul.mubr.bf16.gmra.mrb[0].mxu0 %v505
  %v769 = vpop.f32.mrb[0].mxu0
  %v770 = vadd.f32 0.0, %v769
  %v771 = vpop.f32.mrb[0].mxu0
  %v772 = vpop.f32.mrb[0].mxu0
  %v773 = vadd.f32 0.0, %v772
  %v774 = vpop.f32.mrb[0].mxu0
  %775 = vmatprep.mubr.bf16.mxu0 0
  %776 = vmatmul.mubr.bf16.gmra.mrb[0].mxu0 %v508
  %v777 = vpop.f32.mrb[0].mxu0
  %v778 = vadd.f32 0.0, %v777
  %v779 = vpop.f32.mrb[0].mxu0
  %v780 = vpop.f32.mrb[0].mxu0
  %v781 = vadd.f32 0.0, %v780
  %v782 = vpop.f32.mrb[0].mxu0
  %783 = vmatprep.mubr.bf16.mxu0 0
  %784 = vmatmul.mubr.bf16.gmra.mrb[0].mxu0 %v511
  %v785 = vpop.f32.mrb[0].mxu0
  %v786 = vadd.f32 0.0, %v785
  %v787 = vpop.f32.mrb[0].mxu0
  %v788 = vpop.f32.mrb[0].mxu0
  %v789 = vadd.f32 0.0, %v788
  %v790 = vpop.f32.mrb[0].mxu0
  %791 = vmatprep.mubr.bf16.mxu0 0
  %792 = vmatmul.mubr.bf16.gmra.mrb[0].mxu0 %v514
  %v793 = vpop.f32.mrb[0].mxu0
  %v794 = vadd.f32 0.0, %v793
  %v795 = vpop.f32.mrb[0].mxu0
  %v796 = vpop.f32.mrb[0].mxu0
  %v797 = vadd.f32 0.0, %v796
  %v798 = vpop.f32.mrb[0].mxu0
  %799 = vmatprep.mubr.bf16.mxu0 0
  %800 = vmatmul.mubr.bf16.gmra.mrb[0].mxu0 %v517
  %v801 = vpop.f32.mrb[0].mxu0
  %v802 = vadd.f32 0.0, %v801
  %v803 = vpop.f32.mrb[0].mxu0
  %v804 = vpop.f32.mrb[0].mxu0
  %v805 = vadd.f32 0.0, %v804
  %v806 = vpop.f32.mrb[0].mxu0
  %807 = vmatprep.mubr.bf16.mxu0 0
  %808 = vmatmul.mubr.bf16.gmra.mrb[0].mxu0 %v520
  %v809 = vpop.f32.mrb[0].mxu0
  %v810 = vadd.f32 0.0, %v809
  %v811 = vpop.f32.mrb[0].mxu0
  %v812 = vpop.f32.mrb[0].mxu0
  %v813 = vadd.f32 0.0, %v812
  %v814 = vpop.f32.mrb[0].mxu0
  %815 = vmatprep.mubr.bf16.mxu0 0
  %816 = vmatmul.mubr.bf16.gmra.mrb[0].mxu0 %v523
  %v817 = vpop.f32.mrb[0].mxu0
  %v818 = vadd.f32 0.0, %v817
  %v819 = vpop.f32.mrb[0].mxu0
  %v820 = vpop.f32.mrb[0].mxu0
  %v821 = vadd.f32 0.0, %v820
  %v822 = vpop.f32.mrb[0].mxu0
  %823 = vmatprep.mubr.bf16.mxu0 0
  %824 = vmatmul.mubr.bf16.gmra.mrb[0].mxu0 %v526
  %v825 = vpop.f32.mrb[0].mxu0
  %v826 = vadd.f32 0.0, %v825
  %v827 = vpop.f32.mrb[0].mxu0
  %v828 = vpop.f32.mrb[0].mxu0
  %v829 = vadd.f32 0.0, %v828
  %v830 = vpop.f32.mrb[0].mxu0
  %831 = vmatprep.mubr.bf16.mxu0 0
  %832 = vmatmul.mubr.bf16.gmra.mrb[0].mxu0 %v529
  %v833 = vpop.f32.mrb[0].mxu0
  %v834 = vadd.f32 0.0, %v833
  %v835 = vpop.f32.mrb[0].mxu0
  %v836 = vpop.f32.mrb[0].mxu0
  %v837 = vadd.f32 0.0, %v836
  %v838 = vpop.f32.mrb[0].mxu0
  %839 = vmatprep.mubr.bf16.mxu0 0
  %840 = vmatmul.mubr.bf16.gmra.mrb[0].mxu0 %v532
  %v841 = vpop.f32.mrb[0].mxu0
  %v842 = vadd.f32 0.0, %v841
  %v843 = vpop.f32.mrb[0].mxu0
  %v844 = vpop.f32.mrb[0].mxu0
  %v845 = vadd.f32 0.0, %v844
  %v846 = vpop.f32.mrb[0].mxu0
  %847 = vmatprep.mubr.bf16.mxu0 0
  %848 = vmatmul.mubr.bf16.gmra.mrb[0].mxu0 %v535
  %v849 = vpop.f32.mrb[0].mxu0
  %v850 = vadd.f32 0.0, %v849
  %v851 = vpop.f32.mrb[0].mxu0
  %v852 = vpop.f32.mrb[0].mxu0
  %v853 = vadd.f32 0.0, %v852
  %v854 = vpop.f32.mrb[0].mxu0
  %855 = vmatprep.mubr.bf16.mxu0 0
  %856 = vmatmul.mubr.bf16.gmra.mrb[0].mxu0 %v538
  %v857 = vpop.f32.mrb[0].mxu0
  %v858 = vadd.f32 0.0, %v857
  %v859 = vpop.f32.mrb[0].mxu0
  %v860 = vpop.f32.mrb[0].mxu0
  %v861 = vadd.f32 0.0, %v860
  %v862 = vpop.f32.mrb[0].mxu0
  %863 = vmatprep.mubr.bf16.mxu0 0
  %864 = vmatmul.mubr.bf16.gmra.mrb[0].mxu0 %v541
  %v865 = vpop.f32.mrb[0].mxu0
  %v866 = vadd.f32 0.0, %v865
  %v867 = vpop.f32.mrb[0].mxu0
  %v868 = vpop.f32.mrb[0].mxu0
  %v869 = vadd.f32 0.0, %v868
  %v870 = vpop.f32.mrb[0].mxu0
  %871 = vmatprep.mubr.bf16.mxu0 0
  %872 = vmatmul.mubr.bf16.gmra.mrb[0].mxu0 %v544
  %v873 = vpop.f32.mrb[0].mxu0
  %v874 = vadd.f32 0.0, %v873
  %v875 = vpop.f32.mrb[0].mxu0
  %v876 = vpop.f32.mrb[0].mxu0
  %v877 = vadd.f32 0.0, %v876
  %v878 = vpop.f32.mrb[0].mxu0
  %879 = vmatprep.mubr.bf16.mxu0 0
  %880 = vmatmul.mubr.bf16.gmra.mrb[0].mxu0 %v547
  %v881 = vpop.f32.mrb[0].mxu0
  %v882 = vadd.f32 0.0, %v881
  %v883 = vpop.f32.mrb[0].mxu0
  %v884 = vpop.f32.mrb[0].mxu0
  %v885 = vadd.f32 0.0, %v884
  %v886 = vpop.f32.mrb[0].mxu0
  %887 = vmatprep.mubr.bf16.mxu0 0
  %888 = vmatmul.mubr.bf16.gmra.mrb[0].mxu0 %v550
  %v889 = vpop.f32.mrb[0].mxu0
  %v890 = vadd.f32 0.0, %v889
  %v891 = vpop.f32.mrb[0].mxu0
  %v892 = vpop.f32.mrb[0].mxu0
  %v893 = vadd.f32 0.0, %v892
  %v894 = vpop.f32.mrb[0].mxu0
  %895 = vmatprep.mubr.bf16.mxu0 0
  %896 = vmatmul.mubr.bf16.gmra.mrb[0].mxu0 %v553
  %v897 = vpop.f32.mrb[0].mxu0
  %v898 = vadd.f32 0.0, %v897
  %v899 = vpop.f32.mrb[0].mxu0
  %v900 = vpop.f32.mrb[0].mxu0
  %v901 = vadd.f32 0.0, %v900
  %v902 = vpop.f32.mrb[0].mxu0
  %903 = vmatprep.mubr.bf16.mxu0 0
  %904 = vmatmul.mubr.bf16.gmra.mrb[0].mxu0 %v556
  %v905 = vpop.f32.mrb[0].mxu0
  %v906 = vadd.f32 0.0, %v905
  %v907 = vpop.f32.mrb[0].mxu0
  %v908 = vpop.f32.mrb[0].mxu0
  %v909 = vadd.f32 0.0, %v908
  %v910 = vpop.f32.mrb[0].mxu0
  %911 = vmatprep.mubr.bf16.mxu0 0
  %912 = vmatmul.mubr.bf16.gmra.mrb[0].mxu0 %v559
  %v913 = vpop.f32.mrb[0].mxu0
  %v914 = vadd.f32 0.0, %v913
  %v915 = vpop.f32.mrb[0].mxu0
  %v916 = vpop.f32.mrb[0].mxu0
  %v917 = vadd.f32 0.0, %v916
  %v918 = vpop.f32.mrb[0].mxu0
  %919 = vmatprep.mubr.bf16.mxu0 0
  %920 = vmatmul.mubr.bf16.gmra.mrb[0].mxu0 %v562
  %v921 = vpop.f32.mrb[0].mxu0
  %v922 = vadd.f32 0.0, %v921
  %v923 = vpop.f32.mrb[0].mxu0
  %v924 = vpop.f32.mrb[0].mxu0
  %v925 = vadd.f32 0.0, %v924
  %v926 = vpop.f32.mrb[0].mxu0
  %927 = vmatprep.mubr.bf16.mxu0 0
  %928 = vmatmul.mubr.bf16.gmra.mrb[0].mxu0 %v565
  %v929 = vpop.f32.mrb[0].mxu0
  %v930 = vadd.f32 0.0, %v929
  %v931 = vpop.f32.mrb[0].mxu0
  %v932 = vpop.f32.mrb[0].mxu0
  %v933 = vadd.f32 0.0, %v932
  %v934 = vpop.f32.mrb[0].mxu0
  %935 = vmatprep.mubr.bf16.mxu0 0
  %936 = vmatmul.mubr.bf16.gmra.mrb[0].mxu0 %v568
  %v937 = vpop.f32.mrb[0].mxu0
  %v938 = vadd.f32 0.0, %v937
  %v939 = vpop.f32.mrb[0].mxu0
  %v940 = vpop.f32.mrb[0].mxu0
  %v941 = vadd.f32 0.0, %v940
  %v942 = vpop.f32.mrb[0].mxu0
  %943 = vmatprep.mubr.bf16.mxu0 0
  %944 = vmatmul.mubr.bf16.gmra.mrb[0].mxu0 %v571
  %v945 = vpop.f32.mrb[0].mxu0
  %v946 = vadd.f32 0.0, %v945
  %v947 = vpop.f32.mrb[0].mxu0
  %v948 = vpop.f32.mrb[0].mxu0
  %v949 = vadd.f32 0.0, %v948
  %v950 = vpop.f32.mrb[0].mxu0
  %951 = vmatprep.mubr.bf16.mxu0 0
  %952 = vmatmul.mubr.bf16.gmra.mrb[0].mxu0 %v574
  %v953 = vpop.f32.mrb[0].mxu0
  %v954 = vadd.f32 0.0, %v953
  %v955 = vpop.f32.mrb[0].mxu0
  %v956 = vpop.f32.mrb[0].mxu0
  %v957 = vadd.f32 0.0, %v956
  %v958 = vpop.f32.mrb[0].mxu0
  %959 = vmatprep.mubr.bf16.mxu0 0
  %960 = vmatmul.mubr.bf16.gmra.mrb[0].mxu0 %v577
  %v961 = vpop.f32.mrb[0].mxu0
  %v962 = vadd.f32 0.0, %v961
  %v963 = vpop.f32.mrb[0].mxu0
  %v964 = vpop.f32.mrb[0].mxu0
  %v965 = vadd.f32 0.0, %v964
  %v966 = vpop.f32.mrb[0].mxu0
  %967 = vmatprep.mubr.bf16.mxu0 0
  %968 = vmatmul.mubr.bf16.gmra.mrb[0].mxu0 %v580
  %v969 = vpop.f32.mrb[0].mxu0
  %v970 = vadd.f32 0.0, %v969
  %v971 = vpop.f32.mrb[0].mxu0
  %v972 = vpop.f32.mrb[0].mxu0
  %v973 = vadd.f32 0.0, %v972
  %v974 = vpop.f32.mrb[0].mxu0
  %975 = vmatprep.mubr.bf16.mxu0 0
  %976 = vmatmul.mubr.bf16.gmra.mrb[0].mxu0 %v583
  %v977 = vpop.f32.mrb[0].mxu0
  %v978 = vadd.f32 0.0, %v977
  %v979 = vpop.f32.mrb[0].mxu0
  %v980 = vpop.f32.mrb[0].mxu0
  %v981 = vadd.f32 0.0, %v980
  %v982 = vpop.f32.mrb[0].mxu0
  %983 = vmatprep.mubr.bf16.mxu0 0
  %984 = vmatmul.mubr.bf16.gmra.mrb[0].mxu0 %v586
  %v985 = vpop.f32.mrb[0].mxu0
  %v986 = vadd.f32 0.0, %v985
  %v987 = vpop.f32.mrb[0].mxu0
  %v988 = vpop.f32.mrb[0].mxu0
  %v989 = vadd.f32 0.0, %v988
  %v990 = vpop.f32.mrb[0].mxu0
  %991 = vmatprep.mubr.bf16.mxu0 0
  %992 = vmatmul.mubr.bf16.gmra.mrb[0].mxu0 %v589
  %v993 = vpop.f32.mrb[0].mxu0
  %v994 = vadd.f32 0.0, %v993
  %v995 = vpop.f32.mrb[0].mxu0
  %v996 = vpop.f32.mrb[0].mxu0
  %v997 = vadd.f32 0.0, %v996
  %v998 = vpop.f32.mrb[0].mxu0
  %999 = vmatprep.mubr.bf16.mxu0 0
  %1000 = vmatmul.mubr.bf16.gmra.mrb[0].mxu0 %v592
  %v1001 = vpop.f32.mrb[0].mxu0
  %v1002 = vadd.f32 0.0, %v1001
  %v1003 = vpop.f32.mrb[0].mxu0
  %v1004 = vpop.f32.mrb[0].mxu0
  %v1005 = vadd.f32 0.0, %v1004
  %v1006 = vpop.f32.mrb[0].mxu0
  %1007 = vmatprep.mubr.bf16.mxu0 0
  %1008 = vmatmul.mubr.bf16.gmra.mrb[0].mxu0 %v595
  %v1009 = vpop.f32.mrb[0].mxu0
  %v1010 = vadd.f32 0.0, %v1009
  %v1011 = vpop.f32.mrb[0].mxu0
  %v1012 = vpop.f32.mrb[0].mxu0
  %v1013 = vadd.f32 0.0, %v1012
  %v1014 = vpop.f32.mrb[0].mxu0
  %1015 = vmatprep.mubr.bf16.mxu0 0
  %1016 = vmatmul.mubr.bf16.gmra.mrb[0].mxu0 %v598
  %v1017 = vpop.f32.mrb[0].mxu0
  %v1018 = vadd.f32 0.0, %v1017
  %v1019 = vpop.f32.mrb[0].mxu0
  %v1020 = vpop.f32.mrb[0].mxu0
  %v1021 = vadd.f32 0.0, %v1020
  %v1022 = vpop.f32.mrb[0].mxu0
  %1023 = vmatprep.mubr.bf16.mxu0 0
  %1024 = vmatmul.mubr.bf16.gmra.mrb[0].mxu0 %v601
  %v1025 = vpop.f32.mrb[0].mxu0
  %v1026 = vadd.f32 0.0, %v1025
  %v1027 = vpop.f32.mrb[0].mxu0
  %v1028 = vpop.f32.mrb[0].mxu0
  %v1029 = vadd.f32 0.0, %v1028
  %v1030 = vpop.f32.mrb[0].mxu0
  %1031 = vmatprep.mubr.bf16.mxu0 0
  %1032 = vmatmul.mubr.bf16.gmra.mrb[0].mxu0 %v604
  %v1033 = vpop.f32.mrb[0].mxu0
  %v1034 = vadd.f32 0.0, %v1033
  %v1035 = vpop.f32.mrb[0].mxu0
  %v1036 = vpop.f32.mrb[0].mxu0
  %v1037 = vadd.f32 0.0, %v1036
  %v1038 = vpop.f32.mrb[0].mxu0
  %1039 = vmatprep.mubr.bf16.mxu0 0
  %1040 = vmatmul.mubr.bf16.gmra.mrb[0].mxu0 %v607
  %v1041 = vpop.f32.mrb[0].mxu0
  %v1042 = vadd.f32 0.0, %v1041
  %v1043 = vpop.f32.mrb[0].mxu0
  %v1044 = vpop.f32.mrb[0].mxu0
  %v1045 = vadd.f32 0.0, %v1044
  %v1046 = vpop.f32.mrb[0].mxu0
  %1047 = vmatprep.mubr.bf16.mxu0 0
  %1048 = vmatmul.mubr.bf16.gmra.mrb[0].mxu0 %v610
  %v1049 = vpop.f32.mrb[0].mxu0
  %v1050 = vadd.f32 0.0, %v1049
  %v1051 = vpop.f32.mrb[0].mxu0
  %v1052 = vpop.f32.mrb[0].mxu0
  %v1053 = vadd.f32 0.0, %v1052
  %v1054 = vpop.f32.mrb[0].mxu0
  %1055 = vmatprep.mubr.bf16.mxu0 0
  %1056 = vmatmul.mubr.bf16.gmra.mrb[0].mxu0 %v613
  %v1057 = vpop.f32.mrb[0].mxu0
  %v1058 = vadd.f32 0.0, %v1057
  %v1059 = vpop.f32.mrb[0].mxu0
  %v1060 = vpop.f32.mrb[0].mxu0
  %v1061 = vadd.f32 0.0, %v1060
  %v1062 = vpop.f32.mrb[0].mxu0
  %1063 = vmatprep.mubr.bf16.mxu0 0
  %1064 = vmatmul.mubr.bf16.gmra.mrb[0].mxu0 %v616
  %v1065 = vpop.f32.mrb[0].mxu0
  %v1066 = vadd.f32 0.0, %v1065
  %v1067 = vpop.f32.mrb[0].mxu0
  %v1068 = vpop.f32.mrb[0].mxu0
  %v1069 = vadd.f32 0.0, %v1068
  %v1070 = vpop.f32.mrb[0].mxu0
  %1071 = vmatprep.mubr.bf16.mxu0 0
  %1072 = vmatmul.mubr.bf16.gmra.mrb[0].mxu0 %v619
  %v1073 = vpop.f32.mrb[0].mxu0
  %v1074 = vadd.f32 0.0, %v1073
  %v1075 = vpop.f32.mrb[0].mxu0
  %v1076 = vpop.f32.mrb[0].mxu0
  %v1077 = vadd.f32 0.0, %v1076
  %v1078 = vpop.f32.mrb[0].mxu0
  %1079 = vmatprep.mubr.bf16.mxu0 0
  %1080 = vmatmul.mubr.bf16.gmra.mrb[0].mxu0 %v622
  %v1081 = vpop.f32.mrb[0].mxu0
  %v1082 = vadd.f32 0.0, %v1081
  %v1083 = vpop.f32.mrb[0].mxu0
  %v1084 = vpop.f32.mrb[0].mxu0
  %v1085 = vadd.f32 0.0, %v1084
  %v1086 = vpop.f32.mrb[0].mxu0
  %1087 = vmatprep.mubr.bf16.mxu0 0
  %1088 = vmatmul.mubr.bf16.gmra.mrb[0].mxu0 %v625
  %v1089 = vpop.f32.mrb[0].mxu0
  %v1090 = vadd.f32 0.0, %v1089
  %v1091 = vpop.f32.mrb[0].mxu0
  %v1092 = vpop.f32.mrb[0].mxu0
  %v1093 = vadd.f32 0.0, %v1092
  %v1094 = vpop.f32.mrb[0].mxu0
  %1095 = vmatprep.mubr.bf16.mxu0 0
  %1096 = vmatmul.mubr.bf16.gmra.mrb[0].mxu0 %v628
  %v1097 = vpop.f32.mrb[0].mxu0
  %v1098 = vadd.f32 0.0, %v1097
  %v1099 = vpop.f32.mrb[0].mxu0
  %v1100 = vpop.f32.mrb[0].mxu0
  %v1101 = vadd.f32 0.0, %v1100
  %v1102 = vpop.f32.mrb[0].mxu0
  %1103 = vmatprep.mubr.bf16.mxu0 0
  %1104 = vmatmul.mubr.bf16.gmra.mrb[0].mxu0 %v631
  %v1105 = vpop.f32.mrb[0].mxu0
  %v1106 = vadd.f32 0.0, %v1105
  %v1107 = vpop.f32.mrb[0].mxu0
  %v1108 = vpop.f32.mrb[0].mxu0
  %v1109 = vadd.f32 0.0, %v1108
  %v1110 = vpop.f32.mrb[0].mxu0
  %1111 = vmatprep.mubr.bf16.mxu0 0
  %1112 = vmatmul.mubr.bf16.gmra.mrb[0].mxu0 %v634
  %v1113 = vpop.f32.mrb[0].mxu0
  %v1114 = vadd.f32 0.0, %v1113
  %v1115 = vpop.f32.mrb[0].mxu0
  %v1116 = vpop.f32.mrb[0].mxu0
  %v1117 = vadd.f32 0.0, %v1116
  %v1118 = vpop.f32.mrb[0].mxu0
  %1119 = vmatprep.mubr.bf16.mxu0 0
  %1120 = vmatmul.mubr.bf16.gmra.mrb[0].mxu0 %v637
  %v1121 = vpop.f32.mrb[0].mxu0
  %v1122 = vadd.f32 0.0, %v1121
  %v1123 = vpop.f32.mrb[0].mxu0
  %v1124 = vpop.f32.mrb[0].mxu0
  %v1125 = vadd.f32 0.0, %v1124
  %v1126 = vpop.f32.mrb[0].mxu0
  %1127 = vmatprep.mubr.bf16.mxu0 0
  %1128 = vmatmul.mubr.bf16.gmra.mrb[0].mxu0 %v640
  %v1129 = vpop.f32.mrb[0].mxu0
  %v1130 = vadd.f32 0.0, %v1129
  %v1131 = vpop.f32.mrb[0].mxu0
  %v1132 = vpop.f32.mrb[0].mxu0
  %v1133 = vadd.f32 0.0, %v1132
  %v1134 = vpop.f32.mrb[0].mxu0
  %1135 = vmatprep.mubr.bf16.mxu0 0
  %1136 = vmatmul.mubr.bf16.gmra.mrb[0].mxu0 %v643
  %v1137 = vpop.f32.mrb[0].mxu0
  %v1138 = vadd.f32 0.0, %v1137
  %v1139 = vpop.f32.mrb[0].mxu0
  %v1140 = vpop.f32.mrb[0].mxu0
  %v1141 = vadd.f32 0.0, %v1140
  %v1142 = vpop.f32.mrb[0].mxu0
  %1143 = vmatprep.mubr.bf16.mxu0 0
  %1144 = vmatmul.mubr.bf16.gmra.mrb[0].mxu0 %v646
  %v1145 = vpop.f32.mrb[0].mxu0
  %v1146 = vadd.f32 0.0, %v1145
  %v1147 = vpop.f32.mrb[0].mxu0
  %v1148 = vpop.f32.mrb[0].mxu0
  %v1149 = vadd.f32 0.0, %v1148
  %v1150 = vpop.f32.mrb[0].mxu0
  %1151 = vmatprep.mubr.bf16.mxu0 0
  %1152 = vmatmul.mubr.bf16.gmra.mrb[0].mxu0 %v649
  %v1153 = vpop.f32.mrb[0].mxu0
  %v1154 = vadd.f32 0.0, %v1153
  %v1155 = vpop.f32.mrb[0].mxu0
  %v1156 = vpop.f32.mrb[0].mxu0
  %v1157 = vadd.f32 0.0, %v1156
  %v1158 = vpop.f32.mrb[0].mxu0
  %1159 = vmatprep.mubr.bf16.mxu0 0
  %1160 = vmatmul.mubr.bf16.gmra.mrb[0].mxu0 %v652
  %v1161 = vpop.f32.mrb[0].mxu0
  %v1162 = vadd.f32 0.0, %v1161
  %v1163 = vpop.f32.mrb[0].mxu0
  %v1164 = vpop.f32.mrb[0].mxu0
  %v1165 = vadd.f32 0.0, %v1164
  %v1166 = vpop.f32.mrb[0].mxu0
  %1167 = vmatprep.mubr.bf16.mxu0 0
  %1168 = vmatmul.mubr.bf16.gmra.mrb[0].mxu0 %v655
  %v1169 = vpop.f32.mrb[0].mxu0
  %v1170 = vadd.f32 0.0, %v1169
  %v1171 = vpop.f32.mrb[0].mxu0
  %v1172 = vpop.f32.mrb[0].mxu0
  %v1173 = vadd.f32 0.0, %v1172
  %v1174 = vpop.f32.mrb[0].mxu0
  %1175 = vmatprep.mubr.bf16.mxu0 0
  %1176 = vmatmul.mubr.bf16.gmra.mrb[0].mxu0 %v658
  %v1177 = vpop.f32.mrb[0].mxu0
  %v1178 = vadd.f32 0.0, %v1177
  %v1179 = vpop.f32.mrb[0].mxu0
  %v1180 = vpop.f32.mrb[0].mxu0
  %v1181 = vadd.f32 0.0, %v1180
  %v1182 = vpop.f32.mrb[0].mxu0
  %1183 = vmatprep.mubr.bf16.mxu0 0
  %1184 = vmatmul.mubr.bf16.gmra.mrb[0].mxu0 %v661
  %v1185 = vpop.f32.mrb[0].mxu0
  %v1186 = vadd.f32 0.0, %v1185
  %v1187 = vpop.f32.mrb[0].mxu0
  %v1188 = vpop.f32.mrb[0].mxu0
  %v1189 = vadd.f32 0.0, %v1188
  %v1190 = vpop.f32.mrb[0].mxu0
  %1191 = vmatprep.mubr.bf16.mxu0 0
  %1192 = vmatmul.mubr.bf16.gmra.mrb[0].mxu0 %v664
  %v1193 = vpop.f32.mrb[0].mxu0
  %v1194 = vadd.f32 0.0, %v1193
  %v1195 = vpop.f32.mrb[0].mxu0
  %v1196 = vpop.f32.mrb[0].mxu0
  %v1197 = vadd.f32 0.0, %v1196
  %v1198 = vpop.f32.mrb[0].mxu0
  %1199 = vmatprep.mubr.bf16.mxu0 0
  %1200 = vmatmul.mubr.bf16.gmra.mrb[0].mxu0 %v667
  %v1201 = vpop.f32.mrb[0].mxu0
  %v1202 = vadd.f32 0.0, %v1201
  %v1203 = vpop.f32.mrb[0].mxu0
  %v1204 = vpop.f32.mrb[0].mxu0
  %v1205 = vadd.f32 0.0, %v1204
  %v1206 = vpop.f32.mrb[0].mxu0
  %1207 = vmatprep.mubr.bf16.mxu0 0
  %1208 = vmatmul.mubr.bf16.gmra.mrb[0].mxu0 %v670
  %v1209 = vpop.f32.mrb[0].mxu0
  %v1210 = vadd.f32 0.0, %v1209
  %v1211 = vpop.f32.mrb[0].mxu0
  %v1212 = vpop.f32.mrb[0].mxu0
  %v1213 = vadd.f32 0.0, %v1212
  %v1214 = vpop.f32.mrb[0].mxu0
  %1215 = vmatprep.mubr.bf16.mxu0 0
  %1216 = vmatmul.mubr.bf16.gmra.mrb[0].mxu0 %v673
  %v1217 = vpop.f32.mrb[0].mxu0
  %v1218 = vadd.f32 0.0, %v1217
  %v1219 = vpop.f32.mrb[0].mxu0
  %v1220 = vpop.f32.mrb[0].mxu0
  %v1221 = vadd.f32 0.0, %v1220
  %v1222 = vpop.f32.mrb[0].mxu0
  %1223 = vdwg.mxu0
  %v1224 = vpack.c.bf16 %v717, %v714
  %v1225 = vpack.c.bf16 %v725, %v722
  %v1226 = vpack.c.bf16 %v733, %v730
  %v1227 = vpack.c.bf16 %v741, %v738
  %v1228 = vpack.c.bf16 %v749, %v746
  %v1229 = vpack.c.bf16 %v757, %v754
  %v1230 = vpack.c.bf16 %v765, %v762
  %v1231 = vpack.c.bf16 %v773, %v770
  %v1232 = vpack.c.bf16 %v781, %v778
  %v1233 = vpack.c.bf16 %v789, %v786
  %v1234 = vpack.c.bf16 %v797, %v794
  %v1235 = vpack.c.bf16 %v805, %v802
  %v1236 = vpack.c.bf16 %v813, %v810
  %v1237 = vpack.c.bf16 %v821, %v818
  %v1238 = vpack.c.bf16 %v829, %v826
  %v1239 = vpack.c.bf16 %v837, %v834
  %v1240 = vpack.c.bf16 %v845, %v842
  %v1241 = vpack.c.bf16 %v853, %v850
  %v1242 = vpack.c.bf16 %v861, %v858
  %v1243 = vpack.c.bf16 %v869, %v866
  %v1244 = vpack.c.bf16 %v877, %v874
  %v1245 = vpack.c.bf16 %v885, %v882
  %v1246 = vpack.c.bf16 %v893, %v890
  %v1247 = vpack.c.bf16 %v901, %v898
  %v1248 = vpack.c.bf16 %v909, %v906
  %v1249 = vpack.c.bf16 %v917, %v914
  %v1250 = vpack.c.bf16 %v925, %v922
  %v1251 = vpack.c.bf16 %v933, %v930
  %v1252 = vpack.c.bf16 %v941, %v938
  %v1253 = vpack.c.bf16 %v949, %v946
  %v1254 = vpack.c.bf16 %v957, %v954
  %v1255 = vpack.c.bf16 %v965, %v962
  %v1256 = vpack.c.bf16 %v973, %v970
  %v1257 = vpack.c.bf16 %v981, %v978
  %v1258 = vpack.c.bf16 %v989, %v986
  %v1259 = vpack.c.bf16 %v997, %v994
  %v1260 = vpack.c.bf16 %v1005, %v1002
  %v1261 = vpack.c.bf16 %v1013, %v1010
  %v1262 = vpack.c.bf16 %v1021, %v1018
  %v1263 = vpack.c.bf16 %v1029, %v1026
  %v1264 = vpack.c.bf16 %v1037, %v1034
  %v1265 = vpack.c.bf16 %v1045, %v1042
  %v1266 = vpack.c.bf16 %v1053, %v1050
  %v1267 = vpack.c.bf16 %v1061, %v1058
  %v1268 = vpack.c.bf16 %v1069, %v1066
  %v1269 = vpack.c.bf16 %v1077, %v1074
  %v1270 = vpack.c.bf16 %v1085, %v1082
  %v1271 = vpack.c.bf16 %v1093, %v1090
  %v1272 = vpack.c.bf16 %v1101, %v1098
  %v1273 = vpack.c.bf16 %v1109, %v1106
  %v1274 = vpack.c.bf16 %v1117, %v1114
  %v1275 = vpack.c.bf16 %v1125, %v1122
  %v1276 = vpack.c.bf16 %v1133, %v1130
  %v1277 = vpack.c.bf16 %v1141, %v1138
  %v1278 = vpack.c.bf16 %v1149, %v1146
  %v1279 = vpack.c.bf16 %v1157, %v1154
  %v1280 = vpack.c.bf16 %v1165, %v1162
  %v1281 = vpack.c.bf16 %v1173, %v1170
  %v1282 = vpack.c.bf16 %v1181, %v1178
  %v1283 = vpack.c.bf16 %v1189, %v1186
  %v1284 = vpack.c.bf16 %v1197, %v1194
  %v1285 = vpack.c.bf16 %v1205, %v1202
  %v1286 = vpack.c.bf16 %v1213, %v1210
  %v1287 = vpack.c.bf16 %v1221, %v1218
  %v1352 = vunpack.c.l.b16 %v1224
  %v1353 = vunpack.c.h.b16 %v1224
  %v1354 = vunpack.c.l.b16 %v1225
  %v1355 = vunpack.c.h.b16 %v1225
  %v1356 = vunpack.c.l.b16 %v1226
  %v1357 = vunpack.c.h.b16 %v1226
  %v1358 = vunpack.c.l.b16 %v1227
  %v1359 = vunpack.c.h.b16 %v1227
  %v1360 = vunpack.c.l.b16 %v1228
  %v1361 = vunpack.c.h.b16 %v1228
  %v1362 = vunpack.c.l.b16 %v1229
  %v1363 = vunpack.c.h.b16 %v1229
  %v1364 = vunpack.c.l.b16 %v1230
  %v1365 = vunpack.c.h.b16 %v1230
  %v1366 = vunpack.c.l.b16 %v1231
  %v1367 = vunpack.c.h.b16 %v1231
  %v1368 = vunpack.c.l.b16 %v1232
  %v1369 = vunpack.c.h.b16 %v1232
  %v1370 = vunpack.c.l.b16 %v1233
  %v1371 = vunpack.c.h.b16 %v1233
  %v1372 = vunpack.c.l.b16 %v1234
  %v1373 = vunpack.c.h.b16 %v1234
  %v1374 = vunpack.c.l.b16 %v1235
  %v1375 = vunpack.c.h.b16 %v1235
  %v1376 = vunpack.c.l.b16 %v1236
  %v1377 = vunpack.c.h.b16 %v1236
  %v1378 = vunpack.c.l.b16 %v1237
  %v1379 = vunpack.c.h.b16 %v1237
  %v1380 = vunpack.c.l.b16 %v1238
  %v1381 = vunpack.c.h.b16 %v1238
  %v1382 = vunpack.c.l.b16 %v1239
  %v1383 = vunpack.c.h.b16 %v1239
  %v1384 = vunpack.c.l.b16 %v1240
  %v1385 = vunpack.c.h.b16 %v1240
  %v1386 = vunpack.c.l.b16 %v1241
  %v1387 = vunpack.c.h.b16 %v1241
  %v1388 = vunpack.c.l.b16 %v1242
  %v1389 = vunpack.c.h.b16 %v1242
  %v1390 = vunpack.c.l.b16 %v1243
  %v1391 = vunpack.c.h.b16 %v1243
  %v1392 = vunpack.c.l.b16 %v1244
  %v1393 = vunpack.c.h.b16 %v1244
  %v1394 = vunpack.c.l.b16 %v1245
  %v1395 = vunpack.c.h.b16 %v1245
  %v1396 = vunpack.c.l.b16 %v1246
  %v1397 = vunpack.c.h.b16 %v1246
  %v1398 = vunpack.c.l.b16 %v1247
  %v1399 = vunpack.c.h.b16 %v1247
  %v1400 = vunpack.c.l.b16 %v1248
  %v1401 = vunpack.c.h.b16 %v1248
  %v1402 = vunpack.c.l.b16 %v1249
  %v1403 = vunpack.c.h.b16 %v1249
  %v1404 = vunpack.c.l.b16 %v1250
  %v1405 = vunpack.c.h.b16 %v1250
  %v1406 = vunpack.c.l.b16 %v1251
  %v1407 = vunpack.c.h.b16 %v1251
  %v1408 = vunpack.c.l.b16 %v1252
  %v1409 = vunpack.c.h.b16 %v1252
  %v1410 = vunpack.c.l.b16 %v1253
  %v1411 = vunpack.c.h.b16 %v1253
  %v1412 = vunpack.c.l.b16 %v1254
  %v1413 = vunpack.c.h.b16 %v1254
  %v1414 = vunpack.c.l.b16 %v1255
  %v1415 = vunpack.c.h.b16 %v1255
  %v1416 = vunpack.c.l.b16 %v1256
  %v1417 = vunpack.c.h.b16 %v1256
  %v1418 = vunpack.c.l.b16 %v1257
  %v1419 = vunpack.c.h.b16 %v1257
  %v1420 = vunpack.c.l.b16 %v1258
  %v1421 = vunpack.c.h.b16 %v1258
  %v1422 = vunpack.c.l.b16 %v1259
  %v1423 = vunpack.c.h.b16 %v1259
  %v1424 = vunpack.c.l.b16 %v1260
  %v1425 = vunpack.c.h.b16 %v1260
  %v1426 = vunpack.c.l.b16 %v1261
  %v1427 = vunpack.c.h.b16 %v1261
  %v1428 = vunpack.c.l.b16 %v1262
  %v1429 = vunpack.c.h.b16 %v1262
  %v1430 = vunpack.c.l.b16 %v1263
  %v1431 = vunpack.c.h.b16 %v1263
  %v1432 = vunpack.c.l.b16 %v1264
  %v1433 = vunpack.c.h.b16 %v1264
  %v1434 = vunpack.c.l.b16 %v1265
  %v1435 = vunpack.c.h.b16 %v1265
  %v1436 = vunpack.c.l.b16 %v1266
  %v1437 = vunpack.c.h.b16 %v1266
  %v1438 = vunpack.c.l.b16 %v1267
  %v1439 = vunpack.c.h.b16 %v1267
  %v1440 = vunpack.c.l.b16 %v1268
  %v1441 = vunpack.c.h.b16 %v1268
  %v1442 = vunpack.c.l.b16 %v1269
  %v1443 = vunpack.c.h.b16 %v1269
  %v1444 = vunpack.c.l.b16 %v1270
  %v1445 = vunpack.c.h.b16 %v1270
  %v1446 = vunpack.c.l.b16 %v1271
  %v1447 = vunpack.c.h.b16 %v1271
  %v1448 = vunpack.c.l.b16 %v1272
  %v1449 = vunpack.c.h.b16 %v1272
  %v1450 = vunpack.c.l.b16 %v1273
  %v1451 = vunpack.c.h.b16 %v1273
  %v1452 = vunpack.c.l.b16 %v1274
  %v1453 = vunpack.c.h.b16 %v1274
  %v1454 = vunpack.c.l.b16 %v1275
  %v1455 = vunpack.c.h.b16 %v1275
  %v1456 = vunpack.c.l.b16 %v1276
  %v1457 = vunpack.c.h.b16 %v1276
  %v1458 = vunpack.c.l.b16 %v1277
  %v1459 = vunpack.c.h.b16 %v1277
  %v1460 = vunpack.c.l.b16 %v1278
  %v1461 = vunpack.c.h.b16 %v1278
  %v1462 = vunpack.c.l.b16 %v1279
  %v1463 = vunpack.c.h.b16 %v1279
  %v1464 = vunpack.c.l.b16 %v1280
  %v1465 = vunpack.c.h.b16 %v1280
  %v1466 = vunpack.c.l.b16 %v1281
  %v1467 = vunpack.c.h.b16 %v1281
  %v1468 = vunpack.c.l.b16 %v1282
  %v1469 = vunpack.c.h.b16 %v1282
  %v1470 = vunpack.c.l.b16 %v1283
  %v1471 = vunpack.c.h.b16 %v1283
  %v1472 = vunpack.c.l.b16 %v1284
  %v1473 = vunpack.c.h.b16 %v1284
  %v1474 = vunpack.c.l.b16 %v1285
  %v1475 = vunpack.c.h.b16 %v1285
  %v1476 = vunpack.c.l.b16 %v1286
  %v1477 = vunpack.c.h.b16 %v1286
  %v1478 = vunpack.c.l.b16 %v1287
  %v1479 = vunpack.c.h.b16 %v1287
  %v1480 = vpack.c.b16 %v1352, %v1352
  %v1481 = vpack.c.b16 %v1353, %v1353
  %v1482 = vpack.c.b16 %v1354, %v1354
  %v1483 = vpack.c.b16 %v1355, %v1355
  %v1484 = vpack.c.b16 %v1356, %v1356
  %v1485 = vpack.c.b16 %v1357, %v1357
  %v1486 = vpack.c.b16 %v1358, %v1358
  %v1487 = vpack.c.b16 %v1359, %v1359
  %v1488 = vpack.c.b16 %v1360, %v1360
  %v1489 = vpack.c.b16 %v1361, %v1361
  %v1490 = vpack.c.b16 %v1362, %v1362
  %v1491 = vpack.c.b16 %v1363, %v1363
  %v1492 = vpack.c.b16 %v1364, %v1364
  %v1493 = vpack.c.b16 %v1365, %v1365
  %v1494 = vpack.c.b16 %v1366, %v1366
  %v1495 = vpack.c.b16 %v1367, %v1367
  %v1496 = vpack.c.b16 %v1368, %v1368
  %v1497 = vpack.c.b16 %v1369, %v1369
  %v1498 = vpack.c.b16 %v1370, %v1370
  %v1499 = vpack.c.b16 %v1371, %v1371
  %v1500 = vpack.c.b16 %v1372, %v1372
  %v1501 = vpack.c.b16 %v1373, %v1373
  %v1502 = vpack.c.b16 %v1374, %v1374
  %v1503 = vpack.c.b16 %v1375, %v1375
  %v1504 = vpack.c.b16 %v1376, %v1376
  %v1505 = vpack.c.b16 %v1377, %v1377
  %v1506 = vpack.c.b16 %v1378, %v1378
  %v1507 = vpack.c.b16 %v1379, %v1379
  %v1508 = vpack.c.b16 %v1380, %v1380
  %v1509 = vpack.c.b16 %v1381, %v1381
  %v1510 = vpack.c.b16 %v1382, %v1382
  %v1511 = vpack.c.b16 %v1383, %v1383
  %v1512 = vpack.c.b16 %v1384, %v1384
  %v1513 = vpack.c.b16 %v1385, %v1385
  %v1514 = vpack.c.b16 %v1386, %v1386
  %v1515 = vpack.c.b16 %v1387, %v1387
  %v1516 = vpack.c.b16 %v1388, %v1388
  %v1517 = vpack.c.b16 %v1389, %v1389
  %v1518 = vpack.c.b16 %v1390, %v1390
  %v1519 = vpack.c.b16 %v1391, %v1391
  %v1520 = vpack.c.b16 %v1392, %v1392
  %v1521 = vpack.c.b16 %v1393, %v1393
  %v1522 = vpack.c.b16 %v1394, %v1394
  %v1523 = vpack.c.b16 %v1395, %v1395
  %v1524 = vpack.c.b16 %v1396, %v1396
  %v1525 = vpack.c.b16 %v1397, %v1397
  %v1526 = vpack.c.b16 %v1398, %v1398
  %v1527 = vpack.c.b16 %v1399, %v1399
  %v1528 = vpack.c.b16 %v1400, %v1400
  %v1529 = vpack.c.b16 %v1401, %v1401
  %v1530 = vpack.c.b16 %v1402, %v1402
  %v1531 = vpack.c.b16 %v1403, %v1403
  %v1532 = vpack.c.b16 %v1404, %v1404
  %v1533 = vpack.c.b16 %v1405, %v1405
  %v1534 = vpack.c.b16 %v1406, %v1406
  %v1535 = vpack.c.b16 %v1407, %v1407
  %v1536 = vpack.c.b16 %v1408, %v1408
  %v1537 = vpack.c.b16 %v1409, %v1409
  %v1538 = vpack.c.b16 %v1410, %v1410
  %v1539 = vpack.c.b16 %v1411, %v1411
  %v1540 = vpack.c.b16 %v1412, %v1412
  %v1541 = vpack.c.b16 %v1413, %v1413
  %v1542 = vpack.c.b16 %v1414, %v1414
  %v1543 = vpack.c.b16 %v1415, %v1415
  %v1544 = vpack.c.b16 %v1416, %v1416
  %v1545 = vpack.c.b16 %v1417, %v1417
  %v1546 = vpack.c.b16 %v1418, %v1418
  %v1547 = vpack.c.b16 %v1419, %v1419
  %v1548 = vpack.c.b16 %v1420, %v1420
  %v1549 = vpack.c.b16 %v1421, %v1421
  %v1550 = vpack.c.b16 %v1422, %v1422
  %v1551 = vpack.c.b16 %v1423, %v1423
  %v1552 = vpack.c.b16 %v1424, %v1424
  %v1553 = vpack.c.b16 %v1425, %v1425
  %v1554 = vpack.c.b16 %v1426, %v1426
  %v1555 = vpack.c.b16 %v1427, %v1427
  %v1556 = vpack.c.b16 %v1428, %v1428
  %v1557 = vpack.c.b16 %v1429, %v1429
  %v1558 = vpack.c.b16 %v1430, %v1430
  %v1559 = vpack.c.b16 %v1431, %v1431
  %v1560 = vpack.c.b16 %v1432, %v1432
  %v1561 = vpack.c.b16 %v1433, %v1433
  %v1562 = vpack.c.b16 %v1434, %v1434
  %v1563 = vpack.c.b16 %v1435, %v1435
  %v1564 = vpack.c.b16 %v1436, %v1436
  %v1565 = vpack.c.b16 %v1437, %v1437
  %v1566 = vpack.c.b16 %v1438, %v1438
  %v1567 = vpack.c.b16 %v1439, %v1439
  %v1568 = vpack.c.b16 %v1440, %v1440
  %v1569 = vpack.c.b16 %v1441, %v1441
  %v1570 = vpack.c.b16 %v1442, %v1442
  %v1571 = vpack.c.b16 %v1443, %v1443
  %v1572 = vpack.c.b16 %v1444, %v1444
  %v1573 = vpack.c.b16 %v1445, %v1445
  %v1574 = vpack.c.b16 %v1446, %v1446
  %v1575 = vpack.c.b16 %v1447, %v1447
  %v1576 = vpack.c.b16 %v1448, %v1448
  %v1577 = vpack.c.b16 %v1449, %v1449
  %v1578 = vpack.c.b16 %v1450, %v1450
  %v1579 = vpack.c.b16 %v1451, %v1451
  %v1580 = vpack.c.b16 %v1452, %v1452
  %v1581 = vpack.c.b16 %v1453, %v1453
  %v1582 = vpack.c.b16 %v1454, %v1454
  %v1583 = vpack.c.b16 %v1455, %v1455
  %v1584 = vpack.c.b16 %v1456, %v1456
  %v1585 = vpack.c.b16 %v1457, %v1457
  %v1586 = vpack.c.b16 %v1458, %v1458
  %v1587 = vpack.c.b16 %v1459, %v1459
  %v1588 = vpack.c.b16 %v1460, %v1460
  %v1589 = vpack.c.b16 %v1461, %v1461
  %v1590 = vpack.c.b16 %v1462, %v1462
  %v1591 = vpack.c.b16 %v1463, %v1463
  %v1592 = vpack.c.b16 %v1464, %v1464
  %v1593 = vpack.c.b16 %v1465, %v1465
  %v1594 = vpack.c.b16 %v1466, %v1466
  %v1595 = vpack.c.b16 %v1467, %v1467
  %v1596 = vpack.c.b16 %v1468, %v1468
  %v1597 = vpack.c.b16 %v1469, %v1469
  %v1598 = vpack.c.b16 %v1470, %v1470
  %v1599 = vpack.c.b16 %v1471, %v1471
  %v1600 = vpack.c.b16 %v1472, %v1472
  %v1601 = vpack.c.b16 %v1473, %v1473
  %v1602 = vpack.c.b16 %v1474, %v1474
  %v1603 = vpack.c.b16 %v1475, %v1475
  %v1604 = vpack.c.b16 %v1476, %v1476
  %v1605 = vpack.c.b16 %v1477, %v1477
  %v1606 = vpack.c.b16 %v1478, %v1478
  %v1607 = vpack.c.b16 %v1479, %v1479
  %vm1736 = vcmask 60416
  %1737 = vst.msk [vmem:[%s2] sm:$0xf] %vm1736, %v1480
  %1738 = vst.msk [vmem:[%s2 + $0x4] sm:$0xf] %vm1736, %v1481
  %1739 = vst.msk [vmem:[%s2 + $0x8] sm:$0xf] %vm1736, %v1482
  %1740 = vst.msk [vmem:[%s2 + $0xc] sm:$0xf] %vm1736, %v1483
  %1741 = vst.msk [vmem:[%s2 + $0x10] sm:$0xf] %vm1736, %v1484
  %1742 = vst.msk [vmem:[%s2 + $0x14] sm:$0xf] %vm1736, %v1485
  %1743 = vst.msk [vmem:[%s2 + $0x18] sm:$0xf] %vm1736, %v1486
  %1744 = vst.msk [vmem:[%s2 + $0x1c] sm:$0xf] %vm1736, %v1487
  %1745 = vst.msk [vmem:[%s2 + $0x20] sm:$0xf] %vm1736, %v1488
  %1746 = vst.msk [vmem:[%s2 + $0x24] sm:$0xf] %vm1736, %v1489
  %1747 = vst.msk [vmem:[%s2 + $0x28] sm:$0xf] %vm1736, %v1490
  %1748 = vst.msk [vmem:[%s2 + $0x2c] sm:$0xf] %vm1736, %v1491
  %1749 = vst.msk [vmem:[%s2 + $0x30] sm:$0xf] %vm1736, %v1492
  %1750 = vst.msk [vmem:[%s2 + $0x34] sm:$0xf] %vm1736, %v1493
  %1751 = vst.msk [vmem:[%s2 + $0x38] sm:$0xf] %vm1736, %v1494
  %1752 = vst.msk [vmem:[%s2 + $0x3c] sm:$0xf] %vm1736, %v1495
  %1753 = vst.msk [vmem:[%s2 + $0x40] sm:$0xf] %vm1736, %v1496
  %1754 = vst.msk [vmem:[%s2 + $0x44] sm:$0xf] %vm1736, %v1497
  %1755 = vst.msk [vmem:[%s2 + $0x48] sm:$0xf] %vm1736, %v1498
  %1756 = vst.msk [vmem:[%s2 + $0x4c] sm:$0xf] %vm1736, %v1499
  %1757 = vst.msk [vmem:[%s2 + $0x50] sm:$0xf] %vm1736, %v1500
  %1758 = vst.msk [vmem:[%s2 + $0x54] sm:$0xf] %vm1736, %v1501
  %1759 = vst.msk [vmem:[%s2 + $0x58] sm:$0xf] %vm1736, %v1502
  %1760 = vst.msk [vmem:[%s2 + $0x5c] sm:$0xf] %vm1736, %v1503
  %1761 = vst.msk [vmem:[%s2 + $0x60] sm:$0xf] %vm1736, %v1504
  %1762 = vst.msk [vmem:[%s2 + $0x64] sm:$0xf] %vm1736, %v1505
  %1763 = vst.msk [vmem:[%s2 + $0x68] sm:$0xf] %vm1736, %v1506
  %1764 = vst.msk [vmem:[%s2 + $0x6c] sm:$0xf] %vm1736, %v1507
  %1765 = vst.msk [vmem:[%s2 + $0x70] sm:$0xf] %vm1736, %v1508
  %1766 = vst.msk [vmem:[%s2 + $0x74] sm:$0xf] %vm1736, %v1509
  %1767 = vst.msk [vmem:[%s2 + $0x78] sm:$0xf] %vm1736, %v1510
  %1768 = vst.msk [vmem:[%s2 + $0x7c] sm:$0xf] %vm1736, %v1511
  %1769 = vst.msk [vmem:[%s2 + $0x80] sm:$0xf] %vm1736, %v1512
  %1770 = vst.msk [vmem:[%s2 + $0x84] sm:$0xf] %vm1736, %v1513
  %1771 = vst.msk [vmem:[%s2 + $0x88] sm:$0xf] %vm1736, %v1514
  %1772 = vst.msk [vmem:[%s2 + $0x8c] sm:$0xf] %vm1736, %v1515
  %1773 = vst.msk [vmem:[%s2 + $0x90] sm:$0xf] %vm1736, %v1516
  %1774 = vst.msk [vmem:[%s2 + $0x94] sm:$0xf] %vm1736, %v1517
  %1775 = vst.msk [vmem:[%s2 + $0x98] sm:$0xf] %vm1736, %v1518
  %1776 = vst.msk [vmem:[%s2 + $0x9c] sm:$0xf] %vm1736, %v1519
  %1777 = vst.msk [vmem:[%s2 + $0xa0] sm:$0xf] %vm1736, %v1520
  %1778 = vst.msk [vmem:[%s2 + $0xa4] sm:$0xf] %vm1736, %v1521
  %1779 = vst.msk [vmem:[%s2 + $0xa8] sm:$0xf] %vm1736, %v1522
  %1780 = vst.msk [vmem:[%s2 + $0xac] sm:$0xf] %vm1736, %v1523
  %1781 = vst.msk [vmem:[%s2 + $0xb0] sm:$0xf] %vm1736, %v1524
  %1782 = vst.msk [vmem:[%s2 + $0xb4] sm:$0xf] %vm1736, %v1525
  %1783 = vst.msk [vmem:[%s2 + $0xb8] sm:$0xf] %vm1736, %v1526
  %1784 = vst.msk [vmem:[%s2 + $0xbc] sm:$0xf] %vm1736, %v1527
  %1785 = vst.msk [vmem:[%s2 + $0xc0] sm:$0xf] %vm1736, %v1528
  %1786 = vst.msk [vmem:[%s2 + $0xc4] sm:$0xf] %vm1736, %v1529
  %1787 = vst.msk [vmem:[%s2 + $0xc8] sm:$0xf] %vm1736, %v1530
  %1788 = vst.msk [vmem:[%s2 + $0xcc] sm:$0xf] %vm1736, %v1531
  %1789 = vst.msk [vmem:[%s2 + $0xd0] sm:$0xf] %vm1736, %v1532
  %1790 = vst.msk [vmem:[%s2 + $0xd4] sm:$0xf] %vm1736, %v1533
  %1791 = vst.msk [vmem:[%s2 + $0xd8] sm:$0xf] %vm1736, %v1534
  %1792 = vst.msk [vmem:[%s2 + $0xdc] sm:$0xf] %vm1736, %v1535
  %1793 = vst.msk [vmem:[%s2 + $0xe0] sm:$0xf] %vm1736, %v1536
  %1794 = vst.msk [vmem:[%s2 + $0xe4] sm:$0xf] %vm1736, %v1537
  %1795 = vst.msk [vmem:[%s2 + $0xe8] sm:$0xf] %vm1736, %v1538
  %1796 = vst.msk [vmem:[%s2 + $0xec] sm:$0xf] %vm1736, %v1539
  %1797 = vst.msk [vmem:[%s2 + $0xf0] sm:$0xf] %vm1736, %v1540
  %1798 = vst.msk [vmem:[%s2 + $0xf4] sm:$0xf] %vm1736, %v1541
  %1799 = vst.msk [vmem:[%s2 + $0xf8] sm:$0xf] %vm1736, %v1542
  %1800 = vst.msk [vmem:[%s2 + $0xfc] sm:$0xf] %vm1736, %v1543
  %1801 = vst.msk [vmem:[%s2 + $0x100] sm:$0xf] %vm1736, %v1544
  %1802 = vst.msk [vmem:[%s2 + $0x104] sm:$0xf] %vm1736, %v1545
  %1803 = vst.msk [vmem:[%s2 + $0x108] sm:$0xf] %vm1736, %v1546
  %1804 = vst.msk [vmem:[%s2 + $0x10c] sm:$0xf] %vm1736, %v1547
  %1805 = vst.msk [vmem:[%s2 + $0x110] sm:$0xf] %vm1736, %v1548
  %1806 = vst.msk [vmem:[%s2 + $0x114] sm:$0xf] %vm1736, %v1549
  %1807 = vst.msk [vmem:[%s2 + $0x118] sm:$0xf] %vm1736, %v1550
  %1808 = vst.msk [vmem:[%s2 + $0x11c] sm:$0xf] %vm1736, %v1551
  %1809 = vst.msk [vmem:[%s2 + $0x120] sm:$0xf] %vm1736, %v1552
  %1810 = vst.msk [vmem:[%s2 + $0x124] sm:$0xf] %vm1736, %v1553
  %1811 = vst.msk [vmem:[%s2 + $0x128] sm:$0xf] %vm1736, %v1554
  %1812 = vst.msk [vmem:[%s2 + $0x12c] sm:$0xf] %vm1736, %v1555
  %1813 = vst.msk [vmem:[%s2 + $0x130] sm:$0xf] %vm1736, %v1556
  %1814 = vst.msk [vmem:[%s2 + $0x134] sm:$0xf] %vm1736, %v1557
  %1815 = vst.msk [vmem:[%s2 + $0x138] sm:$0xf] %vm1736, %v1558
  %1816 = vst.msk [vmem:[%s2 + $0x13c] sm:$0xf] %vm1736, %v1559
  %1817 = vst.msk [vmem:[%s2 + $0x140] sm:$0xf] %vm1736, %v1560
  %1818 = vst.msk [vmem:[%s2 + $0x144] sm:$0xf] %vm1736, %v1561
  %1819 = vst.msk [vmem:[%s2 + $0x148] sm:$0xf] %vm1736, %v1562
  %1820 = vst.msk [vmem:[%s2 + $0x14c] sm:$0xf] %vm1736, %v1563
  %1821 = vst.msk [vmem:[%s2 + $0x150] sm:$0xf] %vm1736, %v1564
  %1822 = vst.msk [vmem:[%s2 + $0x154] sm:$0xf] %vm1736, %v1565
  %1823 = vst.msk [vmem:[%s2 + $0x158] sm:$0xf] %vm1736, %v1566
  %1824 = vst.msk [vmem:[%s2 + $0x15c] sm:$0xf] %vm1736, %v1567
  %1825 = vst.msk [vmem:[%s2 + $0x160] sm:$0xf] %vm1736, %v1568
  %1826 = vst.msk [vmem:[%s2 + $0x164] sm:$0xf] %vm1736, %v1569
  %1827 = vst.msk [vmem:[%s2 + $0x168] sm:$0xf] %vm1736, %v1570
  %1828 = vst.msk [vmem:[%s2 + $0x16c] sm:$0xf] %vm1736, %v1571
  %1829 = vst.msk [vmem:[%s2 + $0x170] sm:$0xf] %vm1736, %v1572
  %1830 = vst.msk [vmem:[%s2 + $0x174] sm:$0xf] %vm1736, %v1573
  %1831 = vst.msk [vmem:[%s2 + $0x178] sm:$0xf] %vm1736, %v1574
  %1832 = vst.msk [vmem:[%s2 + $0x17c] sm:$0xf] %vm1736, %v1575
  %1833 = vst.msk [vmem:[%s2 + $0x180] sm:$0xf] %vm1736, %v1576
  %1834 = vst.msk [vmem:[%s2 + $0x184] sm:$0xf] %vm1736, %v1577
  %1835 = vst.msk [vmem:[%s2 + $0x188] sm:$0xf] %vm1736, %v1578
  %1836 = vst.msk [vmem:[%s2 + $0x18c] sm:$0xf] %vm1736, %v1579
  %1837 = vst.msk [vmem:[%s2 + $0x190] sm:$0xf] %vm1736, %v1580
  %1838 = vst.msk [vmem:[%s2 + $0x194] sm:$0xf] %vm1736, %v1581
  %1839 = vst.msk [vmem:[%s2 + $0x198] sm:$0xf] %vm1736, %v1582
  %1840 = vst.msk [vmem:[%s2 + $0x19c] sm:$0xf] %vm1736, %v1583
  %1841 = vst.msk [vmem:[%s2 + $0x1a0] sm:$0xf] %vm1736, %v1584
  %1842 = vst.msk [vmem:[%s2 + $0x1a4] sm:$0xf] %vm1736, %v1585
  %1843 = vst.msk [vmem:[%s2 + $0x1a8] sm:$0xf] %vm1736, %v1586
  %1844 = vst.msk [vmem:[%s2 + $0x1ac] sm:$0xf] %vm1736, %v1587
  %1845 = vst.msk [vmem:[%s2 + $0x1b0] sm:$0xf] %vm1736, %v1588
  %1846 = vst.msk [vmem:[%s2 + $0x1b4] sm:$0xf] %vm1736, %v1589
  %1847 = vst.msk [vmem:[%s2 + $0x1b8] sm:$0xf] %vm1736, %v1590
  %1848 = vst.msk [vmem:[%s2 + $0x1bc] sm:$0xf] %vm1736, %v1591
  %1849 = vst.msk [vmem:[%s2 + $0x1c0] sm:$0xf] %vm1736, %v1592
  %1850 = vst.msk [vmem:[%s2 + $0x1c4] sm:$0xf] %vm1736, %v1593
  %1851 = vst.msk [vmem:[%s2 + $0x1c8] sm:$0xf] %vm1736, %v1594
  %1852 = vst.msk [vmem:[%s2 + $0x1cc] sm:$0xf] %vm1736, %v1595
  %1853 = vst.msk [vmem:[%s2 + $0x1d0] sm:$0xf] %vm1736, %v1596
  %1854 = vst.msk [vmem:[%s2 + $0x1d4] sm:$0xf] %vm1736, %v1597
  %1855 = vst.msk [vmem:[%s2 + $0x1d8] sm:$0xf] %vm1736, %v1598
  %1856 = vst.msk [vmem:[%s2 + $0x1dc] sm:$0xf] %vm1736, %v1599
  %1857 = vst.msk [vmem:[%s2 + $0x1e0] sm:$0xf] %vm1736, %v1600
  %1858 = vst.msk [vmem:[%s2 + $0x1e4] sm:$0xf] %vm1736, %v1601
  %1859 = vst.msk [vmem:[%s2 + $0x1e8] sm:$0xf] %vm1736, %v1602
  %1860 = vst.msk [vmem:[%s2 + $0x1ec] sm:$0xf] %vm1736, %v1603
  %1861 = vst.msk [vmem:[%s2 + $0x1f0] sm:$0xf] %vm1736, %v1604
  %1862 = vst.msk [vmem:[%s2 + $0x1f4] sm:$0xf] %vm1736, %v1605
  %1863 = vst.msk [vmem:[%s2 + $0x1f8] sm:$0xf] %vm1736, %v1606
  %1864 = vst.msk [vmem:[%s2 + $0x1fc] sm:$0xf] %vm1736, %v1607
  %vm1865 = vcmask 64512
  %v1866 = vsel %vm1865, %v714, 0.0
  %v1867 = vsel %vm1865, %v717, 0.0
  %v1868 = vadd.f32 %v1866, %v1867
  %v1869 = vsel %vm1865, %v722, 0.0
  %v1870 = vadd.f32 %v1868, %v1869
  %v1871 = vsel %vm1865, %v725, 0.0
  %v1872 = vadd.f32 %v1870, %v1871
  %v1873 = vsel %vm1865, %v730, 0.0
  %v1874 = vadd.f32 %v1872, %v1873
  %v1875 = vsel %vm1865, %v733, 0.0
  %v1876 = vadd.f32 %v1874, %v1875
  %v1877 = vsel %vm1865, %v738, 0.0
  %v1878 = vadd.f32 %v1876, %v1877
  %v1879 = vsel %vm1865, %v741, 0.0
  %v1880 = vadd.f32 %v1878, %v1879
  %v1881 = vsel %vm1865, %v746, 0.0
  %v1882 = vadd.f32 %v1880, %v1881
  %v1883 = vsel %vm1865, %v749, 0.0
  %v1884 = vadd.f32 %v1882, %v1883
  %v1885 = vsel %vm1865, %v754, 0.0
  %v1886 = vadd.f32 %v1884, %v1885
  %v1887 = vsel %vm1865, %v757, 0.0
  %v1888 = vadd.f32 %v1886, %v1887
  %v1889 = vsel %vm1865, %v762, 0.0
  %v1890 = vadd.f32 %v1888, %v1889
  %v1891 = vsel %vm1865, %v765, 0.0
  %v1892 = vadd.f32 %v1890, %v1891
  %v1893 = vsel %vm1865, %v770, 0.0
  %v1894 = vadd.f32 %v1892, %v1893
  %v1895 = vsel %vm1865, %v773, 0.0
  %v1896 = vadd.f32 %v1894, %v1895
  %v1897 = vsel %vm1865, %v778, 0.0
  %v1898 = vadd.f32 %v1896, %v1897
  %v1899 = vsel %vm1865, %v781, 0.0
  %v1900 = vadd.f32 %v1898, %v1899
  %v1901 = vsel %vm1865, %v786, 0.0
  %v1902 = vadd.f32 %v1900, %v1901
  %v1903 = vsel %vm1865, %v789, 0.0
  %v1904 = vadd.f32 %v1902, %v1903
  %v1905 = vsel %vm1865, %v794, 0.0
  %v1906 = vadd.f32 %v1904, %v1905
  %v1907 = vsel %vm1865, %v797, 0.0
  %v1908 = vadd.f32 %v1906, %v1907
  %v1909 = vsel %vm1865, %v802, 0.0
  %v1910 = vadd.f32 %v1908, %v1909
  %v1911 = vsel %vm1865, %v805, 0.0
  %v1912 = vadd.f32 %v1910, %v1911
  %v1913 = vsel %vm1865, %v810, 0.0
  %v1914 = vadd.f32 %v1912, %v1913
  %v1915 = vsel %vm1865, %v813, 0.0
  %v1916 = vadd.f32 %v1914, %v1915
  %v1917 = vsel %vm1865, %v818, 0.0
  %v1918 = vadd.f32 %v1916, %v1917
  %v1919 = vsel %vm1865, %v821, 0.0
  %v1920 = vadd.f32 %v1918, %v1919
  %v1921 = vsel %vm1865, %v826, 0.0
  %v1922 = vadd.f32 %v1920, %v1921
  %v1923 = vsel %vm1865, %v829, 0.0
  %v1924 = vadd.f32 %v1922, %v1923
  %v1925 = vsel %vm1865, %v834, 0.0
  %v1926 = vadd.f32 %v1924, %v1925
  %v1927 = vsel %vm1865, %v837, 0.0
  %v1928 = vadd.f32 %v1926, %v1927
  %v1929 = vsel %vm1865, %v842, 0.0
  %v1930 = vadd.f32 %v1928, %v1929
  %v1931 = vsel %vm1865, %v845, 0.0
  %v1932 = vadd.f32 %v1930, %v1931
  %v1933 = vsel %vm1865, %v850, 0.0
  %v1934 = vadd.f32 %v1932, %v1933
  %v1935 = vsel %vm1865, %v853, 0.0
  %v1936 = vadd.f32 %v1934, %v1935
  %v1937 = vsel %vm1865, %v858, 0.0
  %v1938 = vadd.f32 %v1936, %v1937
  %v1939 = vsel %vm1865, %v861, 0.0
  %v1940 = vadd.f32 %v1938, %v1939
  %v1941 = vsel %vm1865, %v866, 0.0
  %v1942 = vadd.f32 %v1940, %v1941
  %v1943 = vsel %vm1865, %v869, 0.0
  %v1944 = vadd.f32 %v1942, %v1943
  %v1945 = vsel %vm1865, %v874, 0.0
  %v1946 = vadd.f32 %v1944, %v1945
  %v1947 = vsel %vm1865, %v877, 0.0
  %v1948 = vadd.f32 %v1946, %v1947
  %v1949 = vsel %vm1865, %v882, 0.0
  %v1950 = vadd.f32 %v1948, %v1949
  %v1951 = vsel %vm1865, %v885, 0.0
  %v1952 = vadd.f32 %v1950, %v1951
  %v1953 = vsel %vm1865, %v890, 0.0
  %v1954 = vadd.f32 %v1952, %v1953
  %v1955 = vsel %vm1865, %v893, 0.0
  %v1956 = vadd.f32 %v1954, %v1955
  %v1957 = vsel %vm1865, %v898, 0.0
  %v1958 = vadd.f32 %v1956, %v1957
  %v1959 = vsel %vm1865, %v901, 0.0
  %v1960 = vadd.f32 %v1958, %v1959
  %v1961 = vsel %vm1865, %v906, 0.0
  %v1962 = vadd.f32 %v1960, %v1961
  %v1963 = vsel %vm1865, %v909, 0.0
  %v1964 = vadd.f32 %v1962, %v1963
  %v1965 = vsel %vm1865, %v914, 0.0
  %v1966 = vadd.f32 %v1964, %v1965
  %v1967 = vsel %vm1865, %v917, 0.0
  %v1968 = vadd.f32 %v1966, %v1967
  %v1969 = vsel %vm1865, %v922, 0.0
  %v1970 = vadd.f32 %v1968, %v1969
  %v1971 = vsel %vm1865, %v925, 0.0
  %v1972 = vadd.f32 %v1970, %v1971
  %v1973 = vsel %vm1865, %v930, 0.0
  %v1974 = vadd.f32 %v1972, %v1973
  %v1975 = vsel %vm1865, %v933, 0.0
  %v1976 = vadd.f32 %v1974, %v1975
  %v1977 = vsel %vm1865, %v938, 0.0
  %v1978 = vadd.f32 %v1976, %v1977
  %v1979 = vsel %vm1865, %v941, 0.0
  %v1980 = vadd.f32 %v1978, %v1979
  %v1981 = vsel %vm1865, %v946, 0.0
  %v1982 = vadd.f32 %v1980, %v1981
  %v1983 = vsel %vm1865, %v949, 0.0
  %v1984 = vadd.f32 %v1982, %v1983
  %v1985 = vsel %vm1865, %v954, 0.0
  %v1986 = vadd.f32 %v1984, %v1985
  %v1987 = vsel %vm1865, %v957, 0.0
  %v1988 = vadd.f32 %v1986, %v1987
  %v1989 = vsel %vm1865, %v962, 0.0
  %v1990 = vadd.f32 %v1988, %v1989
  %v1991 = vsel %vm1865, %v965, 0.0
  %v1992 = vadd.f32 %v1990, %v1991
  %v1993 = vsel %vm1865, %v970, 0.0
  %v1994 = vadd.f32 %v1992, %v1993
  %v1995 = vsel %vm1865, %v973, 0.0
  %v1996 = vadd.f32 %v1994, %v1995
  %v1997 = vsel %vm1865, %v978, 0.0
  %v1998 = vadd.f32 %v1996, %v1997
  %v1999 = vsel %vm1865, %v981, 0.0
  %v2000 = vadd.f32 %v1998, %v1999
  %v2001 = vsel %vm1865, %v986, 0.0
  %v2002 = vadd.f32 %v2000, %v2001
  %v2003 = vsel %vm1865, %v989, 0.0
  %v2004 = vadd.f32 %v2002, %v2003
  %v2005 = vsel %vm1865, %v994, 0.0
  %v2006 = vadd.f32 %v2004, %v2005
  %v2007 = vsel %vm1865, %v997, 0.0
  %v2008 = vadd.f32 %v2006, %v2007
  %v2009 = vsel %vm1865, %v1002, 0.0
  %v2010 = vadd.f32 %v2008, %v2009
  %v2011 = vsel %vm1865, %v1005, 0.0
  %v2012 = vadd.f32 %v2010, %v2011
  %v2013 = vsel %vm1865, %v1010, 0.0
  %v2014 = vadd.f32 %v2012, %v2013
  %v2015 = vsel %vm1865, %v1013, 0.0
  %v2016 = vadd.f32 %v2014, %v2015
  %v2017 = vsel %vm1865, %v1018, 0.0
  %v2018 = vadd.f32 %v2016, %v2017
  %v2019 = vsel %vm1865, %v1021, 0.0
  %v2020 = vadd.f32 %v2018, %v2019
  %v2021 = vsel %vm1865, %v1026, 0.0
  %v2022 = vadd.f32 %v2020, %v2021
  %v2023 = vsel %vm1865, %v1029, 0.0
  %v2024 = vadd.f32 %v2022, %v2023
  %v2025 = vsel %vm1865, %v1034, 0.0
  %v2026 = vadd.f32 %v2024, %v2025
  %v2027 = vsel %vm1865, %v1037, 0.0
  %v2028 = vadd.f32 %v2026, %v2027
  %v2029 = vsel %vm1865, %v1042, 0.0
  %v2030 = vadd.f32 %v2028, %v2029
  %v2031 = vsel %vm1865, %v1045, 0.0
  %v2032 = vadd.f32 %v2030, %v2031
  %v2033 = vsel %vm1865, %v1050, 0.0
  %v2034 = vadd.f32 %v2032, %v2033
  %v2035 = vsel %vm1865, %v1053, 0.0
  %v2036 = vadd.f32 %v2034, %v2035
  %v2037 = vsel %vm1865, %v1058, 0.0
  %v2038 = vadd.f32 %v2036, %v2037
  %v2039 = vsel %vm1865, %v1061, 0.0
  %v2040 = vadd.f32 %v2038, %v2039
  %v2041 = vsel %vm1865, %v1066, 0.0
  %v2042 = vadd.f32 %v2040, %v2041
  %v2043 = vsel %vm1865, %v1069, 0.0
  %v2044 = vadd.f32 %v2042, %v2043
  %v2045 = vsel %vm1865, %v1074, 0.0
  %v2046 = vadd.f32 %v2044, %v2045
  %v2047 = vsel %vm1865, %v1077, 0.0
  %v2048 = vadd.f32 %v2046, %v2047
  %v2049 = vsel %vm1865, %v1082, 0.0
  %v2050 = vadd.f32 %v2048, %v2049
  %v2051 = vsel %vm1865, %v1085, 0.0
  %v2052 = vadd.f32 %v2050, %v2051
  %v2053 = vsel %vm1865, %v1090, 0.0
  %v2054 = vadd.f32 %v2052, %v2053
  %v2055 = vsel %vm1865, %v1093, 0.0
  %v2056 = vadd.f32 %v2054, %v2055
  %v2057 = vsel %vm1865, %v1098, 0.0
  %v2058 = vadd.f32 %v2056, %v2057
  %v2059 = vsel %vm1865, %v1101, 0.0
  %v2060 = vadd.f32 %v2058, %v2059
  %v2061 = vsel %vm1865, %v1106, 0.0
  %v2062 = vadd.f32 %v2060, %v2061
  %v2063 = vsel %vm1865, %v1109, 0.0
  %v2064 = vadd.f32 %v2062, %v2063
  %v2065 = vsel %vm1865, %v1114, 0.0
  %v2066 = vadd.f32 %v2064, %v2065
  %v2067 = vsel %vm1865, %v1117, 0.0
  %v2068 = vadd.f32 %v2066, %v2067
  %v2069 = vsel %vm1865, %v1122, 0.0
  %v2070 = vadd.f32 %v2068, %v2069
  %v2071 = vsel %vm1865, %v1125, 0.0
  %v2072 = vadd.f32 %v2070, %v2071
  %v2073 = vsel %vm1865, %v1130, 0.0
  %v2074 = vadd.f32 %v2072, %v2073
  %v2075 = vsel %vm1865, %v1133, 0.0
  %v2076 = vadd.f32 %v2074, %v2075
  %v2077 = vsel %vm1865, %v1138, 0.0
  %v2078 = vadd.f32 %v2076, %v2077
  %v2079 = vsel %vm1865, %v1141, 0.0
  %v2080 = vadd.f32 %v2078, %v2079
  %v2081 = vsel %vm1865, %v1146, 0.0
  %v2082 = vadd.f32 %v2080, %v2081
  %v2083 = vsel %vm1865, %v1149, 0.0
  %v2084 = vadd.f32 %v2082, %v2083
  %v2085 = vsel %vm1865, %v1154, 0.0
  %v2086 = vadd.f32 %v2084, %v2085
  %v2087 = vsel %vm1865, %v1157, 0.0
  %v2088 = vadd.f32 %v2086, %v2087
  %v2089 = vsel %vm1865, %v1162, 0.0
  %v2090 = vadd.f32 %v2088, %v2089
  %v2091 = vsel %vm1865, %v1165, 0.0
  %v2092 = vadd.f32 %v2090, %v2091
  %v2093 = vsel %vm1865, %v1170, 0.0
  %v2094 = vadd.f32 %v2092, %v2093
  %v2095 = vsel %vm1865, %v1173, 0.0
  %v2096 = vadd.f32 %v2094, %v2095
  %v2097 = vsel %vm1865, %v1178, 0.0
  %v2098 = vadd.f32 %v2096, %v2097
  %v2099 = vsel %vm1865, %v1181, 0.0
  %v2100 = vadd.f32 %v2098, %v2099
  %v2101 = vsel %vm1865, %v1186, 0.0
  %v2102 = vadd.f32 %v2100, %v2101
  %v2103 = vsel %vm1865, %v1189, 0.0
  %v2104 = vadd.f32 %v2102, %v2103
  %v2105 = vsel %vm1865, %v1194, 0.0
  %v2106 = vadd.f32 %v2104, %v2105
  %v2107 = vsel %vm1865, %v1197, 0.0
  %v2108 = vadd.f32 %v2106, %v2107
  %v2109 = vsel %vm1865, %v1202, 0.0
  %v2110 = vadd.f32 %v2108, %v2109
  %v2111 = vsel %vm1865, %v1205, 0.0
  %v2112 = vadd.f32 %v2110, %v2111
  %v2113 = vsel %vm1865, %v1210, 0.0
  %v2114 = vadd.f32 %v2112, %v2113
  %v2115 = vsel %vm1865, %v1213, 0.0
  %v2116 = vadd.f32 %v2114, %v2115
  %v2117 = vsel %vm1865, %v1218, 0.0
  %v2118 = vadd.f32 %v2116, %v2117
  %v2119 = vsel %vm1865, %v1221, 0.0
  %v2120 = vadd.f32 %v2118, %v2119
  %v2121 = vrot.slane %v2120, 4
  %v2122 = vadd.f32 %v2120, %v2121
  %v2123 = vrot.slane %v2122, 2
  %v2124 = vadd.f32 %v2122, %v2123
  %v2125 = vrot.slane %v2124, 1
  %v2126 = vadd.f32 %v2124, %v2125
  %v2127 = vmul.f32 %v714, %v714
  %v2128 = vmul.f32 %v717, %v717
  %v2129 = vmul.f32 %v722, %v722
  %v2130 = vmul.f32 %v725, %v725
  %v2131 = vmul.f32 %v730, %v730
  %v2132 = vmul.f32 %v733, %v733
  %v2133 = vmul.f32 %v738, %v738
  %v2134 = vmul.f32 %v741, %v741
  %v2135 = vmul.f32 %v746, %v746
  %v2136 = vmul.f32 %v749, %v749
  %v2137 = vmul.f32 %v754, %v754
  %v2138 = vmul.f32 %v757, %v757
  %v2139 = vmul.f32 %v762, %v762
  %v2140 = vmul.f32 %v765, %v765
  %v2141 = vmul.f32 %v770, %v770
  %v2142 = vmul.f32 %v773, %v773
  %v2143 = vmul.f32 %v778, %v778
  %v2144 = vmul.f32 %v781, %v781
  %v2145 = vmul.f32 %v786, %v786
  %v2146 = vmul.f32 %v789, %v789
  %v2147 = vmul.f32 %v794, %v794
  %v2148 = vmul.f32 %v797, %v797
  %v2149 = vmul.f32 %v802, %v802
  %v2150 = vmul.f32 %v805, %v805
  %v2151 = vmul.f32 %v810, %v810
  %v2152 = vmul.f32 %v813, %v813
  %v2153 = vmul.f32 %v818, %v818
  %v2154 = vmul.f32 %v821, %v821
  %v2155 = vmul.f32 %v826, %v826
  %v2156 = vmul.f32 %v829, %v829
  %v2157 = vmul.f32 %v834, %v834
  %v2158 = vmul.f32 %v837, %v837
  %v2159 = vmul.f32 %v842, %v842
  %v2160 = vmul.f32 %v845, %v845
  %v2161 = vmul.f32 %v850, %v850
  %v2162 = vmul.f32 %v853, %v853
  %v2163 = vmul.f32 %v858, %v858
  %v2164 = vmul.f32 %v861, %v861
  %v2165 = vmul.f32 %v866, %v866
  %v2166 = vmul.f32 %v869, %v869
  %v2167 = vmul.f32 %v874, %v874
  %v2168 = vmul.f32 %v877, %v877
  %v2169 = vmul.f32 %v882, %v882
  %v2170 = vmul.f32 %v885, %v885
  %v2171 = vmul.f32 %v890, %v890
  %v2172 = vmul.f32 %v893, %v893
  %v2173 = vmul.f32 %v898, %v898
  %v2174 = vmul.f32 %v901, %v901
  %v2175 = vmul.f32 %v906, %v906
  %v2176 = vmul.f32 %v909, %v909
  %v2177 = vmul.f32 %v914, %v914
  %v2178 = vmul.f32 %v917, %v917
  %v2179 = vmul.f32 %v922, %v922
  %v2180 = vmul.f32 %v925, %v925
  %v2181 = vmul.f32 %v930, %v930
  %v2182 = vmul.f32 %v933, %v933
  %v2183 = vmul.f32 %v938, %v938
  %v2184 = vmul.f32 %v941, %v941
  %v2185 = vmul.f32 %v946, %v946
  %v2186 = vmul.f32 %v949, %v949
  %v2187 = vmul.f32 %v954, %v954
  %v2188 = vmul.f32 %v957, %v957
  %v2189 = vmul.f32 %v962, %v962
  %v2190 = vmul.f32 %v965, %v965
  %v2191 = vmul.f32 %v970, %v970
  %v2192 = vmul.f32 %v973, %v973
  %v2193 = vmul.f32 %v978, %v978
  %v2194 = vmul.f32 %v981, %v981
  %v2195 = vmul.f32 %v986, %v986
  %v2196 = vmul.f32 %v989, %v989
  %v2197 = vmul.f32 %v994, %v994
  %v2198 = vmul.f32 %v997, %v997
  %v2199 = vmul.f32 %v1002, %v1002
  %v2200 = vmul.f32 %v1005, %v1005
  %v2201 = vmul.f32 %v1010, %v1010
  %v2202 = vmul.f32 %v1013, %v1013
  %v2203 = vmul.f32 %v1018, %v1018
  %v2204 = vmul.f32 %v1021, %v1021
  %v2205 = vmul.f32 %v1026, %v1026
  %v2206 = vmul.f32 %v1029, %v1029
  %v2207 = vmul.f32 %v1034, %v1034
  %v2208 = vmul.f32 %v1037, %v1037
  %v2209 = vmul.f32 %v1042, %v1042
  %v2210 = vmul.f32 %v1045, %v1045
  %v2211 = vmul.f32 %v1050, %v1050
  %v2212 = vmul.f32 %v1053, %v1053
  %v2213 = vmul.f32 %v1058, %v1058
  %v2214 = vmul.f32 %v1061, %v1061
  %v2215 = vmul.f32 %v1066, %v1066
  %v2216 = vmul.f32 %v1069, %v1069
  %v2217 = vmul.f32 %v1074, %v1074
  %v2218 = vmul.f32 %v1077, %v1077
  %v2219 = vmul.f32 %v1082, %v1082
  %v2220 = vmul.f32 %v1085, %v1085
  %v2221 = vmul.f32 %v1090, %v1090
  %v2222 = vmul.f32 %v1093, %v1093
  %v2223 = vmul.f32 %v1098, %v1098
  %v2224 = vmul.f32 %v1101, %v1101
  %v2225 = vmul.f32 %v1106, %v1106
  %v2226 = vmul.f32 %v1109, %v1109
  %v2227 = vmul.f32 %v1114, %v1114
  %v2228 = vmul.f32 %v1117, %v1117
  %v2229 = vmul.f32 %v1122, %v1122
  %v2230 = vmul.f32 %v1125, %v1125
  %v2231 = vmul.f32 %v1130, %v1130
  %v2232 = vmul.f32 %v1133, %v1133
  %v2233 = vmul.f32 %v1138, %v1138
  %v2234 = vmul.f32 %v1141, %v1141
  %v2235 = vmul.f32 %v1146, %v1146
  %v2236 = vmul.f32 %v1149, %v1149
  %v2237 = vmul.f32 %v1154, %v1154
  %v2238 = vmul.f32 %v1157, %v1157
  %v2239 = vmul.f32 %v1162, %v1162
  %v2240 = vmul.f32 %v1165, %v1165
  %v2241 = vmul.f32 %v1170, %v1170
  %v2242 = vmul.f32 %v1173, %v1173
  %v2243 = vmul.f32 %v1178, %v1178
  %v2244 = vmul.f32 %v1181, %v1181
  %v2245 = vmul.f32 %v1186, %v1186
  %v2246 = vmul.f32 %v1189, %v1189
  %v2247 = vmul.f32 %v1194, %v1194
  %v2248 = vmul.f32 %v1197, %v1197
  %v2249 = vmul.f32 %v1202, %v1202
  %v2250 = vmul.f32 %v1205, %v1205
  %v2251 = vmul.f32 %v1210, %v1210
  %v2252 = vmul.f32 %v1213, %v1213
  %v2253 = vmul.f32 %v1218, %v1218
  %v2254 = vmul.f32 %v1221, %v1221
  %v2255 = vsel %vm1865, %v2127, 0.0
  %v2256 = vsel %vm1865, %v2128, 0.0
  %v2257 = vadd.f32 %v2255, %v2256
  %v2258 = vsel %vm1865, %v2129, 0.0
  %v2259 = vadd.f32 %v2257, %v2258
  %v2260 = vsel %vm1865, %v2130, 0.0
  %v2261 = vadd.f32 %v2259, %v2260
  %v2262 = vsel %vm1865, %v2131, 0.0
  %v2263 = vadd.f32 %v2261, %v2262
  %v2264 = vsel %vm1865, %v2132, 0.0
  %v2265 = vadd.f32 %v2263, %v2264
  %v2266 = vsel %vm1865, %v2133, 0.0
  %v2267 = vadd.f32 %v2265, %v2266
  %v2268 = vsel %vm1865, %v2134, 0.0
  %v2269 = vadd.f32 %v2267, %v2268
  %v2270 = vsel %vm1865, %v2135, 0.0
  %v2271 = vadd.f32 %v2269, %v2270
  %v2272 = vsel %vm1865, %v2136, 0.0
  %v2273 = vadd.f32 %v2271, %v2272
  %v2274 = vsel %vm1865, %v2137, 0.0
  %v2275 = vadd.f32 %v2273, %v2274
  %v2276 = vsel %vm1865, %v2138, 0.0
  %v2277 = vadd.f32 %v2275, %v2276
  %v2278 = vsel %vm1865, %v2139, 0.0
  %v2279 = vadd.f32 %v2277, %v2278
  %v2280 = vsel %vm1865, %v2140, 0.0
  %v2281 = vadd.f32 %v2279, %v2280
  %v2282 = vsel %vm1865, %v2141, 0.0
  %v2283 = vadd.f32 %v2281, %v2282
  %v2284 = vsel %vm1865, %v2142, 0.0
  %v2285 = vadd.f32 %v2283, %v2284
  %v2286 = vsel %vm1865, %v2143, 0.0
  %v2287 = vadd.f32 %v2285, %v2286
  %v2288 = vsel %vm1865, %v2144, 0.0
  %v2289 = vadd.f32 %v2287, %v2288
  %v2290 = vsel %vm1865, %v2145, 0.0
  %v2291 = vadd.f32 %v2289, %v2290
  %v2292 = vsel %vm1865, %v2146, 0.0
  %v2293 = vadd.f32 %v2291, %v2292
  %v2294 = vsel %vm1865, %v2147, 0.0
  %v2295 = vadd.f32 %v2293, %v2294
  %v2296 = vsel %vm1865, %v2148, 0.0
  %v2297 = vadd.f32 %v2295, %v2296
  %v2298 = vsel %vm1865, %v2149, 0.0
  %v2299 = vadd.f32 %v2297, %v2298
  %v2300 = vsel %vm1865, %v2150, 0.0
  %v2301 = vadd.f32 %v2299, %v2300
  %v2302 = vsel %vm1865, %v2151, 0.0
  %v2303 = vadd.f32 %v2301, %v2302
  %v2304 = vsel %vm1865, %v2152, 0.0
  %v2305 = vadd.f32 %v2303, %v2304
  %v2306 = vsel %vm1865, %v2153, 0.0
  %v2307 = vadd.f32 %v2305, %v2306
  %v2308 = vsel %vm1865, %v2154, 0.0
  %v2309 = vadd.f32 %v2307, %v2308
  %v2310 = vsel %vm1865, %v2155, 0.0
  %v2311 = vadd.f32 %v2309, %v2310
  %v2312 = vsel %vm1865, %v2156, 0.0
  %v2313 = vadd.f32 %v2311, %v2312
  %v2314 = vsel %vm1865, %v2157, 0.0
  %v2315 = vadd.f32 %v2313, %v2314
  %v2316 = vsel %vm1865, %v2158, 0.0
  %v2317 = vadd.f32 %v2315, %v2316
  %v2318 = vsel %vm1865, %v2159, 0.0
  %v2319 = vadd.f32 %v2317, %v2318
  %v2320 = vsel %vm1865, %v2160, 0.0
  %v2321 = vadd.f32 %v2319, %v2320
  %v2322 = vsel %vm1865, %v2161, 0.0
  %v2323 = vadd.f32 %v2321, %v2322
  %v2324 = vsel %vm1865, %v2162, 0.0
  %v2325 = vadd.f32 %v2323, %v2324
  %v2326 = vsel %vm1865, %v2163, 0.0
  %v2327 = vadd.f32 %v2325, %v2326
  %v2328 = vsel %vm1865, %v2164, 0.0
  %v2329 = vadd.f32 %v2327, %v2328
  %v2330 = vsel %vm1865, %v2165, 0.0
  %v2331 = vadd.f32 %v2329, %v2330
  %v2332 = vsel %vm1865, %v2166, 0.0
  %v2333 = vadd.f32 %v2331, %v2332
  %v2334 = vsel %vm1865, %v2167, 0.0
  %v2335 = vadd.f32 %v2333, %v2334
  %v2336 = vsel %vm1865, %v2168, 0.0
  %v2337 = vadd.f32 %v2335, %v2336
  %v2338 = vsel %vm1865, %v2169, 0.0
  %v2339 = vadd.f32 %v2337, %v2338
  %v2340 = vsel %vm1865, %v2170, 0.0
  %v2341 = vadd.f32 %v2339, %v2340
  %v2342 = vsel %vm1865, %v2171, 0.0
  %v2343 = vadd.f32 %v2341, %v2342
  %v2344 = vsel %vm1865, %v2172, 0.0
  %v2345 = vadd.f32 %v2343, %v2344
  %v2346 = vsel %vm1865, %v2173, 0.0
  %v2347 = vadd.f32 %v2345, %v2346
  %v2348 = vsel %vm1865, %v2174, 0.0
  %v2349 = vadd.f32 %v2347, %v2348
  %v2350 = vsel %vm1865, %v2175, 0.0
  %v2351 = vadd.f32 %v2349, %v2350
  %v2352 = vsel %vm1865, %v2176, 0.0
  %v2353 = vadd.f32 %v2351, %v2352
  %v2354 = vsel %vm1865, %v2177, 0.0
  %v2355 = vadd.f32 %v2353, %v2354
  %v2356 = vsel %vm1865, %v2178, 0.0
  %v2357 = vadd.f32 %v2355, %v2356
  %v2358 = vsel %vm1865, %v2179, 0.0
  %v2359 = vadd.f32 %v2357, %v2358
  %v2360 = vsel %vm1865, %v2180, 0.0
  %v2361 = vadd.f32 %v2359, %v2360
  %v2362 = vsel %vm1865, %v2181, 0.0
  %v2363 = vadd.f32 %v2361, %v2362
  %v2364 = vsel %vm1865, %v2182, 0.0
  %v2365 = vadd.f32 %v2363, %v2364
  %v2366 = vsel %vm1865, %v2183, 0.0
  %v2367 = vadd.f32 %v2365, %v2366
  %v2368 = vsel %vm1865, %v2184, 0.0
  %v2369 = vadd.f32 %v2367, %v2368
  %v2370 = vsel %vm1865, %v2185, 0.0
  %v2371 = vadd.f32 %v2369, %v2370
  %v2372 = vsel %vm1865, %v2186, 0.0
  %v2373 = vadd.f32 %v2371, %v2372
  %v2374 = vsel %vm1865, %v2187, 0.0
  %v2375 = vadd.f32 %v2373, %v2374
  %v2376 = vsel %vm1865, %v2188, 0.0
  %v2377 = vadd.f32 %v2375, %v2376
  %v2378 = vsel %vm1865, %v2189, 0.0
  %v2379 = vadd.f32 %v2377, %v2378
  %v2380 = vsel %vm1865, %v2190, 0.0
  %v2381 = vadd.f32 %v2379, %v2380
  %v2382 = vsel %vm1865, %v2191, 0.0
  %v2383 = vadd.f32 %v2381, %v2382
  %v2384 = vsel %vm1865, %v2192, 0.0
  %v2385 = vadd.f32 %v2383, %v2384
  %v2386 = vsel %vm1865, %v2193, 0.0
  %v2387 = vadd.f32 %v2385, %v2386
  %v2388 = vsel %vm1865, %v2194, 0.0
  %v2389 = vadd.f32 %v2387, %v2388
  %v2390 = vsel %vm1865, %v2195, 0.0
  %v2391 = vadd.f32 %v2389, %v2390
  %v2392 = vsel %vm1865, %v2196, 0.0
  %v2393 = vadd.f32 %v2391, %v2392
  %v2394 = vsel %vm1865, %v2197, 0.0
  %v2395 = vadd.f32 %v2393, %v2394
  %v2396 = vsel %vm1865, %v2198, 0.0
  %v2397 = vadd.f32 %v2395, %v2396
  %v2398 = vsel %vm1865, %v2199, 0.0
  %v2399 = vadd.f32 %v2397, %v2398
  %v2400 = vsel %vm1865, %v2200, 0.0
  %v2401 = vadd.f32 %v2399, %v2400
  %v2402 = vsel %vm1865, %v2201, 0.0
  %v2403 = vadd.f32 %v2401, %v2402
  %v2404 = vsel %vm1865, %v2202, 0.0
  %v2405 = vadd.f32 %v2403, %v2404
  %v2406 = vsel %vm1865, %v2203, 0.0
  %v2407 = vadd.f32 %v2405, %v2406
  %v2408 = vsel %vm1865, %v2204, 0.0
  %v2409 = vadd.f32 %v2407, %v2408
  %v2410 = vsel %vm1865, %v2205, 0.0
  %v2411 = vadd.f32 %v2409, %v2410
  %v2412 = vsel %vm1865, %v2206, 0.0
  %v2413 = vadd.f32 %v2411, %v2412
  %v2414 = vsel %vm1865, %v2207, 0.0
  %v2415 = vadd.f32 %v2413, %v2414
  %v2416 = vsel %vm1865, %v2208, 0.0
  %v2417 = vadd.f32 %v2415, %v2416
  %v2418 = vsel %vm1865, %v2209, 0.0
  %v2419 = vadd.f32 %v2417, %v2418
  %v2420 = vsel %vm1865, %v2210, 0.0
  %v2421 = vadd.f32 %v2419, %v2420
  %v2422 = vsel %vm1865, %v2211, 0.0
  %v2423 = vadd.f32 %v2421, %v2422
  %v2424 = vsel %vm1865, %v2212, 0.0
  %v2425 = vadd.f32 %v2423, %v2424
  %v2426 = vsel %vm1865, %v2213, 0.0
  %v2427 = vadd.f32 %v2425, %v2426
  %v2428 = vsel %vm1865, %v2214, 0.0
  %v2429 = vadd.f32 %v2427, %v2428
  %v2430 = vsel %vm1865, %v2215, 0.0
  %v2431 = vadd.f32 %v2429, %v2430
  %v2432 = vsel %vm1865, %v2216, 0.0
  %v2433 = vadd.f32 %v2431, %v2432
  %v2434 = vsel %vm1865, %v2217, 0.0
  %v2435 = vadd.f32 %v2433, %v2434
  %v2436 = vsel %vm1865, %v2218, 0.0
  %v2437 = vadd.f32 %v2435, %v2436
  %v2438 = vsel %vm1865, %v2219, 0.0
  %v2439 = vadd.f32 %v2437, %v2438
  %v2440 = vsel %vm1865, %v2220, 0.0
  %v2441 = vadd.f32 %v2439, %v2440
  %v2442 = vsel %vm1865, %v2221, 0.0
  %v2443 = vadd.f32 %v2441, %v2442
  %v2444 = vsel %vm1865, %v2222, 0.0
  %v2445 = vadd.f32 %v2443, %v2444
  %v2446 = vsel %vm1865, %v2223, 0.0
  %v2447 = vadd.f32 %v2445, %v2446
  %v2448 = vsel %vm1865, %v2224, 0.0
  %v2449 = vadd.f32 %v2447, %v2448
  %v2450 = vsel %vm1865, %v2225, 0.0
  %v2451 = vadd.f32 %v2449, %v2450
  %v2452 = vsel %vm1865, %v2226, 0.0
  %v2453 = vadd.f32 %v2451, %v2452
  %v2454 = vsel %vm1865, %v2227, 0.0
  %v2455 = vadd.f32 %v2453, %v2454
  %v2456 = vsel %vm1865, %v2228, 0.0
  %v2457 = vadd.f32 %v2455, %v2456
  %v2458 = vsel %vm1865, %v2229, 0.0
  %v2459 = vadd.f32 %v2457, %v2458
  %v2460 = vsel %vm1865, %v2230, 0.0
  %v2461 = vadd.f32 %v2459, %v2460
  %v2462 = vsel %vm1865, %v2231, 0.0
  %v2463 = vadd.f32 %v2461, %v2462
  %v2464 = vsel %vm1865, %v2232, 0.0
  %v2465 = vadd.f32 %v2463, %v2464
  %v2466 = vsel %vm1865, %v2233, 0.0
  %v2467 = vadd.f32 %v2465, %v2466
  %v2468 = vsel %vm1865, %v2234, 0.0
  %v2469 = vadd.f32 %v2467, %v2468
  %v2470 = vsel %vm1865, %v2235, 0.0
  %v2471 = vadd.f32 %v2469, %v2470
  %v2472 = vsel %vm1865, %v2236, 0.0
  %v2473 = vadd.f32 %v2471, %v2472
  %v2474 = vsel %vm1865, %v2237, 0.0
  %v2475 = vadd.f32 %v2473, %v2474
  %v2476 = vsel %vm1865, %v2238, 0.0
  %v2477 = vadd.f32 %v2475, %v2476
  %v2478 = vsel %vm1865, %v2239, 0.0
  %v2479 = vadd.f32 %v2477, %v2478
  %v2480 = vsel %vm1865, %v2240, 0.0
  %v2481 = vadd.f32 %v2479, %v2480
  %v2482 = vsel %vm1865, %v2241, 0.0
  %v2483 = vadd.f32 %v2481, %v2482
  %v2484 = vsel %vm1865, %v2242, 0.0
  %v2485 = vadd.f32 %v2483, %v2484
  %v2486 = vsel %vm1865, %v2243, 0.0
  %v2487 = vadd.f32 %v2485, %v2486
  %v2488 = vsel %vm1865, %v2244, 0.0
  %v2489 = vadd.f32 %v2487, %v2488
  %v2490 = vsel %vm1865, %v2245, 0.0
  %v2491 = vadd.f32 %v2489, %v2490
  %v2492 = vsel %vm1865, %v2246, 0.0
  %v2493 = vadd.f32 %v2491, %v2492
  %v2494 = vsel %vm1865, %v2247, 0.0
  %v2495 = vadd.f32 %v2493, %v2494
  %v2496 = vsel %vm1865, %v2248, 0.0
  %v2497 = vadd.f32 %v2495, %v2496
  %v2498 = vsel %vm1865, %v2249, 0.0
  %v2499 = vadd.f32 %v2497, %v2498
  %v2500 = vsel %vm1865, %v2250, 0.0
  %v2501 = vadd.f32 %v2499, %v2500
  %v2502 = vsel %vm1865, %v2251, 0.0
  %v2503 = vadd.f32 %v2501, %v2502
  %v2504 = vsel %vm1865, %v2252, 0.0
  %v2505 = vadd.f32 %v2503, %v2504
  %v2506 = vsel %vm1865, %v2253, 0.0
  %v2507 = vadd.f32 %v2505, %v2506
  %v2508 = vsel %vm1865, %v2254, 0.0
  %v2509 = vadd.f32 %v2507, %v2508
  %v2510 = vrot.slane %v2509, 4
  %v2511 = vadd.f32 %v2509, %v2510
  %v2512 = vrot.slane %v2511, 2
  %v2513 = vadd.f32 %v2511, %v2512
  %v2514 = vrot.slane %v2513, 1
  %v2515 = vadd.f32 %v2513, %v2514
  %vm2516 = vcmask 1040384
  %v2517 = vsel %vm2516, %v2126, %v2515
  %vm2518 = vcmask 58368
  %2519 = vst.msk [vmem:[%s3] sm:$0x3] %vm2518, %v2517
  // Predicated region
  $region10: #{res_block_2d.6} parent=0 // pred_check
    _
  $region11: #{res_block_2d.6} parent=0 // pred_check_branch
    %2521 = sbr.rel (0) target = $region13
  $region12: #{res_block_2d.6} parent=0 // pred_region
    _
  $region13: #{res_block_2d.6} parent=0 // pred_fallthru
    _
  // Predicated region
  $region14: #{res_block_2d.6} parent=0 // pred_check
    _
  $region15: #{res_block_2d.6} parent=0 // pred_check_branch
    %2523 = sbr.rel (0) target = $region17
  $region16: #{res_block_2d.6} parent=0 // pred_region
    _
  $region17: #{res_block_2d.6} parent=0 // pred_fallthru
    _
  // Predicated region
  $region18: #{res_block_2d.6} parent=0 // pred_check
    _
  $region19: #{res_block_2d.6} parent=0 // pred_check_branch
    %2525 = sbr.rel (0) target = $region21
  $region20: #{res_block_2d.6} parent=0 // pred_region
    _
  $region21: #{res_block_2d.6} parent=0 // pred_fallthru
    _
  // Predicated region
  $region22: #{res_block_2d.6} parent=0 // pred_check
    _
  $region23: #{res_block_2d.6} parent=0 // pred_check_branch
    %2527 = sbr.rel (0) target = $region25
  $region24: #{res_block_2d.6} parent=0 // pred_region
    _
  $region25: #{res_block_2d.6} parent=0 // pred_fallthru
    _

</llo_original>
